<compile_context>
chip_gen: v6e
topology: v6e:2x2x1
jax: 0.10.0
libtpu: 0.0.40
codegen_flags: <defaults>
</compile_context>

<pallas_src>
import functools

import numpy as np
import jax
import jax.numpy as jnp
from jax.experimental import pallas as pl
from jax.experimental.pallas import tpu as pltpu

_BN_EPS = 1e-5


# ---------------------------------------------------------------------------
# Pass 1 kernel: y = conv3x3(relu(x))  +  per-tile BN partial statistics
# ---------------------------------------------------------------------------
def _conv1_stats_kernel(xc_ref, xt_ref, xb_ref, w1_ref,
                        y_ref, sum_ref, sumsq_ref, xpad_ref,
                        *, TH, W, Wp, Cin, Cmid, HB, compute_dtype):
    i = pl.program_id(1)                      # row-block index within the image
    cdt = compute_dtype

    # relu(x) in f32 (VPU); boundary halo rows masked to zero.
    xc = jnp.maximum(xc_ref[0].astype(jnp.float32), 0.0)          # (TH, W, Cin)
    top = jnp.maximum(xt_ref[0, 0].astype(jnp.float32), 0.0)      # (W, Cin)
    bot = jnp.maximum(xb_ref[0, 0].astype(jnp.float32), 0.0)
    top = top * jnp.where(i > 0, 1.0, 0.0)        # zero pad at the image top
    bot = bot * jnp.where(i < HB - 1, 1.0, 0.0)   # zero pad at the image bottom

    # Build the zero-padded tile in VMEM scratch; only the halo is zeroed,
    # the interior is stored exactly once, already in the MXU operand dtype.
    xpad_ref[:, 0:1, :] = jnp.zeros((TH + 2, 1, Cin), cdt)                # left col
    xpad_ref[:, W + 1:Wp, :] = jnp.zeros((TH + 2, Wp - W - 1, Cin), cdt)  # right pad
    xpad_ref[0, 1:W + 1, :] = top.astype(cdt)
    xpad_ref[TH + 1, 1:W + 1, :] = bot.astype(cdt)
    xpad_ref[1:TH + 1, 1:W + 1, :] = xc.astype(cdt)

    # conv1 = 9 shifted (TH*W, Cin) @ (Cin, Cmid) MXU matmuls, f32 accumulator.
    acc = jnp.zeros((TH * W, Cmid), jnp.float32)
    for dy in range(3):
        for dx in range(3):
            a = xpad_ref[dy:dy + TH, dx:dx + W, :].reshape(TH * W, Cin)
            w = w1_ref[(dy * 3 + dx) * Cin:(dy * 3 + dx + 1) * Cin, :]
            acc += jnp.dot(a, w, preferred_element_type=jnp.float32)

    y_ref[...] = acc.reshape(1, TH, W, Cmid).astype(y_ref.dtype)
    # Single-pass BatchNorm partial statistics (f32 accumulation).
    sum_ref[...] = jnp.sum(acc, axis=0).reshape(1, 1, 1, Cmid)
    sumsq_ref[...] = jnp.sum(acc * acc, axis=0).reshape(1, 1, 1, Cmid)


# ---------------------------------------------------------------------------
# Pass 2 kernel: out = conv3x3(relu(scale * y + shift)) + x
# ---------------------------------------------------------------------------
def _bn_conv2_residual_kernel(yc_ref, yt_ref, yb_ref, xc_ref, w2_ref,
                              scale_ref, shift_ref, o_ref, zpad_ref,
                              *, TH, W, Wp, Cmid, Cout, HB, compute_dtype):
    i = pl.program_id(1)
    cdt = compute_dtype
    scale = scale_ref[...].astype(jnp.float32)       # (1, Cmid), broadcasts
    shift = shift_ref[...].astype(jnp.float32)

    def bn_relu(y):                                   # f32 VPU math
        return jnp.maximum(y.astype(jnp.float32) * scale + shift, 0.0)

    zc = bn_relu(yc_ref[0])                                        # (TH, W, Cmid)
    zt = bn_relu(yt_ref[0, 0]) * jnp.where(i > 0, 1.0, 0.0)        # (W, Cmid)
    zb = bn_relu(yb_ref[0, 0]) * jnp.where(i < HB - 1, 1.0, 0.0)

    zpad_ref[:, 0:1, :] = jnp.zeros((TH + 2, 1, Cmid), cdt)
    zpad_ref[:, W + 1:Wp, :] = jnp.zeros((TH + 2, Wp - W - 1, Cmid), cdt)
    zpad_ref[0, 1:W + 1, :] = zt.astype(cdt)
    zpad_ref[TH + 1, 1:W + 1, :] = zb.astype(cdt)
    zpad_ref[1:TH + 1, 1:W + 1, :] = zc.astype(cdt)

    # conv2 = 9 shifted (TH*W, Cmid) @ (Cmid, Cout) MXU matmuls, f32 accumulator.
    acc = jnp.zeros((TH * W, Cout), jnp.float32)
    for dy in range(3):
        for dx in range(3):
            a = zpad_ref[dy:dy + TH, dx:dx + W, :].reshape(TH * W, Cmid)
            w = w2_ref[(dy * 3 + dx) * Cmid:(dy * 3 + dx + 1) * Cmid, :]
            acc += jnp.dot(a, w, preferred_element_type=jnp.float32)

    out = acc.reshape(TH, W, Cout) + xc_ref[0].astype(jnp.float32)  # residual
    o_ref[...] = out.reshape(1, TH, W, Cout).astype(o_ref.dtype)


# ---------------------------------------------------------------------------
# Wrapper helpers
# ---------------------------------------------------------------------------
def _round_up(x, m):
    return ((x + m - 1) // m) * m


def _pick_row_block(H, W, target_rows=512):
    # Largest divisor of H such that one tile is ~256-512 im2col rows.
    cands = [d for d in range(1, H + 1) if H % d == 0 and d * W <= target_rows]
    return max(cands) if cands else 1


def _nbytes(shape, dtype):
    return int(np.prod(shape)) * np.dtype(dtype).itemsize


def _vmem_limit(block_bytes, scratch_bytes):
    # Double-buffered pipelined blocks + scratch + generous headroom for
    # compiler temporaries; clamp to [32 MiB, 64 MiB] (valid on v5e/v6e/v7x).
    need = 2 * block_bytes + scratch_bytes
    return int(min(64 << 20, max(32 << 20, 4 * need)))


# ---------------------------------------------------------------------------
# NHWC forward (the Pallas core)
# ---------------------------------------------------------------------------
def residual_conv_forward_nhwc(x, params, *, compute_dtype=jnp.bfloat16,
                               row_block_rows=None):
    x = x.astype(jnp.float32)
    N, H, W, C = x.shape
    Cmid = params["w1"].shape[1]
    TH = row_block_rows if row_block_rows is not None else _pick_row_block(H, W)
    assert H % TH == 0, (H, TH)
    HB = H // TH
    Wp = _round_up(W + 2, 8)                 # sublane-aligned padded tile width
    grid = (N, HB)
    y_dtype = compute_dtype

    # One-time tiny casts: MXU operands arrive in compute_dtype, no per-step cast.
    w1 = params["w1"].astype(compute_dtype)
    w2 = params["w2"].astype(compute_dtype)

    center4 = lambda n, i: (n, i, 0, 0)
    top_row = lambda n, i: (n, jnp.maximum(i * TH - 1, 0), 0, 0)       # clamped halo
    bot_row = lambda n, i: (n, jnp.minimum(i * TH + TH, H - 1), 0, 0)  # clamped halo
    pinned2 = lambda n, i: (0, 0)
    stats4 = lambda n, i: (n, i, 0, 0)

    # ---------------- pass 1: conv1(relu(x)) + BN partial statistics ----------
    blocks1 = (3 * _nbytes((1, TH, W, C), jnp.float32)
               + _nbytes((9 * C, Cmid), compute_dtype)
               + _nbytes((1, TH, W, Cmid), y_dtype)
               + 2 * _nbytes((1, 1, 1, Cmid), jnp.float32))
    scratch1 = _nbytes((TH + 2, Wp, C), compute_dtype)

    y, psum, psumsq = pl.pallas_call(
        functools.partial(_conv1_stats_kernel, TH=TH, W=W, Wp=Wp, Cin=C,
                          Cmid=Cmid, HB=HB, compute_dtype=compute_dtype),
        grid=grid,
        in_specs=[
            pl.BlockSpec((1, TH, W, C), center4),
            pl.BlockSpec((1, 1, W, C), top_row),
            pl.BlockSpec((1, 1, W, C), bot_row),
            pl.BlockSpec((9 * C, Cmid), pinned2),
        ],
        out_specs=[
            pl.BlockSpec((1, TH, W, Cmid), center4),
            pl.BlockSpec((1, 1, 1, Cmid), stats4),
            pl.BlockSpec((1, 1, 1, Cmid), stats4),
        ],
        out_shape=[
            jax.ShapeDtypeStruct((N, H, W, Cmid), y_dtype),
            jax.ShapeDtypeStruct((N, HB, 1, Cmid), jnp.float32),
            jax.ShapeDtypeStruct((N, HB, 1, Cmid), jnp.float32),
        ],
        scratch_shapes=[pltpu.VMEM((TH + 2, Wp, C), compute_dtype)],
        compiler_params=pltpu.CompilerParams(
            dimension_semantics=("parallel", "parallel"),
            vmem_limit_bytes=_vmem_limit(blocks1, scratch1)),
    )(x, x, x, w1)

    # ------- tiny XLA glue: fold per-tile partial sums into BN scale/shift ----
    cnt = jnp.float32(N * H * W)
    mean = jnp.sum(psum, axis=(0, 1, 2)) / cnt                       # (Cmid,)
    var = jnp.maximum(jnp.sum(psumsq, axis=(0, 1, 2)) / cnt - mean * mean, 0.0)
    inv = jax.lax.rsqrt(var + _BN_EPS)
    gamma = params["gamma"].reshape(-1).astype(jnp.float32)
    beta = params["beta"].reshape(-1).astype(jnp.float32)
    scale = (gamma * inv).reshape(1, Cmid)
    shift = (beta - mean * gamma * inv).reshape(1, Cmid)

    # ---------------- pass 2: conv2(relu(BN(y))) + residual -------------------
    blocks2 = (3 * _nbytes((1, TH, W, Cmid), y_dtype)
               + 2 * _nbytes((1, TH, W, C), jnp.float32)        # x block + out block
               + _nbytes((9 * Cmid, C), compute_dtype)
               + 2 * _nbytes((1, Cmid), jnp.float32))
    scratch2 = _nbytes((TH + 2, Wp, Cmid), compute_dtype)

    out = pl.pallas_call(
        functools.partial(_bn_conv2_residual_kernel, TH=TH, W=W, Wp=Wp,
                          Cmid=Cmid, Cout=C, HB=HB, compute_dtype=compute_dtype),
        grid=grid,
        in_specs=[
            pl.BlockSpec((1, TH, W, Cmid), center4),
            pl.BlockSpec((1, 1, W, Cmid), top_row),
            pl.BlockSpec((1, 1, W, Cmid), bot_row),
            pl.BlockSpec((1, TH, W, C), center4),
            pl.BlockSpec((9 * Cmid, C), pinned2),
            pl.BlockSpec((1, Cmid), pinned2),
            pl.BlockSpec((1, Cmid), pinned2),
        ],
        out_specs=pl.BlockSpec((1, TH, W, C), center4),
        out_shape=jax.ShapeDtypeStruct((N, H, W, C), jnp.float32),
        scratch_shapes=[pltpu.VMEM((TH + 2, Wp, Cmid), compute_dtype)],
        compiler_params=pltpu.CompilerParams(
            dimension_semantics=("parallel", "parallel"),
            vmem_limit_bytes=_vmem_limit(blocks2, scratch2)),
    )(y, y, y, x, w2, scale, shift)
    return out


# ---------------------------------------------------------------------------
# NCHW forward (PyTorch-module interface)
# ---------------------------------------------------------------------------
def residual_conv_forward(x_nchw, params, *, compute_dtype=jnp.bfloat16,
                          row_block_rows=None):
    # The two transposes are full HBM passes; NHWC callers should use
    # residual_conv_forward_nhwc directly.
    x = jnp.transpose(x_nchw, (0, 2, 3, 1))
    out = residual_conv_forward_nhwc(x, params, compute_dtype=compute_dtype,
                                     row_block_rows=row_block_rows)
    return jnp.transpose(out, (0, 3, 1, 2))


# ---------------------------------------------------------------------------
# Deterministic parameter init (PyTorch-like conv magnitudes; BN affine jittered)
# ---------------------------------------------------------------------------
def init_params(key, cin):
    cmid = cin // 2                       # the module's `inchannels / 2`
    k1, k2, k3, k4 = jax.random.split(key, 4)
    b1 = 1.0 / np.sqrt(cin * 9)
    b2 = 1.0 / np.sqrt(cmid * 9)
    return {
        # row index = (dy*3 + dx)*Cin + cin  (matches _conv3x3_ref reshape)
        "w1": jax.random.uniform(k1, (9 * cin, cmid), jnp.float32, -b1, b1),
        "w2": jax.random.uniform(k2, (9 * cmid, cin), jnp.float32, -b2, b2),
        "gamma": (1.0 + 0.1 * jax.random.normal(k3, (1, cmid), jnp.float32)),
        "beta": 0.1 * jax.random.normal(k4, (1, cmid), jnp.float32),
    }


# ---------------------------------------------------------------------------
# Pure-JAX reference (numerical sanity check)
# ---------------------------------------------------------------------------
def _conv3x3_ref(x, w_flat, cin, cout):
    w = w_flat.reshape(3, 3, cin, cout)                       # HWIO
    return jax.lax.conv_general_dilated(
        x, w, (1, 1), ((1, 1), (1, 1)),
        dimension_numbers=("NHWC", "HWIO", "NHWC"),
        precision=jax.lax.Precision.HIGHEST)


def residual_conv_ref(x_nchw, params):
    x = jnp.transpose(x_nchw, (0, 2, 3, 1)).astype(jnp.float32)
    cin = x.shape[-1]
    cmid = params["w1"].shape[1]
    y = _conv3x3_ref(jnp.maximum(x, 0.0), params["w1"], cin, cmid)
    mean = jnp.mean(y, axis=(0, 1, 2))
    var = jnp.mean(jnp.square(y - mean), axis=(0, 1, 2))
    z = (y - mean) / jnp.sqrt(var + _BN_EPS)
    z = z * params["gamma"].reshape(-1) + params["beta"].reshape(-1)
    out = _conv3x3_ref(jnp.maximum(z, 0.0), params["w2"], cmid, cin) + x
    return jnp.transpose(out, (0, 3, 1, 2))


# ---------------------------------------------------------------------------
if __name__ == "__main__":
    key = jax.random.PRNGKey(0)
    kp, kx = jax.random.split(key)

    N, C, H, W = 2, 16, 16, 16            # small NCHW test shape (C must be even)
    params = init_params(kp, C)
    x = jax.random.normal(kx, (N, C, H, W), jnp.float32)

    ref = residual_conv_ref(x, params)

    # f32 MXU-operand path (tight tolerance).
    fwd_f32 = jax.jit(functools.partial(residual_conv_forward,
                                        compute_dtype=jnp.float32))
    out_f32 = jax.block_until_ready(fwd_f32(x, params))
    assert out_f32.shape == (N, C, H, W), out_f32.shape
    np.testing.assert_allclose(np.asarray(out_f32), np.asarray(ref),
                               rtol=3e-2, atol=3e-2)

    # Default bf16 MXU-operand path (recommended on v5e / v6e / v7x).
    fwd_bf16 = jax.jit(residual_conv_forward)
    out_bf16 = jax.block_until_ready(fwd_bf16(x, params))
    np.testing.assert_allclose(np.asarray(out_bf16), np.asarray(ref),
                               rtol=1e-1, atol=1e-1)

    # Smaller row blocks -> exercises the multi-tile halo path (grid (2, 4)).
    fwd_tiled = jax.jit(functools.partial(residual_conv_forward,
                                          compute_dtype=jnp.float32,
                                          row_block_rows=4))
    out_tiled = jax.block_until_ready(fwd_tiled(x, params))
    np.testing.assert_allclose(np.asarray(out_tiled), np.asarray(ref),
                               rtol=3e-2, atol=3e-2)

    print("KERNEL_OK")
</pallas_src>

<mosaic_0001>
module attributes {stable_mosaic.version = 11 : i64} {
  func.func @_conv1_stats_kernel(%arg0: i32, %arg1: i32, %arg2: memref<1x16x16x16xf32, #tpu.memory_space<vmem>>, %arg3: memref<1x1x16x16xf32, #tpu.memory_space<vmem>>, %arg4: memref<1x1x16x16xf32, #tpu.memory_space<vmem>>, %arg5: memref<144x8xf32, #tpu.memory_space<vmem>>, %arg6: memref<1x16x16x8xf32, #tpu.memory_space<vmem>>, %arg7: memref<1x1x1x8xf32, #tpu.memory_space<vmem>>, %arg8: memref<1x1x1x8xf32, #tpu.memory_space<vmem>>, %arg9: memref<18x24x16xf32, #tpu.memory_space<vmem>>) attributes {dimension_semantics = [#tpu.dimension_semantics<parallel>, #tpu.dimension_semantics<parallel>], iteration_bounds = array<i64: 2, 1>, scalar_prefetch = 0 : i64, scratch_operands = 1 : i64, tpu.core_type = #tpu.core_type<tc>, window_params = [{transform_indices = @transform_0, window_bounds = array<i64: 1, 16, 16, 16>}, {transform_indices = @transform_1, window_bounds = array<i64: 1, 1, 16, 16>}, {transform_indices = @transform_2, window_bounds = array<i64: 1, 1, 16, 16>}, {pipeline_mode = #tpu.pipeline_mode<synchronous>, transform_indices = @transform_3, window_bounds = array<i64: 144, 8>}, {transform_indices = @transform_4, window_bounds = array<i64: 1, 16, 16, 8>}, {transform_indices = @transform_5, window_bounds = array<i64: 1, 1, 1, 8>}, {transform_indices = @transform_6, window_bounds = array<i64: 1, 1, 1, 8>}]} {
    %c0 = arith.constant 0 : index
    %c0_0 = arith.constant 0 : index
    %c0_1 = arith.constant 0 : index
    %c0_2 = arith.constant 0 : index
    %0 = vector.load %arg2[%c0, %c0_0, %c0_1, %c0_2] : memref<1x16x16x16xf32, #tpu.memory_space<vmem>>, vector<1x16x16x16xf32>
    %1 = vector.shape_cast %0 : vector<1x16x16x16xf32> to vector<16x16x16xf32>
    %cst = arith.constant 0.000000e+00 : f32
    %2 = vector.broadcast %cst : f32 to vector<16x16x16xf32>
    %3 = arith.maximumf %1, %2 : vector<16x16x16xf32>
    %c0_3 = arith.constant 0 : index
    %c0_4 = arith.constant 0 : index
    %c0_5 = arith.constant 0 : index
    %c0_6 = arith.constant 0 : index
    %4 = vector.load %arg3[%c0_3, %c0_4, %c0_5, %c0_6] : memref<1x1x16x16xf32, #tpu.memory_space<vmem>>, vector<1x1x16x16xf32>
    %5 = vector.shape_cast %4 : vector<1x1x16x16xf32> to vector<16x16xf32>
    %cst_7 = arith.constant 0.000000e+00 : f32
    %6 = vector.broadcast %cst_7 : f32 to vector<16x16xf32>
    %7 = arith.maximumf %5, %6 : vector<16x16xf32>
    %c0_8 = arith.constant 0 : index
    %c0_9 = arith.constant 0 : index
    %c0_10 = arith.constant 0 : index
    %c0_11 = arith.constant 0 : index
    %8 = vector.load %arg4[%c0_8, %c0_9, %c0_10, %c0_11] : memref<1x1x16x16xf32, #tpu.memory_space<vmem>>, vector<1x1x16x16xf32>
    %9 = vector.shape_cast %8 : vector<1x1x16x16xf32> to vector<16x16xf32>
    %cst_12 = arith.constant 0.000000e+00 : f32
    %10 = vector.broadcast %cst_12 : f32 to vector<16x16xf32>
    %11 = arith.maximumf %9, %10 : vector<16x16xf32>
    %c0_i32 = arith.constant 0 : i32
    %12 = arith.cmpi sgt, %arg1, %c0_i32 : i32
    %cst_13 = arith.constant 1.000000e+00 : f32
    %cst_14 = arith.constant 0.000000e+00 : f32
    %13 = arith.select %12, %cst_13, %cst_14 : f32
    %14 = vector.broadcast %13 : f32 to vector<16x16xf32>
    %15 = arith.mulf %7, %14 : vector<16x16xf32>
    %c0_i32_15 = arith.constant 0 : i32
    %16 = arith.cmpi slt, %arg1, %c0_i32_15 : i32
    %cst_16 = arith.constant 1.000000e+00 : f32
    %cst_17 = arith.constant 0.000000e+00 : f32
    %17 = arith.select %16, %cst_16, %cst_17 : f32
    %18 = vector.broadcast %17 : f32 to vector<16x16xf32>
    %19 = arith.mulf %11, %18 : vector<16x16xf32>
    %cst_18 = arith.constant 0.000000e+00 : f32
    %20 = vector.broadcast %cst_18 : f32 to vector<18x1x16xf32>
    %c0_19 = arith.constant 0 : index
    %c0_20 = arith.constant 0 : index
    %c0_21 = arith.constant 0 : index
    %21 = vector.load %arg9[%c0_19, %c0_20, %c0_21] : memref<18x24x16xf32, #tpu.memory_space<vmem>>, vector<18x1x16xf32>
    tpu.vector_store %arg9[%c0_19, %c0_20, %c0_21], %20 {strides = array<i32>} : memref<18x24x16xf32, #tpu.memory_space<vmem>>, vector<18x1x16xf32>,
    %cst_22 = arith.constant 0.000000e+00 : f32
    %22 = vector.broadcast %cst_22 : f32 to vector<18x7x16xf32>
    %c0_23 = arith.constant 0 : index
    %c17 = arith.constant 17 : index
    %c0_24 = arith.constant 0 : index
    %23 = vector.load %arg9[%c0_23, %c17, %c0_24] : memref<18x24x16xf32, #tpu.memory_space<vmem>>, vector<18x7x16xf32>
    tpu.vector_store %arg9[%c0_23, %c17, %c0_24], %22 {strides = array<i32>} : memref<18x24x16xf32, #tpu.memory_space<vmem>>, vector<18x7x16xf32>,
    %c0_25 = arith.constant 0 : index
    %c1 = arith.constant 1 : index
    %c0_26 = arith.constant 0 : index
    %24 = vector.load %arg9[%c0_25, %c1, %c0_26] : memref<18x24x16xf32, #tpu.memory_space<vmem>>, vector<1x16x16xf32>
    %25 = vector.shape_cast %24 : vector<1x16x16xf32> to vector<16x16xf32>
    %26 = vector.shape_cast %15 : vector<16x16xf32> to vector<1x16x16xf32>
    tpu.vector_store %arg9[%c0_25, %c1, %c0_26], %26 {strides = array<i32>} : memref<18x24x16xf32, #tpu.memory_space<vmem>>, vector<1x16x16xf32>,
    %c17_27 = arith.constant 17 : index
    %c1_28 = arith.constant 1 : index
    %c0_29 = arith.constant 0 : index
    %27 = vector.load %arg9[%c17_27, %c1_28, %c0_29] : memref<18x24x16xf32, #tpu.memory_space<vmem>>, vector<1x16x16xf32>
    %28 = vector.shape_cast %27 : vector<1x16x16xf32> to vector<16x16xf32>
    %29 = vector.shape_cast %19 : vector<16x16xf32> to vector<1x16x16xf32>
    tpu.vector_store %arg9[%c17_27, %c1_28, %c0_29], %29 {strides = array<i32>} : memref<18x24x16xf32, #tpu.memory_space<vmem>>, vector<1x16x16xf32>,
    %c1_30 = arith.constant 1 : index
    %c1_31 = arith.constant 1 : index
    %c0_32 = arith.constant 0 : index
    %30 = vector.load %arg9[%c1_30, %c1_31, %c0_32] : memref<18x24x16xf32, #tpu.memory_space<vmem>>, vector<16x16x16xf32>
    tpu.vector_store %arg9[%c1_30, %c1_31, %c0_32], %3 {strides = array<i32>} : memref<18x24x16xf32, #tpu.memory_space<vmem>>, vector<16x16x16xf32>,
    %cst_33 = arith.constant 0.000000e+00 : f32
    %31 = vector.broadcast %cst_33 : f32 to vector<256x8xf32>
    %c0_34 = arith.constant 0 : index
    %c0_35 = arith.constant 0 : index
    %c0_36 = arith.constant 0 : index
    %32 = vector.load %arg9[%c0_34, %c0_35, %c0_36] : memref<18x24x16xf32, #tpu.memory_space<vmem>>, vector<16x16x16xf32>
    %33 = vector.shape_cast %32 : vector<16x16x16xf32> to vector<256x16xf32>
    %c0_37 = arith.constant 0 : index
    %c0_38 = arith.constant 0 : index
    %34 = vector.load %arg5[%c0_37, %c0_38] : memref<144x8xf32, #tpu.memory_space<vmem>>, vector<16x8xf32>
    %cst_39 = arith.constant dense<0.000000e+00> : vector<256x8xf32>
    %35 = tpu.matmul %33, %34, %cst_39 {dimension_numbers = #tpu.dot_dimension_numbers<[1], [0], [0], [1], [0, 0, 1, 1], [], []>} : vector<256x16xf32>, vector<16x8xf32>, vector<256x8xf32> -> vector<256x8xf32>
    %36 = arith.addf %31, %35 : vector<256x8xf32>
    %c0_40 = arith.constant 0 : index
    %c1_41 = arith.constant 1 : index
    %c0_42 = arith.constant 0 : index
    %37 = vector.load %arg9[%c0_40, %c1_41, %c0_42] : memref<18x24x16xf32, #tpu.memory_space<vmem>>, vector<16x16x16xf32>
    %38 = vector.shape_cast %37 : vector<16x16x16xf32> to vector<256x16xf32>
    %c16 = arith.constant 16 : index
    %c0_43 = arith.constant 0 : index
    %39 = vector.load %arg5[%c16, %c0_43] : memref<144x8xf32, #tpu.memory_space<vmem>>, vector<16x8xf32>
    %cst_44 = arith.constant dense<0.000000e+00> : vector<256x8xf32>
    %40 = tpu.matmul %38, %39, %cst_44 {dimension_numbers = #tpu.dot_dimension_numbers<[1], [0], [0], [1], [0, 0, 1, 1], [], []>} : vector<256x16xf32>, vector<16x8xf32>, vector<256x8xf32> -> vector<256x8xf32>
    %41 = arith.addf %36, %40 : vector<256x8xf32>
    %c0_45 = arith.constant 0 : index
    %c2 = arith.constant 2 : index
    %c0_46 = arith.constant 0 : index
    %42 = vector.load %arg9[%c0_45, %c2, %c0_46] : memref<18x24x16xf32, #tpu.memory_space<vmem>>, vector<16x16x16xf32>
    %43 = vector.shape_cast %42 : vector<16x16x16xf32> to vector<256x16xf32>
    %c32 = arith.constant 32 : index
    %c0_47 = arith.constant 0 : index
    %44 = vector.load %arg5[%c32, %c0_47] : memref<144x8xf32, #tpu.memory_space<vmem>>, vector<16x8xf32>
    %cst_48 = arith.constant dense<0.000000e+00> : vector<256x8xf32>
    %45 = tpu.matmul %43, %44, %cst_48 {dimension_numbers = #tpu.dot_dimension_numbers<[1], [0], [0], [1], [0, 0, 1, 1], [], []>} : vector<256x16xf32>, vector<16x8xf32>, vector<256x8xf32> -> vector<256x8xf32>
    %46 = arith.addf %41, %45 : vector<256x8xf32>
    %c1_49 = arith.constant 1 : index
    %c0_50 = arith.constant 0 : index
    %c0_51 = arith.constant 0 : index
    %47 = vector.load %arg9[%c1_49, %c0_50, %c0_51] : memref<18x24x16xf32, #tpu.memory_space<vmem>>, vector<16x16x16xf32>
    %48 = vector.shape_cast %47 : vector<16x16x16xf32> to vector<256x16xf32>
    %c48 = arith.constant 48 : index
    %c0_52 = arith.constant 0 : index
    %49 = vector.load %arg5[%c48, %c0_52] : memref<144x8xf32, #tpu.memory_space<vmem>>, vector<16x8xf32>
    %cst_53 = arith.constant dense<0.000000e+00> : vector<256x8xf32>
    %50 = tpu.matmul %48, %49, %cst_53 {dimension_numbers = #tpu.dot_dimension_numbers<[1], [0], [0], [1], [0, 0, 1, 1], [], []>} : vector<256x16xf32>, vector<16x8xf32>, vector<256x8xf32> -> vector<256x8xf32>
    %51 = arith.addf %46, %50 : vector<256x8xf32>
    %c1_54 = arith.constant 1 : index
    %c1_55 = arith.constant 1 : index
    %c0_56 = arith.constant 0 : index
    %52 = vector.load %arg9[%c1_54, %c1_55, %c0_56] : memref<18x24x16xf32, #tpu.memory_space<vmem>>, vector<16x16x16xf32>
    %53 = vector.shape_cast %52 : vector<16x16x16xf32> to vector<256x16xf32>
    %c64 = arith.constant 64 : index
    %c0_57 = arith.constant 0 : index
    %54 = vector.load %arg5[%c64, %c0_57] : memref<144x8xf32, #tpu.memory_space<vmem>>, vector<16x8xf32>
    %cst_58 = arith.constant dense<0.000000e+00> : vector<256x8xf32>
    %55 = tpu.matmul %53, %54, %cst_58 {dimension_numbers = #tpu.dot_dimension_numbers<[1], [0], [0], [1], [0, 0, 1, 1], [], []>} : vector<256x16xf32>, vector<16x8xf32>, vector<256x8xf32> -> vector<256x8xf32>
    %56 = arith.addf %51, %55 : vector<256x8xf32>
    %c1_59 = arith.constant 1 : index
    %c2_60 = arith.constant 2 : index
    %c0_61 = arith.constant 0 : index
    %57 = vector.load %arg9[%c1_59, %c2_60, %c0_61] : memref<18x24x16xf32, #tpu.memory_space<vmem>>, vector<16x16x16xf32>
    %58 = vector.shape_cast %57 : vector<16x16x16xf32> to vector<256x16xf32>
    %c80 = arith.constant 80 : index
    %c0_62 = arith.constant 0 : index
    %59 = vector.load %arg5[%c80, %c0_62] : memref<144x8xf32, #tpu.memory_space<vmem>>, vector<16x8xf32>
    %cst_63 = arith.constant dense<0.000000e+00> : vector<256x8xf32>
    %60 = tpu.matmul %58, %59, %cst_63 {dimension_numbers = #tpu.dot_dimension_numbers<[1], [0], [0], [1], [0, 0, 1, 1], [], []>} : vector<256x16xf32>, vector<16x8xf32>, vector<256x8xf32> -> vector<256x8xf32>
    %61 = arith.addf %56, %60 : vector<256x8xf32>
    %c2_64 = arith.constant 2 : index
    %c0_65 = arith.constant 0 : index
    %c0_66 = arith.constant 0 : index
    %62 = vector.load %arg9[%c2_64, %c0_65, %c0_66] : memref<18x24x16xf32, #tpu.memory_space<vmem>>, vector<16x16x16xf32>
    %63 = vector.shape_cast %62 : vector<16x16x16xf32> to vector<256x16xf32>
    %c96 = arith.constant 96 : index
    %c0_67 = arith.constant 0 : index
    %64 = vector.load %arg5[%c96, %c0_67] : memref<144x8xf32, #tpu.memory_space<vmem>>, vector<16x8xf32>
    %cst_68 = arith.constant dense<0.000000e+00> : vector<256x8xf32>
    %65 = tpu.matmul %63, %64, %cst_68 {dimension_numbers = #tpu.dot_dimension_numbers<[1], [0], [0], [1], [0, 0, 1, 1], [], []>} : vector<256x16xf32>, vector<16x8xf32>, vector<256x8xf32> -> vector<256x8xf32>
    %66 = arith.addf %61, %65 : vector<256x8xf32>
    %c2_69 = arith.constant 2 : index
    %c1_70 = arith.constant 1 : index
    %c0_71 = arith.constant 0 : index
    %67 = vector.load %arg9[%c2_69, %c1_70, %c0_71] : memref<18x24x16xf32, #tpu.memory_space<vmem>>, vector<16x16x16xf32>
    %68 = vector.shape_cast %67 : vector<16x16x16xf32> to vector<256x16xf32>
    %c112 = arith.constant 112 : index
    %c0_72 = arith.constant 0 : index
    %69 = vector.load %arg5[%c112, %c0_72] : memref<144x8xf32, #tpu.memory_space<vmem>>, vector<16x8xf32>
    %cst_73 = arith.constant dense<0.000000e+00> : vector<256x8xf32>
    %70 = tpu.matmul %68, %69, %cst_73 {dimension_numbers = #tpu.dot_dimension_numbers<[1], [0], [0], [1], [0, 0, 1, 1], [], []>} : vector<256x16xf32>, vector<16x8xf32>, vector<256x8xf32> -> vector<256x8xf32>
    %71 = arith.addf %66, %70 : vector<256x8xf32>
    %c2_74 = arith.constant 2 : index
    %c2_75 = arith.constant 2 : index
    %c0_76 = arith.constant 0 : index
    %72 = vector.load %arg9[%c2_74, %c2_75, %c0_76] : memref<18x24x16xf32, #tpu.memory_space<vmem>>, vector<16x16x16xf32>
    %73 = vector.shape_cast %72 : vector<16x16x16xf32> to vector<256x16xf32>
    %c128 = arith.constant 128 : index
    %c0_77 = arith.constant 0 : index
    %74 = vector.load %arg5[%c128, %c0_77] : memref<144x8xf32, #tpu.memory_space<vmem>>, vector<16x8xf32>
    %cst_78 = arith.constant dense<0.000000e+00> : vector<256x8xf32>
    %75 = tpu.matmul %73, %74, %cst_78 {dimension_numbers = #tpu.dot_dimension_numbers<[1], [0], [0], [1], [0, 0, 1, 1], [], []>} : vector<256x16xf32>, vector<16x8xf32>, vector<256x8xf32> -> vector<256x8xf32>
    %76 = arith.addf %71, %75 : vector<256x8xf32>
    %77 = vector.shape_cast %76 : vector<256x8xf32> to vector<1x16x16x8xf32>
    %c0_79 = arith.constant 0 : index
    %c0_80 = arith.constant 0 : index
    %c0_81 = arith.constant 0 : index
    %c0_82 = arith.constant 0 : index
    %78 = vector.load %arg6[%c0_79, %c0_80, %c0_81, %c0_82] : memref<1x16x16x8xf32, #tpu.memory_space<vmem>>, vector<1x16x16x8xf32>
    tpu.vector_store %arg6[%c0_79, %c0_80, %c0_81, %c0_82], %77 {strides = array<i32>} : memref<1x16x16x8xf32, #tpu.memory_space<vmem>>, vector<1x16x16x8xf32>,
    %cst_83 = arith.constant dense<0.000000e+00> : vector<8xf32>
    %79 = vector.multi_reduction <add>, %76, %cst_83 [0] : vector<256x8xf32> to vector<8xf32>
    %80 = vector.shape_cast %79 : vector<8xf32> to vector<1x1x1x8xf32>
    %c0_84 = arith.constant 0 : index
    %c0_85 = arith.constant 0 : index
    %c0_86 = arith.constant 0 : index
    %c0_87 = arith.constant 0 : index
    %81 = vector.load %arg7[%c0_84, %c0_85, %c0_86, %c0_87] : memref<1x1x1x8xf32, #tpu.memory_space<vmem>>, vector<1x1x1x8xf32>
    tpu.vector_store %arg7[%c0_84, %c0_85, %c0_86, %c0_87], %80 {strides = array<i32>} : memref<1x1x1x8xf32, #tpu.memory_space<vmem>>, vector<1x1x1x8xf32>,
    %82 = arith.mulf %76, %76 : vector<256x8xf32>
    %cst_88 = arith.constant dense<0.000000e+00> : vector<8xf32>
    %83 = vector.multi_reduction <add>, %82, %cst_88 [0] : vector<256x8xf32> to vector<8xf32>
    %84 = vector.shape_cast %83 : vector<8xf32> to vector<1x1x1x8xf32>
    %c0_89 = arith.constant 0 : index
    %c0_90 = arith.constant 0 : index
    %c0_91 = arith.constant 0 : index
    %c0_92 = arith.constant 0 : index
    %85 = vector.load %arg8[%c0_89, %c0_90, %c0_91, %c0_92] : memref<1x1x1x8xf32, #tpu.memory_space<vmem>>, vector<1x1x1x8xf32>
    tpu.vector_store %arg8[%c0_89, %c0_90, %c0_91, %c0_92], %84 {strides = array<i32>} : memref<1x1x1x8xf32, #tpu.memory_space<vmem>>, vector<1x1x1x8xf32>,
    return
  }
  func.func @transform_0(%arg0: i32, %arg1: i32) -> (i32, i32, i32, i32) {
    %c0_i32 = arith.constant 0 : i32
    %c0_i32_0 = arith.constant 0 : i32
    %c0_i32_1 = arith.constant 0 : i32
    return %arg0, %arg1, %c0_i32, %c0_i32_0 : i32, i32, i32, i32
  }
  func.func @transform_1(%arg0: i32, %arg1: i32) -> (i32, i32, i32, i32) {
    %c16_i32 = arith.constant 16 : i32
    %0 = arith.muli %arg1, %c16_i32 : i32
    %c1_i32 = arith.constant 1 : i32
    %1 = arith.subi %0, %c1_i32 : i32
    %c0_i32 = arith.constant 0 : i32
    %2 = arith.maxsi %1, %c0_i32 : i32
    %c0_i32_0 = arith.constant 0 : i32
    %c0_i32_1 = arith.constant 0 : i32
    %c0_i32_2 = arith.constant 0 : i32
    return %arg0, %2, %c0_i32_0, %c0_i32_1 : i32, i32, i32, i32
  }
  func.func @transform_2(%arg0: i32, %arg1: i32) -> (i32, i32, i32, i32) {
    %c16_i32 = arith.constant 16 : i32
    %0 = arith.muli %arg1, %c16_i32 : i32
    %c16_i32_0 = arith.constant 16 : i32
    %1 = arith.addi %0, %c16_i32_0 : i32
    %c15_i32 = arith.constant 15 : i32
    %2 = arith.minsi %1, %c15_i32 : i32
    %c0_i32 = arith.constant 0 : i32
    %c0_i32_1 = arith.constant 0 : i32
    %c0_i32_2 = arith.constant 0 : i32
    return %arg0, %2, %c0_i32, %c0_i32_1 : i32, i32, i32, i32
  }
  func.func @transform_3(%arg0: i32, %arg1: i32) -> (i32, i32) {
    %c0_i32 = arith.constant 0 : i32
    %c0_i32_0 = arith.constant 0 : i32
    %c0_i32_1 = arith.constant 0 : i32
    return %c0_i32, %c0_i32_0 : i32, i32
  }
  func.func @transform_4(%arg0: i32, %arg1: i32) -> (i32, i32, i32, i32) {
    %c0_i32 = arith.constant 0 : i32
    %c0_i32_0 = arith.constant 0 : i32
    %c0_i32_1 = arith.constant 0 : i32
    return %arg0, %arg1, %c0_i32, %c0_i32_0 : i32, i32, i32, i32
  }
  func.func @transform_5(%arg0: i32, %arg1: i32) -> (i32, i32, i32, i32) {
    %c0_i32 = arith.constant 0 : i32
    %c0_i32_0 = arith.constant 0 : i32
    %c0_i32_1 = arith.constant 0 : i32
    return %arg0, %arg1, %c0_i32, %c0_i32_0 : i32, i32, i32, i32
  }
  func.func @transform_6(%arg0: i32, %arg1: i32) -> (i32, i32, i32, i32) {
    %c0_i32 = arith.constant 0 : i32
    %c0_i32_0 = arith.constant 0 : i32
    %c0_i32_1 = arith.constant 0 : i32
    return %arg0, %arg1, %c0_i32, %c0_i32_0 : i32, i32, i32, i32
  }
}

module attributes {stable_mosaic.version = 11 : i64} {
  func.func @_bn_conv2_residual_kernel(%arg0: i32, %arg1: i32, %arg2: memref<1x16x16x8xf32, #tpu.memory_space<vmem>>, %arg3: memref<1x1x16x8xf32, #tpu.memory_space<vmem>>, %arg4: memref<1x1x16x8xf32, #tpu.memory_space<vmem>>, %arg5: memref<1x16x16x16xf32, #tpu.memory_space<vmem>>, %arg6: memref<72x16xf32, #tpu.memory_space<vmem>>, %arg7: memref<1x8xf32, #tpu.memory_space<vmem>>, %arg8: memref<1x8xf32, #tpu.memory_space<vmem>>, %arg9: memref<1x16x16x16xf32, #tpu.memory_space<vmem>>, %arg10: memref<18x24x8xf32, #tpu.memory_space<vmem>>) attributes {dimension_semantics = [#tpu.dimension_semantics<parallel>, #tpu.dimension_semantics<parallel>], iteration_bounds = array<i64: 2, 1>, scalar_prefetch = 0 : i64, scratch_operands = 1 : i64, tpu.core_type = #tpu.core_type<tc>, window_params = [{transform_indices = @transform_0, window_bounds = array<i64: 1, 16, 16, 8>}, {transform_indices = @transform_1, window_bounds = array<i64: 1, 1, 16, 8>}, {transform_indices = @transform_2, window_bounds = array<i64: 1, 1, 16, 8>}, {transform_indices = @transform_3, window_bounds = array<i64: 1, 16, 16, 16>}, {pipeline_mode = #tpu.pipeline_mode<synchronous>, transform_indices = @transform_4, window_bounds = array<i64: 72, 16>}, {pipeline_mode = #tpu.pipeline_mode<synchronous>, transform_indices = @transform_5, window_bounds = array<i64: 1, 8>}, {pipeline_mode = #tpu.pipeline_mode<synchronous>, transform_indices = @transform_6, window_bounds = array<i64: 1, 8>}, {transform_indices = @transform_7, window_bounds = array<i64: 1, 16, 16, 16>}]} {
    %c0 = arith.constant 0 : index
    %c0_0 = arith.constant 0 : index
    %0 = vector.load %arg7[%c0, %c0_0] : memref<1x8xf32, #tpu.memory_space<vmem>>, vector<1x8xf32>
    %c0_1 = arith.constant 0 : index
    %c0_2 = arith.constant 0 : index
    %1 = vector.load %arg8[%c0_1, %c0_2] : memref<1x8xf32, #tpu.memory_space<vmem>>, vector<1x8xf32>
    %c0_3 = arith.constant 0 : index
    %c0_4 = arith.constant 0 : index
    %c0_5 = arith.constant 0 : index
    %c0_6 = arith.constant 0 : index
    %2 = vector.load %arg2[%c0_3, %c0_4, %c0_5, %c0_6] : memref<1x16x16x8xf32, #tpu.memory_space<vmem>>, vector<1x16x16x8xf32>
    %3 = vector.shape_cast %2 : vector<1x16x16x8xf32> to vector<16x16x8xf32>
    %4 = vector.shape_cast %0 : vector<1x8xf32> to vector<1x1x8xf32>
    %5 = vector.broadcast %4 : vector<1x1x8xf32> to vector<16x16x8xf32>
    %6 = arith.mulf %3, %5 : vector<16x16x8xf32>
    %7 = vector.shape_cast %1 : vector<1x8xf32> to vector<1x1x8xf32>
    %8 = vector.broadcast %7 : vector<1x1x8xf32> to vector<16x16x8xf32>
    %9 = arith.addf %6, %8 : vector<16x16x8xf32>
    %cst = arith.constant 0.000000e+00 : f32
    %10 = vector.broadcast %cst : f32 to vector<16x16x8xf32>
    %11 = arith.maximumf %9, %10 : vector<16x16x8xf32>
    %c0_7 = arith.constant 0 : index
    %c0_8 = arith.constant 0 : index
    %c0_9 = arith.constant 0 : index
    %c0_10 = arith.constant 0 : index
    %12 = vector.load %arg3[%c0_7, %c0_8, %c0_9, %c0_10] : memref<1x1x16x8xf32, #tpu.memory_space<vmem>>, vector<1x1x16x8xf32>
    %13 = vector.shape_cast %12 : vector<1x1x16x8xf32> to vector<16x8xf32>
    %14 = vector.broadcast %0 : vector<1x8xf32> to vector<16x8xf32>
    %15 = arith.mulf %13, %14 : vector<16x8xf32>
    %16 = vector.broadcast %1 : vector<1x8xf32> to vector<16x8xf32>
    %17 = arith.addf %15, %16 : vector<16x8xf32>
    %cst_11 = arith.constant 0.000000e+00 : f32
    %18 = vector.broadcast %cst_11 : f32 to vector<16x8xf32>
    %19 = arith.maximumf %17, %18 : vector<16x8xf32>
    %c0_i32 = arith.constant 0 : i32
    %20 = arith.cmpi sgt, %arg1, %c0_i32 : i32
    %cst_12 = arith.constant 1.000000e+00 : f32
    %cst_13 = arith.constant 0.000000e+00 : f32
    %21 = arith.select %20, %cst_12, %cst_13 : f32
    %22 = vector.broadcast %21 : f32 to vector<16x8xf32>
    %23 = arith.mulf %19, %22 : vector<16x8xf32>
    %c0_14 = arith.constant 0 : index
    %c0_15 = arith.constant 0 : index
    %c0_16 = arith.constant 0 : index
    %c0_17 = arith.constant 0 : index
    %24 = vector.load %arg4[%c0_14, %c0_15, %c0_16, %c0_17] : memref<1x1x16x8xf32, #tpu.memory_space<vmem>>, vector<1x1x16x8xf32>
    %25 = vector.shape_cast %24 : vector<1x1x16x8xf32> to vector<16x8xf32>
    %26 = vector.broadcast %0 : vector<1x8xf32> to vector<16x8xf32>
    %27 = arith.mulf %25, %26 : vector<16x8xf32>
    %28 = vector.broadcast %1 : vector<1x8xf32> to vector<16x8xf32>
    %29 = arith.addf %27, %28 : vector<16x8xf32>
    %cst_18 = arith.constant 0.000000e+00 : f32
    %30 = vector.broadcast %cst_18 : f32 to vector<16x8xf32>
    %31 = arith.maximumf %29, %30 : vector<16x8xf32>
    %c0_i32_19 = arith.constant 0 : i32
    %32 = arith.cmpi slt, %arg1, %c0_i32_19 : i32
    %cst_20 = arith.constant 1.000000e+00 : f32
    %cst_21 = arith.constant 0.000000e+00 : f32
    %33 = arith.select %32, %cst_20, %cst_21 : f32
    %34 = vector.broadcast %33 : f32 to vector<16x8xf32>
    %35 = arith.mulf %31, %34 : vector<16x8xf32>
    %cst_22 = arith.constant 0.000000e+00 : f32
    %36 = vector.broadcast %cst_22 : f32 to vector<18x1x8xf32>
    %c0_23 = arith.constant 0 : index
    %c0_24 = arith.constant 0 : index
    %c0_25 = arith.constant 0 : index
    %37 = vector.load %arg10[%c0_23, %c0_24, %c0_25] : memref<18x24x8xf32, #tpu.memory_space<vmem>>, vector<18x1x8xf32>
    tpu.vector_store %arg10[%c0_23, %c0_24, %c0_25], %36 {strides = array<i32>} : memref<18x24x8xf32, #tpu.memory_space<vmem>>, vector<18x1x8xf32>,
    %cst_26 = arith.constant 0.000000e+00 : f32
    %38 = vector.broadcast %cst_26 : f32 to vector<18x7x8xf32>
    %c0_27 = arith.constant 0 : index
    %c17 = arith.constant 17 : index
    %c0_28 = arith.constant 0 : index
    %39 = vector.load %arg10[%c0_27, %c17, %c0_28] : memref<18x24x8xf32, #tpu.memory_space<vmem>>, vector<18x7x8xf32>
    tpu.vector_store %arg10[%c0_27, %c17, %c0_28], %38 {strides = array<i32>} : memref<18x24x8xf32, #tpu.memory_space<vmem>>, vector<18x7x8xf32>,
    %c0_29 = arith.constant 0 : index
    %c1 = arith.constant 1 : index
    %c0_30 = arith.constant 0 : index
    %40 = vector.load %arg10[%c0_29, %c1, %c0_30] : memref<18x24x8xf32, #tpu.memory_space<vmem>>, vector<1x16x8xf32>
    %41 = vector.shape_cast %40 : vector<1x16x8xf32> to vector<16x8xf32>
    %42 = vector.shape_cast %23 : vector<16x8xf32> to vector<1x16x8xf32>
    tpu.vector_store %arg10[%c0_29, %c1, %c0_30], %42 {strides = array<i32>} : memref<18x24x8xf32, #tpu.memory_space<vmem>>, vector<1x16x8xf32>,
    %c17_31 = arith.constant 17 : index
    %c1_32 = arith.constant 1 : index
    %c0_33 = arith.constant 0 : index
    %43 = vector.load %arg10[%c17_31, %c1_32, %c0_33] : memref<18x24x8xf32, #tpu.memory_space<vmem>>, vector<1x16x8xf32>
    %44 = vector.shape_cast %43 : vector<1x16x8xf32> to vector<16x8xf32>
    %45 = vector.shape_cast %35 : vector<16x8xf32> to vector<1x16x8xf32>
    tpu.vector_store %arg10[%c17_31, %c1_32, %c0_33], %45 {strides = array<i32>} : memref<18x24x8xf32, #tpu.memory_space<vmem>>, vector<1x16x8xf32>,
    %c1_34 = arith.constant 1 : index
    %c1_35 = arith.constant 1 : index
    %c0_36 = arith.constant 0 : index
    %46 = vector.load %arg10[%c1_34, %c1_35, %c0_36] : memref<18x24x8xf32, #tpu.memory_space<vmem>>, vector<16x16x8xf32>
    tpu.vector_store %arg10[%c1_34, %c1_35, %c0_36], %11 {strides = array<i32>} : memref<18x24x8xf32, #tpu.memory_space<vmem>>, vector<16x16x8xf32>,
    %cst_37 = arith.constant 0.000000e+00 : f32
    %47 = vector.broadcast %cst_37 : f32 to vector<256x16xf32>
    %c0_38 = arith.constant 0 : index
    %c0_39 = arith.constant 0 : index
    %c0_40 = arith.constant 0 : index
    %48 = vector.load %arg10[%c0_38, %c0_39, %c0_40] : memref<18x24x8xf32, #tpu.memory_space<vmem>>, vector<16x16x8xf32>
    %49 = vector.shape_cast %48 : vector<16x16x8xf32> to vector<256x8xf32>
    %c0_41 = arith.constant 0 : index
    %c0_42 = arith.constant 0 : index
    %50 = vector.load %arg6[%c0_41, %c0_42] : memref<72x16xf32, #tpu.memory_space<vmem>>, vector<8x16xf32>
    %cst_43 = arith.constant dense<0.000000e+00> : vector<256x16xf32>
    %51 = tpu.matmul %49, %50, %cst_43 {dimension_numbers = #tpu.dot_dimension_numbers<[1], [0], [0], [1], [0, 0, 1, 1], [], []>} : vector<256x8xf32>, vector<8x16xf32>, vector<256x16xf32> -> vector<256x16xf32>
    %52 = arith.addf %47, %51 : vector<256x16xf32>
    %c0_44 = arith.constant 0 : index
    %c1_45 = arith.constant 1 : index
    %c0_46 = arith.constant 0 : index
    %53 = vector.load %arg10[%c0_44, %c1_45, %c0_46] : memref<18x24x8xf32, #tpu.memory_space<vmem>>, vector<16x16x8xf32>
    %54 = vector.shape_cast %53 : vector<16x16x8xf32> to vector<256x8xf32>
    %c8 = arith.constant 8 : index
    %c0_47 = arith.constant 0 : index
    %55 = vector.load %arg6[%c8, %c0_47] : memref<72x16xf32, #tpu.memory_space<vmem>>, vector<8x16xf32>
    %cst_48 = arith.constant dense<0.000000e+00> : vector<256x16xf32>
    %56 = tpu.matmul %54, %55, %cst_48 {dimension_numbers = #tpu.dot_dimension_numbers<[1], [0], [0], [1], [0, 0, 1, 1], [], []>} : vector<256x8xf32>, vector<8x16xf32>, vector<256x16xf32> -> vector<256x16xf32>
    %57 = arith.addf %52, %56 : vector<256x16xf32>
    %c0_49 = arith.constant 0 : index
    %c2 = arith.constant 2 : index
    %c0_50 = arith.constant 0 : index
    %58 = vector.load %arg10[%c0_49, %c2, %c0_50] : memref<18x24x8xf32, #tpu.memory_space<vmem>>, vector<16x16x8xf32>
    %59 = vector.shape_cast %58 : vector<16x16x8xf32> to vector<256x8xf32>
    %c16 = arith.constant 16 : index
    %c0_51 = arith.constant 0 : index
    %60 = vector.load %arg6[%c16, %c0_51] : memref<72x16xf32, #tpu.memory_space<vmem>>, vector<8x16xf32>
    %cst_52 = arith.constant dense<0.000000e+00> : vector<256x16xf32>
    %61 = tpu.matmul %59, %60, %cst_52 {dimension_numbers = #tpu.dot_dimension_numbers<[1], [0], [0], [1], [0, 0, 1, 1], [], []>} : vector<256x8xf32>, vector<8x16xf32>, vector<256x16xf32> -> vector<256x16xf32>
    %62 = arith.addf %57, %61 : vector<256x16xf32>
    %c1_53 = arith.constant 1 : index
    %c0_54 = arith.constant 0 : index
    %c0_55 = arith.constant 0 : index
    %63 = vector.load %arg10[%c1_53, %c0_54, %c0_55] : memref<18x24x8xf32, #tpu.memory_space<vmem>>, vector<16x16x8xf32>
    %64 = vector.shape_cast %63 : vector<16x16x8xf32> to vector<256x8xf32>
    %c24 = arith.constant 24 : index
    %c0_56 = arith.constant 0 : index
    %65 = vector.load %arg6[%c24, %c0_56] : memref<72x16xf32, #tpu.memory_space<vmem>>, vector<8x16xf32>
    %cst_57 = arith.constant dense<0.000000e+00> : vector<256x16xf32>
    %66 = tpu.matmul %64, %65, %cst_57 {dimension_numbers = #tpu.dot_dimension_numbers<[1], [0], [0], [1], [0, 0, 1, 1], [], []>} : vector<256x8xf32>, vector<8x16xf32>, vector<256x16xf32> -> vector<256x16xf32>
    %67 = arith.addf %62, %66 : vector<256x16xf32>
    %c1_58 = arith.constant 1 : index
    %c1_59 = arith.constant 1 : index
    %c0_60 = arith.constant 0 : index
    %68 = vector.load %arg10[%c1_58, %c1_59, %c0_60] : memref<18x24x8xf32, #tpu.memory_space<vmem>>, vector<16x16x8xf32>
    %69 = vector.shape_cast %68 : vector<16x16x8xf32> to vector<256x8xf32>
    %c32 = arith.constant 32 : index
    %c0_61 = arith.constant 0 : index
    %70 = vector.load %arg6[%c32, %c0_61] : memref<72x16xf32, #tpu.memory_space<vmem>>, vector<8x16xf32>
    %cst_62 = arith.constant dense<0.000000e+00> : vector<256x16xf32>
    %71 = tpu.matmul %69, %70, %cst_62 {dimension_numbers = #tpu.dot_dimension_numbers<[1], [0], [0], [1], [0, 0, 1, 1], [], []>} : vector<256x8xf32>, vector<8x16xf32>, vector<256x16xf32> -> vector<256x16xf32>
    %72 = arith.addf %67, %71 : vector<256x16xf32>
    %c1_63 = arith.constant 1 : index
    %c2_64 = arith.constant 2 : index
    %c0_65 = arith.constant 0 : index
    %73 = vector.load %arg10[%c1_63, %c2_64, %c0_65] : memref<18x24x8xf32, #tpu.memory_space<vmem>>, vector<16x16x8xf32>
    %74 = vector.shape_cast %73 : vector<16x16x8xf32> to vector<256x8xf32>
    %c40 = arith.constant 40 : index
    %c0_66 = arith.constant 0 : index
    %75 = vector.load %arg6[%c40, %c0_66] : memref<72x16xf32, #tpu.memory_space<vmem>>, vector<8x16xf32>
    %cst_67 = arith.constant dense<0.000000e+00> : vector<256x16xf32>
    %76 = tpu.matmul %74, %75, %cst_67 {dimension_numbers = #tpu.dot_dimension_numbers<[1], [0], [0], [1], [0, 0, 1, 1], [], []>} : vector<256x8xf32>, vector<8x16xf32>, vector<256x16xf32> -> vector<256x16xf32>
    %77 = arith.addf %72, %76 : vector<256x16xf32>
    %c2_68 = arith.constant 2 : index
    %c0_69 = arith.constant 0 : index
    %c0_70 = arith.constant 0 : index
    %78 = vector.load %arg10[%c2_68, %c0_69, %c0_70] : memref<18x24x8xf32, #tpu.memory_space<vmem>>, vector<16x16x8xf32>
    %79 = vector.shape_cast %78 : vector<16x16x8xf32> to vector<256x8xf32>
    %c48 = arith.constant 48 : index
    %c0_71 = arith.constant 0 : index
    %80 = vector.load %arg6[%c48, %c0_71] : memref<72x16xf32, #tpu.memory_space<vmem>>, vector<8x16xf32>
    %cst_72 = arith.constant dense<0.000000e+00> : vector<256x16xf32>
    %81 = tpu.matmul %79, %80, %cst_72 {dimension_numbers = #tpu.dot_dimension_numbers<[1], [0], [0], [1], [0, 0, 1, 1], [], []>} : vector<256x8xf32>, vector<8x16xf32>, vector<256x16xf32> -> vector<256x16xf32>
    %82 = arith.addf %77, %81 : vector<256x16xf32>
    %c2_73 = arith.constant 2 : index
    %c1_74 = arith.constant 1 : index
    %c0_75 = arith.constant 0 : index
    %83 = vector.load %arg10[%c2_73, %c1_74, %c0_75] : memref<18x24x8xf32, #tpu.memory_space<vmem>>, vector<16x16x8xf32>
    %84 = vector.shape_cast %83 : vector<16x16x8xf32> to vector<256x8xf32>
    %c56 = arith.constant 56 : index
    %c0_76 = arith.constant 0 : index
    %85 = vector.load %arg6[%c56, %c0_76] : memref<72x16xf32, #tpu.memory_space<vmem>>, vector<8x16xf32>
    %cst_77 = arith.constant dense<0.000000e+00> : vector<256x16xf32>
    %86 = tpu.matmul %84, %85, %cst_77 {dimension_numbers = #tpu.dot_dimension_numbers<[1], [0], [0], [1], [0, 0, 1, 1], [], []>} : vector<256x8xf32>, vector<8x16xf32>, vector<256x16xf32> -> vector<256x16xf32>
    %87 = arith.addf %82, %86 : vector<256x16xf32>
    %c2_78 = arith.constant 2 : index
    %c2_79 = arith.constant 2 : index
    %c0_80 = arith.constant 0 : index
    %88 = vector.load %arg10[%c2_78, %c2_79, %c0_80] : memref<18x24x8xf32, #tpu.memory_space<vmem>>, vector<16x16x8xf32>
    %89 = vector.shape_cast %88 : vector<16x16x8xf32> to vector<256x8xf32>
    %c64 = arith.constant 64 : index
    %c0_81 = arith.constant 0 : index
    %90 = vector.load %arg6[%c64, %c0_81] : memref<72x16xf32, #tpu.memory_space<vmem>>, vector<8x16xf32>
    %cst_82 = arith.constant dense<0.000000e+00> : vector<256x16xf32>
    %91 = tpu.matmul %89, %90, %cst_82 {dimension_numbers = #tpu.dot_dimension_numbers<[1], [0], [0], [1], [0, 0, 1, 1], [], []>} : vector<256x8xf32>, vector<8x16xf32>, vector<256x16xf32> -> vector<256x16xf32>
    %92 = arith.addf %87, %91 : vector<256x16xf32>
    %93 = vector.shape_cast %92 : vector<256x16xf32> to vector<16x16x16xf32>
    %c0_83 = arith.constant 0 : index
    %c0_84 = arith.constant 0 : index
    %c0_85 = arith.constant 0 : index
    %c0_86 = arith.constant 0 : index
    %94 = vector.load %arg5[%c0_83, %c0_84, %c0_85, %c0_86] : memref<1x16x16x16xf32, #tpu.memory_space<vmem>>, vector<1x16x16x16xf32>
    %95 = vector.shape_cast %94 : vector<1x16x16x16xf32> to vector<16x16x16xf32>
    %96 = arith.addf %93, %95 : vector<16x16x16xf32>
    %97 = vector.shape_cast %96 : vector<16x16x16xf32> to vector<1x16x16x16xf32>
    %c0_87 = arith.constant 0 : index
    %c0_88 = arith.constant 0 : index
    %c0_89 = arith.constant 0 : index
    %c0_90 = arith.constant 0 : index
    %98 = vector.load %arg9[%c0_87, %c0_88, %c0_89, %c0_90] : memref<1x16x16x16xf32, #tpu.memory_space<vmem>>, vector<1x16x16x16xf32>
    tpu.vector_store %arg9[%c0_87, %c0_88, %c0_89, %c0_90], %97 {strides = array<i32>} : memref<1x16x16x16xf32, #tpu.memory_space<vmem>>, vector<1x16x16x16xf32>,
    return
  }
  func.func @transform_0(%arg0: i32, %arg1: i32) -> (i32, i32, i32, i32) {
    %c0_i32 = arith.constant 0 : i32
    %c0_i32_0 = arith.constant 0 : i32
    %c0_i32_1 = arith.constant 0 : i32
    return %arg0, %arg1, %c0_i32, %c0_i32_0 : i32, i32, i32, i32
  }
  func.func @transform_1(%arg0: i32, %arg1: i32) -> (i32, i32, i32, i32) {
    %c16_i32 = arith.constant 16 : i32
    %0 = arith.muli %arg1, %c16_i32 : i32
    %c1_i32 = arith.constant 1 : i32
    %1 = arith.subi %0, %c1_i32 : i32
    %c0_i32 = arith.constant 0 : i32
    %2 = arith.maxsi %1, %c0_i32 : i32
    %c0_i32_0 = arith.constant 0 : i32
    %c0_i32_1 = arith.constant 0 : i32
    %c0_i32_2 = arith.constant 0 : i32
    return %arg0, %2, %c0_i32_0, %c0_i32_1 : i32, i32, i32, i32
  }
  func.func @transform_2(%arg0: i32, %arg1: i32) -> (i32, i32, i32, i32) {
    %c16_i32 = arith.constant 16 : i32
    %0 = arith.muli %arg1, %c16_i32 : i32
    %c16_i32_0 = arith.constant 16 : i32
    %1 = arith.addi %0, %c16_i32_0 : i32
    %c15_i32 = arith.constant 15 : i32
    %2 = arith.minsi %1, %c15_i32 : i32
    %c0_i32 = arith.constant 0 : i32
    %c0_i32_1 = arith.constant 0 : i32
    %c0_i32_2 = arith.constant 0 : i32
    return %arg0, %2, %c0_i32, %c0_i32_1 : i32, i32, i32, i32
  }
  func.func @transform_3(%arg0: i32, %arg1: i32) -> (i32, i32, i32, i32) {
    %c0_i32 = arith.constant 0 : i32
    %c0_i32_0 = arith.constant 0 : i32
    %c0_i32_1 = arith.constant 0 : i32
    return %arg0, %arg1, %c0_i32, %c0_i32_0 : i32, i32, i32, i32
  }
  func.func @transform_4(%arg0: i32, %arg1: i32) -> (i32, i32) {
    %c0_i32 = arith.constant 0 : i32
    %c0_i32_0 = arith.constant 0 : i32
    %c0_i32_1 = arith.constant 0 : i32
    return %c0_i32, %c0_i32_0 : i32, i32
  }
  func.func @transform_5(%arg0: i32, %arg1: i32) -> (i32, i32) {
    %c0_i32 = arith.constant 0 : i32
    %c0_i32_0 = arith.constant 0 : i32
    %c0_i32_1 = arith.constant 0 : i32
    return %c0_i32, %c0_i32_0 : i32, i32
  }
  func.func @transform_6(%arg0: i32, %arg1: i32) -> (i32, i32) {
    %c0_i32 = arith.constant 0 : i32
    %c0_i32_0 = arith.constant 0 : i32
    %c0_i32_1 = arith.constant 0 : i32
    return %c0_i32, %c0_i32_0 : i32, i32
  }
  func.func @transform_7(%arg0: i32, %arg1: i32) -> (i32, i32, i32, i32) {
    %c0_i32 = arith.constant 0 : i32
    %c0_i32_0 = arith.constant 0 : i32
    %c0_i32_1 = arith.constant 0 : i32
    return %arg0, %arg1, %c0_i32, %c0_i32_0 : i32, i32, i32, i32
  }
}

</mosaic_0001>

<llo_original>
// kernel: residual_conv_forward.2
$region0: #{residual_conv_forward.2}
  #allocation0 [shape = 'u32[]', space=smem, size = 0x4, offset = 0x4, fixed_abs, tag = 'smem constant byte address 0x4 - core index']
  #allocation1 [shape = 'u32[144,128]{1,0:T(1,128)}', space=vmem, size = 0x12000, scoped, tag = 'internal scratch']
  #allocation2 [shape = 'f32[18,24,16]{2,1,0:T(8,128)}', space=vmem, size = 0x36000, scoped, tag = 'scratch operand']
  %s0 = inlined_call_operand.vmem [shape: f32[2,16,16,16], index: 0, kind: input, shape index: {}, may-alias: {0,1,2}]
  %s1 = inlined_call_operand.vmem [shape: f32[2,16,16,16], index: 1, kind: input, shape index: {}, may-alias: {0,1,2}]
  %s2 = inlined_call_operand.vmem [shape: f32[2,16,16,16], index: 2, kind: input, shape index: {}, may-alias: {0,1,2}]
  %s3 = inlined_call_operand.vmem [shape: f32[144,8], index: 3, kind: input, shape index: {}]
  %s4 = inlined_call_operand.vmem [shape: f32[2,16,16,8], index: 4, kind: output, shape index: {0}]
  %s5 = inlined_call_operand.vmem [shape: f32[2,1,1,8], index: 5, kind: output, shape index: {1}]
  %s6 = inlined_call_operand.vmem [shape: f32[2,1,1,8], index: 6, kind: output, shape index: {2}]
  %7 = xla_tuple %s4, %s5, %s6
  %s8 = sld [smem:[#allocation0]]
  $region65: #{residual_conv_forward.2} parent=0
    _
  %s10 = ssub.s32 1, %s8
  %s11 = scalar_select 0, %s10, %s8
  loop: start=0, step=1, limit=4
  $region2: #{residual_conv_forward.2} parent=0 // loop_pre_header
    _
  $region3: #{residual_conv_forward.2} parent=0 // loop_header
    %s13 = sphi 0, %s17
    %p14 = scmp.ge.s32.totalorder %s13, 4
    %s20 = sphi 0, %s32
    %s21 = sphi 0, %s28
    %s22 = sphi 0, %s20
    %s23 = sphi 0, %s21
    %s24 = sphi 0, %s22
    %s25 = sphi 0, %s23
    %s37 = sphi 0, %s39
    %s40 = sphi 0, %s37
    %s41 = sphi 0, %s40
    %s57 = sphi 0, %s41
    %s73 = sphi 0, %s75
    %s76 = sphi 0, %s73
    %s77 = sphi 0, %s76
    %s93 = sphi 0, %s77
    %s109 = sphi 0, %s111
    %s112 = sphi 0, %s109
    %s113 = sphi 0, %s112
    %s129 = sphi 0, %s113
    %s133 = sphi 0, %s133
    %s135 = sphi 0, %s133
    %s136 = sphi 0, %s135
    %s150 = sphi 0, %s136
    %s158 = sphi 0, %s160
    %s161 = sphi 0, %s158
    %s162 = sphi 0, %s161
    %s178 = sphi 0, %s162
    %s186 = sphi 0, %s188
    %s189 = sphi 0, %s186
    %s190 = sphi 0, %s189
    %s206 = sphi 0, %s190
    %s214 = sphi 0, %s216
    %s217 = sphi 0, %s214
    %s218 = sphi 0, %s217
    %s234 = sphi 0, %s218
  $region4: #{residual_conv_forward.2} parent=0 // loop_header_branch
    %16 = sbr.rel (%p14) target = $region8
  $region5: #{residual_conv_forward.2} parent=0 // loop_body
    %s18 = ssub.s32 %s13, 1
    %s19 = ssub.s32 %s13, 2
    %s26 = sadd.s32 1, %s21
    %p27 = scmp.ge.s32.totalorder %s26, 1
    %s28 = scalar_select %p27, 0, %s26
    %s29 = sadd.s32 1, %s20
    %s30 = scalar_select %p27, %s29, %s20
    %p31 = scmp.ge.s32.totalorder %s30, 2
    %s32 = scalar_select %p31, 0, %s30
    %s33 = ssub.s32 %s20, %s32
    %s34 = ssub.s32 %s21, %s28
    %s35 = sor.u32 %s33, %s34
    %p36 = scmp.eq.s32.totalorder %s35, 0
    %s38 = sadd.s32 %s37, 1
    %s39 = scalar_select %p36, %s37, %s38
    %p42 = pneg %p36
    %p43 = scmp.eq.s32.totalorder %s13, 1
    %p44 = por %p42, %p43
    %p45 = scmp.ne.s32.totalorder %s37, %s40
    %p46 = scmp.eq.s32.totalorder %s13, 0
    %p47 = por %p45, %p46
    %p48 = scmp.ne.s32.totalorder %s37, %s40
    %p49 = scmp.eq.s32.totalorder %s18, 1
    %p50 = por %p48, %p49
    %p51 = scmp.ne.s32.totalorder %s40, %s41
    %p52 = scmp.eq.s32.totalorder %s18, 0
    %p53 = por %p51, %p52
    %p54 = scmp.ne.s32.totalorder %s40, %s41
    %p55 = scmp.eq.s32.totalorder %s19, 1
    %p56 = por %p54, %p55
    %p58 = scmp.ne.s32.totalorder %s41, %s57
    %p59 = scmp.eq.s32.totalorder %s19, 0
    %p60 = por %p58, %p59
    %s61 = smul.u32 %s21, 16
    %s62 = ssub.s32 %s61, 1
    %p63 = scmp.gt.s32.totalorder %s62, 0
    %s64 = scalar_select %p63, %s62, 0
    %s65 = smul.u32 %s28, 16
    %s66 = ssub.s32 %s65, 1
    %p67 = scmp.gt.s32.totalorder %s66, 0
    %s68 = scalar_select %p67, %s66, 0
    %s69 = ssub.s32 %s20, %s32
    %s70 = ssub.s32 %s64, %s68
    %s71 = sor.u32 %s69, %s70
    %p72 = scmp.eq.s32.totalorder %s71, 0
    %s74 = sadd.s32 %s73, 1
    %s75 = scalar_select %p72, %s73, %s74
    %p78 = pneg %p72
    %p79 = scmp.eq.s32.totalorder %s13, 1
    %p80 = por %p78, %p79
    %p81 = scmp.ne.s32.totalorder %s73, %s76
    %p82 = scmp.eq.s32.totalorder %s13, 0
    %p83 = por %p81, %p82
    %p84 = scmp.ne.s32.totalorder %s73, %s76
    %p85 = scmp.eq.s32.totalorder %s18, 1
    %p86 = por %p84, %p85
    %p87 = scmp.ne.s32.totalorder %s76, %s77
    %p88 = scmp.eq.s32.totalorder %s18, 0
    %p89 = por %p87, %p88
    %p90 = scmp.ne.s32.totalorder %s76, %s77
    %p91 = scmp.eq.s32.totalorder %s19, 1
    %p92 = por %p90, %p91
    %p94 = scmp.ne.s32.totalorder %s77, %s93
    %p95 = scmp.eq.s32.totalorder %s19, 0
    %p96 = por %p94, %p95
    %s97 = smul.u32 %s21, 16
    %s98 = sadd.s32 %s97, 16
    %p99 = scmp.lt.s32.totalorder %s98, 15
    %s100 = scalar_select %p99, %s98, 15
    %s101 = smul.u32 %s28, 16
    %s102 = sadd.s32 %s101, 16
    %p103 = scmp.lt.s32.totalorder %s102, 15
    %s104 = scalar_select %p103, %s102, 15
    %s105 = ssub.s32 %s20, %s32
    %s106 = ssub.s32 %s100, %s104
    %s107 = sor.u32 %s105, %s106
    %p108 = scmp.eq.s32.totalorder %s107, 0
    %s110 = sadd.s32 %s109, 1
    %s111 = scalar_select %p108, %s109, %s110
    %p114 = pneg %p108
    %p115 = scmp.eq.s32.totalorder %s13, 1
    %p116 = por %p114, %p115
    %p117 = scmp.ne.s32.totalorder %s109, %s112
    %p118 = scmp.eq.s32.totalorder %s13, 0
    %p119 = por %p117, %p118
    %p120 = scmp.ne.s32.totalorder %s109, %s112
    %p121 = scmp.eq.s32.totalorder %s18, 1
    %p122 = por %p120, %p121
    %p123 = scmp.ne.s32.totalorder %s112, %s113
    %p124 = scmp.eq.s32.totalorder %s18, 0
    %p125 = por %p123, %p124
    %p126 = scmp.ne.s32.totalorder %s112, %s113
    %p127 = scmp.eq.s32.totalorder %s19, 1
    %p128 = por %p126, %p127
    %p130 = scmp.ne.s32.totalorder %s113, %s129
    %p131 = scmp.eq.s32.totalorder %s19, 0
    %p132 = por %p130, %p131
    %s134 = sadd.s32 %s133, 1
    %p137 = scmp.eq.s32.totalorder %s13, 1
    %p138 = scmp.ne.s32.totalorder %s133, %s135
    %p139 = scmp.eq.s32.totalorder %s13, 0
    %p140 = por %p138, %p139
    %p141 = scmp.ne.s32.totalorder %s133, %s135
    %p142 = scmp.eq.s32.totalorder %s18, 1
    %p143 = por %p141, %p142
    %p144 = scmp.ne.s32.totalorder %s135, %s136
    %p145 = scmp.eq.s32.totalorder %s18, 0
    %p146 = por %p144, %p145
    %p147 = scmp.ne.s32.totalorder %s135, %s136
    %p148 = scmp.eq.s32.totalorder %s19, 1
    %p149 = por %p147, %p148
    %p151 = scmp.ne.s32.totalorder %s136, %s150
    %p152 = scmp.eq.s32.totalorder %s19, 0
    %p153 = por %p151, %p152
    %s154 = ssub.s32 %s20, %s32
    %s155 = ssub.s32 %s21, %s28
    %s156 = sor.u32 %s154, %s155
    %p157 = scmp.eq.s32.totalorder %s156, 0
    %s159 = sadd.s32 %s158, 1
    %s160 = scalar_select %p157, %s158, %s159
    %p163 = pneg %p157
    %p164 = scmp.eq.s32.totalorder %s13, 1
    %p165 = por %p163, %p164
    %p166 = scmp.ne.s32.totalorder %s158, %s161
    %p167 = scmp.eq.s32.totalorder %s13, 0
    %p168 = por %p166, %p167
    %p169 = scmp.ne.s32.totalorder %s158, %s161
    %p170 = scmp.eq.s32.totalorder %s18, 1
    %p171 = por %p169, %p170
    %p172 = scmp.ne.s32.totalorder %s161, %s162
    %p173 = scmp.eq.s32.totalorder %s18, 0
    %p174 = por %p172, %p173
    %p175 = scmp.ne.s32.totalorder %s161, %s162
    %p176 = scmp.eq.s32.totalorder %s19, 1
    %p177 = por %p175, %p176
    %p179 = scmp.ne.s32.totalorder %s162, %s178
    %p180 = scmp.eq.s32.totalorder %s19, 0
    %p181 = por %p179, %p180
    %s182 = ssub.s32 %s20, %s32
    %s183 = ssub.s32 %s21, %s28
    %s184 = sor.u32 %s182, %s183
    %p185 = scmp.eq.s32.totalorder %s184, 0
    %s187 = sadd.s32 %s186, 1
    %s188 = scalar_select %p185, %s186, %s187
    %p191 = pneg %p185
    %p192 = scmp.eq.s32.totalorder %s13, 1
    %p193 = por %p191, %p192
    %p194 = scmp.ne.s32.totalorder %s186, %s189
    %p195 = scmp.eq.s32.totalorder %s13, 0
    %p196 = por %p194, %p195
    %p197 = scmp.ne.s32.totalorder %s186, %s189
    %p198 = scmp.eq.s32.totalorder %s18, 1
    %p199 = por %p197, %p198
    %p200 = scmp.ne.s32.totalorder %s189, %s190
    %p201 = scmp.eq.s32.totalorder %s18, 0
    %p202 = por %p200, %p201
    %p203 = scmp.ne.s32.totalorder %s189, %s190
    %p204 = scmp.eq.s32.totalorder %s19, 1
    %p205 = por %p203, %p204
    %p207 = scmp.ne.s32.totalorder %s190, %s206
    %p208 = scmp.eq.s32.totalorder %s19, 0
    %p209 = por %p207, %p208
    %s210 = ssub.s32 %s20, %s32
    %s211 = ssub.s32 %s21, %s28
    %s212 = sor.u32 %s210, %s211
    %p213 = scmp.eq.s32.totalorder %s212, 0
    %s215 = sadd.s32 %s214, 1
    %s216 = scalar_select %p213, %s214, %s215
    %p219 = pneg %p213
    %p220 = scmp.eq.s32.totalorder %s13, 1
    %p221 = por %p219, %p220
    %p222 = scmp.ne.s32.totalorder %s214, %s217
    %p223 = scmp.eq.s32.totalorder %s13, 0
    %p224 = por %p222, %p223
    %p225 = scmp.ne.s32.totalorder %s214, %s217
    %p226 = scmp.eq.s32.totalorder %s18, 1
    %p227 = por %p225, %p226
    %p228 = scmp.ne.s32.totalorder %s217, %s218
    %p229 = scmp.eq.s32.totalorder %s18, 0
    %p230 = por %p228, %p229
    %p231 = scmp.ne.s32.totalorder %s217, %s218
    %p232 = scmp.eq.s32.totalorder %s19, 1
    %p233 = por %p231, %p232
    %p235 = scmp.ne.s32.totalorder %s218, %s234
    %p236 = scmp.eq.s32.totalorder %s19, 0
    %p237 = por %p235, %p236
    %p238 = scmp.le.s32.totalorder 1, %s13
    %p239 = scmp.lt.s32.totalorder %s13, 3
    %p240 = pnand %p238, %p239
    %p241 = pneg %p240
    // Predicated region
    $region9: #{residual_conv_forward.2} parent=5 // pred_check
      _
    $region10: #{residual_conv_forward.2} parent=5 // pred_check_branch
      %243 = sbr.rel (%p240) target = $region12
    $region11: #{residual_conv_forward.2} parent=5 // pred_region
      %s244 = ssub.s32 %s13, 1
      // Predicated region
      $region13: #{residual_conv_forward.2} parent=11 // pred_check
        %p245 = pneg %p146
      $region14: #{residual_conv_forward.2} parent=11 // pred_check_branch
        %247 = sbr.rel (%p245) target = $region16
      $region15: #{residual_conv_forward.2} parent=11 // pred_region
        _
      $region16: #{residual_conv_forward.2} parent=11 // pred_fallthru
        _
    $region12: #{residual_conv_forward.2} parent=5 // pred_fallthru
      _
    %p248 = scmp.lt.s32.totalorder %s13, 2
    // Predicated region
    $region17: #{residual_conv_forward.2} parent=5 // pred_check
      %p249 = pneg %p248
    $region18: #{residual_conv_forward.2} parent=5 // pred_check_branch
      %251 = sbr.rel (%p249) target = $region20
    $region19: #{residual_conv_forward.2} parent=5 // pred_region
      // Predicated region
      $region21: #{residual_conv_forward.2} parent=19 // pred_check
        %p252 = pneg %p47
      $region22: #{residual_conv_forward.2} parent=19 // pred_check_branch
        %254 = sbr.rel (%p252) target = $region24
      $region23: #{residual_conv_forward.2} parent=19 // pred_region
        %s255 = smul.u32 16, %s21
        %p256 = scmp.lt.s32.totalorder %s20, 1
        %s257 = scalar_select %p256, %s20, 1
        %p258 = scmp.lt.s32.totalorder %s255, 15
        %s259 = scalar_select %p258, %s255, 15
        %s260 = smul.addr %s259, 2
        %s261 = smul.addr %s257, 32
        %s262 = sadd.s32 %s260, %s261
        %s263 = smul.addr %s262, 8
        %s264 = scalar_lea.vmem %s0, %s263
        %s265 = smul.u32 16, %s21
      $region24: #{residual_conv_forward.2} parent=19 // pred_fallthru
        _
      // Predicated region
      $region25: #{residual_conv_forward.2} parent=19 // pred_check
        %p266 = pneg %p83
      $region26: #{residual_conv_forward.2} parent=19 // pred_check_branch
        %268 = sbr.rel (%p266) target = $region28
      $region27: #{residual_conv_forward.2} parent=19 // pred_region
        %s269 = smul.u32 %s21, 16
        %s270 = ssub.s32 %s269, 1
        %p271 = scmp.gt.s32.totalorder %s270, 0
        %s272 = scalar_select %p271, %s270, 0
        %p273 = scmp.lt.s32.totalorder %s20, 1
        %s274 = scalar_select %p273, %s20, 1
        %p275 = scmp.lt.s32.totalorder %s272, 15
        %s276 = scalar_select %p275, %s272, 15
        %s277 = smul.addr %s276, 2
        %s278 = smul.addr %s274, 32
        %s279 = sadd.s32 %s277, %s278
        %s280 = smul.addr %s279, 8
        %s281 = scalar_lea.vmem %s1, %s280
        %s282 = smul.u32 %s21, 16
        %s283 = ssub.s32 %s282, 1
        %p284 = scmp.gt.s32.totalorder %s283, 0
        %s285 = scalar_select %p284, %s283, 0
      $region28: #{residual_conv_forward.2} parent=19 // pred_fallthru
        _
      // Predicated region
      $region29: #{residual_conv_forward.2} parent=19 // pred_check
        %p286 = pneg %p119
      $region30: #{residual_conv_forward.2} parent=19 // pred_check_branch
        %288 = sbr.rel (%p286) target = $region32
      $region31: #{residual_conv_forward.2} parent=19 // pred_region
        %s289 = smul.u32 %s21, 16
        %s290 = sadd.s32 %s289, 16
        %p291 = scmp.lt.s32.totalorder %s290, 15
        %s292 = scalar_select %p291, %s290, 15
        %p293 = scmp.lt.s32.totalorder %s20, 1
        %s294 = scalar_select %p293, %s20, 1
        %p295 = scmp.lt.s32.totalorder %s292, 15
        %s296 = scalar_select %p295, %s292, 15
        %s297 = smul.addr %s296, 2
        %s298 = smul.addr %s294, 32
        %s299 = sadd.s32 %s297, %s298
        %s300 = smul.addr %s299, 8
        %s301 = scalar_lea.vmem %s2, %s300
        %s302 = smul.u32 %s21, 16
        %s303 = sadd.s32 %s302, 16
        %p304 = scmp.lt.s32.totalorder %s303, 15
        %s305 = scalar_select %p304, %s303, 15
      $region32: #{residual_conv_forward.2} parent=19 // pred_fallthru
        _
    $region20: #{residual_conv_forward.2} parent=5 // pred_fallthru
      _
    %p306 = scmp.le.s32.totalorder 1, %s13
    %p307 = scmp.lt.s32.totalorder %s13, 3
    %p308 = pnand %p306, %p307
    %p309 = pneg %p308
    // Predicated region
    $region33: #{residual_conv_forward.2} parent=5 // pred_check
      _
    $region34: #{residual_conv_forward.2} parent=5 // pred_check_branch
      %311 = sbr.rel (%p308) target = $region36
    $region35: #{residual_conv_forward.2} parent=5 // pred_region
      %s312 = ssub.s32 %s13, 1
      %s313 = smul.u32 16, %s23
      %p314 = scmp.lt.s32.totalorder %s22, 1
      %s315 = scalar_select %p314, %s22, 1
      %p316 = scmp.lt.s32.totalorder %s313, 15
      %s317 = scalar_select %p316, %s313, 15
      %s318 = smul.addr %s317, 2
      %s319 = smul.addr %s315, 32
      %s320 = sadd.s32 %s318, %s319
      %s321 = smul.addr %s320, 8
      %s322 = scalar_lea.vmem %s0, %s321
      %p323 = pneg %p53
      %p324 = pneg %p50
      %s325 = smul.u32 %s23, 16
      %s326 = ssub.s32 %s325, 1
      %p327 = scmp.gt.s32.totalorder %s326, 0
      %s328 = scalar_select %p327, %s326, 0
      %p329 = scmp.lt.s32.totalorder %s22, 1
      %s330 = scalar_select %p329, %s22, 1
      %p331 = scmp.lt.s32.totalorder %s328, 15
      %s332 = scalar_select %p331, %s328, 15
      %s333 = smul.addr %s332, 2
      %s334 = smul.addr %s330, 32
      %s335 = sadd.s32 %s333, %s334
      %s336 = smul.addr %s335, 8
      %s337 = scalar_lea.vmem %s1, %s336
      %p338 = pneg %p89
      %p339 = pneg %p86
      %s340 = smul.u32 %s23, 16
      %s341 = sadd.s32 %s340, 16
      %p342 = scmp.lt.s32.totalorder %s341, 15
      %s343 = scalar_select %p342, %s341, 15
      %p344 = scmp.lt.s32.totalorder %s22, 1
      %s345 = scalar_select %p344, %s22, 1
      %p346 = scmp.lt.s32.totalorder %s343, 15
      %s347 = scalar_select %p346, %s343, 15
      %s348 = smul.addr %s347, 2
      %s349 = smul.addr %s345, 32
      %s350 = sadd.s32 %s348, %s349
      %s351 = smul.addr %s350, 8
      %s352 = scalar_lea.vmem %s2, %s351
      %p353 = pneg %p125
      %p354 = pneg %p122
      %p355 = pneg %p146
      %p356 = pneg %p143
      %p357 = pneg %p174
      %p358 = pneg %p171
      %s359 = smul.u32 16, %s23
      %p360 = scmp.lt.s32.totalorder %s22, 1
      %s361 = scalar_select %p360, %s22, 1
      %p362 = scmp.lt.s32.totalorder %s359, 15
      %s363 = scalar_select %p362, %s359, 15
      %s364 = smul.addr %s363, 2
      %s365 = smul.addr %s361, 32
      %s366 = sadd.s32 %s364, %s365
      %s367 = smul.addr %s366, 8
      %s368 = scalar_lea.vmem %s4, %s367
      %p369 = pneg %p202
      %p370 = pneg %p199
      %p371 = scmp.lt.s32.totalorder %s22, 1
      %s372 = scalar_select %p371, %s22, 1
      %p373 = scmp.lt.s32.totalorder %s23, 0
      %s374 = scalar_select %p373, %s23, 0
      %s375 = sadd.s32 %s374, %s372
      %s376 = scalar_lea.vmem %s5, %s375
      %p377 = pneg %p230
      %p378 = pneg %p227
      %p379 = scmp.lt.s32.totalorder %s22, 1
      %s380 = scalar_select %p379, %s22, 1
      %p381 = scmp.lt.s32.totalorder %s23, 0
      %s382 = scalar_select %p381, %s23, 0
      %s383 = sadd.s32 %s382, %s380
      %s384 = scalar_lea.vmem %s6, %s383
      %s385 = smul.u32 16, %s23
      %p386 = scmp.lt.s32.totalorder %s22, 1
      %s387 = scalar_select %p386, %s22, 1
      %p388 = scmp.lt.s32.totalorder %s385, 15
      %s389 = scalar_select %p388, %s385, 15
      %s390 = smul.addr %s389, 2
      %s391 = smul.addr %s387, 32
      %s392 = sadd.s32 %s390, %s391
      %s393 = smul.addr %s392, 8
      %s394 = scalar_lea.vmem %s0, %s393
      %s395 = smul.u32 16, %s23
      %s396 = smul.u32 %s23, 16
      %s397 = ssub.s32 %s396, 1
      %p398 = scmp.gt.s32.totalorder %s397, 0
      %s399 = scalar_select %p398, %s397, 0
      %p400 = scmp.lt.s32.totalorder %s22, 1
      %s401 = scalar_select %p400, %s22, 1
      %p402 = scmp.lt.s32.totalorder %s399, 15
      %s403 = scalar_select %p402, %s399, 15
      %s404 = smul.addr %s403, 2
      %s405 = smul.addr %s401, 32
      %s406 = sadd.s32 %s404, %s405
      %s407 = smul.addr %s406, 8
      %s408 = scalar_lea.vmem %s1, %s407
      %s409 = smul.u32 %s23, 16
      %s410 = ssub.s32 %s409, 1
      %p411 = scmp.gt.s32.totalorder %s410, 0
      %s412 = scalar_select %p411, %s410, 0
      %s413 = smul.u32 %s23, 16
      %s414 = sadd.s32 %s413, 16
      %p415 = scmp.lt.s32.totalorder %s414, 15
      %s416 = scalar_select %p415, %s414, 15
      %p417 = scmp.lt.s32.totalorder %s22, 1
      %s418 = scalar_select %p417, %s22, 1
      %p419 = scmp.lt.s32.totalorder %s416, 15
      %s420 = scalar_select %p419, %s416, 15
      %s421 = smul.addr %s420, 2
      %s422 = smul.addr %s418, 32
      %s423 = sadd.s32 %s421, %s422
      %s424 = smul.addr %s423, 8
      %s425 = scalar_lea.vmem %s2, %s424
      %s426 = smul.u32 %s23, 16
      %s427 = sadd.s32 %s426, 16
      %p428 = scmp.lt.s32.totalorder %s427, 15
      %s429 = scalar_select %p428, %s427, 15
      %s430 = smul.u32 16, %s23
      %p431 = scmp.lt.s32.totalorder %s22, 1
      %s432 = scalar_select %p431, %s22, 1
      %p433 = scmp.lt.s32.totalorder %s430, 15
      %s434 = scalar_select %p433, %s430, 15
      %s435 = smul.addr %s434, 2
      %s436 = smul.addr %s432, 32
      %s437 = sadd.s32 %s435, %s436
      %s438 = smul.addr %s437, 8
      %s439 = scalar_lea.vmem %s4, %s438
      %s440 = smul.u32 16, %s23
      %p441 = scmp.lt.s32.totalorder %s22, 1
      %s442 = scalar_select %p441, %s22, 1
      %p443 = scmp.lt.s32.totalorder %s23, 0
      %s444 = scalar_select %p443, %s23, 0
      %s445 = sadd.s32 %s444, %s442
      %s446 = scalar_lea.vmem %s5, %s445
      %p447 = scmp.lt.s32.totalorder %s22, 1
      %s448 = scalar_select %p447, %s22, 1
      %p449 = scmp.lt.s32.totalorder %s23, 0
      %s450 = scalar_select %p449, %s23, 0
      %s451 = sadd.s32 %s450, %s448
      %s452 = scalar_lea.vmem %s6, %s451
      %v453 = vld [vmem:[%s394] sm:$0xff]
      %v454 = vld [vmem:[%s394 + $0x8] sm:$0xff]
      %v455 = vld [vmem:[%s394 + $0x10] sm:$0xff]
      %v456 = vld [vmem:[%s394 + $0x18] sm:$0xff]
      %v457 = vld [vmem:[%s394 + $0x20] sm:$0xff]
      %v458 = vld [vmem:[%s394 + $0x28] sm:$0xff]
      %v459 = vld [vmem:[%s394 + $0x30] sm:$0xff]
      %v460 = vld [vmem:[%s394 + $0x38] sm:$0xff]
      %v461 = vld [vmem:[%s394 + $0x40] sm:$0xff]
      %v462 = vld [vmem:[%s394 + $0x48] sm:$0xff]
      %v463 = vld [vmem:[%s394 + $0x50] sm:$0xff]
      %v464 = vld [vmem:[%s394 + $0x58] sm:$0xff]
      %v465 = vld [vmem:[%s394 + $0x60] sm:$0xff]
      %v466 = vld [vmem:[%s394 + $0x68] sm:$0xff]
      %v467 = vld [vmem:[%s394 + $0x70] sm:$0xff]
      %v468 = vld [vmem:[%s394 + $0x78] sm:$0xff]
      %v469 = vld [vmem:[%s394 + $0x80] sm:$0xff]
      %v470 = vld [vmem:[%s394 + $0x88] sm:$0xff]
      %v471 = vld [vmem:[%s394 + $0x90] sm:$0xff]
      %v472 = vld [vmem:[%s394 + $0x98] sm:$0xff]
      %v473 = vld [vmem:[%s394 + $0xa0] sm:$0xff]
      %v474 = vld [vmem:[%s394 + $0xa8] sm:$0xff]
      %v475 = vld [vmem:[%s394 + $0xb0] sm:$0xff]
      %v476 = vld [vmem:[%s394 + $0xb8] sm:$0xff]
      %v477 = vld [vmem:[%s394 + $0xc0] sm:$0xff]
      %v478 = vld [vmem:[%s394 + $0xc8] sm:$0xff]
      %v479 = vld [vmem:[%s394 + $0xd0] sm:$0xff]
      %v480 = vld [vmem:[%s394 + $0xd8] sm:$0xff]
      %v481 = vld [vmem:[%s394 + $0xe0] sm:$0xff]
      %v482 = vld [vmem:[%s394 + $0xe8] sm:$0xff]
      %v483 = vld [vmem:[%s394 + $0xf0] sm:$0xff]
      %v484 = vld [vmem:[%s394 + $0xf8] sm:$0xff]
      %v485 = vmax.f32 %v453, 0.0
      %v486 = vmax.f32 %v454, 0.0
      %v487 = vmax.f32 %v455, 0.0
      %v488 = vmax.f32 %v456, 0.0
      %v489 = vmax.f32 %v457, 0.0
      %v490 = vmax.f32 %v458, 0.0
      %v491 = vmax.f32 %v459, 0.0
      %v492 = vmax.f32 %v460, 0.0
      %v493 = vmax.f32 %v461, 0.0
      %v494 = vmax.f32 %v462, 0.0
      %v495 = vmax.f32 %v463, 0.0
      %v496 = vmax.f32 %v464, 0.0
      %v497 = vmax.f32 %v465, 0.0
      %v498 = vmax.f32 %v466, 0.0
      %v499 = vmax.f32 %v467, 0.0
      %v500 = vmax.f32 %v468, 0.0
      %v501 = vmax.f32 %v469, 0.0
      %v502 = vmax.f32 %v470, 0.0
      %v503 = vmax.f32 %v471, 0.0
      %v504 = vmax.f32 %v472, 0.0
      %v505 = vmax.f32 %v473, 0.0
      %v506 = vmax.f32 %v474, 0.0
      %v507 = vmax.f32 %v475, 0.0
      %v508 = vmax.f32 %v476, 0.0
      %v509 = vmax.f32 %v477, 0.0
      %v510 = vmax.f32 %v478, 0.0
      %v511 = vmax.f32 %v479, 0.0
      %v512 = vmax.f32 %v480, 0.0
      %v513 = vmax.f32 %v481, 0.0
      %v514 = vmax.f32 %v482, 0.0
      %v515 = vmax.f32 %v483, 0.0
      %v516 = vmax.f32 %v484, 0.0
      %v517 = vld [vmem:[%s408] sm:$0xff]
      %v518 = vld [vmem:[%s408 + $0x8] sm:$0xff]
      %v519 = vmax.f32 %v517, 0.0
      %v520 = vmax.f32 %v518, 0.0
      %v521 = vld [vmem:[%s425] sm:$0xff]
      %v522 = vld [vmem:[%s425 + $0x8] sm:$0xff]
      %v523 = vmax.f32 %v521, 0.0
      %v524 = vmax.f32 %v522, 0.0
      %p525 = scmp.gt.s32.totalorder %s23, 0
      %s526 = scalar_select %p525, 1.0, 0.0
      %v527 = vstv %s526
      %v528 = vmul.f32 %v519, %v527
      %v529 = vmul.f32 %v520, %v527
      %p530 = scmp.lt.s32.totalorder %s23, 0
      %s531 = scalar_select %p530, 1.0, 0.0
      %v532 = vstv %s531
      %v533 = vmul.f32 %v523, %v532
      %v534 = vmul.f32 %v524, %v532
      %vm535 = vcmask 122880
      %536 = vst.msk [vmem:[#allocation2] sm:$0x1] %vm535, 0.0
      %537 = vst.msk [vmem:[#allocation2 + $0x18] sm:$0x1] %vm535, 0.0
      %538 = vst.msk [vmem:[#allocation2 + $0x30] sm:$0x1] %vm535, 0.0
      %539 = vst.msk [vmem:[#allocation2 + $0x48] sm:$0x1] %vm535, 0.0
      %540 = vst.msk [vmem:[#allocation2 + $0x60] sm:$0x1] %vm535, 0.0
      %541 = vst.msk [vmem:[#allocation2 + $0x78] sm:$0x1] %vm535, 0.0
      %542 = vst.msk [vmem:[#allocation2 + $0x90] sm:$0x1] %vm535, 0.0
      %543 = vst.msk [vmem:[#allocation2 + $0xa8] sm:$0x1] %vm535, 0.0
      %544 = vst.msk [vmem:[#allocation2 + $0xc0] sm:$0x1] %vm535, 0.0
      %545 = vst.msk [vmem:[#allocation2 + $0xd8] sm:$0x1] %vm535, 0.0
      %546 = vst.msk [vmem:[#allocation2 + $0xf0] sm:$0x1] %vm535, 0.0
      %547 = vst.msk [vmem:[#allocation2 + $0x108] sm:$0x1] %vm535, 0.0
      %548 = vst.msk [vmem:[#allocation2 + $0x120] sm:$0x1] %vm535, 0.0
      %549 = vst.msk [vmem:[#allocation2 + $0x138] sm:$0x1] %vm535, 0.0
      %550 = vst.msk [vmem:[#allocation2 + $0x150] sm:$0x1] %vm535, 0.0
      %551 = vst.msk [vmem:[#allocation2 + $0x168] sm:$0x1] %vm535, 0.0
      %552 = vst.msk [vmem:[#allocation2 + $0x180] sm:$0x1] %vm535, 0.0
      %553 = vst.msk [vmem:[#allocation2 + $0x198] sm:$0x1] %vm535, 0.0
      %vm554 = vcmask 129024
      %555 = vst.msk [vmem:[#allocation2 + $0x11] sm:$0x7f] %vm554, 0.0
      %556 = vst.msk [vmem:[#allocation2 + $0x29] sm:$0x7f] %vm554, 0.0
      %557 = vst.msk [vmem:[#allocation2 + $0x41] sm:$0x7f] %vm554, 0.0
      %558 = vst.msk [vmem:[#allocation2 + $0x59] sm:$0x7f] %vm554, 0.0
      %559 = vst.msk [vmem:[#allocation2 + $0x71] sm:$0x7f] %vm554, 0.0
      %560 = vst.msk [vmem:[#allocation2 + $0x89] sm:$0x7f] %vm554, 0.0
      %561 = vst.msk [vmem:[#allocation2 + $0xa1] sm:$0x7f] %vm554, 0.0
      %562 = vst.msk [vmem:[#allocation2 + $0xb9] sm:$0x7f] %vm554, 0.0
      %563 = vst.msk [vmem:[#allocation2 + $0xd1] sm:$0x7f] %vm554, 0.0
      %564 = vst.msk [vmem:[#allocation2 + $0xe9] sm:$0x7f] %vm554, 0.0
      %565 = vst.msk [vmem:[#allocation2 + $0x101] sm:$0x7f] %vm554, 0.0
      %566 = vst.msk [vmem:[#allocation2 + $0x119] sm:$0x7f] %vm554, 0.0
      %567 = vst.msk [vmem:[#allocation2 + $0x131] sm:$0x7f] %vm554, 0.0
      %568 = vst.msk [vmem:[#allocation2 + $0x149] sm:$0x7f] %vm554, 0.0
      %569 = vst.msk [vmem:[#allocation2 + $0x161] sm:$0x7f] %vm554, 0.0
      %570 = vst.msk [vmem:[#allocation2 + $0x179] sm:$0x7f] %vm554, 0.0
      %571 = vst.msk [vmem:[#allocation2 + $0x191] sm:$0x7f] %vm554, 0.0
      %572 = vst.msk [vmem:[#allocation2 + $0x1a9] sm:$0x7f] %vm554, 0.0
      %vm573 = vcmask 130048
      %574 = vst.msk [vmem:[#allocation2 + $0x1] sm:$0xff] %vm573, %v528
      %575 = vst.msk [vmem:[#allocation2 + $0x9] sm:$0xff] %vm573, %v529
      %s576 = scalar_lea.vmem [#allocation2], 408
      %577 = vst.msk [vmem:[%s576 + $0x1] sm:$0xff] %vm573, %v533
      %578 = vst.msk [vmem:[%s576 + $0x9] sm:$0xff] %vm573, %v534
      %s579 = scalar_lea.vmem [#allocation2], 24
      %580 = vst.msk [vmem:[%s579 + $0x1] sm:$0xff] %vm573, %v485
      %581 = vst.msk [vmem:[%s579 + $0x9] sm:$0xff] %vm573, %v486
      %582 = vst.msk [vmem:[%s579 + $0x19] sm:$0xff] %vm573, %v487
      %583 = vst.msk [vmem:[%s579 + $0x21] sm:$0xff] %vm573, %v488
      %584 = vst.msk [vmem:[%s579 + $0x31] sm:$0xff] %vm573, %v489
      %585 = vst.msk [vmem:[%s579 + $0x39] sm:$0xff] %vm573, %v490
      %586 = vst.msk [vmem:[%s579 + $0x49] sm:$0xff] %vm573, %v491
      %587 = vst.msk [vmem:[%s579 + $0x51] sm:$0xff] %vm573, %v492
      %588 = vst.msk [vmem:[%s579 + $0x61] sm:$0xff] %vm573, %v493
      %589 = vst.msk [vmem:[%s579 + $0x69] sm:$0xff] %vm573, %v494
      %590 = vst.msk [vmem:[%s579 + $0x79] sm:$0xff] %vm573, %v495
      %591 = vst.msk [vmem:[%s579 + $0x81] sm:$0xff] %vm573, %v496
      %592 = vst.msk [vmem:[%s579 + $0x91] sm:$0xff] %vm573, %v497
      %593 = vst.msk [vmem:[%s579 + $0x99] sm:$0xff] %vm573, %v498
      %594 = vst.msk [vmem:[%s579 + $0xa9] sm:$0xff] %vm573, %v499
      %595 = vst.msk [vmem:[%s579 + $0xb1] sm:$0xff] %vm573, %v500
      %596 = vst.msk [vmem:[%s579 + $0xc1] sm:$0xff] %vm573, %v501
      %597 = vst.msk [vmem:[%s579 + $0xc9] sm:$0xff] %vm573, %v502
      %598 = vst.msk [vmem:[%s579 + $0xd9] sm:$0xff] %vm573, %v503
      %599 = vst.msk [vmem:[%s579 + $0xe1] sm:$0xff] %vm573, %v504
      %600 = vst.msk [vmem:[%s579 + $0xf1] sm:$0xff] %vm573, %v505
      %601 = vst.msk [vmem:[%s579 + $0xf9] sm:$0xff] %vm573, %v506
      %602 = vst.msk [vmem:[%s579 + $0x109] sm:$0xff] %vm573, %v507
      %603 = vst.msk [vmem:[%s579 + $0x111] sm:$0xff] %vm573, %v508
      %604 = vst.msk [vmem:[%s579 + $0x121] sm:$0xff] %vm573, %v509
      %605 = vst.msk [vmem:[%s579 + $0x129] sm:$0xff] %vm573, %v510
      %606 = vst.msk [vmem:[%s579 + $0x139] sm:$0xff] %vm573, %v511
      %607 = vst.msk [vmem:[%s579 + $0x141] sm:$0xff] %vm573, %v512
      %608 = vst.msk [vmem:[%s579 + $0x151] sm:$0xff] %vm573, %v513
      %609 = vst.msk [vmem:[%s579 + $0x159] sm:$0xff] %vm573, %v514
      %610 = vst.msk [vmem:[%s579 + $0x169] sm:$0xff] %vm573, %v515
      %611 = vst.msk [vmem:[%s579 + $0x171] sm:$0xff] %vm573, %v516
      %v612 = vld [vmem:[#allocation2] sm:$0xff]
      %v613 = vld [vmem:[#allocation2 + $0x8] sm:$0xff]
      %v614 = vld [vmem:[#allocation2 + $0x18] sm:$0xff]
      %v615 = vld [vmem:[#allocation2 + $0x20] sm:$0xff]
      %v616 = vld [vmem:[#allocation2 + $0x30] sm:$0xff]
      %v617 = vld [vmem:[#allocation2 + $0x38] sm:$0xff]
      %v618 = vld [vmem:[#allocation2 + $0x48] sm:$0xff]
      %v619 = vld [vmem:[#allocation2 + $0x50] sm:$0xff]
      %v620 = vld [vmem:[#allocation2 + $0x60] sm:$0xff]
      %v621 = vld [vmem:[#allocation2 + $0x68] sm:$0xff]
      %v622 = vld [vmem:[#allocation2 + $0x78] sm:$0xff]
      %v623 = vld [vmem:[#allocation2 + $0x80] sm:$0xff]
      %v624 = vld [vmem:[#allocation2 + $0x90] sm:$0xff]
      %v625 = vld [vmem:[#allocation2 + $0x98] sm:$0xff]
      %v626 = vld [vmem:[#allocation2 + $0xa8] sm:$0xff]
      %v627 = vld [vmem:[#allocation2 + $0xb0] sm:$0xff]
      %v628 = vld [vmem:[#allocation2 + $0xc0] sm:$0xff]
      %v629 = vld [vmem:[#allocation2 + $0xc8] sm:$0xff]
      %v630 = vld [vmem:[#allocation2 + $0xd8] sm:$0xff]
      %v631 = vld [vmem:[#allocation2 + $0xe0] sm:$0xff]
      %v632 = vld [vmem:[#allocation2 + $0xf0] sm:$0xff]
      %v633 = vld [vmem:[#allocation2 + $0xf8] sm:$0xff]
      %v634 = vld [vmem:[#allocation2 + $0x108] sm:$0xff]
      %v635 = vld [vmem:[#allocation2 + $0x110] sm:$0xff]
      %v636 = vld [vmem:[#allocation2 + $0x120] sm:$0xff]
      %v637 = vld [vmem:[#allocation2 + $0x128] sm:$0xff]
      %v638 = vld [vmem:[#allocation2 + $0x138] sm:$0xff]
      %v639 = vld [vmem:[#allocation2 + $0x140] sm:$0xff]
      %v640 = vld [vmem:[#allocation2 + $0x150] sm:$0xff]
      %v641 = vld [vmem:[#allocation2 + $0x158] sm:$0xff]
      %v642 = vld [vmem:[#allocation2 + $0x168] sm:$0xff]
      %v643 = vld [vmem:[#allocation2 + $0x170] sm:$0xff]
      %v644 = vld [vmem:[%s3] sm:$0xff]
      %v645 = vld [vmem:[%s3 + $0x8] sm:$0xff]
      %v646 = vld [vmem:[#allocation2 + $0x1] sm:$0xff]
      %v647 = vld [vmem:[#allocation2 + $0x9] sm:$0xff]
      %v648 = vld [vmem:[#allocation2 + $0x19] sm:$0xff]
      %v649 = vld [vmem:[#allocation2 + $0x21] sm:$0xff]
      %v650 = vld [vmem:[#allocation2 + $0x31] sm:$0xff]
      %v651 = vld [vmem:[#allocation2 + $0x39] sm:$0xff]
      %v652 = vld [vmem:[#allocation2 + $0x49] sm:$0xff]
      %v653 = vld [vmem:[#allocation2 + $0x51] sm:$0xff]
      %v654 = vld [vmem:[#allocation2 + $0x61] sm:$0xff]
      %v655 = vld [vmem:[#allocation2 + $0x69] sm:$0xff]
      %v656 = vld [vmem:[#allocation2 + $0x79] sm:$0xff]
      %v657 = vld [vmem:[#allocation2 + $0x81] sm:$0xff]
      %v658 = vld [vmem:[#allocation2 + $0x91] sm:$0xff]
      %v659 = vld [vmem:[#allocation2 + $0x99] sm:$0xff]
      %v660 = vld [vmem:[#allocation2 + $0xa9] sm:$0xff]
      %v661 = vld [vmem:[#allocation2 + $0xb1] sm:$0xff]
      %v662 = vld [vmem:[#allocation2 + $0xc1] sm:$0xff]
      %v663 = vld [vmem:[#allocation2 + $0xc9] sm:$0xff]
      %v664 = vld [vmem:[#allocation2 + $0xd9] sm:$0xff]
      %v665 = vld [vmem:[#allocation2 + $0xe1] sm:$0xff]
      %v666 = vld [vmem:[#allocation2 + $0xf1] sm:$0xff]
      %v667 = vld [vmem:[#allocation2 + $0xf9] sm:$0xff]
      %v668 = vld [vmem:[#allocation2 + $0x109] sm:$0xff]
      %v669 = vld [vmem:[#allocation2 + $0x111] sm:$0xff]
      %v670 = vld [vmem:[#allocation2 + $0x121] sm:$0xff]
      %v671 = vld [vmem:[#allocation2 + $0x129] sm:$0xff]
      %v672 = vld [vmem:[#allocation2 + $0x139] sm:$0xff]
      %v673 = vld [vmem:[#allocation2 + $0x141] sm:$0xff]
      %v674 = vld [vmem:[#allocation2 + $0x151] sm:$0xff]
      %v675 = vld [vmem:[#allocation2 + $0x159] sm:$0xff]
      %v676 = vld [vmem:[#allocation2 + $0x169] sm:$0xff]
      %v677 = vld [vmem:[#allocation2 + $0x171] sm:$0xff]
      %v678 = vld [vmem:[%s3 + $0x10] sm:$0xff]
      %v679 = vld [vmem:[%s3 + $0x18] sm:$0xff]
      %v681 = vsel %vm573, %v646, 0
      %v684 = vsel %vm573, %v647, 0
      %v687 = vsel %vm573, %v648, 0
      %v690 = vsel %vm573, %v649, 0
      %v693 = vsel %vm573, %v650, 0
      %v696 = vsel %vm573, %v651, 0
      %v699 = vsel %vm573, %v652, 0
      %v702 = vsel %vm573, %v653, 0
      %v705 = vsel %vm573, %v654, 0
      %v708 = vsel %vm573, %v655, 0
      %v711 = vsel %vm573, %v656, 0
      %v714 = vsel %vm573, %v657, 0
      %v717 = vsel %vm573, %v658, 0
      %v720 = vsel %vm573, %v659, 0
      %v723 = vsel %vm573, %v660, 0
      %v726 = vsel %vm573, %v661, 0
      %v729 = vsel %vm573, %v662, 0
      %v732 = vsel %vm573, %v663, 0
      %v735 = vsel %vm573, %v664, 0
      %v738 = vsel %vm573, %v665, 0
      %v741 = vsel %vm573, %v666, 0
      %v744 = vsel %vm573, %v667, 0
      %v747 = vsel %vm573, %v668, 0
      %v750 = vsel %vm573, %v669, 0
      %v753 = vsel %vm573, %v670, 0
      %v756 = vsel %vm573, %v671, 0
      %v759 = vsel %vm573, %v672, 0
      %v762 = vsel %vm573, %v673, 0
      %v765 = vsel %vm573, %v674, 0
      %v768 = vsel %vm573, %v675, 0
      %v771 = vsel %vm573, %v676, 0
      %v774 = vsel %vm573, %v677, 0
      %776 = vmatprep.subr.mxu0 0.0
      %777 = vmatpush1.msra.mxu0 0.0
      %778 = vmatprep.subr.mxu0 0.0
      %779 = vmatpush1.msra.mxu0 0.0
      %780 = vmatprep.subr.mxu0 0.0
      %781 = vmatpush1.msra.mxu0 0.0
      %782 = vmatprep.subr.mxu0 0.0
      %783 = vmatpush1.msra.mxu0 0.0
      %784 = vmatprep.subr.mxu0 0.0
      %785 = vmatpush1.msra.mxu0 0.0
      %786 = vmatprep.subr.mxu0 0.0
      %787 = vmatpush1.msra.mxu0 0.0
      %788 = vmatprep.subr.mxu0 0.0
      %789 = vmatpush1.msra.mxu0 0.0
      %790 = vmatprep.subr.mxu0 0.0
      %791 = vmatpush1.msra.mxu0 0.0
      %792 = vmatprep.subr.mxu0 0.0
      %793 = vmatpush1.msra.mxu0 0.0
      %794 = vmatprep.subr.mxu0 0.0
      %795 = vmatpush1.msra.mxu0 0.0
      %796 = vmatprep.subr.mxu0 0.0
      %797 = vmatpush1.msra.mxu0 0.0
      %798 = vmatprep.subr.mxu0 0.0
      %799 = vmatpush1.msra.mxu0 0.0
      %800 = vmatprep.subr.mxu0 0.0
      %801 = vmatpush1.msra.mxu0 0.0
      %802 = vmatprep.subr.mxu0 0.0
      %803 = vmatpush1.msra.mxu0 0.0
      %804 = vmatprep.subr.mxu0 0.0
      %805 = vmatpush1.msra.mxu0 %v679
      %806 = vmatprep.subr.mxu0 0.0
      %807 = vmatpush1.msra.mxu0 %v678
      %808 = vmatprep.subr.mxu0 0.0
      %809 = vmatpush2.msra.mxu0 0.0
      %810 = vmatprep.subr.mxu0 0.0
      %811 = vmatpush2.msra.mxu0 0.0
      %812 = vmatprep.subr.mxu0 0.0
      %813 = vmatpush2.msra.mxu0 0.0
      %814 = vmatprep.subr.mxu0 0.0
      %815 = vmatpush2.msra.mxu0 0.0
      %816 = vmatprep.subr.mxu0 0.0
      %817 = vmatpush2.msra.mxu0 0.0
      %818 = vmatprep.subr.mxu0 0.0
      %819 = vmatpush2.msra.mxu0 0.0
      %820 = vmatprep.subr.mxu0 0.0
      %821 = vmatpush2.msra.mxu0 0.0
      %822 = vmatprep.subr.mxu0 0.0
      %823 = vmatpush2.msra.mxu0 0.0
      %824 = vmatprep.subr.mxu0 0.0
      %825 = vmatpush2.msra.mxu0 0.0
      %826 = vmatprep.subr.mxu0 0.0
      %827 = vmatpush2.msra.mxu0 0.0
      %828 = vmatprep.subr.mxu0 0.0
      %829 = vmatpush2.msra.mxu0 0.0
      %830 = vmatprep.subr.mxu0 0.0
      %831 = vmatpush2.msra.mxu0 0.0
      %832 = vmatprep.subr.mxu0 0.0
      %833 = vmatpush2.msra.mxu0 0.0
      %834 = vmatprep.subr.mxu0 0.0
      %835 = vmatpush2.msra.mxu0 0.0
      %836 = vmatprep.subr.mxu0 0.0
      %837 = vmatpush2.msra.mxu0 0.0
      %838 = vmatprep.subr.mxu0 0.0
      %839 = vmatpush2.msra.mxu0 0.0
      %840 = vmatprep.mubr.f32.mxu0 0.0
      %841 = vmatmul.mubr.f32.gmra.mxu0 %v681
      %v842 = vpop.f32.mrf.mxu0
      %v843 = vadd.f32 0.0, %v842
      %v844 = vpop.f32.mrf.mxu0
      %845 = vmatprep.mubr.f32.mxu0 0.0
      %846 = vmatmul.mubr.f32.gmra.mxu0 %v684
      %v847 = vpop.f32.mrf.mxu0
      %v848 = vadd.f32 0.0, %v847
      %v849 = vpop.f32.mrf.mxu0
      %850 = vmatprep.mubr.f32.mxu0 0.0
      %851 = vmatmul.mubr.f32.gmra.mxu0 %v687
      %v852 = vpop.f32.mrf.mxu0
      %v853 = vadd.f32 0.0, %v852
      %v854 = vpop.f32.mrf.mxu0
      %855 = vmatprep.mubr.f32.mxu0 0.0
      %856 = vmatmul.mubr.f32.gmra.mxu0 %v690
      %v857 = vpop.f32.mrf.mxu0
      %v858 = vadd.f32 0.0, %v857
      %v859 = vpop.f32.mrf.mxu0
      %860 = vmatprep.mubr.f32.mxu0 0.0
      %861 = vmatmul.mubr.f32.gmra.mxu0 %v693
      %v862 = vpop.f32.mrf.mxu0
      %v863 = vadd.f32 0.0, %v862
      %v864 = vpop.f32.mrf.mxu0
      %865 = vmatprep.mubr.f32.mxu0 0.0
      %866 = vmatmul.mubr.f32.gmra.mxu0 %v696
      %v867 = vpop.f32.mrf.mxu0
      %v868 = vadd.f32 0.0, %v867
      %v869 = vpop.f32.mrf.mxu0
      %870 = vmatprep.mubr.f32.mxu0 0.0
      %871 = vmatmul.mubr.f32.gmra.mxu0 %v699
      %v872 = vpop.f32.mrf.mxu0
      %v873 = vadd.f32 0.0, %v872
      %v874 = vpop.f32.mrf.mxu0
      %875 = vmatprep.mubr.f32.mxu0 0.0
      %876 = vmatmul.mubr.f32.gmra.mxu0 %v702
      %v877 = vpop.f32.mrf.mxu0
      %v878 = vadd.f32 0.0, %v877
      %v879 = vpop.f32.mrf.mxu0
      %880 = vmatprep.mubr.f32.mxu0 0.0
      %881 = vmatmul.mubr.f32.gmra.mxu0 %v705
      %v882 = vpop.f32.mrf.mxu0
      %v883 = vadd.f32 0.0, %v882
      %v884 = vpop.f32.mrf.mxu0
      %885 = vmatprep.mubr.f32.mxu0 0.0
      %886 = vmatmul.mubr.f32.gmra.mxu0 %v708
      %v887 = vpop.f32.mrf.mxu0
      %v888 = vadd.f32 0.0, %v887
      %v889 = vpop.f32.mrf.mxu0
      %890 = vmatprep.mubr.f32.mxu0 0.0
      %891 = vmatmul.mubr.f32.gmra.mxu0 %v711
      %v892 = vpop.f32.mrf.mxu0
      %v893 = vadd.f32 0.0, %v892
      %v894 = vpop.f32.mrf.mxu0
      %895 = vmatprep.mubr.f32.mxu0 0.0
      %896 = vmatmul.mubr.f32.gmra.mxu0 %v714
      %v897 = vpop.f32.mrf.mxu0
      %v898 = vadd.f32 0.0, %v897
      %v899 = vpop.f32.mrf.mxu0
      %900 = vmatprep.mubr.f32.mxu0 0.0
      %901 = vmatmul.mubr.f32.gmra.mxu0 %v717
      %v902 = vpop.f32.mrf.mxu0
      %v903 = vadd.f32 0.0, %v902
      %v904 = vpop.f32.mrf.mxu0
      %905 = vmatprep.mubr.f32.mxu0 0.0
      %906 = vmatmul.mubr.f32.gmra.mxu0 %v720
      %v907 = vpop.f32.mrf.mxu0
      %v908 = vadd.f32 0.0, %v907
      %v909 = vpop.f32.mrf.mxu0
      %910 = vmatprep.mubr.f32.mxu0 0.0
      %911 = vmatmul.mubr.f32.gmra.mxu0 %v723
      %v912 = vpop.f32.mrf.mxu0
      %v913 = vadd.f32 0.0, %v912
      %v914 = vpop.f32.mrf.mxu0
      %915 = vmatprep.mubr.f32.mxu0 0.0
      %916 = vmatmul.mubr.f32.gmra.mxu0 %v726
      %v917 = vpop.f32.mrf.mxu0
      %v918 = vadd.f32 0.0, %v917
      %v919 = vpop.f32.mrf.mxu0
      %920 = vmatprep.mubr.f32.mxu0 0.0
      %921 = vmatmul.mubr.f32.gmra.mxu0 %v729
      %v922 = vpop.f32.mrf.mxu0
      %v923 = vadd.f32 0.0, %v922
      %v924 = vpop.f32.mrf.mxu0
      %925 = vmatprep.mubr.f32.mxu0 0.0
      %926 = vmatmul.mubr.f32.gmra.mxu0 %v732
      %v927 = vpop.f32.mrf.mxu0
      %v928 = vadd.f32 0.0, %v927
      %v929 = vpop.f32.mrf.mxu0
      %930 = vmatprep.mubr.f32.mxu0 0.0
      %931 = vmatmul.mubr.f32.gmra.mxu0 %v735
      %v932 = vpop.f32.mrf.mxu0
      %v933 = vadd.f32 0.0, %v932
      %v934 = vpop.f32.mrf.mxu0
      %935 = vmatprep.mubr.f32.mxu0 0.0
      %936 = vmatmul.mubr.f32.gmra.mxu0 %v738
      %v937 = vpop.f32.mrf.mxu0
      %v938 = vadd.f32 0.0, %v937
      %v939 = vpop.f32.mrf.mxu0
      %940 = vmatprep.mubr.f32.mxu0 0.0
      %941 = vmatmul.mubr.f32.gmra.mxu0 %v741
      %v942 = vpop.f32.mrf.mxu0
      %v943 = vadd.f32 0.0, %v942
      %v944 = vpop.f32.mrf.mxu0
      %945 = vmatprep.mubr.f32.mxu0 0.0
      %946 = vmatmul.mubr.f32.gmra.mxu0 %v744
      %v947 = vpop.f32.mrf.mxu0
      %v948 = vadd.f32 0.0, %v947
      %v949 = vpop.f32.mrf.mxu0
      %950 = vmatprep.mubr.f32.mxu0 0.0
      %951 = vmatmul.mubr.f32.gmra.mxu0 %v747
      %v952 = vpop.f32.mrf.mxu0
      %v953 = vadd.f32 0.0, %v952
      %v954 = vpop.f32.mrf.mxu0
      %955 = vmatprep.mubr.f32.mxu0 0.0
      %956 = vmatmul.mubr.f32.gmra.mxu0 %v750
      %v957 = vpop.f32.mrf.mxu0
      %v958 = vadd.f32 0.0, %v957
      %v959 = vpop.f32.mrf.mxu0
      %960 = vmatprep.mubr.f32.mxu0 0.0
      %961 = vmatmul.mubr.f32.gmra.mxu0 %v753
      %v962 = vpop.f32.mrf.mxu0
      %v963 = vadd.f32 0.0, %v962
      %v964 = vpop.f32.mrf.mxu0
      %965 = vmatprep.mubr.f32.mxu0 0.0
      %966 = vmatmul.mubr.f32.gmra.mxu0 %v756
      %v967 = vpop.f32.mrf.mxu0
      %v968 = vadd.f32 0.0, %v967
      %v969 = vpop.f32.mrf.mxu0
      %970 = vmatprep.mubr.f32.mxu0 0.0
      %971 = vmatmul.mubr.f32.gmra.mxu0 %v759
      %v972 = vpop.f32.mrf.mxu0
      %v973 = vadd.f32 0.0, %v972
      %v974 = vpop.f32.mrf.mxu0
      %975 = vmatprep.mubr.f32.mxu0 0.0
      %976 = vmatmul.mubr.f32.gmra.mxu0 %v762
      %v977 = vpop.f32.mrf.mxu0
      %v978 = vadd.f32 0.0, %v977
      %v979 = vpop.f32.mrf.mxu0
      %980 = vmatprep.mubr.f32.mxu0 0.0
      %981 = vmatmul.mubr.f32.gmra.mxu0 %v765
      %v982 = vpop.f32.mrf.mxu0
      %v983 = vadd.f32 0.0, %v982
      %v984 = vpop.f32.mrf.mxu0
      %985 = vmatprep.mubr.f32.mxu0 0.0
      %986 = vmatmul.mubr.f32.gmra.mxu0 %v768
      %v987 = vpop.f32.mrf.mxu0
      %v988 = vadd.f32 0.0, %v987
      %v989 = vpop.f32.mrf.mxu0
      %990 = vmatprep.mubr.f32.mxu0 0.0
      %991 = vmatmul.mubr.f32.gmra.mxu0 %v771
      %v992 = vpop.f32.mrf.mxu0
      %v993 = vadd.f32 0.0, %v992
      %v994 = vpop.f32.mrf.mxu0
      %995 = vmatprep.mubr.f32.mxu0 0.0
      %996 = vmatmul.mubr.f32.gmra.mxu0 %v774
      %v997 = vpop.f32.mrf.mxu0
      %v998 = vadd.f32 0.0, %v997
      %v999 = vpop.f32.mrf.mxu0
      %1000 = vdwg.mxu0
      %v1002 = vsel %vm573, %v612, 0
      %v1005 = vsel %vm573, %v613, 0
      %v1008 = vsel %vm573, %v614, 0
      %v1011 = vsel %vm573, %v615, 0
      %v1014 = vsel %vm573, %v616, 0
      %v1017 = vsel %vm573, %v617, 0
      %v1020 = vsel %vm573, %v618, 0
      %v1023 = vsel %vm573, %v619, 0
      %v1026 = vsel %vm573, %v620, 0
      %v1029 = vsel %vm573, %v621, 0
      %v1032 = vsel %vm573, %v622, 0
      %v1035 = vsel %vm573, %v623, 0
      %v1038 = vsel %vm573, %v624, 0
      %v1041 = vsel %vm573, %v625, 0
      %v1044 = vsel %vm573, %v626, 0
      %v1047 = vsel %vm573, %v627, 0
      %v1050 = vsel %vm573, %v628, 0
      %v1053 = vsel %vm573, %v629, 0
      %v1056 = vsel %vm573, %v630, 0
      %v1059 = vsel %vm573, %v631, 0
      %v1062 = vsel %vm573, %v632, 0
      %v1065 = vsel %vm573, %v633, 0
      %v1068 = vsel %vm573, %v634, 0
      %v1071 = vsel %vm573, %v635, 0
      %v1074 = vsel %vm573, %v636, 0
      %v1077 = vsel %vm573, %v637, 0
      %v1080 = vsel %vm573, %v638, 0
      %v1083 = vsel %vm573, %v639, 0
      %v1086 = vsel %vm573, %v640, 0
      %v1089 = vsel %vm573, %v641, 0
      %v1092 = vsel %vm573, %v642, 0
      %v1095 = vsel %vm573, %v643, 0
      %1097 = vmatprep.subr.mxu0 0.0
      %1098 = vmatpush1.msra.mxu0 0.0
      %1099 = vmatprep.subr.mxu0 0.0
      %1100 = vmatpush1.msra.mxu0 0.0
      %1101 = vmatprep.subr.mxu0 0.0
      %1102 = vmatpush1.msra.mxu0 0.0
      %1103 = vmatprep.subr.mxu0 0.0
      %1104 = vmatpush1.msra.mxu0 0.0
      %1105 = vmatprep.subr.mxu0 0.0
      %1106 = vmatpush1.msra.mxu0 0.0
      %1107 = vmatprep.subr.mxu0 0.0
      %1108 = vmatpush1.msra.mxu0 0.0
      %1109 = vmatprep.subr.mxu0 0.0
      %1110 = vmatpush1.msra.mxu0 0.0
      %1111 = vmatprep.subr.mxu0 0.0
      %1112 = vmatpush1.msra.mxu0 0.0
      %1113 = vmatprep.subr.mxu0 0.0
      %1114 = vmatpush1.msra.mxu0 0.0
      %1115 = vmatprep.subr.mxu0 0.0
      %1116 = vmatpush1.msra.mxu0 0.0
      %1117 = vmatprep.subr.mxu0 0.0
      %1118 = vmatpush1.msra.mxu0 0.0
      %1119 = vmatprep.subr.mxu0 0.0
      %1120 = vmatpush1.msra.mxu0 0.0
      %1121 = vmatprep.subr.mxu0 0.0
      %1122 = vmatpush1.msra.mxu0 0.0
      %1123 = vmatprep.subr.mxu0 0.0
      %1124 = vmatpush1.msra.mxu0 0.0
      %1125 = vmatprep.subr.mxu0 0.0
      %1126 = vmatpush1.msra.mxu0 %v645
      %1127 = vmatprep.subr.mxu0 0.0
      %1128 = vmatpush1.msra.mxu0 %v644
      %1129 = vmatprep.subr.mxu0 0.0
      %1130 = vmatpush2.msra.mxu0 0.0
      %1131 = vmatprep.subr.mxu0 0.0
      %1132 = vmatpush2.msra.mxu0 0.0
      %1133 = vmatprep.subr.mxu0 0.0
      %1134 = vmatpush2.msra.mxu0 0.0
      %1135 = vmatprep.subr.mxu0 0.0
      %1136 = vmatpush2.msra.mxu0 0.0
      %1137 = vmatprep.subr.mxu0 0.0
      %1138 = vmatpush2.msra.mxu0 0.0
      %1139 = vmatprep.subr.mxu0 0.0
      %1140 = vmatpush2.msra.mxu0 0.0
      %1141 = vmatprep.subr.mxu0 0.0
      %1142 = vmatpush2.msra.mxu0 0.0
      %1143 = vmatprep.subr.mxu0 0.0
      %1144 = vmatpush2.msra.mxu0 0.0
      %1145 = vmatprep.subr.mxu0 0.0
      %1146 = vmatpush2.msra.mxu0 0.0
      %1147 = vmatprep.subr.mxu0 0.0
      %1148 = vmatpush2.msra.mxu0 0.0
      %1149 = vmatprep.subr.mxu0 0.0
      %1150 = vmatpush2.msra.mxu0 0.0
      %1151 = vmatprep.subr.mxu0 0.0
      %1152 = vmatpush2.msra.mxu0 0.0
      %1153 = vmatprep.subr.mxu0 0.0
      %1154 = vmatpush2.msra.mxu0 0.0
      %1155 = vmatprep.subr.mxu0 0.0
      %1156 = vmatpush2.msra.mxu0 0.0
      %1157 = vmatprep.subr.mxu0 0.0
      %1158 = vmatpush2.msra.mxu0 0.0
      %1159 = vmatprep.subr.mxu0 0.0
      %1160 = vmatpush2.msra.mxu0 0.0
      %1161 = vmatprep.mubr.f32.mxu0 0.0
      %1162 = vmatmul.mubr.f32.gmra.mxu0 %v1002
      %v1163 = vpop.f32.mrf.mxu0
      %v1164 = vadd.f32 %v843, %v1163
      %v1165 = vpop.f32.mrf.mxu0
      %1166 = vmatprep.mubr.f32.mxu0 0.0
      %1167 = vmatmul.mubr.f32.gmra.mxu0 %v1005
      %v1168 = vpop.f32.mrf.mxu0
      %v1169 = vadd.f32 %v848, %v1168
      %v1170 = vpop.f32.mrf.mxu0
      %1171 = vmatprep.mubr.f32.mxu0 0.0
      %1172 = vmatmul.mubr.f32.gmra.mxu0 %v1008
      %v1173 = vpop.f32.mrf.mxu0
      %v1174 = vadd.f32 %v853, %v1173
      %v1175 = vpop.f32.mrf.mxu0
      %1176 = vmatprep.mubr.f32.mxu0 0.0
      %1177 = vmatmul.mubr.f32.gmra.mxu0 %v1011
      %v1178 = vpop.f32.mrf.mxu0
      %v1179 = vadd.f32 %v858, %v1178
      %v1180 = vpop.f32.mrf.mxu0
      %1181 = vmatprep.mubr.f32.mxu0 0.0
      %1182 = vmatmul.mubr.f32.gmra.mxu0 %v1014
      %v1183 = vpop.f32.mrf.mxu0
      %v1184 = vadd.f32 %v863, %v1183
      %v1185 = vpop.f32.mrf.mxu0
      %1186 = vmatprep.mubr.f32.mxu0 0.0
      %1187 = vmatmul.mubr.f32.gmra.mxu0 %v1017
      %v1188 = vpop.f32.mrf.mxu0
      %v1189 = vadd.f32 %v868, %v1188
      %v1190 = vpop.f32.mrf.mxu0
      %1191 = vmatprep.mubr.f32.mxu0 0.0
      %1192 = vmatmul.mubr.f32.gmra.mxu0 %v1020
      %v1193 = vpop.f32.mrf.mxu0
      %v1194 = vadd.f32 %v873, %v1193
      %v1195 = vpop.f32.mrf.mxu0
      %1196 = vmatprep.mubr.f32.mxu0 0.0
      %1197 = vmatmul.mubr.f32.gmra.mxu0 %v1023
      %v1198 = vpop.f32.mrf.mxu0
      %v1199 = vadd.f32 %v878, %v1198
      %v1200 = vpop.f32.mrf.mxu0
      %1201 = vmatprep.mubr.f32.mxu0 0.0
      %1202 = vmatmul.mubr.f32.gmra.mxu0 %v1026
      %v1203 = vpop.f32.mrf.mxu0
      %v1204 = vadd.f32 %v883, %v1203
      %v1205 = vpop.f32.mrf.mxu0
      %1206 = vmatprep.mubr.f32.mxu0 0.0
      %1207 = vmatmul.mubr.f32.gmra.mxu0 %v1029
      %v1208 = vpop.f32.mrf.mxu0
      %v1209 = vadd.f32 %v888, %v1208
      %v1210 = vpop.f32.mrf.mxu0
      %1211 = vmatprep.mubr.f32.mxu0 0.0
      %1212 = vmatmul.mubr.f32.gmra.mxu0 %v1032
      %v1213 = vpop.f32.mrf.mxu0
      %v1214 = vadd.f32 %v893, %v1213
      %v1215 = vpop.f32.mrf.mxu0
      %1216 = vmatprep.mubr.f32.mxu0 0.0
      %1217 = vmatmul.mubr.f32.gmra.mxu0 %v1035
      %v1218 = vpop.f32.mrf.mxu0
      %v1219 = vadd.f32 %v898, %v1218
      %v1220 = vpop.f32.mrf.mxu0
      %1221 = vmatprep.mubr.f32.mxu0 0.0
      %1222 = vmatmul.mubr.f32.gmra.mxu0 %v1038
      %v1223 = vpop.f32.mrf.mxu0
      %v1224 = vadd.f32 %v903, %v1223
      %v1225 = vpop.f32.mrf.mxu0
      %1226 = vmatprep.mubr.f32.mxu0 0.0
      %1227 = vmatmul.mubr.f32.gmra.mxu0 %v1041
      %v1228 = vpop.f32.mrf.mxu0
      %v1229 = vadd.f32 %v908, %v1228
      %v1230 = vpop.f32.mrf.mxu0
      %1231 = vmatprep.mubr.f32.mxu0 0.0
      %1232 = vmatmul.mubr.f32.gmra.mxu0 %v1044
      %v1233 = vpop.f32.mrf.mxu0
      %v1234 = vadd.f32 %v913, %v1233
      %v1235 = vpop.f32.mrf.mxu0
      %1236 = vmatprep.mubr.f32.mxu0 0.0
      %1237 = vmatmul.mubr.f32.gmra.mxu0 %v1047
      %v1238 = vpop.f32.mrf.mxu0
      %v1239 = vadd.f32 %v918, %v1238
      %v1240 = vpop.f32.mrf.mxu0
      %1241 = vmatprep.mubr.f32.mxu0 0.0
      %1242 = vmatmul.mubr.f32.gmra.mxu0 %v1050
      %v1243 = vpop.f32.mrf.mxu0
      %v1244 = vadd.f32 %v923, %v1243
      %v1245 = vpop.f32.mrf.mxu0
      %1246 = vmatprep.mubr.f32.mxu0 0.0
      %1247 = vmatmul.mubr.f32.gmra.mxu0 %v1053
      %v1248 = vpop.f32.mrf.mxu0
      %v1249 = vadd.f32 %v928, %v1248
      %v1250 = vpop.f32.mrf.mxu0
      %1251 = vmatprep.mubr.f32.mxu0 0.0
      %1252 = vmatmul.mubr.f32.gmra.mxu0 %v1056
      %v1253 = vpop.f32.mrf.mxu0
      %v1254 = vadd.f32 %v933, %v1253
      %v1255 = vpop.f32.mrf.mxu0
      %1256 = vmatprep.mubr.f32.mxu0 0.0
      %1257 = vmatmul.mubr.f32.gmra.mxu0 %v1059
      %v1258 = vpop.f32.mrf.mxu0
      %v1259 = vadd.f32 %v938, %v1258
      %v1260 = vpop.f32.mrf.mxu0
      %1261 = vmatprep.mubr.f32.mxu0 0.0
      %1262 = vmatmul.mubr.f32.gmra.mxu0 %v1062
      %v1263 = vpop.f32.mrf.mxu0
      %v1264 = vadd.f32 %v943, %v1263
      %v1265 = vpop.f32.mrf.mxu0
      %1266 = vmatprep.mubr.f32.mxu0 0.0
      %1267 = vmatmul.mubr.f32.gmra.mxu0 %v1065
      %v1268 = vpop.f32.mrf.mxu0
      %v1269 = vadd.f32 %v948, %v1268
      %v1270 = vpop.f32.mrf.mxu0
      %1271 = vmatprep.mubr.f32.mxu0 0.0
      %1272 = vmatmul.mubr.f32.gmra.mxu0 %v1068
      %v1273 = vpop.f32.mrf.mxu0
      %v1274 = vadd.f32 %v953, %v1273
      %v1275 = vpop.f32.mrf.mxu0
      %1276 = vmatprep.mubr.f32.mxu0 0.0
      %1277 = vmatmul.mubr.f32.gmra.mxu0 %v1071
      %v1278 = vpop.f32.mrf.mxu0
      %v1279 = vadd.f32 %v958, %v1278
      %v1280 = vpop.f32.mrf.mxu0
      %1281 = vmatprep.mubr.f32.mxu0 0.0
      %1282 = vmatmul.mubr.f32.gmra.mxu0 %v1074
      %v1283 = vpop.f32.mrf.mxu0
      %v1284 = vadd.f32 %v963, %v1283
      %v1285 = vpop.f32.mrf.mxu0
      %1286 = vmatprep.mubr.f32.mxu0 0.0
      %1287 = vmatmul.mubr.f32.gmra.mxu0 %v1077
      %v1288 = vpop.f32.mrf.mxu0
      %v1289 = vadd.f32 %v968, %v1288
      %v1290 = vpop.f32.mrf.mxu0
      %1291 = vmatprep.mubr.f32.mxu0 0.0
      %1292 = vmatmul.mubr.f32.gmra.mxu0 %v1080
      %v1293 = vpop.f32.mrf.mxu0
      %v1294 = vadd.f32 %v973, %v1293
      %v1295 = vpop.f32.mrf.mxu0
      %1296 = vmatprep.mubr.f32.mxu0 0.0
      %1297 = vmatmul.mubr.f32.gmra.mxu0 %v1083
      %v1298 = vpop.f32.mrf.mxu0
      %v1299 = vadd.f32 %v978, %v1298
      %v1300 = vpop.f32.mrf.mxu0
      %1301 = vmatprep.mubr.f32.mxu0 0.0
      %1302 = vmatmul.mubr.f32.gmra.mxu0 %v1086
      %v1303 = vpop.f32.mrf.mxu0
      %v1304 = vadd.f32 %v983, %v1303
      %v1305 = vpop.f32.mrf.mxu0
      %1306 = vmatprep.mubr.f32.mxu0 0.0
      %1307 = vmatmul.mubr.f32.gmra.mxu0 %v1089
      %v1308 = vpop.f32.mrf.mxu0
      %v1309 = vadd.f32 %v988, %v1308
      %v1310 = vpop.f32.mrf.mxu0
      %1311 = vmatprep.mubr.f32.mxu0 0.0
      %1312 = vmatmul.mubr.f32.gmra.mxu0 %v1092
      %v1313 = vpop.f32.mrf.mxu0
      %v1314 = vadd.f32 %v993, %v1313
      %v1315 = vpop.f32.mrf.mxu0
      %1316 = vmatprep.mubr.f32.mxu0 0.0
      %1317 = vmatmul.mubr.f32.gmra.mxu0 %v1095
      %v1318 = vpop.f32.mrf.mxu0
      %v1319 = vadd.f32 %v998, %v1318
      %v1320 = vpop.f32.mrf.mxu0
      %1321 = vdwg.mxu0
      %v1322 = vld [vmem:[#allocation2 + $0x2] sm:$0xff]
      %v1323 = vld [vmem:[#allocation2 + $0xa] sm:$0xff]
      %v1324 = vld [vmem:[#allocation2 + $0x1a] sm:$0xff]
      %v1325 = vld [vmem:[#allocation2 + $0x22] sm:$0xff]
      %v1326 = vld [vmem:[#allocation2 + $0x32] sm:$0xff]
      %v1327 = vld [vmem:[#allocation2 + $0x3a] sm:$0xff]
      %v1328 = vld [vmem:[#allocation2 + $0x4a] sm:$0xff]
      %v1329 = vld [vmem:[#allocation2 + $0x52] sm:$0xff]
      %v1330 = vld [vmem:[#allocation2 + $0x62] sm:$0xff]
      %v1331 = vld [vmem:[#allocation2 + $0x6a] sm:$0xff]
      %v1332 = vld [vmem:[#allocation2 + $0x7a] sm:$0xff]
      %v1333 = vld [vmem:[#allocation2 + $0x82] sm:$0xff]
      %v1334 = vld [vmem:[#allocation2 + $0x92] sm:$0xff]
      %v1335 = vld [vmem:[#allocation2 + $0x9a] sm:$0xff]
      %v1336 = vld [vmem:[#allocation2 + $0xaa] sm:$0xff]
      %v1337 = vld [vmem:[#allocation2 + $0xb2] sm:$0xff]
      %v1338 = vld [vmem:[#allocation2 + $0xc2] sm:$0xff]
      %v1339 = vld [vmem:[#allocation2 + $0xca] sm:$0xff]
      %v1340 = vld [vmem:[#allocation2 + $0xda] sm:$0xff]
      %v1341 = vld [vmem:[#allocation2 + $0xe2] sm:$0xff]
      %v1342 = vld [vmem:[#allocation2 + $0xf2] sm:$0xff]
      %v1343 = vld [vmem:[#allocation2 + $0xfa] sm:$0xff]
      %v1344 = vld [vmem:[#allocation2 + $0x10a] sm:$0xff]
      %v1345 = vld [vmem:[#allocation2 + $0x112] sm:$0xff]
      %v1346 = vld [vmem:[#allocation2 + $0x122] sm:$0xff]
      %v1347 = vld [vmem:[#allocation2 + $0x12a] sm:$0xff]
      %v1348 = vld [vmem:[#allocation2 + $0x13a] sm:$0xff]
      %v1349 = vld [vmem:[#allocation2 + $0x142] sm:$0xff]
      %v1350 = vld [vmem:[#allocation2 + $0x152] sm:$0xff]
      %v1351 = vld [vmem:[#allocation2 + $0x15a] sm:$0xff]
      %v1352 = vld [vmem:[#allocation2 + $0x16a] sm:$0xff]
      %v1353 = vld [vmem:[#allocation2 + $0x172] sm:$0xff]
      %v1354 = vld [vmem:[%s3 + $0x20] sm:$0xff]
      %v1355 = vld [vmem:[%s3 + $0x28] sm:$0xff]
      %v1357 = vsel %vm573, %v1322, 0
      %v1360 = vsel %vm573, %v1323, 0
      %v1363 = vsel %vm573, %v1324, 0
      %v1366 = vsel %vm573, %v1325, 0
      %v1369 = vsel %vm573, %v1326, 0
      %v1372 = vsel %vm573, %v1327, 0
      %v1375 = vsel %vm573, %v1328, 0
      %v1378 = vsel %vm573, %v1329, 0
      %v1381 = vsel %vm573, %v1330, 0
      %v1384 = vsel %vm573, %v1331, 0
      %v1387 = vsel %vm573, %v1332, 0
      %v1390 = vsel %vm573, %v1333, 0
      %v1393 = vsel %vm573, %v1334, 0
      %v1396 = vsel %vm573, %v1335, 0
      %v1399 = vsel %vm573, %v1336, 0
      %v1402 = vsel %vm573, %v1337, 0
      %v1405 = vsel %vm573, %v1338, 0
      %v1408 = vsel %vm573, %v1339, 0
      %v1411 = vsel %vm573, %v1340, 0
      %v1414 = vsel %vm573, %v1341, 0
      %v1417 = vsel %vm573, %v1342, 0
      %v1420 = vsel %vm573, %v1343, 0
      %v1423 = vsel %vm573, %v1344, 0
      %v1426 = vsel %vm573, %v1345, 0
      %v1429 = vsel %vm573, %v1346, 0
      %v1432 = vsel %vm573, %v1347, 0
      %v1435 = vsel %vm573, %v1348, 0
      %v1438 = vsel %vm573, %v1349, 0
      %v1441 = vsel %vm573, %v1350, 0
      %v1444 = vsel %vm573, %v1351, 0
      %v1447 = vsel %vm573, %v1352, 0
      %v1450 = vsel %vm573, %v1353, 0
      %1452 = vmatprep.subr.mxu0 0.0
      %1453 = vmatpush1.msra.mxu0 0.0
      %1454 = vmatprep.subr.mxu0 0.0
      %1455 = vmatpush1.msra.mxu0 0.0
      %1456 = vmatprep.subr.mxu0 0.0
      %1457 = vmatpush1.msra.mxu0 0.0
      %1458 = vmatprep.subr.mxu0 0.0
      %1459 = vmatpush1.msra.mxu0 0.0
      %1460 = vmatprep.subr.mxu0 0.0
      %1461 = vmatpush1.msra.mxu0 0.0
      %1462 = vmatprep.subr.mxu0 0.0
      %1463 = vmatpush1.msra.mxu0 0.0
      %1464 = vmatprep.subr.mxu0 0.0
      %1465 = vmatpush1.msra.mxu0 0.0
      %1466 = vmatprep.subr.mxu0 0.0
      %1467 = vmatpush1.msra.mxu0 0.0
      %1468 = vmatprep.subr.mxu0 0.0
      %1469 = vmatpush1.msra.mxu0 0.0
      %1470 = vmatprep.subr.mxu0 0.0
      %1471 = vmatpush1.msra.mxu0 0.0
      %1472 = vmatprep.subr.mxu0 0.0
      %1473 = vmatpush1.msra.mxu0 0.0
      %1474 = vmatprep.subr.mxu0 0.0
      %1475 = vmatpush1.msra.mxu0 0.0
      %1476 = vmatprep.subr.mxu0 0.0
      %1477 = vmatpush1.msra.mxu0 0.0
      %1478 = vmatprep.subr.mxu0 0.0
      %1479 = vmatpush1.msra.mxu0 0.0
      %1480 = vmatprep.subr.mxu0 0.0
      %1481 = vmatpush1.msra.mxu0 %v1355
      %1482 = vmatprep.subr.mxu0 0.0
      %1483 = vmatpush1.msra.mxu0 %v1354
      %1484 = vmatprep.subr.mxu0 0.0
      %1485 = vmatpush2.msra.mxu0 0.0
      %1486 = vmatprep.subr.mxu0 0.0
      %1487 = vmatpush2.msra.mxu0 0.0
      %1488 = vmatprep.subr.mxu0 0.0
      %1489 = vmatpush2.msra.mxu0 0.0
      %1490 = vmatprep.subr.mxu0 0.0
      %1491 = vmatpush2.msra.mxu0 0.0
      %1492 = vmatprep.subr.mxu0 0.0
      %1493 = vmatpush2.msra.mxu0 0.0
      %1494 = vmatprep.subr.mxu0 0.0
      %1495 = vmatpush2.msra.mxu0 0.0
      %1496 = vmatprep.subr.mxu0 0.0
      %1497 = vmatpush2.msra.mxu0 0.0
      %1498 = vmatprep.subr.mxu0 0.0
      %1499 = vmatpush2.msra.mxu0 0.0
      %1500 = vmatprep.subr.mxu0 0.0
      %1501 = vmatpush2.msra.mxu0 0.0
      %1502 = vmatprep.subr.mxu0 0.0
      %1503 = vmatpush2.msra.mxu0 0.0
      %1504 = vmatprep.subr.mxu0 0.0
      %1505 = vmatpush2.msra.mxu0 0.0
      %1506 = vmatprep.subr.mxu0 0.0
      %1507 = vmatpush2.msra.mxu0 0.0
      %1508 = vmatprep.subr.mxu0 0.0
      %1509 = vmatpush2.msra.mxu0 0.0
      %1510 = vmatprep.subr.mxu0 0.0
      %1511 = vmatpush2.msra.mxu0 0.0
      %1512 = vmatprep.subr.mxu0 0.0
      %1513 = vmatpush2.msra.mxu0 0.0
      %1514 = vmatprep.subr.mxu0 0.0
      %1515 = vmatpush2.msra.mxu0 0.0
      %1516 = vmatprep.mubr.f32.mxu0 0.0
      %1517 = vmatmul.mubr.f32.gmra.mxu0 %v1357
      %v1518 = vpop.f32.mrf.mxu0
      %v1519 = vadd.f32 0.0, %v1518
      %v1520 = vpop.f32.mrf.mxu0
      %1521 = vmatprep.mubr.f32.mxu0 0.0
      %1522 = vmatmul.mubr.f32.gmra.mxu0 %v1360
      %v1523 = vpop.f32.mrf.mxu0
      %v1524 = vadd.f32 0.0, %v1523
      %v1525 = vpop.f32.mrf.mxu0
      %1526 = vmatprep.mubr.f32.mxu0 0.0
      %1527 = vmatmul.mubr.f32.gmra.mxu0 %v1363
      %v1528 = vpop.f32.mrf.mxu0
      %v1529 = vadd.f32 0.0, %v1528
      %v1530 = vpop.f32.mrf.mxu0
      %1531 = vmatprep.mubr.f32.mxu0 0.0
      %1532 = vmatmul.mubr.f32.gmra.mxu0 %v1366
      %v1533 = vpop.f32.mrf.mxu0
      %v1534 = vadd.f32 0.0, %v1533
      %v1535 = vpop.f32.mrf.mxu0
      %1536 = vmatprep.mubr.f32.mxu0 0.0
      %1537 = vmatmul.mubr.f32.gmra.mxu0 %v1369
      %v1538 = vpop.f32.mrf.mxu0
      %v1539 = vadd.f32 0.0, %v1538
      %v1540 = vpop.f32.mrf.mxu0
      %1541 = vmatprep.mubr.f32.mxu0 0.0
      %1542 = vmatmul.mubr.f32.gmra.mxu0 %v1372
      %v1543 = vpop.f32.mrf.mxu0
      %v1544 = vadd.f32 0.0, %v1543
      %v1545 = vpop.f32.mrf.mxu0
      %1546 = vmatprep.mubr.f32.mxu0 0.0
      %1547 = vmatmul.mubr.f32.gmra.mxu0 %v1375
      %v1548 = vpop.f32.mrf.mxu0
      %v1549 = vadd.f32 0.0, %v1548
      %v1550 = vpop.f32.mrf.mxu0
      %1551 = vmatprep.mubr.f32.mxu0 0.0
      %1552 = vmatmul.mubr.f32.gmra.mxu0 %v1378
      %v1553 = vpop.f32.mrf.mxu0
      %v1554 = vadd.f32 0.0, %v1553
      %v1555 = vpop.f32.mrf.mxu0
      %1556 = vmatprep.mubr.f32.mxu0 0.0
      %1557 = vmatmul.mubr.f32.gmra.mxu0 %v1381
      %v1558 = vpop.f32.mrf.mxu0
      %v1559 = vadd.f32 0.0, %v1558
      %v1560 = vpop.f32.mrf.mxu0
      %1561 = vmatprep.mubr.f32.mxu0 0.0
      %1562 = vmatmul.mubr.f32.gmra.mxu0 %v1384
      %v1563 = vpop.f32.mrf.mxu0
      %v1564 = vadd.f32 0.0, %v1563
      %v1565 = vpop.f32.mrf.mxu0
      %1566 = vmatprep.mubr.f32.mxu0 0.0
      %1567 = vmatmul.mubr.f32.gmra.mxu0 %v1387
      %v1568 = vpop.f32.mrf.mxu0
      %v1569 = vadd.f32 0.0, %v1568
      %v1570 = vpop.f32.mrf.mxu0
      %1571 = vmatprep.mubr.f32.mxu0 0.0
      %1572 = vmatmul.mubr.f32.gmra.mxu0 %v1390
      %v1573 = vpop.f32.mrf.mxu0
      %v1574 = vadd.f32 0.0, %v1573
      %v1575 = vpop.f32.mrf.mxu0
      %1576 = vmatprep.mubr.f32.mxu0 0.0
      %1577 = vmatmul.mubr.f32.gmra.mxu0 %v1393
      %v1578 = vpop.f32.mrf.mxu0
      %v1579 = vadd.f32 0.0, %v1578
      %v1580 = vpop.f32.mrf.mxu0
      %1581 = vmatprep.mubr.f32.mxu0 0.0
      %1582 = vmatmul.mubr.f32.gmra.mxu0 %v1396
      %v1583 = vpop.f32.mrf.mxu0
      %v1584 = vadd.f32 0.0, %v1583
      %v1585 = vpop.f32.mrf.mxu0
      %1586 = vmatprep.mubr.f32.mxu0 0.0
      %1587 = vmatmul.mubr.f32.gmra.mxu0 %v1399
      %v1588 = vpop.f32.mrf.mxu0
      %v1589 = vadd.f32 0.0, %v1588
      %v1590 = vpop.f32.mrf.mxu0
      %1591 = vmatprep.mubr.f32.mxu0 0.0
      %1592 = vmatmul.mubr.f32.gmra.mxu0 %v1402
      %v1593 = vpop.f32.mrf.mxu0
      %v1594 = vadd.f32 0.0, %v1593
      %v1595 = vpop.f32.mrf.mxu0
      %1596 = vmatprep.mubr.f32.mxu0 0.0
      %1597 = vmatmul.mubr.f32.gmra.mxu0 %v1405
      %v1598 = vpop.f32.mrf.mxu0
      %v1599 = vadd.f32 0.0, %v1598
      %v1600 = vpop.f32.mrf.mxu0
      %1601 = vmatprep.mubr.f32.mxu0 0.0
      %1602 = vmatmul.mubr.f32.gmra.mxu0 %v1408
      %v1603 = vpop.f32.mrf.mxu0
      %v1604 = vadd.f32 0.0, %v1603
      %v1605 = vpop.f32.mrf.mxu0
      %1606 = vmatprep.mubr.f32.mxu0 0.0
      %1607 = vmatmul.mubr.f32.gmra.mxu0 %v1411
      %v1608 = vpop.f32.mrf.mxu0
      %v1609 = vadd.f32 0.0, %v1608
      %v1610 = vpop.f32.mrf.mxu0
      %1611 = vmatprep.mubr.f32.mxu0 0.0
      %1612 = vmatmul.mubr.f32.gmra.mxu0 %v1414
      %v1613 = vpop.f32.mrf.mxu0
      %v1614 = vadd.f32 0.0, %v1613
      %v1615 = vpop.f32.mrf.mxu0
      %1616 = vmatprep.mubr.f32.mxu0 0.0
      %1617 = vmatmul.mubr.f32.gmra.mxu0 %v1417
      %v1618 = vpop.f32.mrf.mxu0
      %v1619 = vadd.f32 0.0, %v1618
      %v1620 = vpop.f32.mrf.mxu0
      %1621 = vmatprep.mubr.f32.mxu0 0.0
      %1622 = vmatmul.mubr.f32.gmra.mxu0 %v1420
      %v1623 = vpop.f32.mrf.mxu0
      %v1624 = vadd.f32 0.0, %v1623
      %v1625 = vpop.f32.mrf.mxu0
      %1626 = vmatprep.mubr.f32.mxu0 0.0
      %1627 = vmatmul.mubr.f32.gmra.mxu0 %v1423
      %v1628 = vpop.f32.mrf.mxu0
      %v1629 = vadd.f32 0.0, %v1628
      %v1630 = vpop.f32.mrf.mxu0
      %1631 = vmatprep.mubr.f32.mxu0 0.0
      %1632 = vmatmul.mubr.f32.gmra.mxu0 %v1426
      %v1633 = vpop.f32.mrf.mxu0
      %v1634 = vadd.f32 0.0, %v1633
      %v1635 = vpop.f32.mrf.mxu0
      %1636 = vmatprep.mubr.f32.mxu0 0.0
      %1637 = vmatmul.mubr.f32.gmra.mxu0 %v1429
      %v1638 = vpop.f32.mrf.mxu0
      %v1639 = vadd.f32 0.0, %v1638
      %v1640 = vpop.f32.mrf.mxu0
      %1641 = vmatprep.mubr.f32.mxu0 0.0
      %1642 = vmatmul.mubr.f32.gmra.mxu0 %v1432
      %v1643 = vpop.f32.mrf.mxu0
      %v1644 = vadd.f32 0.0, %v1643
      %v1645 = vpop.f32.mrf.mxu0
      %1646 = vmatprep.mubr.f32.mxu0 0.0
      %1647 = vmatmul.mubr.f32.gmra.mxu0 %v1435
      %v1648 = vpop.f32.mrf.mxu0
      %v1649 = vadd.f32 0.0, %v1648
      %v1650 = vpop.f32.mrf.mxu0
      %1651 = vmatprep.mubr.f32.mxu0 0.0
      %1652 = vmatmul.mubr.f32.gmra.mxu0 %v1438
      %v1653 = vpop.f32.mrf.mxu0
      %v1654 = vadd.f32 0.0, %v1653
      %v1655 = vpop.f32.mrf.mxu0
      %1656 = vmatprep.mubr.f32.mxu0 0.0
      %1657 = vmatmul.mubr.f32.gmra.mxu0 %v1441
      %v1658 = vpop.f32.mrf.mxu0
      %v1659 = vadd.f32 0.0, %v1658
      %v1660 = vpop.f32.mrf.mxu0
      %1661 = vmatprep.mubr.f32.mxu0 0.0
      %1662 = vmatmul.mubr.f32.gmra.mxu0 %v1444
      %v1663 = vpop.f32.mrf.mxu0
      %v1664 = vadd.f32 0.0, %v1663
      %v1665 = vpop.f32.mrf.mxu0
      %1666 = vmatprep.mubr.f32.mxu0 0.0
      %1667 = vmatmul.mubr.f32.gmra.mxu0 %v1447
      %v1668 = vpop.f32.mrf.mxu0
      %v1669 = vadd.f32 0.0, %v1668
      %v1670 = vpop.f32.mrf.mxu0
      %1671 = vmatprep.mubr.f32.mxu0 0.0
      %1672 = vmatmul.mubr.f32.gmra.mxu0 %v1450
      %v1673 = vpop.f32.mrf.mxu0
      %v1674 = vadd.f32 0.0, %v1673
      %v1675 = vpop.f32.mrf.mxu0
      %1676 = vdwg.mxu0
      %v1677 = vadd.f32 %v1164, %v1519
      %v1678 = vadd.f32 %v1169, %v1524
      %v1679 = vadd.f32 %v1174, %v1529
      %v1680 = vadd.f32 %v1179, %v1534
      %v1681 = vadd.f32 %v1184, %v1539
      %v1682 = vadd.f32 %v1189, %v1544
      %v1683 = vadd.f32 %v1194, %v1549
      %v1684 = vadd.f32 %v1199, %v1554
      %v1685 = vadd.f32 %v1204, %v1559
      %v1686 = vadd.f32 %v1209, %v1564
      %v1687 = vadd.f32 %v1214, %v1569
      %v1688 = vadd.f32 %v1219, %v1574
      %v1689 = vadd.f32 %v1224, %v1579
      %v1690 = vadd.f32 %v1229, %v1584
      %v1691 = vadd.f32 %v1234, %v1589
      %v1692 = vadd.f32 %v1239, %v1594
      %v1693 = vadd.f32 %v1244, %v1599
      %v1694 = vadd.f32 %v1249, %v1604
      %v1695 = vadd.f32 %v1254, %v1609
      %v1696 = vadd.f32 %v1259, %v1614
      %v1697 = vadd.f32 %v1264, %v1619
      %v1698 = vadd.f32 %v1269, %v1624
      %v1699 = vadd.f32 %v1274, %v1629
      %v1700 = vadd.f32 %v1279, %v1634
      %v1701 = vadd.f32 %v1284, %v1639
      %v1702 = vadd.f32 %v1289, %v1644
      %v1703 = vadd.f32 %v1294, %v1649
      %v1704 = vadd.f32 %v1299, %v1654
      %v1705 = vadd.f32 %v1304, %v1659
      %v1706 = vadd.f32 %v1309, %v1664
      %v1707 = vadd.f32 %v1314, %v1669
      %v1708 = vadd.f32 %v1319, %v1674
      %v1709 = vld [vmem:[%s579] sm:$0xff]
      %v1710 = vld [vmem:[%s579 + $0x8] sm:$0xff]
      %v1711 = vld [vmem:[%s579 + $0x18] sm:$0xff]
      %v1712 = vld [vmem:[%s579 + $0x20] sm:$0xff]
      %v1713 = vld [vmem:[%s579 + $0x30] sm:$0xff]
      %v1714 = vld [vmem:[%s579 + $0x38] sm:$0xff]
      %v1715 = vld [vmem:[%s579 + $0x48] sm:$0xff]
      %v1716 = vld [vmem:[%s579 + $0x50] sm:$0xff]
      %v1717 = vld [vmem:[%s579 + $0x60] sm:$0xff]
      %v1718 = vld [vmem:[%s579 + $0x68] sm:$0xff]
      %v1719 = vld [vmem:[%s579 + $0x78] sm:$0xff]
      %v1720 = vld [vmem:[%s579 + $0x80] sm:$0xff]
      %v1721 = vld [vmem:[%s579 + $0x90] sm:$0xff]
      %v1722 = vld [vmem:[%s579 + $0x98] sm:$0xff]
      %v1723 = vld [vmem:[%s579 + $0xa8] sm:$0xff]
      %v1724 = vld [vmem:[%s579 + $0xb0] sm:$0xff]
      %v1725 = vld [vmem:[%s579 + $0xc0] sm:$0xff]
      %v1726 = vld [vmem:[%s579 + $0xc8] sm:$0xff]
      %v1727 = vld [vmem:[%s579 + $0xd8] sm:$0xff]
      %v1728 = vld [vmem:[%s579 + $0xe0] sm:$0xff]
      %v1729 = vld [vmem:[%s579 + $0xf0] sm:$0xff]
      %v1730 = vld [vmem:[%s579 + $0xf8] sm:$0xff]
      %v1731 = vld [vmem:[%s579 + $0x108] sm:$0xff]
      %v1732 = vld [vmem:[%s579 + $0x110] sm:$0xff]
      %v1733 = vld [vmem:[%s579 + $0x120] sm:$0xff]
      %v1734 = vld [vmem:[%s579 + $0x128] sm:$0xff]
      %v1735 = vld [vmem:[%s579 + $0x138] sm:$0xff]
      %v1736 = vld [vmem:[%s579 + $0x140] sm:$0xff]
      %v1737 = vld [vmem:[%s579 + $0x150] sm:$0xff]
      %v1738 = vld [vmem:[%s579 + $0x158] sm:$0xff]
      %v1739 = vld [vmem:[%s579 + $0x168] sm:$0xff]
      %v1740 = vld [vmem:[%s579 + $0x170] sm:$0xff]
      %v1741 = vld [vmem:[%s3 + $0x30] sm:$0xff]
      %v1742 = vld [vmem:[%s3 + $0x38] sm:$0xff]
      %v1744 = vsel %vm573, %v1709, 0
      %v1747 = vsel %vm573, %v1710, 0
      %v1750 = vsel %vm573, %v1711, 0
      %v1753 = vsel %vm573, %v1712, 0
      %v1756 = vsel %vm573, %v1713, 0
      %v1759 = vsel %vm573, %v1714, 0
      %v1762 = vsel %vm573, %v1715, 0
      %v1765 = vsel %vm573, %v1716, 0
      %v1768 = vsel %vm573, %v1717, 0
      %v1771 = vsel %vm573, %v1718, 0
      %v1774 = vsel %vm573, %v1719, 0
      %v1777 = vsel %vm573, %v1720, 0
      %v1780 = vsel %vm573, %v1721, 0
      %v1783 = vsel %vm573, %v1722, 0
      %v1786 = vsel %vm573, %v1723, 0
      %v1789 = vsel %vm573, %v1724, 0
      %v1792 = vsel %vm573, %v1725, 0
      %v1795 = vsel %vm573, %v1726, 0
      %v1798 = vsel %vm573, %v1727, 0
      %v1801 = vsel %vm573, %v1728, 0
      %v1804 = vsel %vm573, %v1729, 0
      %v1807 = vsel %vm573, %v1730, 0
      %v1810 = vsel %vm573, %v1731, 0
      %v1813 = vsel %vm573, %v1732, 0
      %v1816 = vsel %vm573, %v1733, 0
      %v1819 = vsel %vm573, %v1734, 0
      %v1822 = vsel %vm573, %v1735, 0
      %v1825 = vsel %vm573, %v1736, 0
      %v1828 = vsel %vm573, %v1737, 0
      %v1831 = vsel %vm573, %v1738, 0
      %v1834 = vsel %vm573, %v1739, 0
      %v1837 = vsel %vm573, %v1740, 0
      %1839 = vmatprep.subr.mxu0 0.0
      %1840 = vmatpush1.msra.mxu0 0.0
      %1841 = vmatprep.subr.mxu0 0.0
      %1842 = vmatpush1.msra.mxu0 0.0
      %1843 = vmatprep.subr.mxu0 0.0
      %1844 = vmatpush1.msra.mxu0 0.0
      %1845 = vmatprep.subr.mxu0 0.0
      %1846 = vmatpush1.msra.mxu0 0.0
      %1847 = vmatprep.subr.mxu0 0.0
      %1848 = vmatpush1.msra.mxu0 0.0
      %1849 = vmatprep.subr.mxu0 0.0
      %1850 = vmatpush1.msra.mxu0 0.0
      %1851 = vmatprep.subr.mxu0 0.0
      %1852 = vmatpush1.msra.mxu0 0.0
      %1853 = vmatprep.subr.mxu0 0.0
      %1854 = vmatpush1.msra.mxu0 0.0
      %1855 = vmatprep.subr.mxu0 0.0
      %1856 = vmatpush1.msra.mxu0 0.0
      %1857 = vmatprep.subr.mxu0 0.0
      %1858 = vmatpush1.msra.mxu0 0.0
      %1859 = vmatprep.subr.mxu0 0.0
      %1860 = vmatpush1.msra.mxu0 0.0
      %1861 = vmatprep.subr.mxu0 0.0
      %1862 = vmatpush1.msra.mxu0 0.0
      %1863 = vmatprep.subr.mxu0 0.0
      %1864 = vmatpush1.msra.mxu0 0.0
      %1865 = vmatprep.subr.mxu0 0.0
      %1866 = vmatpush1.msra.mxu0 0.0
      %1867 = vmatprep.subr.mxu0 0.0
      %1868 = vmatpush1.msra.mxu0 %v1742
      %1869 = vmatprep.subr.mxu0 0.0
      %1870 = vmatpush1.msra.mxu0 %v1741
      %1871 = vmatprep.subr.mxu0 0.0
      %1872 = vmatpush2.msra.mxu0 0.0
      %1873 = vmatprep.subr.mxu0 0.0
      %1874 = vmatpush2.msra.mxu0 0.0
      %1875 = vmatprep.subr.mxu0 0.0
      %1876 = vmatpush2.msra.mxu0 0.0
      %1877 = vmatprep.subr.mxu0 0.0
      %1878 = vmatpush2.msra.mxu0 0.0
      %1879 = vmatprep.subr.mxu0 0.0
      %1880 = vmatpush2.msra.mxu0 0.0
      %1881 = vmatprep.subr.mxu0 0.0
      %1882 = vmatpush2.msra.mxu0 0.0
      %1883 = vmatprep.subr.mxu0 0.0
      %1884 = vmatpush2.msra.mxu0 0.0
      %1885 = vmatprep.subr.mxu0 0.0
      %1886 = vmatpush2.msra.mxu0 0.0
      %1887 = vmatprep.subr.mxu0 0.0
      %1888 = vmatpush2.msra.mxu0 0.0
      %1889 = vmatprep.subr.mxu0 0.0
      %1890 = vmatpush2.msra.mxu0 0.0
      %1891 = vmatprep.subr.mxu0 0.0
      %1892 = vmatpush2.msra.mxu0 0.0
      %1893 = vmatprep.subr.mxu0 0.0
      %1894 = vmatpush2.msra.mxu0 0.0
      %1895 = vmatprep.subr.mxu0 0.0
      %1896 = vmatpush2.msra.mxu0 0.0
      %1897 = vmatprep.subr.mxu0 0.0
      %1898 = vmatpush2.msra.mxu0 0.0
      %1899 = vmatprep.subr.mxu0 0.0
      %1900 = vmatpush2.msra.mxu0 0.0
      %1901 = vmatprep.subr.mxu0 0.0
      %1902 = vmatpush2.msra.mxu0 0.0
      %1903 = vmatprep.mubr.f32.mxu0 0.0
      %1904 = vmatmul.mubr.f32.gmra.mxu0 %v1744
      %v1905 = vpop.f32.mrf.mxu0
      %v1906 = vadd.f32 0.0, %v1905
      %v1907 = vpop.f32.mrf.mxu0
      %1908 = vmatprep.mubr.f32.mxu0 0.0
      %1909 = vmatmul.mubr.f32.gmra.mxu0 %v1747
      %v1910 = vpop.f32.mrf.mxu0
      %v1911 = vadd.f32 0.0, %v1910
      %v1912 = vpop.f32.mrf.mxu0
      %1913 = vmatprep.mubr.f32.mxu0 0.0
      %1914 = vmatmul.mubr.f32.gmra.mxu0 %v1750
      %v1915 = vpop.f32.mrf.mxu0
      %v1916 = vadd.f32 0.0, %v1915
      %v1917 = vpop.f32.mrf.mxu0
      %1918 = vmatprep.mubr.f32.mxu0 0.0
      %1919 = vmatmul.mubr.f32.gmra.mxu0 %v1753
      %v1920 = vpop.f32.mrf.mxu0
      %v1921 = vadd.f32 0.0, %v1920
      %v1922 = vpop.f32.mrf.mxu0
      %1923 = vmatprep.mubr.f32.mxu0 0.0
      %1924 = vmatmul.mubr.f32.gmra.mxu0 %v1756
      %v1925 = vpop.f32.mrf.mxu0
      %v1926 = vadd.f32 0.0, %v1925
      %v1927 = vpop.f32.mrf.mxu0
      %1928 = vmatprep.mubr.f32.mxu0 0.0
      %1929 = vmatmul.mubr.f32.gmra.mxu0 %v1759
      %v1930 = vpop.f32.mrf.mxu0
      %v1931 = vadd.f32 0.0, %v1930
      %v1932 = vpop.f32.mrf.mxu0
      %1933 = vmatprep.mubr.f32.mxu0 0.0
      %1934 = vmatmul.mubr.f32.gmra.mxu0 %v1762
      %v1935 = vpop.f32.mrf.mxu0
      %v1936 = vadd.f32 0.0, %v1935
      %v1937 = vpop.f32.mrf.mxu0
      %1938 = vmatprep.mubr.f32.mxu0 0.0
      %1939 = vmatmul.mubr.f32.gmra.mxu0 %v1765
      %v1940 = vpop.f32.mrf.mxu0
      %v1941 = vadd.f32 0.0, %v1940
      %v1942 = vpop.f32.mrf.mxu0
      %1943 = vmatprep.mubr.f32.mxu0 0.0
      %1944 = vmatmul.mubr.f32.gmra.mxu0 %v1768
      %v1945 = vpop.f32.mrf.mxu0
      %v1946 = vadd.f32 0.0, %v1945
      %v1947 = vpop.f32.mrf.mxu0
      %1948 = vmatprep.mubr.f32.mxu0 0.0
      %1949 = vmatmul.mubr.f32.gmra.mxu0 %v1771
      %v1950 = vpop.f32.mrf.mxu0
      %v1951 = vadd.f32 0.0, %v1950
      %v1952 = vpop.f32.mrf.mxu0
      %1953 = vmatprep.mubr.f32.mxu0 0.0
      %1954 = vmatmul.mubr.f32.gmra.mxu0 %v1774
      %v1955 = vpop.f32.mrf.mxu0
      %v1956 = vadd.f32 0.0, %v1955
      %v1957 = vpop.f32.mrf.mxu0
      %1958 = vmatprep.mubr.f32.mxu0 0.0
      %1959 = vmatmul.mubr.f32.gmra.mxu0 %v1777
      %v1960 = vpop.f32.mrf.mxu0
      %v1961 = vadd.f32 0.0, %v1960
      %v1962 = vpop.f32.mrf.mxu0
      %1963 = vmatprep.mubr.f32.mxu0 0.0
      %1964 = vmatmul.mubr.f32.gmra.mxu0 %v1780
      %v1965 = vpop.f32.mrf.mxu0
      %v1966 = vadd.f32 0.0, %v1965
      %v1967 = vpop.f32.mrf.mxu0
      %1968 = vmatprep.mubr.f32.mxu0 0.0
      %1969 = vmatmul.mubr.f32.gmra.mxu0 %v1783
      %v1970 = vpop.f32.mrf.mxu0
      %v1971 = vadd.f32 0.0, %v1970
      %v1972 = vpop.f32.mrf.mxu0
      %1973 = vmatprep.mubr.f32.mxu0 0.0
      %1974 = vmatmul.mubr.f32.gmra.mxu0 %v1786
      %v1975 = vpop.f32.mrf.mxu0
      %v1976 = vadd.f32 0.0, %v1975
      %v1977 = vpop.f32.mrf.mxu0
      %1978 = vmatprep.mubr.f32.mxu0 0.0
      %1979 = vmatmul.mubr.f32.gmra.mxu0 %v1789
      %v1980 = vpop.f32.mrf.mxu0
      %v1981 = vadd.f32 0.0, %v1980
      %v1982 = vpop.f32.mrf.mxu0
      %1983 = vmatprep.mubr.f32.mxu0 0.0
      %1984 = vmatmul.mubr.f32.gmra.mxu0 %v1792
      %v1985 = vpop.f32.mrf.mxu0
      %v1986 = vadd.f32 0.0, %v1985
      %v1987 = vpop.f32.mrf.mxu0
      %1988 = vmatprep.mubr.f32.mxu0 0.0
      %1989 = vmatmul.mubr.f32.gmra.mxu0 %v1795
      %v1990 = vpop.f32.mrf.mxu0
      %v1991 = vadd.f32 0.0, %v1990
      %v1992 = vpop.f32.mrf.mxu0
      %1993 = vmatprep.mubr.f32.mxu0 0.0
      %1994 = vmatmul.mubr.f32.gmra.mxu0 %v1798
      %v1995 = vpop.f32.mrf.mxu0
      %v1996 = vadd.f32 0.0, %v1995
      %v1997 = vpop.f32.mrf.mxu0
      %1998 = vmatprep.mubr.f32.mxu0 0.0
      %1999 = vmatmul.mubr.f32.gmra.mxu0 %v1801
      %v2000 = vpop.f32.mrf.mxu0
      %v2001 = vadd.f32 0.0, %v2000
      %v2002 = vpop.f32.mrf.mxu0
      %2003 = vmatprep.mubr.f32.mxu0 0.0
      %2004 = vmatmul.mubr.f32.gmra.mxu0 %v1804
      %v2005 = vpop.f32.mrf.mxu0
      %v2006 = vadd.f32 0.0, %v2005
      %v2007 = vpop.f32.mrf.mxu0
      %2008 = vmatprep.mubr.f32.mxu0 0.0
      %2009 = vmatmul.mubr.f32.gmra.mxu0 %v1807
      %v2010 = vpop.f32.mrf.mxu0
      %v2011 = vadd.f32 0.0, %v2010
      %v2012 = vpop.f32.mrf.mxu0
      %2013 = vmatprep.mubr.f32.mxu0 0.0
      %2014 = vmatmul.mubr.f32.gmra.mxu0 %v1810
      %v2015 = vpop.f32.mrf.mxu0
      %v2016 = vadd.f32 0.0, %v2015
      %v2017 = vpop.f32.mrf.mxu0
      %2018 = vmatprep.mubr.f32.mxu0 0.0
      %2019 = vmatmul.mubr.f32.gmra.mxu0 %v1813
      %v2020 = vpop.f32.mrf.mxu0
      %v2021 = vadd.f32 0.0, %v2020
      %v2022 = vpop.f32.mrf.mxu0
      %2023 = vmatprep.mubr.f32.mxu0 0.0
      %2024 = vmatmul.mubr.f32.gmra.mxu0 %v1816
      %v2025 = vpop.f32.mrf.mxu0
      %v2026 = vadd.f32 0.0, %v2025
      %v2027 = vpop.f32.mrf.mxu0
      %2028 = vmatprep.mubr.f32.mxu0 0.0
      %2029 = vmatmul.mubr.f32.gmra.mxu0 %v1819
      %v2030 = vpop.f32.mrf.mxu0
      %v2031 = vadd.f32 0.0, %v2030
      %v2032 = vpop.f32.mrf.mxu0
      %2033 = vmatprep.mubr.f32.mxu0 0.0
      %2034 = vmatmul.mubr.f32.gmra.mxu0 %v1822
      %v2035 = vpop.f32.mrf.mxu0
      %v2036 = vadd.f32 0.0, %v2035
      %v2037 = vpop.f32.mrf.mxu0
      %2038 = vmatprep.mubr.f32.mxu0 0.0
      %2039 = vmatmul.mubr.f32.gmra.mxu0 %v1825
      %v2040 = vpop.f32.mrf.mxu0
      %v2041 = vadd.f32 0.0, %v2040
      %v2042 = vpop.f32.mrf.mxu0
      %2043 = vmatprep.mubr.f32.mxu0 0.0
      %2044 = vmatmul.mubr.f32.gmra.mxu0 %v1828
      %v2045 = vpop.f32.mrf.mxu0
      %v2046 = vadd.f32 0.0, %v2045
      %v2047 = vpop.f32.mrf.mxu0
      %2048 = vmatprep.mubr.f32.mxu0 0.0
      %2049 = vmatmul.mubr.f32.gmra.mxu0 %v1831
      %v2050 = vpop.f32.mrf.mxu0
      %v2051 = vadd.f32 0.0, %v2050
      %v2052 = vpop.f32.mrf.mxu0
      %2053 = vmatprep.mubr.f32.mxu0 0.0
      %2054 = vmatmul.mubr.f32.gmra.mxu0 %v1834
      %v2055 = vpop.f32.mrf.mxu0
      %v2056 = vadd.f32 0.0, %v2055
      %v2057 = vpop.f32.mrf.mxu0
      %2058 = vmatprep.mubr.f32.mxu0 0.0
      %2059 = vmatmul.mubr.f32.gmra.mxu0 %v1837
      %v2060 = vpop.f32.mrf.mxu0
      %v2061 = vadd.f32 0.0, %v2060
      %v2062 = vpop.f32.mrf.mxu0
      %2063 = vdwg.mxu0
      %v2064 = vadd.f32 %v1677, %v1906
      %v2065 = vadd.f32 %v1678, %v1911
      %v2066 = vadd.f32 %v1679, %v1916
      %v2067 = vadd.f32 %v1680, %v1921
      %v2068 = vadd.f32 %v1681, %v1926
      %v2069 = vadd.f32 %v1682, %v1931
      %v2070 = vadd.f32 %v1683, %v1936
      %v2071 = vadd.f32 %v1684, %v1941
      %v2072 = vadd.f32 %v1685, %v1946
      %v2073 = vadd.f32 %v1686, %v1951
      %v2074 = vadd.f32 %v1687, %v1956
      %v2075 = vadd.f32 %v1688, %v1961
      %v2076 = vadd.f32 %v1689, %v1966
      %v2077 = vadd.f32 %v1690, %v1971
      %v2078 = vadd.f32 %v1691, %v1976
      %v2079 = vadd.f32 %v1692, %v1981
      %v2080 = vadd.f32 %v1693, %v1986
      %v2081 = vadd.f32 %v1694, %v1991
      %v2082 = vadd.f32 %v1695, %v1996
      %v2083 = vadd.f32 %v1696, %v2001
      %v2084 = vadd.f32 %v1697, %v2006
      %v2085 = vadd.f32 %v1698, %v2011
      %v2086 = vadd.f32 %v1699, %v2016
      %v2087 = vadd.f32 %v1700, %v2021
      %v2088 = vadd.f32 %v1701, %v2026
      %v2089 = vadd.f32 %v1702, %v2031
      %v2090 = vadd.f32 %v1703, %v2036
      %v2091 = vadd.f32 %v1704, %v2041
      %v2092 = vadd.f32 %v1705, %v2046
      %v2093 = vadd.f32 %v1706, %v2051
      %v2094 = vadd.f32 %v1707, %v2056
      %v2095 = vadd.f32 %v1708, %v2061
      %v2096 = vld [vmem:[%s579 + $0x1] sm:$0xff]
      %v2097 = vld [vmem:[%s579 + $0x9] sm:$0xff]
      %v2098 = vld [vmem:[%s579 + $0x19] sm:$0xff]
      %v2099 = vld [vmem:[%s579 + $0x21] sm:$0xff]
      %v2100 = vld [vmem:[%s579 + $0x31] sm:$0xff]
      %v2101 = vld [vmem:[%s579 + $0x39] sm:$0xff]
      %v2102 = vld [vmem:[%s579 + $0x49] sm:$0xff]
      %v2103 = vld [vmem:[%s579 + $0x51] sm:$0xff]
      %v2104 = vld [vmem:[%s579 + $0x61] sm:$0xff]
      %v2105 = vld [vmem:[%s579 + $0x69] sm:$0xff]
      %v2106 = vld [vmem:[%s579 + $0x79] sm:$0xff]
      %v2107 = vld [vmem:[%s579 + $0x81] sm:$0xff]
      %v2108 = vld [vmem:[%s579 + $0x91] sm:$0xff]
      %v2109 = vld [vmem:[%s579 + $0x99] sm:$0xff]
      %v2110 = vld [vmem:[%s579 + $0xa9] sm:$0xff]
      %v2111 = vld [vmem:[%s579 + $0xb1] sm:$0xff]
      %v2112 = vld [vmem:[%s579 + $0xc1] sm:$0xff]
      %v2113 = vld [vmem:[%s579 + $0xc9] sm:$0xff]
      %v2114 = vld [vmem:[%s579 + $0xd9] sm:$0xff]
      %v2115 = vld [vmem:[%s579 + $0xe1] sm:$0xff]
      %v2116 = vld [vmem:[%s579 + $0xf1] sm:$0xff]
      %v2117 = vld [vmem:[%s579 + $0xf9] sm:$0xff]
      %v2118 = vld [vmem:[%s579 + $0x109] sm:$0xff]
      %v2119 = vld [vmem:[%s579 + $0x111] sm:$0xff]
      %v2120 = vld [vmem:[%s579 + $0x121] sm:$0xff]
      %v2121 = vld [vmem:[%s579 + $0x129] sm:$0xff]
      %v2122 = vld [vmem:[%s579 + $0x139] sm:$0xff]
      %v2123 = vld [vmem:[%s579 + $0x141] sm:$0xff]
      %v2124 = vld [vmem:[%s579 + $0x151] sm:$0xff]
      %v2125 = vld [vmem:[%s579 + $0x159] sm:$0xff]
      %v2126 = vld [vmem:[%s579 + $0x169] sm:$0xff]
      %v2127 = vld [vmem:[%s579 + $0x171] sm:$0xff]
      %v2128 = vld [vmem:[%s3 + $0x40] sm:$0xff]
      %v2129 = vld [vmem:[%s3 + $0x48] sm:$0xff]
      %v2131 = vsel %vm573, %v2096, 0
      %v2134 = vsel %vm573, %v2097, 0
      %v2137 = vsel %vm573, %v2098, 0
      %v2140 = vsel %vm573, %v2099, 0
      %v2143 = vsel %vm573, %v2100, 0
      %v2146 = vsel %vm573, %v2101, 0
      %v2149 = vsel %vm573, %v2102, 0
      %v2152 = vsel %vm573, %v2103, 0
      %v2155 = vsel %vm573, %v2104, 0
      %v2158 = vsel %vm573, %v2105, 0
      %v2161 = vsel %vm573, %v2106, 0
      %v2164 = vsel %vm573, %v2107, 0
      %v2167 = vsel %vm573, %v2108, 0
      %v2170 = vsel %vm573, %v2109, 0
      %v2173 = vsel %vm573, %v2110, 0
      %v2176 = vsel %vm573, %v2111, 0
      %v2179 = vsel %vm573, %v2112, 0
      %v2182 = vsel %vm573, %v2113, 0
      %v2185 = vsel %vm573, %v2114, 0
      %v2188 = vsel %vm573, %v2115, 0
      %v2191 = vsel %vm573, %v2116, 0
      %v2194 = vsel %vm573, %v2117, 0
      %v2197 = vsel %vm573, %v2118, 0
      %v2200 = vsel %vm573, %v2119, 0
      %v2203 = vsel %vm573, %v2120, 0
      %v2206 = vsel %vm573, %v2121, 0
      %v2209 = vsel %vm573, %v2122, 0
      %v2212 = vsel %vm573, %v2123, 0
      %v2215 = vsel %vm573, %v2124, 0
      %v2218 = vsel %vm573, %v2125, 0
      %v2221 = vsel %vm573, %v2126, 0
      %v2224 = vsel %vm573, %v2127, 0
      %2226 = vmatprep.subr.mxu0 0.0
      %2227 = vmatpush1.msra.mxu0 0.0
      %2228 = vmatprep.subr.mxu0 0.0
      %2229 = vmatpush1.msra.mxu0 0.0
      %2230 = vmatprep.subr.mxu0 0.0
      %2231 = vmatpush1.msra.mxu0 0.0
      %2232 = vmatprep.subr.mxu0 0.0
      %2233 = vmatpush1.msra.mxu0 0.0
      %2234 = vmatprep.subr.mxu0 0.0
      %2235 = vmatpush1.msra.mxu0 0.0
      %2236 = vmatprep.subr.mxu0 0.0
      %2237 = vmatpush1.msra.mxu0 0.0
      %2238 = vmatprep.subr.mxu0 0.0
      %2239 = vmatpush1.msra.mxu0 0.0
      %2240 = vmatprep.subr.mxu0 0.0
      %2241 = vmatpush1.msra.mxu0 0.0
      %2242 = vmatprep.subr.mxu0 0.0
      %2243 = vmatpush1.msra.mxu0 0.0
      %2244 = vmatprep.subr.mxu0 0.0
      %2245 = vmatpush1.msra.mxu0 0.0
      %2246 = vmatprep.subr.mxu0 0.0
      %2247 = vmatpush1.msra.mxu0 0.0
      %2248 = vmatprep.subr.mxu0 0.0
      %2249 = vmatpush1.msra.mxu0 0.0
      %2250 = vmatprep.subr.mxu0 0.0
      %2251 = vmatpush1.msra.mxu0 0.0
      %2252 = vmatprep.subr.mxu0 0.0
      %2253 = vmatpush1.msra.mxu0 0.0
      %2254 = vmatprep.subr.mxu0 0.0
      %2255 = vmatpush1.msra.mxu0 %v2129
      %2256 = vmatprep.subr.mxu0 0.0
      %2257 = vmatpush1.msra.mxu0 %v2128
      %2258 = vmatprep.subr.mxu0 0.0
      %2259 = vmatpush2.msra.mxu0 0.0
      %2260 = vmatprep.subr.mxu0 0.0
      %2261 = vmatpush2.msra.mxu0 0.0
      %2262 = vmatprep.subr.mxu0 0.0
      %2263 = vmatpush2.msra.mxu0 0.0
      %2264 = vmatprep.subr.mxu0 0.0
      %2265 = vmatpush2.msra.mxu0 0.0
      %2266 = vmatprep.subr.mxu0 0.0
      %2267 = vmatpush2.msra.mxu0 0.0
      %2268 = vmatprep.subr.mxu0 0.0
      %2269 = vmatpush2.msra.mxu0 0.0
      %2270 = vmatprep.subr.mxu0 0.0
      %2271 = vmatpush2.msra.mxu0 0.0
      %2272 = vmatprep.subr.mxu0 0.0
      %2273 = vmatpush2.msra.mxu0 0.0
      %2274 = vmatprep.subr.mxu0 0.0
      %2275 = vmatpush2.msra.mxu0 0.0
      %2276 = vmatprep.subr.mxu0 0.0
      %2277 = vmatpush2.msra.mxu0 0.0
      %2278 = vmatprep.subr.mxu0 0.0
      %2279 = vmatpush2.msra.mxu0 0.0
      %2280 = vmatprep.subr.mxu0 0.0
      %2281 = vmatpush2.msra.mxu0 0.0
      %2282 = vmatprep.subr.mxu0 0.0
      %2283 = vmatpush2.msra.mxu0 0.0
      %2284 = vmatprep.subr.mxu0 0.0
      %2285 = vmatpush2.msra.mxu0 0.0
      %2286 = vmatprep.subr.mxu0 0.0
      %2287 = vmatpush2.msra.mxu0 0.0
      %2288 = vmatprep.subr.mxu0 0.0
      %2289 = vmatpush2.msra.mxu0 0.0
      %2290 = vmatprep.mubr.f32.mxu0 0.0
      %2291 = vmatmul.mubr.f32.gmra.mxu0 %v2131
      %v2292 = vpop.f32.mrf.mxu0
      %v2293 = vadd.f32 0.0, %v2292
      %v2294 = vpop.f32.mrf.mxu0
      %2295 = vmatprep.mubr.f32.mxu0 0.0
      %2296 = vmatmul.mubr.f32.gmra.mxu0 %v2134
      %v2297 = vpop.f32.mrf.mxu0
      %v2298 = vadd.f32 0.0, %v2297
      %v2299 = vpop.f32.mrf.mxu0
      %2300 = vmatprep.mubr.f32.mxu0 0.0
      %2301 = vmatmul.mubr.f32.gmra.mxu0 %v2137
      %v2302 = vpop.f32.mrf.mxu0
      %v2303 = vadd.f32 0.0, %v2302
      %v2304 = vpop.f32.mrf.mxu0
      %2305 = vmatprep.mubr.f32.mxu0 0.0
      %2306 = vmatmul.mubr.f32.gmra.mxu0 %v2140
      %v2307 = vpop.f32.mrf.mxu0
      %v2308 = vadd.f32 0.0, %v2307
      %v2309 = vpop.f32.mrf.mxu0
      %2310 = vmatprep.mubr.f32.mxu0 0.0
      %2311 = vmatmul.mubr.f32.gmra.mxu0 %v2143
      %v2312 = vpop.f32.mrf.mxu0
      %v2313 = vadd.f32 0.0, %v2312
      %v2314 = vpop.f32.mrf.mxu0
      %2315 = vmatprep.mubr.f32.mxu0 0.0
      %2316 = vmatmul.mubr.f32.gmra.mxu0 %v2146
      %v2317 = vpop.f32.mrf.mxu0
      %v2318 = vadd.f32 0.0, %v2317
      %v2319 = vpop.f32.mrf.mxu0
      %2320 = vmatprep.mubr.f32.mxu0 0.0
      %2321 = vmatmul.mubr.f32.gmra.mxu0 %v2149
      %v2322 = vpop.f32.mrf.mxu0
      %v2323 = vadd.f32 0.0, %v2322
      %v2324 = vpop.f32.mrf.mxu0
      %2325 = vmatprep.mubr.f32.mxu0 0.0
      %2326 = vmatmul.mubr.f32.gmra.mxu0 %v2152
      %v2327 = vpop.f32.mrf.mxu0
      %v2328 = vadd.f32 0.0, %v2327
      %v2329 = vpop.f32.mrf.mxu0
      %2330 = vmatprep.mubr.f32.mxu0 0.0
      %2331 = vmatmul.mubr.f32.gmra.mxu0 %v2155
      %v2332 = vpop.f32.mrf.mxu0
      %v2333 = vadd.f32 0.0, %v2332
      %v2334 = vpop.f32.mrf.mxu0
      %2335 = vmatprep.mubr.f32.mxu0 0.0
      %2336 = vmatmul.mubr.f32.gmra.mxu0 %v2158
      %v2337 = vpop.f32.mrf.mxu0
      %v2338 = vadd.f32 0.0, %v2337
      %v2339 = vpop.f32.mrf.mxu0
      %2340 = vmatprep.mubr.f32.mxu0 0.0
      %2341 = vmatmul.mubr.f32.gmra.mxu0 %v2161
      %v2342 = vpop.f32.mrf.mxu0
      %v2343 = vadd.f32 0.0, %v2342
      %v2344 = vpop.f32.mrf.mxu0
      %2345 = vmatprep.mubr.f32.mxu0 0.0
      %2346 = vmatmul.mubr.f32.gmra.mxu0 %v2164
      %v2347 = vpop.f32.mrf.mxu0
      %v2348 = vadd.f32 0.0, %v2347
      %v2349 = vpop.f32.mrf.mxu0
      %2350 = vmatprep.mubr.f32.mxu0 0.0
      %2351 = vmatmul.mubr.f32.gmra.mxu0 %v2167
      %v2352 = vpop.f32.mrf.mxu0
      %v2353 = vadd.f32 0.0, %v2352
      %v2354 = vpop.f32.mrf.mxu0
      %2355 = vmatprep.mubr.f32.mxu0 0.0
      %2356 = vmatmul.mubr.f32.gmra.mxu0 %v2170
      %v2357 = vpop.f32.mrf.mxu0
      %v2358 = vadd.f32 0.0, %v2357
      %v2359 = vpop.f32.mrf.mxu0
      %2360 = vmatprep.mubr.f32.mxu0 0.0
      %2361 = vmatmul.mubr.f32.gmra.mxu0 %v2173
      %v2362 = vpop.f32.mrf.mxu0
      %v2363 = vadd.f32 0.0, %v2362
      %v2364 = vpop.f32.mrf.mxu0
      %2365 = vmatprep.mubr.f32.mxu0 0.0
      %2366 = vmatmul.mubr.f32.gmra.mxu0 %v2176
      %v2367 = vpop.f32.mrf.mxu0
      %v2368 = vadd.f32 0.0, %v2367
      %v2369 = vpop.f32.mrf.mxu0
      %2370 = vmatprep.mubr.f32.mxu0 0.0
      %2371 = vmatmul.mubr.f32.gmra.mxu0 %v2179
      %v2372 = vpop.f32.mrf.mxu0
      %v2373 = vadd.f32 0.0, %v2372
      %v2374 = vpop.f32.mrf.mxu0
      %2375 = vmatprep.mubr.f32.mxu0 0.0
      %2376 = vmatmul.mubr.f32.gmra.mxu0 %v2182
      %v2377 = vpop.f32.mrf.mxu0
      %v2378 = vadd.f32 0.0, %v2377
      %v2379 = vpop.f32.mrf.mxu0
      %2380 = vmatprep.mubr.f32.mxu0 0.0
      %2381 = vmatmul.mubr.f32.gmra.mxu0 %v2185
      %v2382 = vpop.f32.mrf.mxu0
      %v2383 = vadd.f32 0.0, %v2382
      %v2384 = vpop.f32.mrf.mxu0
      %2385 = vmatprep.mubr.f32.mxu0 0.0
      %2386 = vmatmul.mubr.f32.gmra.mxu0 %v2188
      %v2387 = vpop.f32.mrf.mxu0
      %v2388 = vadd.f32 0.0, %v2387
      %v2389 = vpop.f32.mrf.mxu0
      %2390 = vmatprep.mubr.f32.mxu0 0.0
      %2391 = vmatmul.mubr.f32.gmra.mxu0 %v2191
      %v2392 = vpop.f32.mrf.mxu0
      %v2393 = vadd.f32 0.0, %v2392
      %v2394 = vpop.f32.mrf.mxu0
      %2395 = vmatprep.mubr.f32.mxu0 0.0
      %2396 = vmatmul.mubr.f32.gmra.mxu0 %v2194
      %v2397 = vpop.f32.mrf.mxu0
      %v2398 = vadd.f32 0.0, %v2397
      %v2399 = vpop.f32.mrf.mxu0
      %2400 = vmatprep.mubr.f32.mxu0 0.0
      %2401 = vmatmul.mubr.f32.gmra.mxu0 %v2197
      %v2402 = vpop.f32.mrf.mxu0
      %v2403 = vadd.f32 0.0, %v2402
      %v2404 = vpop.f32.mrf.mxu0
      %2405 = vmatprep.mubr.f32.mxu0 0.0
      %2406 = vmatmul.mubr.f32.gmra.mxu0 %v2200
      %v2407 = vpop.f32.mrf.mxu0
      %v2408 = vadd.f32 0.0, %v2407
      %v2409 = vpop.f32.mrf.mxu0
      %2410 = vmatprep.mubr.f32.mxu0 0.0
      %2411 = vmatmul.mubr.f32.gmra.mxu0 %v2203
      %v2412 = vpop.f32.mrf.mxu0
      %v2413 = vadd.f32 0.0, %v2412
      %v2414 = vpop.f32.mrf.mxu0
      %2415 = vmatprep.mubr.f32.mxu0 0.0
      %2416 = vmatmul.mubr.f32.gmra.mxu0 %v2206
      %v2417 = vpop.f32.mrf.mxu0
      %v2418 = vadd.f32 0.0, %v2417
      %v2419 = vpop.f32.mrf.mxu0
      %2420 = vmatprep.mubr.f32.mxu0 0.0
      %2421 = vmatmul.mubr.f32.gmra.mxu0 %v2209
      %v2422 = vpop.f32.mrf.mxu0
      %v2423 = vadd.f32 0.0, %v2422
      %v2424 = vpop.f32.mrf.mxu0
      %2425 = vmatprep.mubr.f32.mxu0 0.0
      %2426 = vmatmul.mubr.f32.gmra.mxu0 %v2212
      %v2427 = vpop.f32.mrf.mxu0
      %v2428 = vadd.f32 0.0, %v2427
      %v2429 = vpop.f32.mrf.mxu0
      %2430 = vmatprep.mubr.f32.mxu0 0.0
      %2431 = vmatmul.mubr.f32.gmra.mxu0 %v2215
      %v2432 = vpop.f32.mrf.mxu0
      %v2433 = vadd.f32 0.0, %v2432
      %v2434 = vpop.f32.mrf.mxu0
      %2435 = vmatprep.mubr.f32.mxu0 0.0
      %2436 = vmatmul.mubr.f32.gmra.mxu0 %v2218
      %v2437 = vpop.f32.mrf.mxu0
      %v2438 = vadd.f32 0.0, %v2437
      %v2439 = vpop.f32.mrf.mxu0
      %2440 = vmatprep.mubr.f32.mxu0 0.0
      %2441 = vmatmul.mubr.f32.gmra.mxu0 %v2221
      %v2442 = vpop.f32.mrf.mxu0
      %v2443 = vadd.f32 0.0, %v2442
      %v2444 = vpop.f32.mrf.mxu0
      %2445 = vmatprep.mubr.f32.mxu0 0.0
      %2446 = vmatmul.mubr.f32.gmra.mxu0 %v2224
      %v2447 = vpop.f32.mrf.mxu0
      %v2448 = vadd.f32 0.0, %v2447
      %v2449 = vpop.f32.mrf.mxu0
      %2450 = vdwg.mxu0
      %v2451 = vadd.f32 %v2064, %v2293
      %v2452 = vadd.f32 %v2065, %v2298
      %v2453 = vadd.f32 %v2066, %v2303
      %v2454 = vadd.f32 %v2067, %v2308
      %v2455 = vadd.f32 %v2068, %v2313
      %v2456 = vadd.f32 %v2069, %v2318
      %v2457 = vadd.f32 %v2070, %v2323
      %v2458 = vadd.f32 %v2071, %v2328
      %v2459 = vadd.f32 %v2072, %v2333
      %v2460 = vadd.f32 %v2073, %v2338
      %v2461 = vadd.f32 %v2074, %v2343
      %v2462 = vadd.f32 %v2075, %v2348
      %v2463 = vadd.f32 %v2076, %v2353
      %v2464 = vadd.f32 %v2077, %v2358
      %v2465 = vadd.f32 %v2078, %v2363
      %v2466 = vadd.f32 %v2079, %v2368
      %v2467 = vadd.f32 %v2080, %v2373
      %v2468 = vadd.f32 %v2081, %v2378
      %v2469 = vadd.f32 %v2082, %v2383
      %v2470 = vadd.f32 %v2083, %v2388
      %v2471 = vadd.f32 %v2084, %v2393
      %v2472 = vadd.f32 %v2085, %v2398
      %v2473 = vadd.f32 %v2086, %v2403
      %v2474 = vadd.f32 %v2087, %v2408
      %v2475 = vadd.f32 %v2088, %v2413
      %v2476 = vadd.f32 %v2089, %v2418
      %v2477 = vadd.f32 %v2090, %v2423
      %v2478 = vadd.f32 %v2091, %v2428
      %v2479 = vadd.f32 %v2092, %v2433
      %v2480 = vadd.f32 %v2093, %v2438
      %v2481 = vadd.f32 %v2094, %v2443
      %v2482 = vadd.f32 %v2095, %v2448
      %v2483 = vld [vmem:[%s579 + $0x2] sm:$0xff]
      %v2484 = vld [vmem:[%s579 + $0xa] sm:$0xff]
      %v2485 = vld [vmem:[%s579 + $0x1a] sm:$0xff]
      %v2486 = vld [vmem:[%s579 + $0x22] sm:$0xff]
      %v2487 = vld [vmem:[%s579 + $0x32] sm:$0xff]
      %v2488 = vld [vmem:[%s579 + $0x3a] sm:$0xff]
      %v2489 = vld [vmem:[%s579 + $0x4a] sm:$0xff]
      %v2490 = vld [vmem:[%s579 + $0x52] sm:$0xff]
      %v2491 = vld [vmem:[%s579 + $0x62] sm:$0xff]
      %v2492 = vld [vmem:[%s579 + $0x6a] sm:$0xff]
      %v2493 = vld [vmem:[%s579 + $0x7a] sm:$0xff]
      %v2494 = vld [vmem:[%s579 + $0x82] sm:$0xff]
      %v2495 = vld [vmem:[%s579 + $0x92] sm:$0xff]
      %v2496 = vld [vmem:[%s579 + $0x9a] sm:$0xff]
      %v2497 = vld [vmem:[%s579 + $0xaa] sm:$0xff]
      %v2498 = vld [vmem:[%s579 + $0xb2] sm:$0xff]
      %v2499 = vld [vmem:[%s579 + $0xc2] sm:$0xff]
      %v2500 = vld [vmem:[%s579 + $0xca] sm:$0xff]
      %v2501 = vld [vmem:[%s579 + $0xda] sm:$0xff]
      %v2502 = vld [vmem:[%s579 + $0xe2] sm:$0xff]
      %v2503 = vld [vmem:[%s579 + $0xf2] sm:$0xff]
      %v2504 = vld [vmem:[%s579 + $0xfa] sm:$0xff]
      %v2505 = vld [vmem:[%s579 + $0x10a] sm:$0xff]
      %v2506 = vld [vmem:[%s579 + $0x112] sm:$0xff]
      %v2507 = vld [vmem:[%s579 + $0x122] sm:$0xff]
      %v2508 = vld [vmem:[%s579 + $0x12a] sm:$0xff]
      %v2509 = vld [vmem:[%s579 + $0x13a] sm:$0xff]
      %v2510 = vld [vmem:[%s579 + $0x142] sm:$0xff]
      %v2511 = vld [vmem:[%s579 + $0x152] sm:$0xff]
      %v2512 = vld [vmem:[%s579 + $0x15a] sm:$0xff]
      %v2513 = vld [vmem:[%s579 + $0x16a] sm:$0xff]
      %v2514 = vld [vmem:[%s579 + $0x172] sm:$0xff]
      %v2515 = vld [vmem:[%s3 + $0x50] sm:$0xff]
      %v2516 = vld [vmem:[%s3 + $0x58] sm:$0xff]
      %v2518 = vsel %vm573, %v2483, 0
      %v2521 = vsel %vm573, %v2484, 0
      %v2524 = vsel %vm573, %v2485, 0
      %v2527 = vsel %vm573, %v2486, 0
      %v2530 = vsel %vm573, %v2487, 0
      %v2533 = vsel %vm573, %v2488, 0
      %v2536 = vsel %vm573, %v2489, 0
      %v2539 = vsel %vm573, %v2490, 0
      %v2542 = vsel %vm573, %v2491, 0
      %v2545 = vsel %vm573, %v2492, 0
      %v2548 = vsel %vm573, %v2493, 0
      %v2551 = vsel %vm573, %v2494, 0
      %v2554 = vsel %vm573, %v2495, 0
      %v2557 = vsel %vm573, %v2496, 0
      %v2560 = vsel %vm573, %v2497, 0
      %v2563 = vsel %vm573, %v2498, 0
      %v2566 = vsel %vm573, %v2499, 0
      %v2569 = vsel %vm573, %v2500, 0
      %v2572 = vsel %vm573, %v2501, 0
      %v2575 = vsel %vm573, %v2502, 0
      %v2578 = vsel %vm573, %v2503, 0
      %v2581 = vsel %vm573, %v2504, 0
      %v2584 = vsel %vm573, %v2505, 0
      %v2587 = vsel %vm573, %v2506, 0
      %v2590 = vsel %vm573, %v2507, 0
      %v2593 = vsel %vm573, %v2508, 0
      %v2596 = vsel %vm573, %v2509, 0
      %v2599 = vsel %vm573, %v2510, 0
      %v2602 = vsel %vm573, %v2511, 0
      %v2605 = vsel %vm573, %v2512, 0
      %v2608 = vsel %vm573, %v2513, 0
      %v2611 = vsel %vm573, %v2514, 0
      %2613 = vmatprep.subr.mxu0 0.0
      %2614 = vmatpush1.msra.mxu0 0.0
      %2615 = vmatprep.subr.mxu0 0.0
      %2616 = vmatpush1.msra.mxu0 0.0
      %2617 = vmatprep.subr.mxu0 0.0
      %2618 = vmatpush1.msra.mxu0 0.0
      %2619 = vmatprep.subr.mxu0 0.0
      %2620 = vmatpush1.msra.mxu0 0.0
      %2621 = vmatprep.subr.mxu0 0.0
      %2622 = vmatpush1.msra.mxu0 0.0
      %2623 = vmatprep.subr.mxu0 0.0
      %2624 = vmatpush1.msra.mxu0 0.0
      %2625 = vmatprep.subr.mxu0 0.0
      %2626 = vmatpush1.msra.mxu0 0.0
      %2627 = vmatprep.subr.mxu0 0.0
      %2628 = vmatpush1.msra.mxu0 0.0
      %2629 = vmatprep.subr.mxu0 0.0
      %2630 = vmatpush1.msra.mxu0 0.0
      %2631 = vmatprep.subr.mxu0 0.0
      %2632 = vmatpush1.msra.mxu0 0.0
      %2633 = vmatprep.subr.mxu0 0.0
      %2634 = vmatpush1.msra.mxu0 0.0
      %2635 = vmatprep.subr.mxu0 0.0
      %2636 = vmatpush1.msra.mxu0 0.0
      %2637 = vmatprep.subr.mxu0 0.0
      %2638 = vmatpush1.msra.mxu0 0.0
      %2639 = vmatprep.subr.mxu0 0.0
      %2640 = vmatpush1.msra.mxu0 0.0
      %2641 = vmatprep.subr.mxu0 0.0
      %2642 = vmatpush1.msra.mxu0 %v2516
      %2643 = vmatprep.subr.mxu0 0.0
      %2644 = vmatpush1.msra.mxu0 %v2515
      %2645 = vmatprep.subr.mxu0 0.0
      %2646 = vmatpush2.msra.mxu0 0.0
      %2647 = vmatprep.subr.mxu0 0.0
      %2648 = vmatpush2.msra.mxu0 0.0
      %2649 = vmatprep.subr.mxu0 0.0
      %2650 = vmatpush2.msra.mxu0 0.0
      %2651 = vmatprep.subr.mxu0 0.0
      %2652 = vmatpush2.msra.mxu0 0.0
      %2653 = vmatprep.subr.mxu0 0.0
      %2654 = vmatpush2.msra.mxu0 0.0
      %2655 = vmatprep.subr.mxu0 0.0
      %2656 = vmatpush2.msra.mxu0 0.0
      %2657 = vmatprep.subr.mxu0 0.0
      %2658 = vmatpush2.msra.mxu0 0.0
      %2659 = vmatprep.subr.mxu0 0.0
      %2660 = vmatpush2.msra.mxu0 0.0
      %2661 = vmatprep.subr.mxu0 0.0
      %2662 = vmatpush2.msra.mxu0 0.0
      %2663 = vmatprep.subr.mxu0 0.0
      %2664 = vmatpush2.msra.mxu0 0.0
      %2665 = vmatprep.subr.mxu0 0.0
      %2666 = vmatpush2.msra.mxu0 0.0
      %2667 = vmatprep.subr.mxu0 0.0
      %2668 = vmatpush2.msra.mxu0 0.0
      %2669 = vmatprep.subr.mxu0 0.0
      %2670 = vmatpush2.msra.mxu0 0.0
      %2671 = vmatprep.subr.mxu0 0.0
      %2672 = vmatpush2.msra.mxu0 0.0
      %2673 = vmatprep.subr.mxu0 0.0
      %2674 = vmatpush2.msra.mxu0 0.0
      %2675 = vmatprep.subr.mxu0 0.0
      %2676 = vmatpush2.msra.mxu0 0.0
      %2677 = vmatprep.mubr.f32.mxu0 0.0
      %2678 = vmatmul.mubr.f32.gmra.mxu0 %v2518
      %v2679 = vpop.f32.mrf.mxu0
      %v2680 = vadd.f32 0.0, %v2679
      %v2681 = vpop.f32.mrf.mxu0
      %2682 = vmatprep.mubr.f32.mxu0 0.0
      %2683 = vmatmul.mubr.f32.gmra.mxu0 %v2521
      %v2684 = vpop.f32.mrf.mxu0
      %v2685 = vadd.f32 0.0, %v2684
      %v2686 = vpop.f32.mrf.mxu0
      %2687 = vmatprep.mubr.f32.mxu0 0.0
      %2688 = vmatmul.mubr.f32.gmra.mxu0 %v2524
      %v2689 = vpop.f32.mrf.mxu0
      %v2690 = vadd.f32 0.0, %v2689
      %v2691 = vpop.f32.mrf.mxu0
      %2692 = vmatprep.mubr.f32.mxu0 0.0
      %2693 = vmatmul.mubr.f32.gmra.mxu0 %v2527
      %v2694 = vpop.f32.mrf.mxu0
      %v2695 = vadd.f32 0.0, %v2694
      %v2696 = vpop.f32.mrf.mxu0
      %2697 = vmatprep.mubr.f32.mxu0 0.0
      %2698 = vmatmul.mubr.f32.gmra.mxu0 %v2530
      %v2699 = vpop.f32.mrf.mxu0
      %v2700 = vadd.f32 0.0, %v2699
      %v2701 = vpop.f32.mrf.mxu0
      %2702 = vmatprep.mubr.f32.mxu0 0.0
      %2703 = vmatmul.mubr.f32.gmra.mxu0 %v2533
      %v2704 = vpop.f32.mrf.mxu0
      %v2705 = vadd.f32 0.0, %v2704
      %v2706 = vpop.f32.mrf.mxu0
      %2707 = vmatprep.mubr.f32.mxu0 0.0
      %2708 = vmatmul.mubr.f32.gmra.mxu0 %v2536
      %v2709 = vpop.f32.mrf.mxu0
      %v2710 = vadd.f32 0.0, %v2709
      %v2711 = vpop.f32.mrf.mxu0
      %2712 = vmatprep.mubr.f32.mxu0 0.0
      %2713 = vmatmul.mubr.f32.gmra.mxu0 %v2539
      %v2714 = vpop.f32.mrf.mxu0
      %v2715 = vadd.f32 0.0, %v2714
      %v2716 = vpop.f32.mrf.mxu0
      %2717 = vmatprep.mubr.f32.mxu0 0.0
      %2718 = vmatmul.mubr.f32.gmra.mxu0 %v2542
      %v2719 = vpop.f32.mrf.mxu0
      %v2720 = vadd.f32 0.0, %v2719
      %v2721 = vpop.f32.mrf.mxu0
      %2722 = vmatprep.mubr.f32.mxu0 0.0
      %2723 = vmatmul.mubr.f32.gmra.mxu0 %v2545
      %v2724 = vpop.f32.mrf.mxu0
      %v2725 = vadd.f32 0.0, %v2724
      %v2726 = vpop.f32.mrf.mxu0
      %2727 = vmatprep.mubr.f32.mxu0 0.0
      %2728 = vmatmul.mubr.f32.gmra.mxu0 %v2548
      %v2729 = vpop.f32.mrf.mxu0
      %v2730 = vadd.f32 0.0, %v2729
      %v2731 = vpop.f32.mrf.mxu0
      %2732 = vmatprep.mubr.f32.mxu0 0.0
      %2733 = vmatmul.mubr.f32.gmra.mxu0 %v2551
      %v2734 = vpop.f32.mrf.mxu0
      %v2735 = vadd.f32 0.0, %v2734
      %v2736 = vpop.f32.mrf.mxu0
      %2737 = vmatprep.mubr.f32.mxu0 0.0
      %2738 = vmatmul.mubr.f32.gmra.mxu0 %v2554
      %v2739 = vpop.f32.mrf.mxu0
      %v2740 = vadd.f32 0.0, %v2739
      %v2741 = vpop.f32.mrf.mxu0
      %2742 = vmatprep.mubr.f32.mxu0 0.0
      %2743 = vmatmul.mubr.f32.gmra.mxu0 %v2557
      %v2744 = vpop.f32.mrf.mxu0
      %v2745 = vadd.f32 0.0, %v2744
      %v2746 = vpop.f32.mrf.mxu0
      %2747 = vmatprep.mubr.f32.mxu0 0.0
      %2748 = vmatmul.mubr.f32.gmra.mxu0 %v2560
      %v2749 = vpop.f32.mrf.mxu0
      %v2750 = vadd.f32 0.0, %v2749
      %v2751 = vpop.f32.mrf.mxu0
      %2752 = vmatprep.mubr.f32.mxu0 0.0
      %2753 = vmatmul.mubr.f32.gmra.mxu0 %v2563
      %v2754 = vpop.f32.mrf.mxu0
      %v2755 = vadd.f32 0.0, %v2754
      %v2756 = vpop.f32.mrf.mxu0
      %2757 = vmatprep.mubr.f32.mxu0 0.0
      %2758 = vmatmul.mubr.f32.gmra.mxu0 %v2566
      %v2759 = vpop.f32.mrf.mxu0
      %v2760 = vadd.f32 0.0, %v2759
      %v2761 = vpop.f32.mrf.mxu0
      %2762 = vmatprep.mubr.f32.mxu0 0.0
      %2763 = vmatmul.mubr.f32.gmra.mxu0 %v2569
      %v2764 = vpop.f32.mrf.mxu0
      %v2765 = vadd.f32 0.0, %v2764
      %v2766 = vpop.f32.mrf.mxu0
      %2767 = vmatprep.mubr.f32.mxu0 0.0
      %2768 = vmatmul.mubr.f32.gmra.mxu0 %v2572
      %v2769 = vpop.f32.mrf.mxu0
      %v2770 = vadd.f32 0.0, %v2769
      %v2771 = vpop.f32.mrf.mxu0
      %2772 = vmatprep.mubr.f32.mxu0 0.0
      %2773 = vmatmul.mubr.f32.gmra.mxu0 %v2575
      %v2774 = vpop.f32.mrf.mxu0
      %v2775 = vadd.f32 0.0, %v2774
      %v2776 = vpop.f32.mrf.mxu0
      %2777 = vmatprep.mubr.f32.mxu0 0.0
      %2778 = vmatmul.mubr.f32.gmra.mxu0 %v2578
      %v2779 = vpop.f32.mrf.mxu0
      %v2780 = vadd.f32 0.0, %v2779
      %v2781 = vpop.f32.mrf.mxu0
      %2782 = vmatprep.mubr.f32.mxu0 0.0
      %2783 = vmatmul.mubr.f32.gmra.mxu0 %v2581
      %v2784 = vpop.f32.mrf.mxu0
      %v2785 = vadd.f32 0.0, %v2784
      %v2786 = vpop.f32.mrf.mxu0
      %2787 = vmatprep.mubr.f32.mxu0 0.0
      %2788 = vmatmul.mubr.f32.gmra.mxu0 %v2584
      %v2789 = vpop.f32.mrf.mxu0
      %v2790 = vadd.f32 0.0, %v2789
      %v2791 = vpop.f32.mrf.mxu0
      %2792 = vmatprep.mubr.f32.mxu0 0.0
      %2793 = vmatmul.mubr.f32.gmra.mxu0 %v2587
      %v2794 = vpop.f32.mrf.mxu0
      %v2795 = vadd.f32 0.0, %v2794
      %v2796 = vpop.f32.mrf.mxu0
      %2797 = vmatprep.mubr.f32.mxu0 0.0
      %2798 = vmatmul.mubr.f32.gmra.mxu0 %v2590
      %v2799 = vpop.f32.mrf.mxu0
      %v2800 = vadd.f32 0.0, %v2799
      %v2801 = vpop.f32.mrf.mxu0
      %2802 = vmatprep.mubr.f32.mxu0 0.0
      %2803 = vmatmul.mubr.f32.gmra.mxu0 %v2593
      %v2804 = vpop.f32.mrf.mxu0
      %v2805 = vadd.f32 0.0, %v2804
      %v2806 = vpop.f32.mrf.mxu0
      %2807 = vmatprep.mubr.f32.mxu0 0.0
      %2808 = vmatmul.mubr.f32.gmra.mxu0 %v2596
      %v2809 = vpop.f32.mrf.mxu0
      %v2810 = vadd.f32 0.0, %v2809
      %v2811 = vpop.f32.mrf.mxu0
      %2812 = vmatprep.mubr.f32.mxu0 0.0
      %2813 = vmatmul.mubr.f32.gmra.mxu0 %v2599
      %v2814 = vpop.f32.mrf.mxu0
      %v2815 = vadd.f32 0.0, %v2814
      %v2816 = vpop.f32.mrf.mxu0
      %2817 = vmatprep.mubr.f32.mxu0 0.0
      %2818 = vmatmul.mubr.f32.gmra.mxu0 %v2602
      %v2819 = vpop.f32.mrf.mxu0
      %v2820 = vadd.f32 0.0, %v2819
      %v2821 = vpop.f32.mrf.mxu0
      %2822 = vmatprep.mubr.f32.mxu0 0.0
      %2823 = vmatmul.mubr.f32.gmra.mxu0 %v2605
      %v2824 = vpop.f32.mrf.mxu0
      %v2825 = vadd.f32 0.0, %v2824
      %v2826 = vpop.f32.mrf.mxu0
      %2827 = vmatprep.mubr.f32.mxu0 0.0
      %2828 = vmatmul.mubr.f32.gmra.mxu0 %v2608
      %v2829 = vpop.f32.mrf.mxu0
      %v2830 = vadd.f32 0.0, %v2829
      %v2831 = vpop.f32.mrf.mxu0
      %2832 = vmatprep.mubr.f32.mxu0 0.0
      %2833 = vmatmul.mubr.f32.gmra.mxu0 %v2611
      %v2834 = vpop.f32.mrf.mxu0
      %v2835 = vadd.f32 0.0, %v2834
      %v2836 = vpop.f32.mrf.mxu0
      %2837 = vdwg.mxu0
      %v2838 = vadd.f32 %v2451, %v2680
      %v2839 = vadd.f32 %v2452, %v2685
      %v2840 = vadd.f32 %v2453, %v2690
      %v2841 = vadd.f32 %v2454, %v2695
      %v2842 = vadd.f32 %v2455, %v2700
      %v2843 = vadd.f32 %v2456, %v2705
      %v2844 = vadd.f32 %v2457, %v2710
      %v2845 = vadd.f32 %v2458, %v2715
      %v2846 = vadd.f32 %v2459, %v2720
      %v2847 = vadd.f32 %v2460, %v2725
      %v2848 = vadd.f32 %v2461, %v2730
      %v2849 = vadd.f32 %v2462, %v2735
      %v2850 = vadd.f32 %v2463, %v2740
      %v2851 = vadd.f32 %v2464, %v2745
      %v2852 = vadd.f32 %v2465, %v2750
      %v2853 = vadd.f32 %v2466, %v2755
      %v2854 = vadd.f32 %v2467, %v2760
      %v2855 = vadd.f32 %v2468, %v2765
      %v2856 = vadd.f32 %v2469, %v2770
      %v2857 = vadd.f32 %v2470, %v2775
      %v2858 = vadd.f32 %v2471, %v2780
      %v2859 = vadd.f32 %v2472, %v2785
      %v2860 = vadd.f32 %v2473, %v2790
      %v2861 = vadd.f32 %v2474, %v2795
      %v2862 = vadd.f32 %v2475, %v2800
      %v2863 = vadd.f32 %v2476, %v2805
      %v2864 = vadd.f32 %v2477, %v2810
      %v2865 = vadd.f32 %v2478, %v2815
      %v2866 = vadd.f32 %v2479, %v2820
      %v2867 = vadd.f32 %v2480, %v2825
      %v2868 = vadd.f32 %v2481, %v2830
      %v2869 = vadd.f32 %v2482, %v2835
      %s2870 = scalar_lea.vmem [#allocation2], 48
      %v2871 = vld [vmem:[%s2870] sm:$0xff]
      %v2872 = vld [vmem:[%s2870 + $0x8] sm:$0xff]
      %v2873 = vld [vmem:[%s2870 + $0x18] sm:$0xff]
      %v2874 = vld [vmem:[%s2870 + $0x20] sm:$0xff]
      %v2875 = vld [vmem:[%s2870 + $0x30] sm:$0xff]
      %v2876 = vld [vmem:[%s2870 + $0x38] sm:$0xff]
      %v2877 = vld [vmem:[%s2870 + $0x48] sm:$0xff]
      %v2878 = vld [vmem:[%s2870 + $0x50] sm:$0xff]
      %v2879 = vld [vmem:[%s2870 + $0x60] sm:$0xff]
      %v2880 = vld [vmem:[%s2870 + $0x68] sm:$0xff]
      %v2881 = vld [vmem:[%s2870 + $0x78] sm:$0xff]
      %v2882 = vld [vmem:[%s2870 + $0x80] sm:$0xff]
      %v2883 = vld [vmem:[%s2870 + $0x90] sm:$0xff]
      %v2884 = vld [vmem:[%s2870 + $0x98] sm:$0xff]
      %v2885 = vld [vmem:[%s2870 + $0xa8] sm:$0xff]
      %v2886 = vld [vmem:[%s2870 + $0xb0] sm:$0xff]
      %v2887 = vld [vmem:[%s2870 + $0xc0] sm:$0xff]
      %v2888 = vld [vmem:[%s2870 + $0xc8] sm:$0xff]
      %v2889 = vld [vmem:[%s2870 + $0xd8] sm:$0xff]
      %v2890 = vld [vmem:[%s2870 + $0xe0] sm:$0xff]
      %v2891 = vld [vmem:[%s2870 + $0xf0] sm:$0xff]
      %v2892 = vld [vmem:[%s2870 + $0xf8] sm:$0xff]
      %v2893 = vld [vmem:[%s2870 + $0x108] sm:$0xff]
      %v2894 = vld [vmem:[%s2870 + $0x110] sm:$0xff]
      %v2895 = vld [vmem:[%s2870 + $0x120] sm:$0xff]
      %v2896 = vld [vmem:[%s2870 + $0x128] sm:$0xff]
      %v2897 = vld [vmem:[%s2870 + $0x138] sm:$0xff]
      %v2898 = vld [vmem:[%s2870 + $0x140] sm:$0xff]
      %v2899 = vld [vmem:[%s2870 + $0x150] sm:$0xff]
      %v2900 = vld [vmem:[%s2870 + $0x158] sm:$0xff]
      %v2901 = vld [vmem:[%s2870 + $0x168] sm:$0xff]
      %v2902 = vld [vmem:[%s2870 + $0x170] sm:$0xff]
      %v2903 = vld [vmem:[%s3 + $0x60] sm:$0xff]
      %v2904 = vld [vmem:[%s3 + $0x68] sm:$0xff]
      %v2906 = vsel %vm573, %v2871, 0
      %v2909 = vsel %vm573, %v2872, 0
      %v2912 = vsel %vm573, %v2873, 0
      %v2915 = vsel %vm573, %v2874, 0
      %v2918 = vsel %vm573, %v2875, 0
      %v2921 = vsel %vm573, %v2876, 0
      %v2924 = vsel %vm573, %v2877, 0
      %v2927 = vsel %vm573, %v2878, 0
      %v2930 = vsel %vm573, %v2879, 0
      %v2933 = vsel %vm573, %v2880, 0
      %v2936 = vsel %vm573, %v2881, 0
      %v2939 = vsel %vm573, %v2882, 0
      %v2942 = vsel %vm573, %v2883, 0
      %v2945 = vsel %vm573, %v2884, 0
      %v2948 = vsel %vm573, %v2885, 0
      %v2951 = vsel %vm573, %v2886, 0
      %v2954 = vsel %vm573, %v2887, 0
      %v2957 = vsel %vm573, %v2888, 0
      %v2960 = vsel %vm573, %v2889, 0
      %v2963 = vsel %vm573, %v2890, 0
      %v2966 = vsel %vm573, %v2891, 0
      %v2969 = vsel %vm573, %v2892, 0
      %v2972 = vsel %vm573, %v2893, 0
      %v2975 = vsel %vm573, %v2894, 0
      %v2978 = vsel %vm573, %v2895, 0
      %v2981 = vsel %vm573, %v2896, 0
      %v2984 = vsel %vm573, %v2897, 0
      %v2987 = vsel %vm573, %v2898, 0
      %v2990 = vsel %vm573, %v2899, 0
      %v2993 = vsel %vm573, %v2900, 0
      %v2996 = vsel %vm573, %v2901, 0
      %v2999 = vsel %vm573, %v2902, 0
      %3001 = vmatprep.subr.mxu0 0.0
      %3002 = vmatpush1.msra.mxu0 0.0
      %3003 = vmatprep.subr.mxu0 0.0
      %3004 = vmatpush1.msra.mxu0 0.0
      %3005 = vmatprep.subr.mxu0 0.0
      %3006 = vmatpush1.msra.mxu0 0.0
      %3007 = vmatprep.subr.mxu0 0.0
      %3008 = vmatpush1.msra.mxu0 0.0
      %3009 = vmatprep.subr.mxu0 0.0
      %3010 = vmatpush1.msra.mxu0 0.0
      %3011 = vmatprep.subr.mxu0 0.0
      %3012 = vmatpush1.msra.mxu0 0.0
      %3013 = vmatprep.subr.mxu0 0.0
      %3014 = vmatpush1.msra.mxu0 0.0
      %3015 = vmatprep.subr.mxu0 0.0
      %3016 = vmatpush1.msra.mxu0 0.0
      %3017 = vmatprep.subr.mxu0 0.0
      %3018 = vmatpush1.msra.mxu0 0.0
      %3019 = vmatprep.subr.mxu0 0.0
      %3020 = vmatpush1.msra.mxu0 0.0
      %3021 = vmatprep.subr.mxu0 0.0
      %3022 = vmatpush1.msra.mxu0 0.0
      %3023 = vmatprep.subr.mxu0 0.0
      %3024 = vmatpush1.msra.mxu0 0.0
      %3025 = vmatprep.subr.mxu0 0.0
      %3026 = vmatpush1.msra.mxu0 0.0
      %3027 = vmatprep.subr.mxu0 0.0
      %3028 = vmatpush1.msra.mxu0 0.0
      %3029 = vmatprep.subr.mxu0 0.0
      %3030 = vmatpush1.msra.mxu0 %v2904
      %3031 = vmatprep.subr.mxu0 0.0
      %3032 = vmatpush1.msra.mxu0 %v2903
      %3033 = vmatprep.subr.mxu0 0.0
      %3034 = vmatpush2.msra.mxu0 0.0
      %3035 = vmatprep.subr.mxu0 0.0
      %3036 = vmatpush2.msra.mxu0 0.0
      %3037 = vmatprep.subr.mxu0 0.0
      %3038 = vmatpush2.msra.mxu0 0.0
      %3039 = vmatprep.subr.mxu0 0.0
      %3040 = vmatpush2.msra.mxu0 0.0
      %3041 = vmatprep.subr.mxu0 0.0
      %3042 = vmatpush2.msra.mxu0 0.0
      %3043 = vmatprep.subr.mxu0 0.0
      %3044 = vmatpush2.msra.mxu0 0.0
      %3045 = vmatprep.subr.mxu0 0.0
      %3046 = vmatpush2.msra.mxu0 0.0
      %3047 = vmatprep.subr.mxu0 0.0
      %3048 = vmatpush2.msra.mxu0 0.0
      %3049 = vmatprep.subr.mxu0 0.0
      %3050 = vmatpush2.msra.mxu0 0.0
      %3051 = vmatprep.subr.mxu0 0.0
      %3052 = vmatpush2.msra.mxu0 0.0
      %3053 = vmatprep.subr.mxu0 0.0
      %3054 = vmatpush2.msra.mxu0 0.0
      %3055 = vmatprep.subr.mxu0 0.0
      %3056 = vmatpush2.msra.mxu0 0.0
      %3057 = vmatprep.subr.mxu0 0.0
      %3058 = vmatpush2.msra.mxu0 0.0
      %3059 = vmatprep.subr.mxu0 0.0
      %3060 = vmatpush2.msra.mxu0 0.0
      %3061 = vmatprep.subr.mxu0 0.0
      %3062 = vmatpush2.msra.mxu0 0.0
      %3063 = vmatprep.subr.mxu0 0.0
      %3064 = vmatpush2.msra.mxu0 0.0
      %3065 = vmatprep.mubr.f32.mxu0 0.0
      %3066 = vmatmul.mubr.f32.gmra.mxu0 %v2906
      %v3067 = vpop.f32.mrf.mxu0
      %v3068 = vadd.f32 0.0, %v3067
      %v3069 = vpop.f32.mrf.mxu0
      %3070 = vmatprep.mubr.f32.mxu0 0.0
      %3071 = vmatmul.mubr.f32.gmra.mxu0 %v2909
      %v3072 = vpop.f32.mrf.mxu0
      %v3073 = vadd.f32 0.0, %v3072
      %v3074 = vpop.f32.mrf.mxu0
      %3075 = vmatprep.mubr.f32.mxu0 0.0
      %3076 = vmatmul.mubr.f32.gmra.mxu0 %v2912
      %v3077 = vpop.f32.mrf.mxu0
      %v3078 = vadd.f32 0.0, %v3077
      %v3079 = vpop.f32.mrf.mxu0
      %3080 = vmatprep.mubr.f32.mxu0 0.0
      %3081 = vmatmul.mubr.f32.gmra.mxu0 %v2915
      %v3082 = vpop.f32.mrf.mxu0
      %v3083 = vadd.f32 0.0, %v3082
      %v3084 = vpop.f32.mrf.mxu0
      %3085 = vmatprep.mubr.f32.mxu0 0.0
      %3086 = vmatmul.mubr.f32.gmra.mxu0 %v2918
      %v3087 = vpop.f32.mrf.mxu0
      %v3088 = vadd.f32 0.0, %v3087
      %v3089 = vpop.f32.mrf.mxu0
      %3090 = vmatprep.mubr.f32.mxu0 0.0
      %3091 = vmatmul.mubr.f32.gmra.mxu0 %v2921
      %v3092 = vpop.f32.mrf.mxu0
      %v3093 = vadd.f32 0.0, %v3092
      %v3094 = vpop.f32.mrf.mxu0
      %3095 = vmatprep.mubr.f32.mxu0 0.0
      %3096 = vmatmul.mubr.f32.gmra.mxu0 %v2924
      %v3097 = vpop.f32.mrf.mxu0
      %v3098 = vadd.f32 0.0, %v3097
      %v3099 = vpop.f32.mrf.mxu0
      %3100 = vmatprep.mubr.f32.mxu0 0.0
      %3101 = vmatmul.mubr.f32.gmra.mxu0 %v2927
      %v3102 = vpop.f32.mrf.mxu0
      %v3103 = vadd.f32 0.0, %v3102
      %v3104 = vpop.f32.mrf.mxu0
      %3105 = vmatprep.mubr.f32.mxu0 0.0
      %3106 = vmatmul.mubr.f32.gmra.mxu0 %v2930
      %v3107 = vpop.f32.mrf.mxu0
      %v3108 = vadd.f32 0.0, %v3107
      %v3109 = vpop.f32.mrf.mxu0
      %3110 = vmatprep.mubr.f32.mxu0 0.0
      %3111 = vmatmul.mubr.f32.gmra.mxu0 %v2933
      %v3112 = vpop.f32.mrf.mxu0
      %v3113 = vadd.f32 0.0, %v3112
      %v3114 = vpop.f32.mrf.mxu0
      %3115 = vmatprep.mubr.f32.mxu0 0.0
      %3116 = vmatmul.mubr.f32.gmra.mxu0 %v2936
      %v3117 = vpop.f32.mrf.mxu0
      %v3118 = vadd.f32 0.0, %v3117
      %v3119 = vpop.f32.mrf.mxu0
      %3120 = vmatprep.mubr.f32.mxu0 0.0
      %3121 = vmatmul.mubr.f32.gmra.mxu0 %v2939
      %v3122 = vpop.f32.mrf.mxu0
      %v3123 = vadd.f32 0.0, %v3122
      %v3124 = vpop.f32.mrf.mxu0
      %3125 = vmatprep.mubr.f32.mxu0 0.0
      %3126 = vmatmul.mubr.f32.gmra.mxu0 %v2942
      %v3127 = vpop.f32.mrf.mxu0
      %v3128 = vadd.f32 0.0, %v3127
      %v3129 = vpop.f32.mrf.mxu0
      %3130 = vmatprep.mubr.f32.mxu0 0.0
      %3131 = vmatmul.mubr.f32.gmra.mxu0 %v2945
      %v3132 = vpop.f32.mrf.mxu0
      %v3133 = vadd.f32 0.0, %v3132
      %v3134 = vpop.f32.mrf.mxu0
      %3135 = vmatprep.mubr.f32.mxu0 0.0
      %3136 = vmatmul.mubr.f32.gmra.mxu0 %v2948
      %v3137 = vpop.f32.mrf.mxu0
      %v3138 = vadd.f32 0.0, %v3137
      %v3139 = vpop.f32.mrf.mxu0
      %3140 = vmatprep.mubr.f32.mxu0 0.0
      %3141 = vmatmul.mubr.f32.gmra.mxu0 %v2951
      %v3142 = vpop.f32.mrf.mxu0
      %v3143 = vadd.f32 0.0, %v3142
      %v3144 = vpop.f32.mrf.mxu0
      %3145 = vmatprep.mubr.f32.mxu0 0.0
      %3146 = vmatmul.mubr.f32.gmra.mxu0 %v2954
      %v3147 = vpop.f32.mrf.mxu0
      %v3148 = vadd.f32 0.0, %v3147
      %v3149 = vpop.f32.mrf.mxu0
      %3150 = vmatprep.mubr.f32.mxu0 0.0
      %3151 = vmatmul.mubr.f32.gmra.mxu0 %v2957
      %v3152 = vpop.f32.mrf.mxu0
      %v3153 = vadd.f32 0.0, %v3152
      %v3154 = vpop.f32.mrf.mxu0
      %3155 = vmatprep.mubr.f32.mxu0 0.0
      %3156 = vmatmul.mubr.f32.gmra.mxu0 %v2960
      %v3157 = vpop.f32.mrf.mxu0
      %v3158 = vadd.f32 0.0, %v3157
      %v3159 = vpop.f32.mrf.mxu0
      %3160 = vmatprep.mubr.f32.mxu0 0.0
      %3161 = vmatmul.mubr.f32.gmra.mxu0 %v2963
      %v3162 = vpop.f32.mrf.mxu0
      %v3163 = vadd.f32 0.0, %v3162
      %v3164 = vpop.f32.mrf.mxu0
      %3165 = vmatprep.mubr.f32.mxu0 0.0
      %3166 = vmatmul.mubr.f32.gmra.mxu0 %v2966
      %v3167 = vpop.f32.mrf.mxu0
      %v3168 = vadd.f32 0.0, %v3167
      %v3169 = vpop.f32.mrf.mxu0
      %3170 = vmatprep.mubr.f32.mxu0 0.0
      %3171 = vmatmul.mubr.f32.gmra.mxu0 %v2969
      %v3172 = vpop.f32.mrf.mxu0
      %v3173 = vadd.f32 0.0, %v3172
      %v3174 = vpop.f32.mrf.mxu0
      %3175 = vmatprep.mubr.f32.mxu0 0.0
      %3176 = vmatmul.mubr.f32.gmra.mxu0 %v2972
      %v3177 = vpop.f32.mrf.mxu0
      %v3178 = vadd.f32 0.0, %v3177
      %v3179 = vpop.f32.mrf.mxu0
      %3180 = vmatprep.mubr.f32.mxu0 0.0
      %3181 = vmatmul.mubr.f32.gmra.mxu0 %v2975
      %v3182 = vpop.f32.mrf.mxu0
      %v3183 = vadd.f32 0.0, %v3182
      %v3184 = vpop.f32.mrf.mxu0
      %3185 = vmatprep.mubr.f32.mxu0 0.0
      %3186 = vmatmul.mubr.f32.gmra.mxu0 %v2978
      %v3187 = vpop.f32.mrf.mxu0
      %v3188 = vadd.f32 0.0, %v3187
      %v3189 = vpop.f32.mrf.mxu0
      %3190 = vmatprep.mubr.f32.mxu0 0.0
      %3191 = vmatmul.mubr.f32.gmra.mxu0 %v2981
      %v3192 = vpop.f32.mrf.mxu0
      %v3193 = vadd.f32 0.0, %v3192
      %v3194 = vpop.f32.mrf.mxu0
      %3195 = vmatprep.mubr.f32.mxu0 0.0
      %3196 = vmatmul.mubr.f32.gmra.mxu0 %v2984
      %v3197 = vpop.f32.mrf.mxu0
      %v3198 = vadd.f32 0.0, %v3197
      %v3199 = vpop.f32.mrf.mxu0
      %3200 = vmatprep.mubr.f32.mxu0 0.0
      %3201 = vmatmul.mubr.f32.gmra.mxu0 %v2987
      %v3202 = vpop.f32.mrf.mxu0
      %v3203 = vadd.f32 0.0, %v3202
      %v3204 = vpop.f32.mrf.mxu0
      %3205 = vmatprep.mubr.f32.mxu0 0.0
      %3206 = vmatmul.mubr.f32.gmra.mxu0 %v2990
      %v3207 = vpop.f32.mrf.mxu0
      %v3208 = vadd.f32 0.0, %v3207
      %v3209 = vpop.f32.mrf.mxu0
      %3210 = vmatprep.mubr.f32.mxu0 0.0
      %3211 = vmatmul.mubr.f32.gmra.mxu0 %v2993
      %v3212 = vpop.f32.mrf.mxu0
      %v3213 = vadd.f32 0.0, %v3212
      %v3214 = vpop.f32.mrf.mxu0
      %3215 = vmatprep.mubr.f32.mxu0 0.0
      %3216 = vmatmul.mubr.f32.gmra.mxu0 %v2996
      %v3217 = vpop.f32.mrf.mxu0
      %v3218 = vadd.f32 0.0, %v3217
      %v3219 = vpop.f32.mrf.mxu0
      %3220 = vmatprep.mubr.f32.mxu0 0.0
      %3221 = vmatmul.mubr.f32.gmra.mxu0 %v2999
      %v3222 = vpop.f32.mrf.mxu0
      %v3223 = vadd.f32 0.0, %v3222
      %v3224 = vpop.f32.mrf.mxu0
      %3225 = vdwg.mxu0
      %v3226 = vadd.f32 %v2838, %v3068
      %v3227 = vadd.f32 %v2839, %v3073
      %v3228 = vadd.f32 %v2840, %v3078
      %v3229 = vadd.f32 %v2841, %v3083
      %v3230 = vadd.f32 %v2842, %v3088
      %v3231 = vadd.f32 %v2843, %v3093
      %v3232 = vadd.f32 %v2844, %v3098
      %v3233 = vadd.f32 %v2845, %v3103
      %v3234 = vadd.f32 %v2846, %v3108
      %v3235 = vadd.f32 %v2847, %v3113
      %v3236 = vadd.f32 %v2848, %v3118
      %v3237 = vadd.f32 %v2849, %v3123
      %v3238 = vadd.f32 %v2850, %v3128
      %v3239 = vadd.f32 %v2851, %v3133
      %v3240 = vadd.f32 %v2852, %v3138
      %v3241 = vadd.f32 %v2853, %v3143
      %v3242 = vadd.f32 %v2854, %v3148
      %v3243 = vadd.f32 %v2855, %v3153
      %v3244 = vadd.f32 %v2856, %v3158
      %v3245 = vadd.f32 %v2857, %v3163
      %v3246 = vadd.f32 %v2858, %v3168
      %v3247 = vadd.f32 %v2859, %v3173
      %v3248 = vadd.f32 %v2860, %v3178
      %v3249 = vadd.f32 %v2861, %v3183
      %v3250 = vadd.f32 %v2862, %v3188
      %v3251 = vadd.f32 %v2863, %v3193
      %v3252 = vadd.f32 %v2864, %v3198
      %v3253 = vadd.f32 %v2865, %v3203
      %v3254 = vadd.f32 %v2866, %v3208
      %v3255 = vadd.f32 %v2867, %v3213
      %v3256 = vadd.f32 %v2868, %v3218
      %v3257 = vadd.f32 %v2869, %v3223
      %v3258 = vld [vmem:[%s2870 + $0x1] sm:$0xff]
      %v3259 = vld [vmem:[%s2870 + $0x9] sm:$0xff]
      %v3260 = vld [vmem:[%s2870 + $0x19] sm:$0xff]
      %v3261 = vld [vmem:[%s2870 + $0x21] sm:$0xff]
      %v3262 = vld [vmem:[%s2870 + $0x31] sm:$0xff]
      %v3263 = vld [vmem:[%s2870 + $0x39] sm:$0xff]
      %v3264 = vld [vmem:[%s2870 + $0x49] sm:$0xff]
      %v3265 = vld [vmem:[%s2870 + $0x51] sm:$0xff]
      %v3266 = vld [vmem:[%s2870 + $0x61] sm:$0xff]
      %v3267 = vld [vmem:[%s2870 + $0x69] sm:$0xff]
      %v3268 = vld [vmem:[%s2870 + $0x79] sm:$0xff]
      %v3269 = vld [vmem:[%s2870 + $0x81] sm:$0xff]
      %v3270 = vld [vmem:[%s2870 + $0x91] sm:$0xff]
      %v3271 = vld [vmem:[%s2870 + $0x99] sm:$0xff]
      %v3272 = vld [vmem:[%s2870 + $0xa9] sm:$0xff]
      %v3273 = vld [vmem:[%s2870 + $0xb1] sm:$0xff]
      %v3274 = vld [vmem:[%s2870 + $0xc1] sm:$0xff]
      %v3275 = vld [vmem:[%s2870 + $0xc9] sm:$0xff]
      %v3276 = vld [vmem:[%s2870 + $0xd9] sm:$0xff]
      %v3277 = vld [vmem:[%s2870 + $0xe1] sm:$0xff]
      %v3278 = vld [vmem:[%s2870 + $0xf1] sm:$0xff]
      %v3279 = vld [vmem:[%s2870 + $0xf9] sm:$0xff]
      %v3280 = vld [vmem:[%s2870 + $0x109] sm:$0xff]
      %v3281 = vld [vmem:[%s2870 + $0x111] sm:$0xff]
      %v3282 = vld [vmem:[%s2870 + $0x121] sm:$0xff]
      %v3283 = vld [vmem:[%s2870 + $0x129] sm:$0xff]
      %v3284 = vld [vmem:[%s2870 + $0x139] sm:$0xff]
      %v3285 = vld [vmem:[%s2870 + $0x141] sm:$0xff]
      %v3286 = vld [vmem:[%s2870 + $0x151] sm:$0xff]
      %v3287 = vld [vmem:[%s2870 + $0x159] sm:$0xff]
      %v3288 = vld [vmem:[%s2870 + $0x169] sm:$0xff]
      %v3289 = vld [vmem:[%s2870 + $0x171] sm:$0xff]
      %v3290 = vld [vmem:[%s3 + $0x70] sm:$0xff]
      %v3291 = vld [vmem:[%s3 + $0x78] sm:$0xff]
      %v3293 = vsel %vm573, %v3258, 0
      %v3296 = vsel %vm573, %v3259, 0
      %v3299 = vsel %vm573, %v3260, 0
      %v3302 = vsel %vm573, %v3261, 0
      %v3305 = vsel %vm573, %v3262, 0
      %v3308 = vsel %vm573, %v3263, 0
      %v3311 = vsel %vm573, %v3264, 0
      %v3314 = vsel %vm573, %v3265, 0
      %v3317 = vsel %vm573, %v3266, 0
      %v3320 = vsel %vm573, %v3267, 0
      %v3323 = vsel %vm573, %v3268, 0
      %v3326 = vsel %vm573, %v3269, 0
      %v3329 = vsel %vm573, %v3270, 0
      %v3332 = vsel %vm573, %v3271, 0
      %v3335 = vsel %vm573, %v3272, 0
      %v3338 = vsel %vm573, %v3273, 0
      %v3341 = vsel %vm573, %v3274, 0
      %v3344 = vsel %vm573, %v3275, 0
      %v3347 = vsel %vm573, %v3276, 0
      %v3350 = vsel %vm573, %v3277, 0
      %v3353 = vsel %vm573, %v3278, 0
      %v3356 = vsel %vm573, %v3279, 0
      %v3359 = vsel %vm573, %v3280, 0
      %v3362 = vsel %vm573, %v3281, 0
      %v3365 = vsel %vm573, %v3282, 0
      %v3368 = vsel %vm573, %v3283, 0
      %v3371 = vsel %vm573, %v3284, 0
      %v3374 = vsel %vm573, %v3285, 0
      %v3377 = vsel %vm573, %v3286, 0
      %v3380 = vsel %vm573, %v3287, 0
      %v3383 = vsel %vm573, %v3288, 0
      %v3386 = vsel %vm573, %v3289, 0
      %3388 = vmatprep.subr.mxu0 0.0
      %3389 = vmatpush1.msra.mxu0 0.0
      %3390 = vmatprep.subr.mxu0 0.0
      %3391 = vmatpush1.msra.mxu0 0.0
      %3392 = vmatprep.subr.mxu0 0.0
      %3393 = vmatpush1.msra.mxu0 0.0
      %3394 = vmatprep.subr.mxu0 0.0
      %3395 = vmatpush1.msra.mxu0 0.0
      %3396 = vmatprep.subr.mxu0 0.0
      %3397 = vmatpush1.msra.mxu0 0.0
      %3398 = vmatprep.subr.mxu0 0.0
      %3399 = vmatpush1.msra.mxu0 0.0
      %3400 = vmatprep.subr.mxu0 0.0
      %3401 = vmatpush1.msra.mxu0 0.0
      %3402 = vmatprep.subr.mxu0 0.0
      %3403 = vmatpush1.msra.mxu0 0.0
      %3404 = vmatprep.subr.mxu0 0.0
      %3405 = vmatpush1.msra.mxu0 0.0
      %3406 = vmatprep.subr.mxu0 0.0
      %3407 = vmatpush1.msra.mxu0 0.0
      %3408 = vmatprep.subr.mxu0 0.0
      %3409 = vmatpush1.msra.mxu0 0.0
      %3410 = vmatprep.subr.mxu0 0.0
      %3411 = vmatpush1.msra.mxu0 0.0
      %3412 = vmatprep.subr.mxu0 0.0
      %3413 = vmatpush1.msra.mxu0 0.0
      %3414 = vmatprep.subr.mxu0 0.0
      %3415 = vmatpush1.msra.mxu0 0.0
      %3416 = vmatprep.subr.mxu0 0.0
      %3417 = vmatpush1.msra.mxu0 %v3291
      %3418 = vmatprep.subr.mxu0 0.0
      %3419 = vmatpush1.msra.mxu0 %v3290
      %3420 = vmatprep.subr.mxu0 0.0
      %3421 = vmatpush2.msra.mxu0 0.0
      %3422 = vmatprep.subr.mxu0 0.0
      %3423 = vmatpush2.msra.mxu0 0.0
      %3424 = vmatprep.subr.mxu0 0.0
      %3425 = vmatpush2.msra.mxu0 0.0
      %3426 = vmatprep.subr.mxu0 0.0
      %3427 = vmatpush2.msra.mxu0 0.0
      %3428 = vmatprep.subr.mxu0 0.0
      %3429 = vmatpush2.msra.mxu0 0.0
      %3430 = vmatprep.subr.mxu0 0.0
      %3431 = vmatpush2.msra.mxu0 0.0
      %3432 = vmatprep.subr.mxu0 0.0
      %3433 = vmatpush2.msra.mxu0 0.0
      %3434 = vmatprep.subr.mxu0 0.0
      %3435 = vmatpush2.msra.mxu0 0.0
      %3436 = vmatprep.subr.mxu0 0.0
      %3437 = vmatpush2.msra.mxu0 0.0
      %3438 = vmatprep.subr.mxu0 0.0
      %3439 = vmatpush2.msra.mxu0 0.0
      %3440 = vmatprep.subr.mxu0 0.0
      %3441 = vmatpush2.msra.mxu0 0.0
      %3442 = vmatprep.subr.mxu0 0.0
      %3443 = vmatpush2.msra.mxu0 0.0
      %3444 = vmatprep.subr.mxu0 0.0
      %3445 = vmatpush2.msra.mxu0 0.0
      %3446 = vmatprep.subr.mxu0 0.0
      %3447 = vmatpush2.msra.mxu0 0.0
      %3448 = vmatprep.subr.mxu0 0.0
      %3449 = vmatpush2.msra.mxu0 0.0
      %3450 = vmatprep.subr.mxu0 0.0
      %3451 = vmatpush2.msra.mxu0 0.0
      %3452 = vmatprep.mubr.f32.mxu0 0.0
      %3453 = vmatmul.mubr.f32.gmra.mxu0 %v3293
      %v3454 = vpop.f32.mrf.mxu0
      %v3455 = vadd.f32 0.0, %v3454
      %v3456 = vpop.f32.mrf.mxu0
      %3457 = vmatprep.mubr.f32.mxu0 0.0
      %3458 = vmatmul.mubr.f32.gmra.mxu0 %v3296
      %v3459 = vpop.f32.mrf.mxu0
      %v3460 = vadd.f32 0.0, %v3459
      %v3461 = vpop.f32.mrf.mxu0
      %3462 = vmatprep.mubr.f32.mxu0 0.0
      %3463 = vmatmul.mubr.f32.gmra.mxu0 %v3299
      %v3464 = vpop.f32.mrf.mxu0
      %v3465 = vadd.f32 0.0, %v3464
      %v3466 = vpop.f32.mrf.mxu0
      %3467 = vmatprep.mubr.f32.mxu0 0.0
      %3468 = vmatmul.mubr.f32.gmra.mxu0 %v3302
      %v3469 = vpop.f32.mrf.mxu0
      %v3470 = vadd.f32 0.0, %v3469
      %v3471 = vpop.f32.mrf.mxu0
      %3472 = vmatprep.mubr.f32.mxu0 0.0
      %3473 = vmatmul.mubr.f32.gmra.mxu0 %v3305
      %v3474 = vpop.f32.mrf.mxu0
      %v3475 = vadd.f32 0.0, %v3474
      %v3476 = vpop.f32.mrf.mxu0
      %3477 = vmatprep.mubr.f32.mxu0 0.0
      %3478 = vmatmul.mubr.f32.gmra.mxu0 %v3308
      %v3479 = vpop.f32.mrf.mxu0
      %v3480 = vadd.f32 0.0, %v3479
      %v3481 = vpop.f32.mrf.mxu0
      %3482 = vmatprep.mubr.f32.mxu0 0.0
      %3483 = vmatmul.mubr.f32.gmra.mxu0 %v3311
      %v3484 = vpop.f32.mrf.mxu0
      %v3485 = vadd.f32 0.0, %v3484
      %v3486 = vpop.f32.mrf.mxu0
      %3487 = vmatprep.mubr.f32.mxu0 0.0
      %3488 = vmatmul.mubr.f32.gmra.mxu0 %v3314
      %v3489 = vpop.f32.mrf.mxu0
      %v3490 = vadd.f32 0.0, %v3489
      %v3491 = vpop.f32.mrf.mxu0
      %3492 = vmatprep.mubr.f32.mxu0 0.0
      %3493 = vmatmul.mubr.f32.gmra.mxu0 %v3317
      %v3494 = vpop.f32.mrf.mxu0
      %v3495 = vadd.f32 0.0, %v3494
      %v3496 = vpop.f32.mrf.mxu0
      %3497 = vmatprep.mubr.f32.mxu0 0.0
      %3498 = vmatmul.mubr.f32.gmra.mxu0 %v3320
      %v3499 = vpop.f32.mrf.mxu0
      %v3500 = vadd.f32 0.0, %v3499
      %v3501 = vpop.f32.mrf.mxu0
      %3502 = vmatprep.mubr.f32.mxu0 0.0
      %3503 = vmatmul.mubr.f32.gmra.mxu0 %v3323
      %v3504 = vpop.f32.mrf.mxu0
      %v3505 = vadd.f32 0.0, %v3504
      %v3506 = vpop.f32.mrf.mxu0
      %3507 = vmatprep.mubr.f32.mxu0 0.0
      %3508 = vmatmul.mubr.f32.gmra.mxu0 %v3326
      %v3509 = vpop.f32.mrf.mxu0
      %v3510 = vadd.f32 0.0, %v3509
      %v3511 = vpop.f32.mrf.mxu0
      %3512 = vmatprep.mubr.f32.mxu0 0.0
      %3513 = vmatmul.mubr.f32.gmra.mxu0 %v3329
      %v3514 = vpop.f32.mrf.mxu0
      %v3515 = vadd.f32 0.0, %v3514
      %v3516 = vpop.f32.mrf.mxu0
      %3517 = vmatprep.mubr.f32.mxu0 0.0
      %3518 = vmatmul.mubr.f32.gmra.mxu0 %v3332
      %v3519 = vpop.f32.mrf.mxu0
      %v3520 = vadd.f32 0.0, %v3519
      %v3521 = vpop.f32.mrf.mxu0
      %3522 = vmatprep.mubr.f32.mxu0 0.0
      %3523 = vmatmul.mubr.f32.gmra.mxu0 %v3335
      %v3524 = vpop.f32.mrf.mxu0
      %v3525 = vadd.f32 0.0, %v3524
      %v3526 = vpop.f32.mrf.mxu0
      %3527 = vmatprep.mubr.f32.mxu0 0.0
      %3528 = vmatmul.mubr.f32.gmra.mxu0 %v3338
      %v3529 = vpop.f32.mrf.mxu0
      %v3530 = vadd.f32 0.0, %v3529
      %v3531 = vpop.f32.mrf.mxu0
      %3532 = vmatprep.mubr.f32.mxu0 0.0
      %3533 = vmatmul.mubr.f32.gmra.mxu0 %v3341
      %v3534 = vpop.f32.mrf.mxu0
      %v3535 = vadd.f32 0.0, %v3534
      %v3536 = vpop.f32.mrf.mxu0
      %3537 = vmatprep.mubr.f32.mxu0 0.0
      %3538 = vmatmul.mubr.f32.gmra.mxu0 %v3344
      %v3539 = vpop.f32.mrf.mxu0
      %v3540 = vadd.f32 0.0, %v3539
      %v3541 = vpop.f32.mrf.mxu0
      %3542 = vmatprep.mubr.f32.mxu0 0.0
      %3543 = vmatmul.mubr.f32.gmra.mxu0 %v3347
      %v3544 = vpop.f32.mrf.mxu0
      %v3545 = vadd.f32 0.0, %v3544
      %v3546 = vpop.f32.mrf.mxu0
      %3547 = vmatprep.mubr.f32.mxu0 0.0
      %3548 = vmatmul.mubr.f32.gmra.mxu0 %v3350
      %v3549 = vpop.f32.mrf.mxu0
      %v3550 = vadd.f32 0.0, %v3549
      %v3551 = vpop.f32.mrf.mxu0
      %3552 = vmatprep.mubr.f32.mxu0 0.0
      %3553 = vmatmul.mubr.f32.gmra.mxu0 %v3353
      %v3554 = vpop.f32.mrf.mxu0
      %v3555 = vadd.f32 0.0, %v3554
      %v3556 = vpop.f32.mrf.mxu0
      %3557 = vmatprep.mubr.f32.mxu0 0.0
      %3558 = vmatmul.mubr.f32.gmra.mxu0 %v3356
      %v3559 = vpop.f32.mrf.mxu0
      %v3560 = vadd.f32 0.0, %v3559
      %v3561 = vpop.f32.mrf.mxu0
      %3562 = vmatprep.mubr.f32.mxu0 0.0
      %3563 = vmatmul.mubr.f32.gmra.mxu0 %v3359
      %v3564 = vpop.f32.mrf.mxu0
      %v3565 = vadd.f32 0.0, %v3564
      %v3566 = vpop.f32.mrf.mxu0
      %3567 = vmatprep.mubr.f32.mxu0 0.0
      %3568 = vmatmul.mubr.f32.gmra.mxu0 %v3362
      %v3569 = vpop.f32.mrf.mxu0
      %v3570 = vadd.f32 0.0, %v3569
      %v3571 = vpop.f32.mrf.mxu0
      %3572 = vmatprep.mubr.f32.mxu0 0.0
      %3573 = vmatmul.mubr.f32.gmra.mxu0 %v3365
      %v3574 = vpop.f32.mrf.mxu0
      %v3575 = vadd.f32 0.0, %v3574
      %v3576 = vpop.f32.mrf.mxu0
      %3577 = vmatprep.mubr.f32.mxu0 0.0
      %3578 = vmatmul.mubr.f32.gmra.mxu0 %v3368
      %v3579 = vpop.f32.mrf.mxu0
      %v3580 = vadd.f32 0.0, %v3579
      %v3581 = vpop.f32.mrf.mxu0
      %3582 = vmatprep.mubr.f32.mxu0 0.0
      %3583 = vmatmul.mubr.f32.gmra.mxu0 %v3371
      %v3584 = vpop.f32.mrf.mxu0
      %v3585 = vadd.f32 0.0, %v3584
      %v3586 = vpop.f32.mrf.mxu0
      %3587 = vmatprep.mubr.f32.mxu0 0.0
      %3588 = vmatmul.mubr.f32.gmra.mxu0 %v3374
      %v3589 = vpop.f32.mrf.mxu0
      %v3590 = vadd.f32 0.0, %v3589
      %v3591 = vpop.f32.mrf.mxu0
      %3592 = vmatprep.mubr.f32.mxu0 0.0
      %3593 = vmatmul.mubr.f32.gmra.mxu0 %v3377
      %v3594 = vpop.f32.mrf.mxu0
      %v3595 = vadd.f32 0.0, %v3594
      %v3596 = vpop.f32.mrf.mxu0
      %3597 = vmatprep.mubr.f32.mxu0 0.0
      %3598 = vmatmul.mubr.f32.gmra.mxu0 %v3380
      %v3599 = vpop.f32.mrf.mxu0
      %v3600 = vadd.f32 0.0, %v3599
      %v3601 = vpop.f32.mrf.mxu0
      %3602 = vmatprep.mubr.f32.mxu0 0.0
      %3603 = vmatmul.mubr.f32.gmra.mxu0 %v3383
      %v3604 = vpop.f32.mrf.mxu0
      %v3605 = vadd.f32 0.0, %v3604
      %v3606 = vpop.f32.mrf.mxu0
      %3607 = vmatprep.mubr.f32.mxu0 0.0
      %3608 = vmatmul.mubr.f32.gmra.mxu0 %v3386
      %v3609 = vpop.f32.mrf.mxu0
      %v3610 = vadd.f32 0.0, %v3609
      %v3611 = vpop.f32.mrf.mxu0
      %3612 = vdwg.mxu0
      %v3613 = vadd.f32 %v3226, %v3455
      %v3614 = vadd.f32 %v3227, %v3460
      %v3615 = vadd.f32 %v3228, %v3465
      %v3616 = vadd.f32 %v3229, %v3470
      %v3617 = vadd.f32 %v3230, %v3475
      %v3618 = vadd.f32 %v3231, %v3480
      %v3619 = vadd.f32 %v3232, %v3485
      %v3620 = vadd.f32 %v3233, %v3490
      %v3621 = vadd.f32 %v3234, %v3495
      %v3622 = vadd.f32 %v3235, %v3500
      %v3623 = vadd.f32 %v3236, %v3505
      %v3624 = vadd.f32 %v3237, %v3510
      %v3625 = vadd.f32 %v3238, %v3515
      %v3626 = vadd.f32 %v3239, %v3520
      %v3627 = vadd.f32 %v3240, %v3525
      %v3628 = vadd.f32 %v3241, %v3530
      %v3629 = vadd.f32 %v3242, %v3535
      %v3630 = vadd.f32 %v3243, %v3540
      %v3631 = vadd.f32 %v3244, %v3545
      %v3632 = vadd.f32 %v3245, %v3550
      %v3633 = vadd.f32 %v3246, %v3555
      %v3634 = vadd.f32 %v3247, %v3560
      %v3635 = vadd.f32 %v3248, %v3565
      %v3636 = vadd.f32 %v3249, %v3570
      %v3637 = vadd.f32 %v3250, %v3575
      %v3638 = vadd.f32 %v3251, %v3580
      %v3639 = vadd.f32 %v3252, %v3585
      %v3640 = vadd.f32 %v3253, %v3590
      %v3641 = vadd.f32 %v3254, %v3595
      %v3642 = vadd.f32 %v3255, %v3600
      %v3643 = vadd.f32 %v3256, %v3605
      %v3644 = vadd.f32 %v3257, %v3610
      %v3645 = vld [vmem:[%s2870 + $0x2] sm:$0xff]
      %v3646 = vld [vmem:[%s2870 + $0xa] sm:$0xff]
      %v3647 = vld [vmem:[%s2870 + $0x1a] sm:$0xff]
      %v3648 = vld [vmem:[%s2870 + $0x22] sm:$0xff]
      %v3649 = vld [vmem:[%s2870 + $0x32] sm:$0xff]
      %v3650 = vld [vmem:[%s2870 + $0x3a] sm:$0xff]
      %v3651 = vld [vmem:[%s2870 + $0x4a] sm:$0xff]
      %v3652 = vld [vmem:[%s2870 + $0x52] sm:$0xff]
      %v3653 = vld [vmem:[%s2870 + $0x62] sm:$0xff]
      %v3654 = vld [vmem:[%s2870 + $0x6a] sm:$0xff]
      %v3655 = vld [vmem:[%s2870 + $0x7a] sm:$0xff]
      %v3656 = vld [vmem:[%s2870 + $0x82] sm:$0xff]
      %v3657 = vld [vmem:[%s2870 + $0x92] sm:$0xff]
      %v3658 = vld [vmem:[%s2870 + $0x9a] sm:$0xff]
      %v3659 = vld [vmem:[%s2870 + $0xaa] sm:$0xff]
      %v3660 = vld [vmem:[%s2870 + $0xb2] sm:$0xff]
      %v3661 = vld [vmem:[%s2870 + $0xc2] sm:$0xff]
      %v3662 = vld [vmem:[%s2870 + $0xca] sm:$0xff]
      %v3663 = vld [vmem:[%s2870 + $0xda] sm:$0xff]
      %v3664 = vld [vmem:[%s2870 + $0xe2] sm:$0xff]
      %v3665 = vld [vmem:[%s2870 + $0xf2] sm:$0xff]
      %v3666 = vld [vmem:[%s2870 + $0xfa] sm:$0xff]
      %v3667 = vld [vmem:[%s2870 + $0x10a] sm:$0xff]
      %v3668 = vld [vmem:[%s2870 + $0x112] sm:$0xff]
      %v3669 = vld [vmem:[%s2870 + $0x122] sm:$0xff]
      %v3670 = vld [vmem:[%s2870 + $0x12a] sm:$0xff]
      %v3671 = vld [vmem:[%s2870 + $0x13a] sm:$0xff]
      %v3672 = vld [vmem:[%s2870 + $0x142] sm:$0xff]
      %v3673 = vld [vmem:[%s2870 + $0x152] sm:$0xff]
      %v3674 = vld [vmem:[%s2870 + $0x15a] sm:$0xff]
      %v3675 = vld [vmem:[%s2870 + $0x16a] sm:$0xff]
      %v3676 = vld [vmem:[%s2870 + $0x172] sm:$0xff]
      %v3677 = vld [vmem:[%s3 + $0x80] sm:$0xff]
      %v3678 = vld [vmem:[%s3 + $0x88] sm:$0xff]
      %v3680 = vsel %vm573, %v3645, 0
      %v3683 = vsel %vm573, %v3646, 0
      %v3686 = vsel %vm573, %v3647, 0
      %v3689 = vsel %vm573, %v3648, 0
      %v3692 = vsel %vm573, %v3649, 0
      %v3695 = vsel %vm573, %v3650, 0
      %v3698 = vsel %vm573, %v3651, 0
      %v3701 = vsel %vm573, %v3652, 0
      %v3704 = vsel %vm573, %v3653, 0
      %v3707 = vsel %vm573, %v3654, 0
      %v3710 = vsel %vm573, %v3655, 0
      %v3713 = vsel %vm573, %v3656, 0
      %v3716 = vsel %vm573, %v3657, 0
      %v3719 = vsel %vm573, %v3658, 0
      %v3722 = vsel %vm573, %v3659, 0
      %v3725 = vsel %vm573, %v3660, 0
      %v3728 = vsel %vm573, %v3661, 0
      %v3731 = vsel %vm573, %v3662, 0
      %v3734 = vsel %vm573, %v3663, 0
      %v3737 = vsel %vm573, %v3664, 0
      %v3740 = vsel %vm573, %v3665, 0
      %v3743 = vsel %vm573, %v3666, 0
      %v3746 = vsel %vm573, %v3667, 0
      %v3749 = vsel %vm573, %v3668, 0
      %v3752 = vsel %vm573, %v3669, 0
      %v3755 = vsel %vm573, %v3670, 0
      %v3758 = vsel %vm573, %v3671, 0
      %v3761 = vsel %vm573, %v3672, 0
      %v3764 = vsel %vm573, %v3673, 0
      %v3767 = vsel %vm573, %v3674, 0
      %v3770 = vsel %vm573, %v3675, 0
      %v3773 = vsel %vm573, %v3676, 0
      %3775 = vmatprep.subr.mxu0 0.0
      %3776 = vmatpush1.msra.mxu0 0.0
      %3777 = vmatprep.subr.mxu0 0.0
      %3778 = vmatpush1.msra.mxu0 0.0
      %3779 = vmatprep.subr.mxu0 0.0
      %3780 = vmatpush1.msra.mxu0 0.0
      %3781 = vmatprep.subr.mxu0 0.0
      %3782 = vmatpush1.msra.mxu0 0.0
      %3783 = vmatprep.subr.mxu0 0.0
      %3784 = vmatpush1.msra.mxu0 0.0
      %3785 = vmatprep.subr.mxu0 0.0
      %3786 = vmatpush1.msra.mxu0 0.0
      %3787 = vmatprep.subr.mxu0 0.0
      %3788 = vmatpush1.msra.mxu0 0.0
      %3789 = vmatprep.subr.mxu0 0.0
      %3790 = vmatpush1.msra.mxu0 0.0
      %3791 = vmatprep.subr.mxu0 0.0
      %3792 = vmatpush1.msra.mxu0 0.0
      %3793 = vmatprep.subr.mxu0 0.0
      %3794 = vmatpush1.msra.mxu0 0.0
      %3795 = vmatprep.subr.mxu0 0.0
      %3796 = vmatpush1.msra.mxu0 0.0
      %3797 = vmatprep.subr.mxu0 0.0
      %3798 = vmatpush1.msra.mxu0 0.0
      %3799 = vmatprep.subr.mxu0 0.0
      %3800 = vmatpush1.msra.mxu0 0.0
      %3801 = vmatprep.subr.mxu0 0.0
      %3802 = vmatpush1.msra.mxu0 0.0
      %3803 = vmatprep.subr.mxu0 0.0
      %3804 = vmatpush1.msra.mxu0 %v3678
      %3805 = vmatprep.subr.mxu0 0.0
      %3806 = vmatpush1.msra.mxu0 %v3677
      %3807 = vmatprep.subr.mxu0 0.0
      %3808 = vmatpush2.msra.mxu0 0.0
      %3809 = vmatprep.subr.mxu0 0.0
      %3810 = vmatpush2.msra.mxu0 0.0
      %3811 = vmatprep.subr.mxu0 0.0
      %3812 = vmatpush2.msra.mxu0 0.0
      %3813 = vmatprep.subr.mxu0 0.0
      %3814 = vmatpush2.msra.mxu0 0.0
      %3815 = vmatprep.subr.mxu0 0.0
      %3816 = vmatpush2.msra.mxu0 0.0
      %3817 = vmatprep.subr.mxu0 0.0
      %3818 = vmatpush2.msra.mxu0 0.0
      %3819 = vmatprep.subr.mxu0 0.0
      %3820 = vmatpush2.msra.mxu0 0.0
      %3821 = vmatprep.subr.mxu0 0.0
      %3822 = vmatpush2.msra.mxu0 0.0
      %3823 = vmatprep.subr.mxu0 0.0
      %3824 = vmatpush2.msra.mxu0 0.0
      %3825 = vmatprep.subr.mxu0 0.0
      %3826 = vmatpush2.msra.mxu0 0.0
      %3827 = vmatprep.subr.mxu0 0.0
      %3828 = vmatpush2.msra.mxu0 0.0
      %3829 = vmatprep.subr.mxu0 0.0
      %3830 = vmatpush2.msra.mxu0 0.0
      %3831 = vmatprep.subr.mxu0 0.0
      %3832 = vmatpush2.msra.mxu0 0.0
      %3833 = vmatprep.subr.mxu0 0.0
      %3834 = vmatpush2.msra.mxu0 0.0
      %3835 = vmatprep.subr.mxu0 0.0
      %3836 = vmatpush2.msra.mxu0 0.0
      %3837 = vmatprep.subr.mxu0 0.0
      %3838 = vmatpush2.msra.mxu0 0.0
      %3839 = vmatprep.mubr.f32.mxu0 0.0
      %3840 = vmatmul.mubr.f32.gmra.mxu0 %v3680
      %v3841 = vpop.f32.mrf.mxu0
      %v3842 = vadd.f32 0.0, %v3841
      %v3843 = vpop.f32.mrf.mxu0
      %3844 = vmatprep.mubr.f32.mxu0 0.0
      %3845 = vmatmul.mubr.f32.gmra.mxu0 %v3683
      %v3846 = vpop.f32.mrf.mxu0
      %v3847 = vadd.f32 0.0, %v3846
      %v3848 = vpop.f32.mrf.mxu0
      %3849 = vmatprep.mubr.f32.mxu0 0.0
      %3850 = vmatmul.mubr.f32.gmra.mxu0 %v3686
      %v3851 = vpop.f32.mrf.mxu0
      %v3852 = vadd.f32 0.0, %v3851
      %v3853 = vpop.f32.mrf.mxu0
      %3854 = vmatprep.mubr.f32.mxu0 0.0
      %3855 = vmatmul.mubr.f32.gmra.mxu0 %v3689
      %v3856 = vpop.f32.mrf.mxu0
      %v3857 = vadd.f32 0.0, %v3856
      %v3858 = vpop.f32.mrf.mxu0
      %3859 = vmatprep.mubr.f32.mxu0 0.0
      %3860 = vmatmul.mubr.f32.gmra.mxu0 %v3692
      %v3861 = vpop.f32.mrf.mxu0
      %v3862 = vadd.f32 0.0, %v3861
      %v3863 = vpop.f32.mrf.mxu0
      %3864 = vmatprep.mubr.f32.mxu0 0.0
      %3865 = vmatmul.mubr.f32.gmra.mxu0 %v3695
      %v3866 = vpop.f32.mrf.mxu0
      %v3867 = vadd.f32 0.0, %v3866
      %v3868 = vpop.f32.mrf.mxu0
      %3869 = vmatprep.mubr.f32.mxu0 0.0
      %3870 = vmatmul.mubr.f32.gmra.mxu0 %v3698
      %v3871 = vpop.f32.mrf.mxu0
      %v3872 = vadd.f32 0.0, %v3871
      %v3873 = vpop.f32.mrf.mxu0
      %3874 = vmatprep.mubr.f32.mxu0 0.0
      %3875 = vmatmul.mubr.f32.gmra.mxu0 %v3701
      %v3876 = vpop.f32.mrf.mxu0
      %v3877 = vadd.f32 0.0, %v3876
      %v3878 = vpop.f32.mrf.mxu0
      %3879 = vmatprep.mubr.f32.mxu0 0.0
      %3880 = vmatmul.mubr.f32.gmra.mxu0 %v3704
      %v3881 = vpop.f32.mrf.mxu0
      %v3882 = vadd.f32 0.0, %v3881
      %v3883 = vpop.f32.mrf.mxu0
      %3884 = vmatprep.mubr.f32.mxu0 0.0
      %3885 = vmatmul.mubr.f32.gmra.mxu0 %v3707
      %v3886 = vpop.f32.mrf.mxu0
      %v3887 = vadd.f32 0.0, %v3886
      %v3888 = vpop.f32.mrf.mxu0
      %3889 = vmatprep.mubr.f32.mxu0 0.0
      %3890 = vmatmul.mubr.f32.gmra.mxu0 %v3710
      %v3891 = vpop.f32.mrf.mxu0
      %v3892 = vadd.f32 0.0, %v3891
      %v3893 = vpop.f32.mrf.mxu0
      %3894 = vmatprep.mubr.f32.mxu0 0.0
      %3895 = vmatmul.mubr.f32.gmra.mxu0 %v3713
      %v3896 = vpop.f32.mrf.mxu0
      %v3897 = vadd.f32 0.0, %v3896
      %v3898 = vpop.f32.mrf.mxu0
      %3899 = vmatprep.mubr.f32.mxu0 0.0
      %3900 = vmatmul.mubr.f32.gmra.mxu0 %v3716
      %v3901 = vpop.f32.mrf.mxu0
      %v3902 = vadd.f32 0.0, %v3901
      %v3903 = vpop.f32.mrf.mxu0
      %3904 = vmatprep.mubr.f32.mxu0 0.0
      %3905 = vmatmul.mubr.f32.gmra.mxu0 %v3719
      %v3906 = vpop.f32.mrf.mxu0
      %v3907 = vadd.f32 0.0, %v3906
      %v3908 = vpop.f32.mrf.mxu0
      %3909 = vmatprep.mubr.f32.mxu0 0.0
      %3910 = vmatmul.mubr.f32.gmra.mxu0 %v3722
      %v3911 = vpop.f32.mrf.mxu0
      %v3912 = vadd.f32 0.0, %v3911
      %v3913 = vpop.f32.mrf.mxu0
      %3914 = vmatprep.mubr.f32.mxu0 0.0
      %3915 = vmatmul.mubr.f32.gmra.mxu0 %v3725
      %v3916 = vpop.f32.mrf.mxu0
      %v3917 = vadd.f32 0.0, %v3916
      %v3918 = vpop.f32.mrf.mxu0
      %3919 = vmatprep.mubr.f32.mxu0 0.0
      %3920 = vmatmul.mubr.f32.gmra.mxu0 %v3728
      %v3921 = vpop.f32.mrf.mxu0
      %v3922 = vadd.f32 0.0, %v3921
      %v3923 = vpop.f32.mrf.mxu0
      %3924 = vmatprep.mubr.f32.mxu0 0.0
      %3925 = vmatmul.mubr.f32.gmra.mxu0 %v3731
      %v3926 = vpop.f32.mrf.mxu0
      %v3927 = vadd.f32 0.0, %v3926
      %v3928 = vpop.f32.mrf.mxu0
      %3929 = vmatprep.mubr.f32.mxu0 0.0
      %3930 = vmatmul.mubr.f32.gmra.mxu0 %v3734
      %v3931 = vpop.f32.mrf.mxu0
      %v3932 = vadd.f32 0.0, %v3931
      %v3933 = vpop.f32.mrf.mxu0
      %3934 = vmatprep.mubr.f32.mxu0 0.0
      %3935 = vmatmul.mubr.f32.gmra.mxu0 %v3737
      %v3936 = vpop.f32.mrf.mxu0
      %v3937 = vadd.f32 0.0, %v3936
      %v3938 = vpop.f32.mrf.mxu0
      %3939 = vmatprep.mubr.f32.mxu0 0.0
      %3940 = vmatmul.mubr.f32.gmra.mxu0 %v3740
      %v3941 = vpop.f32.mrf.mxu0
      %v3942 = vadd.f32 0.0, %v3941
      %v3943 = vpop.f32.mrf.mxu0
      %3944 = vmatprep.mubr.f32.mxu0 0.0
      %3945 = vmatmul.mubr.f32.gmra.mxu0 %v3743
      %v3946 = vpop.f32.mrf.mxu0
      %v3947 = vadd.f32 0.0, %v3946
      %v3948 = vpop.f32.mrf.mxu0
      %3949 = vmatprep.mubr.f32.mxu0 0.0
      %3950 = vmatmul.mubr.f32.gmra.mxu0 %v3746
      %v3951 = vpop.f32.mrf.mxu0
      %v3952 = vadd.f32 0.0, %v3951
      %v3953 = vpop.f32.mrf.mxu0
      %3954 = vmatprep.mubr.f32.mxu0 0.0
      %3955 = vmatmul.mubr.f32.gmra.mxu0 %v3749
      %v3956 = vpop.f32.mrf.mxu0
      %v3957 = vadd.f32 0.0, %v3956
      %v3958 = vpop.f32.mrf.mxu0
      %3959 = vmatprep.mubr.f32.mxu0 0.0
      %3960 = vmatmul.mubr.f32.gmra.mxu0 %v3752
      %v3961 = vpop.f32.mrf.mxu0
      %v3962 = vadd.f32 0.0, %v3961
      %v3963 = vpop.f32.mrf.mxu0
      %3964 = vmatprep.mubr.f32.mxu0 0.0
      %3965 = vmatmul.mubr.f32.gmra.mxu0 %v3755
      %v3966 = vpop.f32.mrf.mxu0
      %v3967 = vadd.f32 0.0, %v3966
      %v3968 = vpop.f32.mrf.mxu0
      %3969 = vmatprep.mubr.f32.mxu0 0.0
      %3970 = vmatmul.mubr.f32.gmra.mxu0 %v3758
      %v3971 = vpop.f32.mrf.mxu0
      %v3972 = vadd.f32 0.0, %v3971
      %v3973 = vpop.f32.mrf.mxu0
      %3974 = vmatprep.mubr.f32.mxu0 0.0
      %3975 = vmatmul.mubr.f32.gmra.mxu0 %v3761
      %v3976 = vpop.f32.mrf.mxu0
      %v3977 = vadd.f32 0.0, %v3976
      %v3978 = vpop.f32.mrf.mxu0
      %3979 = vmatprep.mubr.f32.mxu0 0.0
      %3980 = vmatmul.mubr.f32.gmra.mxu0 %v3764
      %v3981 = vpop.f32.mrf.mxu0
      %v3982 = vadd.f32 0.0, %v3981
      %v3983 = vpop.f32.mrf.mxu0
      %3984 = vmatprep.mubr.f32.mxu0 0.0
      %3985 = vmatmul.mubr.f32.gmra.mxu0 %v3767
      %v3986 = vpop.f32.mrf.mxu0
      %v3987 = vadd.f32 0.0, %v3986
      %v3988 = vpop.f32.mrf.mxu0
      %3989 = vmatprep.mubr.f32.mxu0 0.0
      %3990 = vmatmul.mubr.f32.gmra.mxu0 %v3770
      %v3991 = vpop.f32.mrf.mxu0
      %v3992 = vadd.f32 0.0, %v3991
      %v3993 = vpop.f32.mrf.mxu0
      %3994 = vmatprep.mubr.f32.mxu0 0.0
      %3995 = vmatmul.mubr.f32.gmra.mxu0 %v3773
      %v3996 = vpop.f32.mrf.mxu0
      %v3997 = vadd.f32 0.0, %v3996
      %v3998 = vpop.f32.mrf.mxu0
      %3999 = vdwg.mxu0
      %v4000 = vadd.f32 %v3613, %v3842
      %v4001 = vadd.f32 %v3614, %v3847
      %v4002 = vadd.f32 %v3615, %v3852
      %v4003 = vadd.f32 %v3616, %v3857
      %v4004 = vadd.f32 %v3617, %v3862
      %v4005 = vadd.f32 %v3618, %v3867
      %v4006 = vadd.f32 %v3619, %v3872
      %v4007 = vadd.f32 %v3620, %v3877
      %v4008 = vadd.f32 %v3621, %v3882
      %v4009 = vadd.f32 %v3622, %v3887
      %v4010 = vadd.f32 %v3623, %v3892
      %v4011 = vadd.f32 %v3624, %v3897
      %v4012 = vadd.f32 %v3625, %v3902
      %v4013 = vadd.f32 %v3626, %v3907
      %v4014 = vadd.f32 %v3627, %v3912
      %v4015 = vadd.f32 %v3628, %v3917
      %v4016 = vadd.f32 %v3629, %v3922
      %v4017 = vadd.f32 %v3630, %v3927
      %v4018 = vadd.f32 %v3631, %v3932
      %v4019 = vadd.f32 %v3632, %v3937
      %v4020 = vadd.f32 %v3633, %v3942
      %v4021 = vadd.f32 %v3634, %v3947
      %v4022 = vadd.f32 %v3635, %v3952
      %v4023 = vadd.f32 %v3636, %v3957
      %v4024 = vadd.f32 %v3637, %v3962
      %v4025 = vadd.f32 %v3638, %v3967
      %v4026 = vadd.f32 %v3639, %v3972
      %v4027 = vadd.f32 %v3640, %v3977
      %v4028 = vadd.f32 %v3641, %v3982
      %v4029 = vadd.f32 %v3642, %v3987
      %v4030 = vadd.f32 %v3643, %v3992
      %v4031 = vadd.f32 %v3644, %v3997
      %vm4032 = vcmask 64512
      %4033 = vst.msk [vmem:[%s439] sm:$0xff] %vm4032, %v4000
      %4034 = vst.msk [vmem:[%s439 + $0x8] sm:$0xff] %vm4032, %v4001
      %4035 = vst.msk [vmem:[%s439 + $0x10] sm:$0xff] %vm4032, %v4002
      %4036 = vst.msk [vmem:[%s439 + $0x18] sm:$0xff] %vm4032, %v4003
      %4037 = vst.msk [vmem:[%s439 + $0x20] sm:$0xff] %vm4032, %v4004
      %4038 = vst.msk [vmem:[%s439 + $0x28] sm:$0xff] %vm4032, %v4005
      %4039 = vst.msk [vmem:[%s439 + $0x30] sm:$0xff] %vm4032, %v4006
      %4040 = vst.msk [vmem:[%s439 + $0x38] sm:$0xff] %vm4032, %v4007
      %4041 = vst.msk [vmem:[%s439 + $0x40] sm:$0xff] %vm4032, %v4008
      %4042 = vst.msk [vmem:[%s439 + $0x48] sm:$0xff] %vm4032, %v4009
      %4043 = vst.msk [vmem:[%s439 + $0x50] sm:$0xff] %vm4032, %v4010
      %4044 = vst.msk [vmem:[%s439 + $0x58] sm:$0xff] %vm4032, %v4011
      %4045 = vst.msk [vmem:[%s439 + $0x60] sm:$0xff] %vm4032, %v4012
      %4046 = vst.msk [vmem:[%s439 + $0x68] sm:$0xff] %vm4032, %v4013
      %4047 = vst.msk [vmem:[%s439 + $0x70] sm:$0xff] %vm4032, %v4014
      %4048 = vst.msk [vmem:[%s439 + $0x78] sm:$0xff] %vm4032, %v4015
      %4049 = vst.msk [vmem:[%s439 + $0x80] sm:$0xff] %vm4032, %v4016
      %4050 = vst.msk [vmem:[%s439 + $0x88] sm:$0xff] %vm4032, %v4017
      %4051 = vst.msk [vmem:[%s439 + $0x90] sm:$0xff] %vm4032, %v4018
      %4052 = vst.msk [vmem:[%s439 + $0x98] sm:$0xff] %vm4032, %v4019
      %4053 = vst.msk [vmem:[%s439 + $0xa0] sm:$0xff] %vm4032, %v4020
      %4054 = vst.msk [vmem:[%s439 + $0xa8] sm:$0xff] %vm4032, %v4021
      %4055 = vst.msk [vmem:[%s439 + $0xb0] sm:$0xff] %vm4032, %v4022
      %4056 = vst.msk [vmem:[%s439 + $0xb8] sm:$0xff] %vm4032, %v4023
      %4057 = vst.msk [vmem:[%s439 + $0xc0] sm:$0xff] %vm4032, %v4024
      %4058 = vst.msk [vmem:[%s439 + $0xc8] sm:$0xff] %vm4032, %v4025
      %4059 = vst.msk [vmem:[%s439 + $0xd0] sm:$0xff] %vm4032, %v4026
      %4060 = vst.msk [vmem:[%s439 + $0xd8] sm:$0xff] %vm4032, %v4027
      %4061 = vst.msk [vmem:[%s439 + $0xe0] sm:$0xff] %vm4032, %v4028
      %4062 = vst.msk [vmem:[%s439 + $0xe8] sm:$0xff] %vm4032, %v4029
      %4063 = vst.msk [vmem:[%s439 + $0xf0] sm:$0xff] %vm4032, %v4030
      %4064 = vst.msk [vmem:[%s439 + $0xf8] sm:$0xff] %vm4032, %v4031
      %v4065 = vsel %vm4032, %v4000, 0.0
      %v4066 = vsel %vm4032, %v4001, 0.0
      %v4067 = vadd.f32 %v4065, %v4066
      %v4068 = vsel %vm4032, %v4002, 0.0
      %v4069 = vadd.f32 %v4067, %v4068
      %v4070 = vsel %vm4032, %v4003, 0.0
      %v4071 = vadd.f32 %v4069, %v4070
      %v4072 = vsel %vm4032, %v4004, 0.0
      %v4073 = vadd.f32 %v4071, %v4072
      %v4074 = vsel %vm4032, %v4005, 0.0
      %v4075 = vadd.f32 %v4073, %v4074
      %v4076 = vsel %vm4032, %v4006, 0.0
      %v4077 = vadd.f32 %v4075, %v4076
      %v4078 = vsel %vm4032, %v4007, 0.0
      %v4079 = vadd.f32 %v4077, %v4078
      %v4080 = vsel %vm4032, %v4008, 0.0
      %v4081 = vadd.f32 %v4079, %v4080
      %v4082 = vsel %vm4032, %v4009, 0.0
      %v4083 = vadd.f32 %v4081, %v4082
      %v4084 = vsel %vm4032, %v4010, 0.0
      %v4085 = vadd.f32 %v4083, %v4084
      %v4086 = vsel %vm4032, %v4011, 0.0
      %v4087 = vadd.f32 %v4085, %v4086
      %v4088 = vsel %vm4032, %v4012, 0.0
      %v4089 = vadd.f32 %v4087, %v4088
      %v4090 = vsel %vm4032, %v4013, 0.0
      %v4091 = vadd.f32 %v4089, %v4090
      %v4092 = vsel %vm4032, %v4014, 0.0
      %v4093 = vadd.f32 %v4091, %v4092
      %v4094 = vsel %vm4032, %v4015, 0.0
      %v4095 = vadd.f32 %v4093, %v4094
      %v4096 = vsel %vm4032, %v4016, 0.0
      %v4097 = vadd.f32 %v4095, %v4096
      %v4098 = vsel %vm4032, %v4017, 0.0
      %v4099 = vadd.f32 %v4097, %v4098
      %v4100 = vsel %vm4032, %v4018, 0.0
      %v4101 = vadd.f32 %v4099, %v4100
      %v4102 = vsel %vm4032, %v4019, 0.0
      %v4103 = vadd.f32 %v4101, %v4102
      %v4104 = vsel %vm4032, %v4020, 0.0
      %v4105 = vadd.f32 %v4103, %v4104
      %v4106 = vsel %vm4032, %v4021, 0.0
      %v4107 = vadd.f32 %v4105, %v4106
      %v4108 = vsel %vm4032, %v4022, 0.0
      %v4109 = vadd.f32 %v4107, %v4108
      %v4110 = vsel %vm4032, %v4023, 0.0
      %v4111 = vadd.f32 %v4109, %v4110
      %v4112 = vsel %vm4032, %v4024, 0.0
      %v4113 = vadd.f32 %v4111, %v4112
      %v4114 = vsel %vm4032, %v4025, 0.0
      %v4115 = vadd.f32 %v4113, %v4114
      %v4116 = vsel %vm4032, %v4026, 0.0
      %v4117 = vadd.f32 %v4115, %v4116
      %v4118 = vsel %vm4032, %v4027, 0.0
      %v4119 = vadd.f32 %v4117, %v4118
      %v4120 = vsel %vm4032, %v4028, 0.0
      %v4121 = vadd.f32 %v4119, %v4120
      %v4122 = vsel %vm4032, %v4029, 0.0
      %v4123 = vadd.f32 %v4121, %v4122
      %v4124 = vsel %vm4032, %v4030, 0.0
      %v4125 = vadd.f32 %v4123, %v4124
      %v4126 = vsel %vm4032, %v4031, 0.0
      %v4127 = vadd.f32 %v4125, %v4126
      %v4128 = vrot.slane %v4127, 4
      %v4129 = vadd.f32 %v4127, %v4128
      %v4130 = vrot.slane %v4129, 2
      %v4131 = vadd.f32 %v4129, %v4130
      %v4132 = vrot.slane %v4131, 1
      %v4133 = vadd.f32 %v4131, %v4132
      %vm4134 = vcmask 57344
      %4135 = vst.msk [vmem:[%s446] sm:$0x1] %vm4134, %v4133
      %v4136 = vmul.f32 %v4000, %v4000
      %v4137 = vmul.f32 %v4001, %v4001
      %v4138 = vmul.f32 %v4002, %v4002
      %v4139 = vmul.f32 %v4003, %v4003
      %v4140 = vmul.f32 %v4004, %v4004
      %v4141 = vmul.f32 %v4005, %v4005
      %v4142 = vmul.f32 %v4006, %v4006
      %v4143 = vmul.f32 %v4007, %v4007
      %v4144 = vmul.f32 %v4008, %v4008
      %v4145 = vmul.f32 %v4009, %v4009
      %v4146 = vmul.f32 %v4010, %v4010
      %v4147 = vmul.f32 %v4011, %v4011
      %v4148 = vmul.f32 %v4012, %v4012
      %v4149 = vmul.f32 %v4013, %v4013
      %v4150 = vmul.f32 %v4014, %v4014
      %v4151 = vmul.f32 %v4015, %v4015
      %v4152 = vmul.f32 %v4016, %v4016
      %v4153 = vmul.f32 %v4017, %v4017
      %v4154 = vmul.f32 %v4018, %v4018
      %v4155 = vmul.f32 %v4019, %v4019
      %v4156 = vmul.f32 %v4020, %v4020
      %v4157 = vmul.f32 %v4021, %v4021
      %v4158 = vmul.f32 %v4022, %v4022
      %v4159 = vmul.f32 %v4023, %v4023
      %v4160 = vmul.f32 %v4024, %v4024
      %v4161 = vmul.f32 %v4025, %v4025
      %v4162 = vmul.f32 %v4026, %v4026
      %v4163 = vmul.f32 %v4027, %v4027
      %v4164 = vmul.f32 %v4028, %v4028
      %v4165 = vmul.f32 %v4029, %v4029
      %v4166 = vmul.f32 %v4030, %v4030
      %v4167 = vmul.f32 %v4031, %v4031
      %v4168 = vsel %vm4032, %v4136, 0.0
      %v4169 = vsel %vm4032, %v4137, 0.0
      %v4170 = vadd.f32 %v4168, %v4169
      %v4171 = vsel %vm4032, %v4138, 0.0
      %v4172 = vadd.f32 %v4170, %v4171
      %v4173 = vsel %vm4032, %v4139, 0.0
      %v4174 = vadd.f32 %v4172, %v4173
      %v4175 = vsel %vm4032, %v4140, 0.0
      %v4176 = vadd.f32 %v4174, %v4175
      %v4177 = vsel %vm4032, %v4141, 0.0
      %v4178 = vadd.f32 %v4176, %v4177
      %v4179 = vsel %vm4032, %v4142, 0.0
      %v4180 = vadd.f32 %v4178, %v4179
      %v4181 = vsel %vm4032, %v4143, 0.0
      %v4182 = vadd.f32 %v4180, %v4181
      %v4183 = vsel %vm4032, %v4144, 0.0
      %v4184 = vadd.f32 %v4182, %v4183
      %v4185 = vsel %vm4032, %v4145, 0.0
      %v4186 = vadd.f32 %v4184, %v4185
      %v4187 = vsel %vm4032, %v4146, 0.0
      %v4188 = vadd.f32 %v4186, %v4187
      %v4189 = vsel %vm4032, %v4147, 0.0
      %v4190 = vadd.f32 %v4188, %v4189
      %v4191 = vsel %vm4032, %v4148, 0.0
      %v4192 = vadd.f32 %v4190, %v4191
      %v4193 = vsel %vm4032, %v4149, 0.0
      %v4194 = vadd.f32 %v4192, %v4193
      %v4195 = vsel %vm4032, %v4150, 0.0
      %v4196 = vadd.f32 %v4194, %v4195
      %v4197 = vsel %vm4032, %v4151, 0.0
      %v4198 = vadd.f32 %v4196, %v4197
      %v4199 = vsel %vm4032, %v4152, 0.0
      %v4200 = vadd.f32 %v4198, %v4199
      %v4201 = vsel %vm4032, %v4153, 0.0
      %v4202 = vadd.f32 %v4200, %v4201
      %v4203 = vsel %vm4032, %v4154, 0.0
      %v4204 = vadd.f32 %v4202, %v4203
      %v4205 = vsel %vm4032, %v4155, 0.0
      %v4206 = vadd.f32 %v4204, %v4205
      %v4207 = vsel %vm4032, %v4156, 0.0
      %v4208 = vadd.f32 %v4206, %v4207
      %v4209 = vsel %vm4032, %v4157, 0.0
      %v4210 = vadd.f32 %v4208, %v4209
      %v4211 = vsel %vm4032, %v4158, 0.0
      %v4212 = vadd.f32 %v4210, %v4211
      %v4213 = vsel %vm4032, %v4159, 0.0
      %v4214 = vadd.f32 %v4212, %v4213
      %v4215 = vsel %vm4032, %v4160, 0.0
      %v4216 = vadd.f32 %v4214, %v4215
      %v4217 = vsel %vm4032, %v4161, 0.0
      %v4218 = vadd.f32 %v4216, %v4217
      %v4219 = vsel %vm4032, %v4162, 0.0
      %v4220 = vadd.f32 %v4218, %v4219
      %v4221 = vsel %vm4032, %v4163, 0.0
      %v4222 = vadd.f32 %v4220, %v4221
      %v4223 = vsel %vm4032, %v4164, 0.0
      %v4224 = vadd.f32 %v4222, %v4223
      %v4225 = vsel %vm4032, %v4165, 0.0
      %v4226 = vadd.f32 %v4224, %v4225
      %v4227 = vsel %vm4032, %v4166, 0.0
      %v4228 = vadd.f32 %v4226, %v4227
      %v4229 = vsel %vm4032, %v4167, 0.0
      %v4230 = vadd.f32 %v4228, %v4229
      %v4231 = vrot.slane %v4230, 4
      %v4232 = vadd.f32 %v4230, %v4231
      %v4233 = vrot.slane %v4232, 2
      %v4234 = vadd.f32 %v4232, %v4233
      %v4235 = vrot.slane %v4234, 1
      %v4236 = vadd.f32 %v4234, %v4235
      %4237 = vst.msk [vmem:[%s452] sm:$0x1] %vm4134, %v4236
      %s4238 = smul.u32 16, %s23
      %p4239 = scmp.lt.s32.totalorder %s22, 1
      %s4240 = scalar_select %p4239, %s22, 1
      %p4241 = scmp.lt.s32.totalorder %s4238, 15
      %s4242 = scalar_select %p4241, %s4238, 15
      %s4243 = smul.addr %s4242, 2
      %s4244 = smul.addr %s4240, 32
      %s4245 = sadd.s32 %s4243, %s4244
      %s4246 = smul.addr %s4245, 8
      %s4247 = scalar_lea.vmem %s4, %s4246
      %p4248 = scmp.lt.s32.totalorder %s22, 1
      %s4249 = scalar_select %p4248, %s22, 1
      %p4250 = scmp.lt.s32.totalorder %s23, 0
      %s4251 = scalar_select %p4250, %s23, 0
      %s4252 = sadd.s32 %s4251, %s4249
      %s4253 = scalar_lea.vmem %s5, %s4252
      %p4254 = scmp.lt.s32.totalorder %s22, 1
      %s4255 = scalar_select %p4254, %s22, 1
      %p4256 = scmp.lt.s32.totalorder %s23, 0
      %s4257 = scalar_select %p4256, %s23, 0
      %s4258 = sadd.s32 %s4257, %s4255
      %s4259 = scalar_lea.vmem %s6, %s4258
      // Predicated region
      $region37: #{residual_conv_forward.2} parent=35 // pred_check
        %p4260 = pneg %p171
      $region38: #{residual_conv_forward.2} parent=35 // pred_check_branch
        %4262 = sbr.rel (%p4260) target = $region40
      $region39: #{residual_conv_forward.2} parent=35 // pred_region
        %s4263 = smul.u32 16, %s23
      $region40: #{residual_conv_forward.2} parent=35 // pred_fallthru
        _
      // Predicated region
      $region41: #{residual_conv_forward.2} parent=35 // pred_check
        %p4264 = pneg %p199
      $region42: #{residual_conv_forward.2} parent=35 // pred_check_branch
        %4266 = sbr.rel (%p4264) target = $region44
      $region43: #{residual_conv_forward.2} parent=35 // pred_region
        _
      $region44: #{residual_conv_forward.2} parent=35 // pred_fallthru
        _
      // Predicated region
      $region45: #{residual_conv_forward.2} parent=35 // pred_check
        %p4267 = pneg %p227
      $region46: #{residual_conv_forward.2} parent=35 // pred_check_branch
        %4269 = sbr.rel (%p4267) target = $region48
      $region47: #{residual_conv_forward.2} parent=35 // pred_region
        _
      $region48: #{residual_conv_forward.2} parent=35 // pred_fallthru
        _
    $region36: #{residual_conv_forward.2} parent=5 // pred_fallthru
      _
    %p4270 = scmp.le.s32.totalorder 2, %s13
    // Predicated region
    $region49: #{residual_conv_forward.2} parent=5 // pred_check
      %p4271 = pneg %p4270
    $region50: #{residual_conv_forward.2} parent=5 // pred_check_branch
      %4273 = sbr.rel (%p4271) target = $region52
    $region51: #{residual_conv_forward.2} parent=5 // pred_region
      %s4274 = ssub.s32 %s13, 2
      // Predicated region
      $region53: #{residual_conv_forward.2} parent=51 // pred_check
        %p4275 = pneg %p177
      $region54: #{residual_conv_forward.2} parent=51 // pred_check_branch
        %4277 = sbr.rel (%p4275) target = $region56
      $region55: #{residual_conv_forward.2} parent=51 // pred_region
        %s4278 = smul.u32 16, %s25
        %p4279 = scmp.lt.s32.totalorder %s24, 1
        %s4280 = scalar_select %p4279, %s24, 1
        %p4281 = scmp.lt.s32.totalorder %s4278, 15
        %s4282 = scalar_select %p4281, %s4278, 15
        %s4283 = smul.addr %s4282, 2
        %s4284 = smul.addr %s4280, 32
        %s4285 = sadd.s32 %s4283, %s4284
        %s4286 = smul.addr %s4285, 8
        %s4287 = scalar_lea.vmem %s4, %s4286
      $region56: #{residual_conv_forward.2} parent=51 // pred_fallthru
        _
      // Predicated region
      $region57: #{residual_conv_forward.2} parent=51 // pred_check
        %p4288 = pneg %p205
      $region58: #{residual_conv_forward.2} parent=51 // pred_check_branch
        %4290 = sbr.rel (%p4288) target = $region60
      $region59: #{residual_conv_forward.2} parent=51 // pred_region
        %p4291 = scmp.lt.s32.totalorder %s24, 1
        %s4292 = scalar_select %p4291, %s24, 1
        %p4293 = scmp.lt.s32.totalorder %s25, 0
        %s4294 = scalar_select %p4293, %s25, 0
        %s4295 = sadd.s32 %s4294, %s4292
        %s4296 = scalar_lea.vmem %s5, %s4295
      $region60: #{residual_conv_forward.2} parent=51 // pred_fallthru
        _
      // Predicated region
      $region61: #{residual_conv_forward.2} parent=51 // pred_check
        %p4297 = pneg %p233
      $region62: #{residual_conv_forward.2} parent=51 // pred_check_branch
        %4299 = sbr.rel (%p4297) target = $region64
      $region63: #{residual_conv_forward.2} parent=51 // pred_region
        %p4300 = scmp.lt.s32.totalorder %s24, 1
        %s4301 = scalar_select %p4300, %s24, 1
        %p4302 = scmp.lt.s32.totalorder %s25, 0
        %s4303 = scalar_select %p4302, %s25, 0
        %s4304 = sadd.s32 %s4303, %s4301
        %s4305 = scalar_lea.vmem %s6, %s4304
      $region64: #{residual_conv_forward.2} parent=51 // pred_fallthru
        _
    $region52: #{residual_conv_forward.2} parent=5 // pred_fallthru
      _
  $region6: #{residual_conv_forward.2} parent=0 // loop_footer
    %s17 = sadd.s32 1, %s13
  $region7: #{residual_conv_forward.2} parent=0 // loop_footer_branch
    %12 = sbr.rel target = $region3
  $region8: #{residual_conv_forward.2} parent=0 // loop_exit
    _

// kernel: residual_conv_forward.3
$region0: #{residual_conv_forward.3}
  #allocation0 [shape = 'u32[]', space=smem, size = 0x4, offset = 0x4, fixed_abs, tag = 'smem constant byte address 0x4 - core index']
  #allocation1 [shape = 'u32[144,128]{1,0:T(1,128)}', space=vmem, size = 0x12000, scoped, tag = 'internal scratch']
  #allocation2 [shape = 'f32[18,24,8]{2,1,0:T(8,128)}', space=vmem, size = 0x36000, scoped, tag = 'scratch operand']
  %s0 = inlined_call_operand.vmem [shape: f32[2,16,16,8], index: 0, kind: input, shape index: {}, may-alias: {0,1,2}]
  %s1 = inlined_call_operand.vmem [shape: f32[2,16,16,8], index: 1, kind: input, shape index: {}, may-alias: {0,1,2}]
  %s2 = inlined_call_operand.vmem [shape: f32[2,16,16,8], index: 2, kind: input, shape index: {}, may-alias: {0,1,2}]
  %s3 = inlined_call_operand.vmem [shape: f32[2,16,16,16], index: 3, kind: input, shape index: {}]
  %s4 = inlined_call_operand.vmem [shape: f32[72,16], index: 4, kind: input, shape index: {}]
  %s5 = inlined_call_operand.vmem [shape: f32[1,8], index: 5, kind: input, shape index: {}]
  %s6 = inlined_call_operand.vmem [shape: f32[1,8], index: 6, kind: input, shape index: {}]
  %s7 = inlined_call_operand.vmem [shape: f32[2,16,16,16], index: 7, kind: output, shape index: {}]
  %s8 = sld [smem:[#allocation0]]
  $region61: #{residual_conv_forward.3} parent=0
    _
  %s10 = ssub.s32 1, %s8
  %s11 = scalar_select 0, %s10, %s8
  loop: start=0, step=1, limit=4
  $region2: #{residual_conv_forward.3} parent=0 // loop_pre_header
    _
  $region3: #{residual_conv_forward.3} parent=0 // loop_header
    %s13 = sphi 0, %s17
    %p14 = scmp.ge.s32.totalorder %s13, 4
    %s20 = sphi 0, %s32
    %s21 = sphi 0, %s28
    %s22 = sphi 0, %s20
    %s23 = sphi 0, %s21
    %s24 = sphi 0, %s22
    %s25 = sphi 0, %s23
    %s37 = sphi 0, %s39
    %s40 = sphi 0, %s37
    %s41 = sphi 0, %s40
    %s57 = sphi 0, %s41
    %s73 = sphi 0, %s75
    %s76 = sphi 0, %s73
    %s77 = sphi 0, %s76
    %s93 = sphi 0, %s77
    %s109 = sphi 0, %s111
    %s112 = sphi 0, %s109
    %s113 = sphi 0, %s112
    %s129 = sphi 0, %s113
    %s137 = sphi 0, %s139
    %s140 = sphi 0, %s137
    %s141 = sphi 0, %s140
    %s157 = sphi 0, %s141
    %s161 = sphi 0, %s161
    %s163 = sphi 0, %s161
    %s164 = sphi 0, %s163
    %s178 = sphi 0, %s164
    %s182 = sphi 0, %s182
    %s184 = sphi 0, %s182
    %s185 = sphi 0, %s184
    %s199 = sphi 0, %s185
    %s203 = sphi 0, %s203
    %s205 = sphi 0, %s203
    %s206 = sphi 0, %s205
    %s220 = sphi 0, %s206
    %s228 = sphi 0, %s230
    %s231 = sphi 0, %s228
    %s232 = sphi 0, %s231
    %s248 = sphi 0, %s232
  $region4: #{residual_conv_forward.3} parent=0 // loop_header_branch
    %16 = sbr.rel (%p14) target = $region8
  $region5: #{residual_conv_forward.3} parent=0 // loop_body
    %s18 = ssub.s32 %s13, 1
    %s19 = ssub.s32 %s13, 2
    %s26 = sadd.s32 1, %s21
    %p27 = scmp.ge.s32.totalorder %s26, 1
    %s28 = scalar_select %p27, 0, %s26
    %s29 = sadd.s32 1, %s20
    %s30 = scalar_select %p27, %s29, %s20
    %p31 = scmp.ge.s32.totalorder %s30, 2
    %s32 = scalar_select %p31, 0, %s30
    %s33 = ssub.s32 %s20, %s32
    %s34 = ssub.s32 %s21, %s28
    %s35 = sor.u32 %s33, %s34
    %p36 = scmp.eq.s32.totalorder %s35, 0
    %s38 = sadd.s32 %s37, 1
    %s39 = scalar_select %p36, %s37, %s38
    %p42 = pneg %p36
    %p43 = scmp.eq.s32.totalorder %s13, 1
    %p44 = por %p42, %p43
    %p45 = scmp.ne.s32.totalorder %s37, %s40
    %p46 = scmp.eq.s32.totalorder %s13, 0
    %p47 = por %p45, %p46
    %p48 = scmp.ne.s32.totalorder %s37, %s40
    %p49 = scmp.eq.s32.totalorder %s18, 1
    %p50 = por %p48, %p49
    %p51 = scmp.ne.s32.totalorder %s40, %s41
    %p52 = scmp.eq.s32.totalorder %s18, 0
    %p53 = por %p51, %p52
    %p54 = scmp.ne.s32.totalorder %s40, %s41
    %p55 = scmp.eq.s32.totalorder %s19, 1
    %p56 = por %p54, %p55
    %p58 = scmp.ne.s32.totalorder %s41, %s57
    %p59 = scmp.eq.s32.totalorder %s19, 0
    %p60 = por %p58, %p59
    %s61 = smul.u32 %s21, 16
    %s62 = ssub.s32 %s61, 1
    %p63 = scmp.gt.s32.totalorder %s62, 0
    %s64 = scalar_select %p63, %s62, 0
    %s65 = smul.u32 %s28, 16
    %s66 = ssub.s32 %s65, 1
    %p67 = scmp.gt.s32.totalorder %s66, 0
    %s68 = scalar_select %p67, %s66, 0
    %s69 = ssub.s32 %s20, %s32
    %s70 = ssub.s32 %s64, %s68
    %s71 = sor.u32 %s69, %s70
    %p72 = scmp.eq.s32.totalorder %s71, 0
    %s74 = sadd.s32 %s73, 1
    %s75 = scalar_select %p72, %s73, %s74
    %p78 = pneg %p72
    %p79 = scmp.eq.s32.totalorder %s13, 1
    %p80 = por %p78, %p79
    %p81 = scmp.ne.s32.totalorder %s73, %s76
    %p82 = scmp.eq.s32.totalorder %s13, 0
    %p83 = por %p81, %p82
    %p84 = scmp.ne.s32.totalorder %s73, %s76
    %p85 = scmp.eq.s32.totalorder %s18, 1
    %p86 = por %p84, %p85
    %p87 = scmp.ne.s32.totalorder %s76, %s77
    %p88 = scmp.eq.s32.totalorder %s18, 0
    %p89 = por %p87, %p88
    %p90 = scmp.ne.s32.totalorder %s76, %s77
    %p91 = scmp.eq.s32.totalorder %s19, 1
    %p92 = por %p90, %p91
    %p94 = scmp.ne.s32.totalorder %s77, %s93
    %p95 = scmp.eq.s32.totalorder %s19, 0
    %p96 = por %p94, %p95
    %s97 = smul.u32 %s21, 16
    %s98 = sadd.s32 %s97, 16
    %p99 = scmp.lt.s32.totalorder %s98, 15
    %s100 = scalar_select %p99, %s98, 15
    %s101 = smul.u32 %s28, 16
    %s102 = sadd.s32 %s101, 16
    %p103 = scmp.lt.s32.totalorder %s102, 15
    %s104 = scalar_select %p103, %s102, 15
    %s105 = ssub.s32 %s20, %s32
    %s106 = ssub.s32 %s100, %s104
    %s107 = sor.u32 %s105, %s106
    %p108 = scmp.eq.s32.totalorder %s107, 0
    %s110 = sadd.s32 %s109, 1
    %s111 = scalar_select %p108, %s109, %s110
    %p114 = pneg %p108
    %p115 = scmp.eq.s32.totalorder %s13, 1
    %p116 = por %p114, %p115
    %p117 = scmp.ne.s32.totalorder %s109, %s112
    %p118 = scmp.eq.s32.totalorder %s13, 0
    %p119 = por %p117, %p118
    %p120 = scmp.ne.s32.totalorder %s109, %s112
    %p121 = scmp.eq.s32.totalorder %s18, 1
    %p122 = por %p120, %p121
    %p123 = scmp.ne.s32.totalorder %s112, %s113
    %p124 = scmp.eq.s32.totalorder %s18, 0
    %p125 = por %p123, %p124
    %p126 = scmp.ne.s32.totalorder %s112, %s113
    %p127 = scmp.eq.s32.totalorder %s19, 1
    %p128 = por %p126, %p127
    %p130 = scmp.ne.s32.totalorder %s113, %s129
    %p131 = scmp.eq.s32.totalorder %s19, 0
    %p132 = por %p130, %p131
    %s133 = ssub.s32 %s20, %s32
    %s134 = ssub.s32 %s21, %s28
    %s135 = sor.u32 %s133, %s134
    %p136 = scmp.eq.s32.totalorder %s135, 0
    %s138 = sadd.s32 %s137, 1
    %s139 = scalar_select %p136, %s137, %s138
    %p142 = pneg %p136
    %p143 = scmp.eq.s32.totalorder %s13, 1
    %p144 = por %p142, %p143
    %p145 = scmp.ne.s32.totalorder %s137, %s140
    %p146 = scmp.eq.s32.totalorder %s13, 0
    %p147 = por %p145, %p146
    %p148 = scmp.ne.s32.totalorder %s137, %s140
    %p149 = scmp.eq.s32.totalorder %s18, 1
    %p150 = por %p148, %p149
    %p151 = scmp.ne.s32.totalorder %s140, %s141
    %p152 = scmp.eq.s32.totalorder %s18, 0
    %p153 = por %p151, %p152
    %p154 = scmp.ne.s32.totalorder %s140, %s141
    %p155 = scmp.eq.s32.totalorder %s19, 1
    %p156 = por %p154, %p155
    %p158 = scmp.ne.s32.totalorder %s141, %s157
    %p159 = scmp.eq.s32.totalorder %s19, 0
    %p160 = por %p158, %p159
    %s162 = sadd.s32 %s161, 1
    %p165 = scmp.eq.s32.totalorder %s13, 1
    %p166 = scmp.ne.s32.totalorder %s161, %s163
    %p167 = scmp.eq.s32.totalorder %s13, 0
    %p168 = por %p166, %p167
    %p169 = scmp.ne.s32.totalorder %s161, %s163
    %p170 = scmp.eq.s32.totalorder %s18, 1
    %p171 = por %p169, %p170
    %p172 = scmp.ne.s32.totalorder %s163, %s164
    %p173 = scmp.eq.s32.totalorder %s18, 0
    %p174 = por %p172, %p173
    %p175 = scmp.ne.s32.totalorder %s163, %s164
    %p176 = scmp.eq.s32.totalorder %s19, 1
    %p177 = por %p175, %p176
    %p179 = scmp.ne.s32.totalorder %s164, %s178
    %p180 = scmp.eq.s32.totalorder %s19, 0
    %p181 = por %p179, %p180
    %s183 = sadd.s32 %s182, 1
    %p186 = scmp.eq.s32.totalorder %s13, 1
    %p187 = scmp.ne.s32.totalorder %s182, %s184
    %p188 = scmp.eq.s32.totalorder %s13, 0
    %p189 = por %p187, %p188
    %p190 = scmp.ne.s32.totalorder %s182, %s184
    %p191 = scmp.eq.s32.totalorder %s18, 1
    %p192 = por %p190, %p191
    %p193 = scmp.ne.s32.totalorder %s184, %s185
    %p194 = scmp.eq.s32.totalorder %s18, 0
    %p195 = por %p193, %p194
    %p196 = scmp.ne.s32.totalorder %s184, %s185
    %p197 = scmp.eq.s32.totalorder %s19, 1
    %p198 = por %p196, %p197
    %p200 = scmp.ne.s32.totalorder %s185, %s199
    %p201 = scmp.eq.s32.totalorder %s19, 0
    %p202 = por %p200, %p201
    %s204 = sadd.s32 %s203, 1
    %p207 = scmp.eq.s32.totalorder %s13, 1
    %p208 = scmp.ne.s32.totalorder %s203, %s205
    %p209 = scmp.eq.s32.totalorder %s13, 0
    %p210 = por %p208, %p209
    %p211 = scmp.ne.s32.totalorder %s203, %s205
    %p212 = scmp.eq.s32.totalorder %s18, 1
    %p213 = por %p211, %p212
    %p214 = scmp.ne.s32.totalorder %s205, %s206
    %p215 = scmp.eq.s32.totalorder %s18, 0
    %p216 = por %p214, %p215
    %p217 = scmp.ne.s32.totalorder %s205, %s206
    %p218 = scmp.eq.s32.totalorder %s19, 1
    %p219 = por %p217, %p218
    %p221 = scmp.ne.s32.totalorder %s206, %s220
    %p222 = scmp.eq.s32.totalorder %s19, 0
    %p223 = por %p221, %p222
    %s224 = ssub.s32 %s20, %s32
    %s225 = ssub.s32 %s21, %s28
    %s226 = sor.u32 %s224, %s225
    %p227 = scmp.eq.s32.totalorder %s226, 0
    %s229 = sadd.s32 %s228, 1
    %s230 = scalar_select %p227, %s228, %s229
    %p233 = pneg %p227
    %p234 = scmp.eq.s32.totalorder %s13, 1
    %p235 = por %p233, %p234
    %p236 = scmp.ne.s32.totalorder %s228, %s231
    %p237 = scmp.eq.s32.totalorder %s13, 0
    %p238 = por %p236, %p237
    %p239 = scmp.ne.s32.totalorder %s228, %s231
    %p240 = scmp.eq.s32.totalorder %s18, 1
    %p241 = por %p239, %p240
    %p242 = scmp.ne.s32.totalorder %s231, %s232
    %p243 = scmp.eq.s32.totalorder %s18, 0
    %p244 = por %p242, %p243
    %p245 = scmp.ne.s32.totalorder %s231, %s232
    %p246 = scmp.eq.s32.totalorder %s19, 1
    %p247 = por %p245, %p246
    %p249 = scmp.ne.s32.totalorder %s232, %s248
    %p250 = scmp.eq.s32.totalorder %s19, 0
    %p251 = por %p249, %p250
    %p252 = scmp.le.s32.totalorder 1, %s13
    %p253 = scmp.lt.s32.totalorder %s13, 3
    %p254 = pnand %p252, %p253
    %p255 = pneg %p254
    // Predicated region
    $region9: #{residual_conv_forward.3} parent=5 // pred_check
      _
    $region10: #{residual_conv_forward.3} parent=5 // pred_check_branch
      %257 = sbr.rel (%p254) target = $region12
    $region11: #{residual_conv_forward.3} parent=5 // pred_region
      %s258 = ssub.s32 %s13, 1
      // Predicated region
      $region13: #{residual_conv_forward.3} parent=11 // pred_check
        %p259 = pneg %p174
      $region14: #{residual_conv_forward.3} parent=11 // pred_check_branch
        %261 = sbr.rel (%p259) target = $region16
      $region15: #{residual_conv_forward.3} parent=11 // pred_region
        _
      $region16: #{residual_conv_forward.3} parent=11 // pred_fallthru
        _
      // Predicated region
      $region17: #{residual_conv_forward.3} parent=11 // pred_check
        %p262 = pneg %p195
      $region18: #{residual_conv_forward.3} parent=11 // pred_check_branch
        %264 = sbr.rel (%p262) target = $region20
      $region19: #{residual_conv_forward.3} parent=11 // pred_region
        _
      $region20: #{residual_conv_forward.3} parent=11 // pred_fallthru
        _
      // Predicated region
      $region21: #{residual_conv_forward.3} parent=11 // pred_check
        %p265 = pneg %p216
      $region22: #{residual_conv_forward.3} parent=11 // pred_check_branch
        %267 = sbr.rel (%p265) target = $region24
      $region23: #{residual_conv_forward.3} parent=11 // pred_region
        _
      $region24: #{residual_conv_forward.3} parent=11 // pred_fallthru
        _
    $region12: #{residual_conv_forward.3} parent=5 // pred_fallthru
      _
    %p268 = scmp.lt.s32.totalorder %s13, 2
    // Predicated region
    $region25: #{residual_conv_forward.3} parent=5 // pred_check
      %p269 = pneg %p268
    $region26: #{residual_conv_forward.3} parent=5 // pred_check_branch
      %271 = sbr.rel (%p269) target = $region28
    $region27: #{residual_conv_forward.3} parent=5 // pred_region
      // Predicated region
      $region29: #{residual_conv_forward.3} parent=27 // pred_check
        %p272 = pneg %p47
      $region30: #{residual_conv_forward.3} parent=27 // pred_check_branch
        %274 = sbr.rel (%p272) target = $region32
      $region31: #{residual_conv_forward.3} parent=27 // pred_region
        %s275 = smul.u32 16, %s21
        %p276 = scmp.lt.s32.totalorder %s20, 1
        %s277 = scalar_select %p276, %s20, 1
        %p278 = scmp.lt.s32.totalorder %s275, 15
        %s279 = scalar_select %p278, %s275, 15
        %s280 = smul.addr %s279, 2
        %s281 = smul.addr %s277, 32
        %s282 = sadd.s32 %s280, %s281
        %s283 = smul.addr %s282, 8
        %s284 = scalar_lea.vmem %s0, %s283
        %s285 = smul.u32 16, %s21
      $region32: #{residual_conv_forward.3} parent=27 // pred_fallthru
        _
      // Predicated region
      $region33: #{residual_conv_forward.3} parent=27 // pred_check
        %p286 = pneg %p83
      $region34: #{residual_conv_forward.3} parent=27 // pred_check_branch
        %288 = sbr.rel (%p286) target = $region36
      $region35: #{residual_conv_forward.3} parent=27 // pred_region
        %s289 = smul.u32 %s21, 16
        %s290 = ssub.s32 %s289, 1
        %p291 = scmp.gt.s32.totalorder %s290, 0
        %s292 = scalar_select %p291, %s290, 0
        %p293 = scmp.lt.s32.totalorder %s20, 1
        %s294 = scalar_select %p293, %s20, 1
        %p295 = scmp.lt.s32.totalorder %s292, 15
        %s296 = scalar_select %p295, %s292, 15
        %s297 = smul.addr %s296, 2
        %s298 = smul.addr %s294, 32
        %s299 = sadd.s32 %s297, %s298
        %s300 = smul.addr %s299, 8
        %s301 = scalar_lea.vmem %s1, %s300
        %s302 = smul.u32 %s21, 16
        %s303 = ssub.s32 %s302, 1
        %p304 = scmp.gt.s32.totalorder %s303, 0
        %s305 = scalar_select %p304, %s303, 0
      $region36: #{residual_conv_forward.3} parent=27 // pred_fallthru
        _
      // Predicated region
      $region37: #{residual_conv_forward.3} parent=27 // pred_check
        %p306 = pneg %p119
      $region38: #{residual_conv_forward.3} parent=27 // pred_check_branch
        %308 = sbr.rel (%p306) target = $region40
      $region39: #{residual_conv_forward.3} parent=27 // pred_region
        %s309 = smul.u32 %s21, 16
        %s310 = sadd.s32 %s309, 16
        %p311 = scmp.lt.s32.totalorder %s310, 15
        %s312 = scalar_select %p311, %s310, 15
        %p313 = scmp.lt.s32.totalorder %s20, 1
        %s314 = scalar_select %p313, %s20, 1
        %p315 = scmp.lt.s32.totalorder %s312, 15
        %s316 = scalar_select %p315, %s312, 15
        %s317 = smul.addr %s316, 2
        %s318 = smul.addr %s314, 32
        %s319 = sadd.s32 %s317, %s318
        %s320 = smul.addr %s319, 8
        %s321 = scalar_lea.vmem %s2, %s320
        %s322 = smul.u32 %s21, 16
        %s323 = sadd.s32 %s322, 16
        %p324 = scmp.lt.s32.totalorder %s323, 15
        %s325 = scalar_select %p324, %s323, 15
      $region40: #{residual_conv_forward.3} parent=27 // pred_fallthru
        _
      // Predicated region
      $region41: #{residual_conv_forward.3} parent=27 // pred_check
        %p326 = pneg %p147
      $region42: #{residual_conv_forward.3} parent=27 // pred_check_branch
        %328 = sbr.rel (%p326) target = $region44
      $region43: #{residual_conv_forward.3} parent=27 // pred_region
        %s329 = smul.u32 16, %s21
        %p330 = scmp.lt.s32.totalorder %s20, 1
        %s331 = scalar_select %p330, %s20, 1
        %p332 = scmp.lt.s32.totalorder %s329, 15
        %s333 = scalar_select %p332, %s329, 15
        %s334 = smul.addr %s333, 2
        %s335 = smul.addr %s331, 32
        %s336 = sadd.s32 %s334, %s335
        %s337 = smul.addr %s336, 8
        %s338 = scalar_lea.vmem %s3, %s337
        %s339 = smul.u32 16, %s21
      $region44: #{residual_conv_forward.3} parent=27 // pred_fallthru
        _
    $region28: #{residual_conv_forward.3} parent=5 // pred_fallthru
      _
    %p340 = scmp.le.s32.totalorder 1, %s13
    %p341 = scmp.lt.s32.totalorder %s13, 3
    %p342 = pnand %p340, %p341
    %p343 = pneg %p342
    // Predicated region
    $region45: #{residual_conv_forward.3} parent=5 // pred_check
      _
    $region46: #{residual_conv_forward.3} parent=5 // pred_check_branch
      %345 = sbr.rel (%p342) target = $region48
    $region47: #{residual_conv_forward.3} parent=5 // pred_region
      %s346 = ssub.s32 %s13, 1
      %s347 = smul.u32 16, %s23
      %p348 = scmp.lt.s32.totalorder %s22, 1
      %s349 = scalar_select %p348, %s22, 1
      %p350 = scmp.lt.s32.totalorder %s347, 15
      %s351 = scalar_select %p350, %s347, 15
      %s352 = smul.addr %s351, 2
      %s353 = smul.addr %s349, 32
      %s354 = sadd.s32 %s352, %s353
      %s355 = smul.addr %s354, 8
      %s356 = scalar_lea.vmem %s0, %s355
      %p357 = pneg %p53
      %p358 = pneg %p50
      %s359 = smul.u32 %s23, 16
      %s360 = ssub.s32 %s359, 1
      %p361 = scmp.gt.s32.totalorder %s360, 0
      %s362 = scalar_select %p361, %s360, 0
      %p363 = scmp.lt.s32.totalorder %s22, 1
      %s364 = scalar_select %p363, %s22, 1
      %p365 = scmp.lt.s32.totalorder %s362, 15
      %s366 = scalar_select %p365, %s362, 15
      %s367 = smul.addr %s366, 2
      %s368 = smul.addr %s364, 32
      %s369 = sadd.s32 %s367, %s368
      %s370 = smul.addr %s369, 8
      %s371 = scalar_lea.vmem %s1, %s370
      %p372 = pneg %p89
      %p373 = pneg %p86
      %s374 = smul.u32 %s23, 16
      %s375 = sadd.s32 %s374, 16
      %p376 = scmp.lt.s32.totalorder %s375, 15
      %s377 = scalar_select %p376, %s375, 15
      %p378 = scmp.lt.s32.totalorder %s22, 1
      %s379 = scalar_select %p378, %s22, 1
      %p380 = scmp.lt.s32.totalorder %s377, 15
      %s381 = scalar_select %p380, %s377, 15
      %s382 = smul.addr %s381, 2
      %s383 = smul.addr %s379, 32
      %s384 = sadd.s32 %s382, %s383
      %s385 = smul.addr %s384, 8
      %s386 = scalar_lea.vmem %s2, %s385
      %p387 = pneg %p125
      %p388 = pneg %p122
      %s389 = smul.u32 16, %s23
      %p390 = scmp.lt.s32.totalorder %s22, 1
      %s391 = scalar_select %p390, %s22, 1
      %p392 = scmp.lt.s32.totalorder %s389, 15
      %s393 = scalar_select %p392, %s389, 15
      %s394 = smul.addr %s393, 2
      %s395 = smul.addr %s391, 32
      %s396 = sadd.s32 %s394, %s395
      %s397 = smul.addr %s396, 8
      %s398 = scalar_lea.vmem %s3, %s397
      %p399 = pneg %p153
      %p400 = pneg %p150
      %p401 = pneg %p174
      %p402 = pneg %p171
      %p403 = pneg %p195
      %p404 = pneg %p192
      %p405 = pneg %p216
      %p406 = pneg %p213
      %p407 = pneg %p244
      %p408 = pneg %p241
      %s409 = smul.u32 16, %s23
      %p410 = scmp.lt.s32.totalorder %s22, 1
      %s411 = scalar_select %p410, %s22, 1
      %p412 = scmp.lt.s32.totalorder %s409, 15
      %s413 = scalar_select %p412, %s409, 15
      %s414 = smul.addr %s413, 2
      %s415 = smul.addr %s411, 32
      %s416 = sadd.s32 %s414, %s415
      %s417 = smul.addr %s416, 8
      %s418 = scalar_lea.vmem %s7, %s417
      %s419 = smul.u32 16, %s23
      %p420 = scmp.lt.s32.totalorder %s22, 1
      %s421 = scalar_select %p420, %s22, 1
      %p422 = scmp.lt.s32.totalorder %s419, 15
      %s423 = scalar_select %p422, %s419, 15
      %s424 = smul.addr %s423, 2
      %s425 = smul.addr %s421, 32
      %s426 = sadd.s32 %s424, %s425
      %s427 = smul.addr %s426, 8
      %s428 = scalar_lea.vmem %s0, %s427
      %s429 = smul.u32 16, %s23
      %s430 = smul.u32 %s23, 16
      %s431 = ssub.s32 %s430, 1
      %p432 = scmp.gt.s32.totalorder %s431, 0
      %s433 = scalar_select %p432, %s431, 0
      %p434 = scmp.lt.s32.totalorder %s22, 1
      %s435 = scalar_select %p434, %s22, 1
      %p436 = scmp.lt.s32.totalorder %s433, 15
      %s437 = scalar_select %p436, %s433, 15
      %s438 = smul.addr %s437, 2
      %s439 = smul.addr %s435, 32
      %s440 = sadd.s32 %s438, %s439
      %s441 = smul.addr %s440, 8
      %s442 = scalar_lea.vmem %s1, %s441
      %s443 = smul.u32 %s23, 16
      %s444 = ssub.s32 %s443, 1
      %p445 = scmp.gt.s32.totalorder %s444, 0
      %s446 = scalar_select %p445, %s444, 0
      %s447 = smul.u32 %s23, 16
      %s448 = sadd.s32 %s447, 16
      %p449 = scmp.lt.s32.totalorder %s448, 15
      %s450 = scalar_select %p449, %s448, 15
      %p451 = scmp.lt.s32.totalorder %s22, 1
      %s452 = scalar_select %p451, %s22, 1
      %p453 = scmp.lt.s32.totalorder %s450, 15
      %s454 = scalar_select %p453, %s450, 15
      %s455 = smul.addr %s454, 2
      %s456 = smul.addr %s452, 32
      %s457 = sadd.s32 %s455, %s456
      %s458 = smul.addr %s457, 8
      %s459 = scalar_lea.vmem %s2, %s458
      %s460 = smul.u32 %s23, 16
      %s461 = sadd.s32 %s460, 16
      %p462 = scmp.lt.s32.totalorder %s461, 15
      %s463 = scalar_select %p462, %s461, 15
      %s464 = smul.u32 16, %s23
      %p465 = scmp.lt.s32.totalorder %s22, 1
      %s466 = scalar_select %p465, %s22, 1
      %p467 = scmp.lt.s32.totalorder %s464, 15
      %s468 = scalar_select %p467, %s464, 15
      %s469 = smul.addr %s468, 2
      %s470 = smul.addr %s466, 32
      %s471 = sadd.s32 %s469, %s470
      %s472 = smul.addr %s471, 8
      %s473 = scalar_lea.vmem %s3, %s472
      %s474 = smul.u32 16, %s23
      %s475 = smul.u32 16, %s23
      %p476 = scmp.lt.s32.totalorder %s22, 1
      %s477 = scalar_select %p476, %s22, 1
      %p478 = scmp.lt.s32.totalorder %s475, 15
      %s479 = scalar_select %p478, %s475, 15
      %s480 = smul.addr %s479, 2
      %s481 = smul.addr %s477, 32
      %s482 = sadd.s32 %s480, %s481
      %s483 = smul.addr %s482, 8
      %s484 = scalar_lea.vmem %s7, %s483
      %s485 = smul.u32 16, %s23
      %v486 = vld [vmem:[%s5] sm:$0x1]
      %v487 = vld [vmem:[%s6] sm:$0x1]
      %v488 = vld [vmem:[%s428] sm:$0xff]
      %v489 = vld [vmem:[%s428 + $0x8] sm:$0xff]
      %v490 = vld [vmem:[%s428 + $0x10] sm:$0xff]
      %v491 = vld [vmem:[%s428 + $0x18] sm:$0xff]
      %v492 = vld [vmem:[%s428 + $0x20] sm:$0xff]
      %v493 = vld [vmem:[%s428 + $0x28] sm:$0xff]
      %v494 = vld [vmem:[%s428 + $0x30] sm:$0xff]
      %v495 = vld [vmem:[%s428 + $0x38] sm:$0xff]
      %v496 = vld [vmem:[%s428 + $0x40] sm:$0xff]
      %v497 = vld [vmem:[%s428 + $0x48] sm:$0xff]
      %v498 = vld [vmem:[%s428 + $0x50] sm:$0xff]
      %v499 = vld [vmem:[%s428 + $0x58] sm:$0xff]
      %v500 = vld [vmem:[%s428 + $0x60] sm:$0xff]
      %v501 = vld [vmem:[%s428 + $0x68] sm:$0xff]
      %v502 = vld [vmem:[%s428 + $0x70] sm:$0xff]
      %v503 = vld [vmem:[%s428 + $0x78] sm:$0xff]
      %v504 = vld [vmem:[%s428 + $0x80] sm:$0xff]
      %v505 = vld [vmem:[%s428 + $0x88] sm:$0xff]
      %v506 = vld [vmem:[%s428 + $0x90] sm:$0xff]
      %v507 = vld [vmem:[%s428 + $0x98] sm:$0xff]
      %v508 = vld [vmem:[%s428 + $0xa0] sm:$0xff]
      %v509 = vld [vmem:[%s428 + $0xa8] sm:$0xff]
      %v510 = vld [vmem:[%s428 + $0xb0] sm:$0xff]
      %v511 = vld [vmem:[%s428 + $0xb8] sm:$0xff]
      %v512 = vld [vmem:[%s428 + $0xc0] sm:$0xff]
      %v513 = vld [vmem:[%s428 + $0xc8] sm:$0xff]
      %v514 = vld [vmem:[%s428 + $0xd0] sm:$0xff]
      %v515 = vld [vmem:[%s428 + $0xd8] sm:$0xff]
      %v516 = vld [vmem:[%s428 + $0xe0] sm:$0xff]
      %v517 = vld [vmem:[%s428 + $0xe8] sm:$0xff]
      %v518 = vld [vmem:[%s428 + $0xf0] sm:$0xff]
      %v519 = vld [vmem:[%s428 + $0xf8] sm:$0xff]
      %v521 = vlaneseq
      %v522 = vshrl.u32 %v521, 7
      %v523 = vsub.s32 0, %v522
      %v524 = vrot.slane %v486, %v523
      %v526 = vmul.f32 %v488, %v524
      %v527 = vmul.f32 %v489, %v524
      %v528 = vmul.f32 %v490, %v524
      %v529 = vmul.f32 %v491, %v524
      %v530 = vmul.f32 %v492, %v524
      %v531 = vmul.f32 %v493, %v524
      %v532 = vmul.f32 %v494, %v524
      %v533 = vmul.f32 %v495, %v524
      %v534 = vmul.f32 %v496, %v524
      %v535 = vmul.f32 %v497, %v524
      %v536 = vmul.f32 %v498, %v524
      %v537 = vmul.f32 %v499, %v524
      %v538 = vmul.f32 %v500, %v524
      %v539 = vmul.f32 %v501, %v524
      %v540 = vmul.f32 %v502, %v524
      %v541 = vmul.f32 %v503, %v524
      %v542 = vmul.f32 %v504, %v524
      %v543 = vmul.f32 %v505, %v524
      %v544 = vmul.f32 %v506, %v524
      %v545 = vmul.f32 %v507, %v524
      %v546 = vmul.f32 %v508, %v524
      %v547 = vmul.f32 %v509, %v524
      %v548 = vmul.f32 %v510, %v524
      %v549 = vmul.f32 %v511, %v524
      %v550 = vmul.f32 %v512, %v524
      %v551 = vmul.f32 %v513, %v524
      %v552 = vmul.f32 %v514, %v524
      %v553 = vmul.f32 %v515, %v524
      %v554 = vmul.f32 %v516, %v524
      %v555 = vmul.f32 %v517, %v524
      %v556 = vmul.f32 %v518, %v524
      %v557 = vmul.f32 %v519, %v524
      %v559 = vlaneseq
      %v560 = vshrl.u32 %v559, 7
      %v561 = vsub.s32 0, %v560
      %v562 = vrot.slane %v487, %v561
      %v564 = vadd.f32 %v526, %v562
      %v565 = vadd.f32 %v527, %v562
      %v566 = vadd.f32 %v528, %v562
      %v567 = vadd.f32 %v529, %v562
      %v568 = vadd.f32 %v530, %v562
      %v569 = vadd.f32 %v531, %v562
      %v570 = vadd.f32 %v532, %v562
      %v571 = vadd.f32 %v533, %v562
      %v572 = vadd.f32 %v534, %v562
      %v573 = vadd.f32 %v535, %v562
      %v574 = vadd.f32 %v536, %v562
      %v575 = vadd.f32 %v537, %v562
      %v576 = vadd.f32 %v538, %v562
      %v577 = vadd.f32 %v539, %v562
      %v578 = vadd.f32 %v540, %v562
      %v579 = vadd.f32 %v541, %v562
      %v580 = vadd.f32 %v542, %v562
      %v581 = vadd.f32 %v543, %v562
      %v582 = vadd.f32 %v544, %v562
      %v583 = vadd.f32 %v545, %v562
      %v584 = vadd.f32 %v546, %v562
      %v585 = vadd.f32 %v547, %v562
      %v586 = vadd.f32 %v548, %v562
      %v587 = vadd.f32 %v549, %v562
      %v588 = vadd.f32 %v550, %v562
      %v589 = vadd.f32 %v551, %v562
      %v590 = vadd.f32 %v552, %v562
      %v591 = vadd.f32 %v553, %v562
      %v592 = vadd.f32 %v554, %v562
      %v593 = vadd.f32 %v555, %v562
      %v594 = vadd.f32 %v556, %v562
      %v595 = vadd.f32 %v557, %v562
      %v596 = vmax.f32 %v564, 0.0
      %v597 = vmax.f32 %v565, 0.0
      %v598 = vmax.f32 %v566, 0.0
      %v599 = vmax.f32 %v567, 0.0
      %v600 = vmax.f32 %v568, 0.0
      %v601 = vmax.f32 %v569, 0.0
      %v602 = vmax.f32 %v570, 0.0
      %v603 = vmax.f32 %v571, 0.0
      %v604 = vmax.f32 %v572, 0.0
      %v605 = vmax.f32 %v573, 0.0
      %v606 = vmax.f32 %v574, 0.0
      %v607 = vmax.f32 %v575, 0.0
      %v608 = vmax.f32 %v576, 0.0
      %v609 = vmax.f32 %v577, 0.0
      %v610 = vmax.f32 %v578, 0.0
      %v611 = vmax.f32 %v579, 0.0
      %v612 = vmax.f32 %v580, 0.0
      %v613 = vmax.f32 %v581, 0.0
      %v614 = vmax.f32 %v582, 0.0
      %v615 = vmax.f32 %v583, 0.0
      %v616 = vmax.f32 %v584, 0.0
      %v617 = vmax.f32 %v585, 0.0
      %v618 = vmax.f32 %v586, 0.0
      %v619 = vmax.f32 %v587, 0.0
      %v620 = vmax.f32 %v588, 0.0
      %v621 = vmax.f32 %v589, 0.0
      %v622 = vmax.f32 %v590, 0.0
      %v623 = vmax.f32 %v591, 0.0
      %v624 = vmax.f32 %v592, 0.0
      %v625 = vmax.f32 %v593, 0.0
      %v626 = vmax.f32 %v594, 0.0
      %v627 = vmax.f32 %v595, 0.0
      %v628 = vld [vmem:[%s442] sm:$0xff]
      %v629 = vld [vmem:[%s442 + $0x8] sm:$0xff]
      %v630 = vmul.f32 %v628, %v524
      %v631 = vmul.f32 %v629, %v524
      %v632 = vadd.f32 %v630, %v562
      %v633 = vadd.f32 %v631, %v562
      %v634 = vmax.f32 %v632, 0.0
      %v635 = vmax.f32 %v633, 0.0
      %p636 = scmp.gt.s32.totalorder %s23, 0
      %s637 = scalar_select %p636, 1.0, 0.0
      %v638 = vstv %s637
      %v639 = vmul.f32 %v634, %v638
      %v640 = vmul.f32 %v635, %v638
      %v641 = vld [vmem:[%s459] sm:$0xff]
      %v642 = vld [vmem:[%s459 + $0x8] sm:$0xff]
      %v643 = vmul.f32 %v641, %v524
      %v644 = vmul.f32 %v642, %v524
      %v645 = vadd.f32 %v643, %v562
      %v646 = vadd.f32 %v644, %v562
      %v647 = vmax.f32 %v645, 0.0
      %v648 = vmax.f32 %v646, 0.0
      %p649 = scmp.lt.s32.totalorder %s23, 0
      %s650 = scalar_select %p649, 1.0, 0.0
      %v651 = vstv %s650
      %v652 = vmul.f32 %v647, %v651
      %v653 = vmul.f32 %v648, %v651
      %vm654 = vcmask 57344
      %655 = vst.msk [vmem:[#allocation2] sm:$0x1] %vm654, 0.0
      %656 = vst.msk [vmem:[#allocation2 + $0x18] sm:$0x1] %vm654, 0.0
      %657 = vst.msk [vmem:[#allocation2 + $0x30] sm:$0x1] %vm654, 0.0
      %658 = vst.msk [vmem:[#allocation2 + $0x48] sm:$0x1] %vm654, 0.0
      %659 = vst.msk [vmem:[#allocation2 + $0x60] sm:$0x1] %vm654, 0.0
      %660 = vst.msk [vmem:[#allocation2 + $0x78] sm:$0x1] %vm654, 0.0
      %661 = vst.msk [vmem:[#allocation2 + $0x90] sm:$0x1] %vm654, 0.0
      %662 = vst.msk [vmem:[#allocation2 + $0xa8] sm:$0x1] %vm654, 0.0
      %663 = vst.msk [vmem:[#allocation2 + $0xc0] sm:$0x1] %vm654, 0.0
      %664 = vst.msk [vmem:[#allocation2 + $0xd8] sm:$0x1] %vm654, 0.0
      %665 = vst.msk [vmem:[#allocation2 + $0xf0] sm:$0x1] %vm654, 0.0
      %666 = vst.msk [vmem:[#allocation2 + $0x108] sm:$0x1] %vm654, 0.0
      %667 = vst.msk [vmem:[#allocation2 + $0x120] sm:$0x1] %vm654, 0.0
      %668 = vst.msk [vmem:[#allocation2 + $0x138] sm:$0x1] %vm654, 0.0
      %669 = vst.msk [vmem:[#allocation2 + $0x150] sm:$0x1] %vm654, 0.0
      %670 = vst.msk [vmem:[#allocation2 + $0x168] sm:$0x1] %vm654, 0.0
      %671 = vst.msk [vmem:[#allocation2 + $0x180] sm:$0x1] %vm654, 0.0
      %672 = vst.msk [vmem:[#allocation2 + $0x198] sm:$0x1] %vm654, 0.0
      %vm673 = vcmask 63488
      %674 = vst.msk [vmem:[#allocation2 + $0x11] sm:$0x7f] %vm673, 0.0
      %675 = vst.msk [vmem:[#allocation2 + $0x29] sm:$0x7f] %vm673, 0.0
      %676 = vst.msk [vmem:[#allocation2 + $0x41] sm:$0x7f] %vm673, 0.0
      %677 = vst.msk [vmem:[#allocation2 + $0x59] sm:$0x7f] %vm673, 0.0
      %678 = vst.msk [vmem:[#allocation2 + $0x71] sm:$0x7f] %vm673, 0.0
      %679 = vst.msk [vmem:[#allocation2 + $0x89] sm:$0x7f] %vm673, 0.0
      %680 = vst.msk [vmem:[#allocation2 + $0xa1] sm:$0x7f] %vm673, 0.0
      %681 = vst.msk [vmem:[#allocation2 + $0xb9] sm:$0x7f] %vm673, 0.0
      %682 = vst.msk [vmem:[#allocation2 + $0xd1] sm:$0x7f] %vm673, 0.0
      %683 = vst.msk [vmem:[#allocation2 + $0xe9] sm:$0x7f] %vm673, 0.0
      %684 = vst.msk [vmem:[#allocation2 + $0x101] sm:$0x7f] %vm673, 0.0
      %685 = vst.msk [vmem:[#allocation2 + $0x119] sm:$0x7f] %vm673, 0.0
      %686 = vst.msk [vmem:[#allocation2 + $0x131] sm:$0x7f] %vm673, 0.0
      %687 = vst.msk [vmem:[#allocation2 + $0x149] sm:$0x7f] %vm673, 0.0
      %688 = vst.msk [vmem:[#allocation2 + $0x161] sm:$0x7f] %vm673, 0.0
      %689 = vst.msk [vmem:[#allocation2 + $0x179] sm:$0x7f] %vm673, 0.0
      %690 = vst.msk [vmem:[#allocation2 + $0x191] sm:$0x7f] %vm673, 0.0
      %691 = vst.msk [vmem:[#allocation2 + $0x1a9] sm:$0x7f] %vm673, 0.0
      %vm692 = vcmask 64512
      %693 = vst.msk [vmem:[#allocation2 + $0x1] sm:$0xff] %vm692, %v639
      %694 = vst.msk [vmem:[#allocation2 + $0x9] sm:$0xff] %vm692, %v640
      %s695 = scalar_lea.vmem [#allocation2], 408
      %696 = vst.msk [vmem:[%s695 + $0x1] sm:$0xff] %vm692, %v652
      %697 = vst.msk [vmem:[%s695 + $0x9] sm:$0xff] %vm692, %v653
      %s698 = scalar_lea.vmem [#allocation2], 24
      %699 = vst.msk [vmem:[%s698 + $0x1] sm:$0xff] %vm692, %v596
      %700 = vst.msk [vmem:[%s698 + $0x9] sm:$0xff] %vm692, %v597
      %701 = vst.msk [vmem:[%s698 + $0x19] sm:$0xff] %vm692, %v598
      %702 = vst.msk [vmem:[%s698 + $0x21] sm:$0xff] %vm692, %v599
      %703 = vst.msk [vmem:[%s698 + $0x31] sm:$0xff] %vm692, %v600
      %704 = vst.msk [vmem:[%s698 + $0x39] sm:$0xff] %vm692, %v601
      %705 = vst.msk [vmem:[%s698 + $0x49] sm:$0xff] %vm692, %v602
      %706 = vst.msk [vmem:[%s698 + $0x51] sm:$0xff] %vm692, %v603
      %707 = vst.msk [vmem:[%s698 + $0x61] sm:$0xff] %vm692, %v604
      %708 = vst.msk [vmem:[%s698 + $0x69] sm:$0xff] %vm692, %v605
      %709 = vst.msk [vmem:[%s698 + $0x79] sm:$0xff] %vm692, %v606
      %710 = vst.msk [vmem:[%s698 + $0x81] sm:$0xff] %vm692, %v607
      %711 = vst.msk [vmem:[%s698 + $0x91] sm:$0xff] %vm692, %v608
      %712 = vst.msk [vmem:[%s698 + $0x99] sm:$0xff] %vm692, %v609
      %713 = vst.msk [vmem:[%s698 + $0xa9] sm:$0xff] %vm692, %v610
      %714 = vst.msk [vmem:[%s698 + $0xb1] sm:$0xff] %vm692, %v611
      %715 = vst.msk [vmem:[%s698 + $0xc1] sm:$0xff] %vm692, %v612
      %716 = vst.msk [vmem:[%s698 + $0xc9] sm:$0xff] %vm692, %v613
      %717 = vst.msk [vmem:[%s698 + $0xd9] sm:$0xff] %vm692, %v614
      %718 = vst.msk [vmem:[%s698 + $0xe1] sm:$0xff] %vm692, %v615
      %719 = vst.msk [vmem:[%s698 + $0xf1] sm:$0xff] %vm692, %v616
      %720 = vst.msk [vmem:[%s698 + $0xf9] sm:$0xff] %vm692, %v617
      %721 = vst.msk [vmem:[%s698 + $0x109] sm:$0xff] %vm692, %v618
      %722 = vst.msk [vmem:[%s698 + $0x111] sm:$0xff] %vm692, %v619
      %723 = vst.msk [vmem:[%s698 + $0x121] sm:$0xff] %vm692, %v620
      %724 = vst.msk [vmem:[%s698 + $0x129] sm:$0xff] %vm692, %v621
      %725 = vst.msk [vmem:[%s698 + $0x139] sm:$0xff] %vm692, %v622
      %726 = vst.msk [vmem:[%s698 + $0x141] sm:$0xff] %vm692, %v623
      %727 = vst.msk [vmem:[%s698 + $0x151] sm:$0xff] %vm692, %v624
      %728 = vst.msk [vmem:[%s698 + $0x159] sm:$0xff] %vm692, %v625
      %729 = vst.msk [vmem:[%s698 + $0x169] sm:$0xff] %vm692, %v626
      %730 = vst.msk [vmem:[%s698 + $0x171] sm:$0xff] %vm692, %v627
      %v731 = vld [vmem:[#allocation2] sm:$0xff]
      %v732 = vld [vmem:[#allocation2 + $0x8] sm:$0xff]
      %v733 = vld [vmem:[#allocation2 + $0x18] sm:$0xff]
      %v734 = vld [vmem:[#allocation2 + $0x20] sm:$0xff]
      %v735 = vld [vmem:[#allocation2 + $0x30] sm:$0xff]
      %v736 = vld [vmem:[#allocation2 + $0x38] sm:$0xff]
      %v737 = vld [vmem:[#allocation2 + $0x48] sm:$0xff]
      %v738 = vld [vmem:[#allocation2 + $0x50] sm:$0xff]
      %v739 = vld [vmem:[#allocation2 + $0x60] sm:$0xff]
      %v740 = vld [vmem:[#allocation2 + $0x68] sm:$0xff]
      %v741 = vld [vmem:[#allocation2 + $0x78] sm:$0xff]
      %v742 = vld [vmem:[#allocation2 + $0x80] sm:$0xff]
      %v743 = vld [vmem:[#allocation2 + $0x90] sm:$0xff]
      %v744 = vld [vmem:[#allocation2 + $0x98] sm:$0xff]
      %v745 = vld [vmem:[#allocation2 + $0xa8] sm:$0xff]
      %v746 = vld [vmem:[#allocation2 + $0xb0] sm:$0xff]
      %v747 = vld [vmem:[#allocation2 + $0xc0] sm:$0xff]
      %v748 = vld [vmem:[#allocation2 + $0xc8] sm:$0xff]
      %v749 = vld [vmem:[#allocation2 + $0xd8] sm:$0xff]
      %v750 = vld [vmem:[#allocation2 + $0xe0] sm:$0xff]
      %v751 = vld [vmem:[#allocation2 + $0xf0] sm:$0xff]
      %v752 = vld [vmem:[#allocation2 + $0xf8] sm:$0xff]
      %v753 = vld [vmem:[#allocation2 + $0x108] sm:$0xff]
      %v754 = vld [vmem:[#allocation2 + $0x110] sm:$0xff]
      %v755 = vld [vmem:[#allocation2 + $0x120] sm:$0xff]
      %v756 = vld [vmem:[#allocation2 + $0x128] sm:$0xff]
      %v757 = vld [vmem:[#allocation2 + $0x138] sm:$0xff]
      %v758 = vld [vmem:[#allocation2 + $0x140] sm:$0xff]
      %v759 = vld [vmem:[#allocation2 + $0x150] sm:$0xff]
      %v760 = vld [vmem:[#allocation2 + $0x158] sm:$0xff]
      %v761 = vld [vmem:[#allocation2 + $0x168] sm:$0xff]
      %v762 = vld [vmem:[#allocation2 + $0x170] sm:$0xff]
      %v763 = vld [vmem:[%s4] sm:$0xff]
      %v764 = vld [vmem:[#allocation2 + $0x1] sm:$0xff]
      %v765 = vld [vmem:[#allocation2 + $0x9] sm:$0xff]
      %v766 = vld [vmem:[#allocation2 + $0x19] sm:$0xff]
      %v767 = vld [vmem:[#allocation2 + $0x21] sm:$0xff]
      %v768 = vld [vmem:[#allocation2 + $0x31] sm:$0xff]
      %v769 = vld [vmem:[#allocation2 + $0x39] sm:$0xff]
      %v770 = vld [vmem:[#allocation2 + $0x49] sm:$0xff]
      %v771 = vld [vmem:[#allocation2 + $0x51] sm:$0xff]
      %v772 = vld [vmem:[#allocation2 + $0x61] sm:$0xff]
      %v773 = vld [vmem:[#allocation2 + $0x69] sm:$0xff]
      %v774 = vld [vmem:[#allocation2 + $0x79] sm:$0xff]
      %v775 = vld [vmem:[#allocation2 + $0x81] sm:$0xff]
      %v776 = vld [vmem:[#allocation2 + $0x91] sm:$0xff]
      %v777 = vld [vmem:[#allocation2 + $0x99] sm:$0xff]
      %v778 = vld [vmem:[#allocation2 + $0xa9] sm:$0xff]
      %v779 = vld [vmem:[#allocation2 + $0xb1] sm:$0xff]
      %v780 = vld [vmem:[#allocation2 + $0xc1] sm:$0xff]
      %v781 = vld [vmem:[#allocation2 + $0xc9] sm:$0xff]
      %v782 = vld [vmem:[#allocation2 + $0xd9] sm:$0xff]
      %v783 = vld [vmem:[#allocation2 + $0xe1] sm:$0xff]
      %v784 = vld [vmem:[#allocation2 + $0xf1] sm:$0xff]
      %v785 = vld [vmem:[#allocation2 + $0xf9] sm:$0xff]
      %v786 = vld [vmem:[#allocation2 + $0x109] sm:$0xff]
      %v787 = vld [vmem:[#allocation2 + $0x111] sm:$0xff]
      %v788 = vld [vmem:[#allocation2 + $0x121] sm:$0xff]
      %v789 = vld [vmem:[#allocation2 + $0x129] sm:$0xff]
      %v790 = vld [vmem:[#allocation2 + $0x139] sm:$0xff]
      %v791 = vld [vmem:[#allocation2 + $0x141] sm:$0xff]
      %v792 = vld [vmem:[#allocation2 + $0x151] sm:$0xff]
      %v793 = vld [vmem:[#allocation2 + $0x159] sm:$0xff]
      %v794 = vld [vmem:[#allocation2 + $0x169] sm:$0xff]
      %v795 = vld [vmem:[#allocation2 + $0x171] sm:$0xff]
      %v796 = vld [vmem:[%s4 + $0x8] sm:$0xff]
      %v798 = vsel %vm692, %v764, 0
      %v801 = vsel %vm692, %v765, 0
      %v804 = vsel %vm692, %v766, 0
      %v807 = vsel %vm692, %v767, 0
      %v810 = vsel %vm692, %v768, 0
      %v813 = vsel %vm692, %v769, 0
      %v816 = vsel %vm692, %v770, 0
      %v819 = vsel %vm692, %v771, 0
      %v822 = vsel %vm692, %v772, 0
      %v825 = vsel %vm692, %v773, 0
      %v828 = vsel %vm692, %v774, 0
      %v831 = vsel %vm692, %v775, 0
      %v834 = vsel %vm692, %v776, 0
      %v837 = vsel %vm692, %v777, 0
      %v840 = vsel %vm692, %v778, 0
      %v843 = vsel %vm692, %v779, 0
      %v846 = vsel %vm692, %v780, 0
      %v849 = vsel %vm692, %v781, 0
      %v852 = vsel %vm692, %v782, 0
      %v855 = vsel %vm692, %v783, 0
      %v858 = vsel %vm692, %v784, 0
      %v861 = vsel %vm692, %v785, 0
      %v864 = vsel %vm692, %v786, 0
      %v867 = vsel %vm692, %v787, 0
      %v870 = vsel %vm692, %v788, 0
      %v873 = vsel %vm692, %v789, 0
      %v876 = vsel %vm692, %v790, 0
      %v879 = vsel %vm692, %v791, 0
      %v882 = vsel %vm692, %v792, 0
      %v885 = vsel %vm692, %v793, 0
      %v888 = vsel %vm692, %v794, 0
      %v891 = vsel %vm692, %v795, 0
      %893 = vmatprep.subr.mxu0 0.0
      %894 = vmatpush1.msra.mxu0 0.0
      %895 = vmatprep.subr.mxu0 0.0
      %896 = vmatpush1.msra.mxu0 0.0
      %897 = vmatprep.subr.mxu0 0.0
      %898 = vmatpush1.msra.mxu0 0.0
      %899 = vmatprep.subr.mxu0 0.0
      %900 = vmatpush1.msra.mxu0 0.0
      %901 = vmatprep.subr.mxu0 0.0
      %902 = vmatpush1.msra.mxu0 0.0
      %903 = vmatprep.subr.mxu0 0.0
      %904 = vmatpush1.msra.mxu0 0.0
      %905 = vmatprep.subr.mxu0 0.0
      %906 = vmatpush1.msra.mxu0 0.0
      %907 = vmatprep.subr.mxu0 0.0
      %908 = vmatpush1.msra.mxu0 0.0
      %909 = vmatprep.subr.mxu0 0.0
      %910 = vmatpush1.msra.mxu0 0.0
      %911 = vmatprep.subr.mxu0 0.0
      %912 = vmatpush1.msra.mxu0 0.0
      %913 = vmatprep.subr.mxu0 0.0
      %914 = vmatpush1.msra.mxu0 0.0
      %915 = vmatprep.subr.mxu0 0.0
      %916 = vmatpush1.msra.mxu0 0.0
      %917 = vmatprep.subr.mxu0 0.0
      %918 = vmatpush1.msra.mxu0 0.0
      %919 = vmatprep.subr.mxu0 0.0
      %920 = vmatpush1.msra.mxu0 0.0
      %921 = vmatprep.subr.mxu0 0.0
      %922 = vmatpush1.msra.mxu0 0.0
      %923 = vmatprep.subr.mxu0 0.0
      %924 = vmatpush1.msra.mxu0 %v796
      %925 = vmatprep.subr.mxu0 0.0
      %926 = vmatpush2.msra.mxu0 0.0
      %927 = vmatprep.subr.mxu0 0.0
      %928 = vmatpush2.msra.mxu0 0.0
      %929 = vmatprep.subr.mxu0 0.0
      %930 = vmatpush2.msra.mxu0 0.0
      %931 = vmatprep.subr.mxu0 0.0
      %932 = vmatpush2.msra.mxu0 0.0
      %933 = vmatprep.subr.mxu0 0.0
      %934 = vmatpush2.msra.mxu0 0.0
      %935 = vmatprep.subr.mxu0 0.0
      %936 = vmatpush2.msra.mxu0 0.0
      %937 = vmatprep.subr.mxu0 0.0
      %938 = vmatpush2.msra.mxu0 0.0
      %939 = vmatprep.subr.mxu0 0.0
      %940 = vmatpush2.msra.mxu0 0.0
      %941 = vmatprep.subr.mxu0 0.0
      %942 = vmatpush2.msra.mxu0 0.0
      %943 = vmatprep.subr.mxu0 0.0
      %944 = vmatpush2.msra.mxu0 0.0
      %945 = vmatprep.subr.mxu0 0.0
      %946 = vmatpush2.msra.mxu0 0.0
      %947 = vmatprep.subr.mxu0 0.0
      %948 = vmatpush2.msra.mxu0 0.0
      %949 = vmatprep.subr.mxu0 0.0
      %950 = vmatpush2.msra.mxu0 0.0
      %951 = vmatprep.subr.mxu0 0.0
      %952 = vmatpush2.msra.mxu0 0.0
      %953 = vmatprep.subr.mxu0 0.0
      %954 = vmatpush2.msra.mxu0 0.0
      %955 = vmatprep.subr.mxu0 0.0
      %956 = vmatpush2.msra.mxu0 0.0
      %957 = vmatprep.mubr.f32.mxu0 0.0
      %958 = vmatmul.mubr.f32.gmra.mxu0 %v798
      %v959 = vpop.f32.mrf.mxu0
      %v960 = vadd.f32 0.0, %v959
      %v961 = vpop.f32.mrf.mxu0
      %962 = vmatprep.mubr.f32.mxu0 0.0
      %963 = vmatmul.mubr.f32.gmra.mxu0 %v801
      %v964 = vpop.f32.mrf.mxu0
      %v965 = vadd.f32 0.0, %v964
      %v966 = vpop.f32.mrf.mxu0
      %967 = vmatprep.mubr.f32.mxu0 0.0
      %968 = vmatmul.mubr.f32.gmra.mxu0 %v804
      %v969 = vpop.f32.mrf.mxu0
      %v970 = vadd.f32 0.0, %v969
      %v971 = vpop.f32.mrf.mxu0
      %972 = vmatprep.mubr.f32.mxu0 0.0
      %973 = vmatmul.mubr.f32.gmra.mxu0 %v807
      %v974 = vpop.f32.mrf.mxu0
      %v975 = vadd.f32 0.0, %v974
      %v976 = vpop.f32.mrf.mxu0
      %977 = vmatprep.mubr.f32.mxu0 0.0
      %978 = vmatmul.mubr.f32.gmra.mxu0 %v810
      %v979 = vpop.f32.mrf.mxu0
      %v980 = vadd.f32 0.0, %v979
      %v981 = vpop.f32.mrf.mxu0
      %982 = vmatprep.mubr.f32.mxu0 0.0
      %983 = vmatmul.mubr.f32.gmra.mxu0 %v813
      %v984 = vpop.f32.mrf.mxu0
      %v985 = vadd.f32 0.0, %v984
      %v986 = vpop.f32.mrf.mxu0
      %987 = vmatprep.mubr.f32.mxu0 0.0
      %988 = vmatmul.mubr.f32.gmra.mxu0 %v816
      %v989 = vpop.f32.mrf.mxu0
      %v990 = vadd.f32 0.0, %v989
      %v991 = vpop.f32.mrf.mxu0
      %992 = vmatprep.mubr.f32.mxu0 0.0
      %993 = vmatmul.mubr.f32.gmra.mxu0 %v819
      %v994 = vpop.f32.mrf.mxu0
      %v995 = vadd.f32 0.0, %v994
      %v996 = vpop.f32.mrf.mxu0
      %997 = vmatprep.mubr.f32.mxu0 0.0
      %998 = vmatmul.mubr.f32.gmra.mxu0 %v822
      %v999 = vpop.f32.mrf.mxu0
      %v1000 = vadd.f32 0.0, %v999
      %v1001 = vpop.f32.mrf.mxu0
      %1002 = vmatprep.mubr.f32.mxu0 0.0
      %1003 = vmatmul.mubr.f32.gmra.mxu0 %v825
      %v1004 = vpop.f32.mrf.mxu0
      %v1005 = vadd.f32 0.0, %v1004
      %v1006 = vpop.f32.mrf.mxu0
      %1007 = vmatprep.mubr.f32.mxu0 0.0
      %1008 = vmatmul.mubr.f32.gmra.mxu0 %v828
      %v1009 = vpop.f32.mrf.mxu0
      %v1010 = vadd.f32 0.0, %v1009
      %v1011 = vpop.f32.mrf.mxu0
      %1012 = vmatprep.mubr.f32.mxu0 0.0
      %1013 = vmatmul.mubr.f32.gmra.mxu0 %v831
      %v1014 = vpop.f32.mrf.mxu0
      %v1015 = vadd.f32 0.0, %v1014
      %v1016 = vpop.f32.mrf.mxu0
      %1017 = vmatprep.mubr.f32.mxu0 0.0
      %1018 = vmatmul.mubr.f32.gmra.mxu0 %v834
      %v1019 = vpop.f32.mrf.mxu0
      %v1020 = vadd.f32 0.0, %v1019
      %v1021 = vpop.f32.mrf.mxu0
      %1022 = vmatprep.mubr.f32.mxu0 0.0
      %1023 = vmatmul.mubr.f32.gmra.mxu0 %v837
      %v1024 = vpop.f32.mrf.mxu0
      %v1025 = vadd.f32 0.0, %v1024
      %v1026 = vpop.f32.mrf.mxu0
      %1027 = vmatprep.mubr.f32.mxu0 0.0
      %1028 = vmatmul.mubr.f32.gmra.mxu0 %v840
      %v1029 = vpop.f32.mrf.mxu0
      %v1030 = vadd.f32 0.0, %v1029
      %v1031 = vpop.f32.mrf.mxu0
      %1032 = vmatprep.mubr.f32.mxu0 0.0
      %1033 = vmatmul.mubr.f32.gmra.mxu0 %v843
      %v1034 = vpop.f32.mrf.mxu0
      %v1035 = vadd.f32 0.0, %v1034
      %v1036 = vpop.f32.mrf.mxu0
      %1037 = vmatprep.mubr.f32.mxu0 0.0
      %1038 = vmatmul.mubr.f32.gmra.mxu0 %v846
      %v1039 = vpop.f32.mrf.mxu0
      %v1040 = vadd.f32 0.0, %v1039
      %v1041 = vpop.f32.mrf.mxu0
      %1042 = vmatprep.mubr.f32.mxu0 0.0
      %1043 = vmatmul.mubr.f32.gmra.mxu0 %v849
      %v1044 = vpop.f32.mrf.mxu0
      %v1045 = vadd.f32 0.0, %v1044
      %v1046 = vpop.f32.mrf.mxu0
      %1047 = vmatprep.mubr.f32.mxu0 0.0
      %1048 = vmatmul.mubr.f32.gmra.mxu0 %v852
      %v1049 = vpop.f32.mrf.mxu0
      %v1050 = vadd.f32 0.0, %v1049
      %v1051 = vpop.f32.mrf.mxu0
      %1052 = vmatprep.mubr.f32.mxu0 0.0
      %1053 = vmatmul.mubr.f32.gmra.mxu0 %v855
      %v1054 = vpop.f32.mrf.mxu0
      %v1055 = vadd.f32 0.0, %v1054
      %v1056 = vpop.f32.mrf.mxu0
      %1057 = vmatprep.mubr.f32.mxu0 0.0
      %1058 = vmatmul.mubr.f32.gmra.mxu0 %v858
      %v1059 = vpop.f32.mrf.mxu0
      %v1060 = vadd.f32 0.0, %v1059
      %v1061 = vpop.f32.mrf.mxu0
      %1062 = vmatprep.mubr.f32.mxu0 0.0
      %1063 = vmatmul.mubr.f32.gmra.mxu0 %v861
      %v1064 = vpop.f32.mrf.mxu0
      %v1065 = vadd.f32 0.0, %v1064
      %v1066 = vpop.f32.mrf.mxu0
      %1067 = vmatprep.mubr.f32.mxu0 0.0
      %1068 = vmatmul.mubr.f32.gmra.mxu0 %v864
      %v1069 = vpop.f32.mrf.mxu0
      %v1070 = vadd.f32 0.0, %v1069
      %v1071 = vpop.f32.mrf.mxu0
      %1072 = vmatprep.mubr.f32.mxu0 0.0
      %1073 = vmatmul.mubr.f32.gmra.mxu0 %v867
      %v1074 = vpop.f32.mrf.mxu0
      %v1075 = vadd.f32 0.0, %v1074
      %v1076 = vpop.f32.mrf.mxu0
      %1077 = vmatprep.mubr.f32.mxu0 0.0
      %1078 = vmatmul.mubr.f32.gmra.mxu0 %v870
      %v1079 = vpop.f32.mrf.mxu0
      %v1080 = vadd.f32 0.0, %v1079
      %v1081 = vpop.f32.mrf.mxu0
      %1082 = vmatprep.mubr.f32.mxu0 0.0
      %1083 = vmatmul.mubr.f32.gmra.mxu0 %v873
      %v1084 = vpop.f32.mrf.mxu0
      %v1085 = vadd.f32 0.0, %v1084
      %v1086 = vpop.f32.mrf.mxu0
      %1087 = vmatprep.mubr.f32.mxu0 0.0
      %1088 = vmatmul.mubr.f32.gmra.mxu0 %v876
      %v1089 = vpop.f32.mrf.mxu0
      %v1090 = vadd.f32 0.0, %v1089
      %v1091 = vpop.f32.mrf.mxu0
      %1092 = vmatprep.mubr.f32.mxu0 0.0
      %1093 = vmatmul.mubr.f32.gmra.mxu0 %v879
      %v1094 = vpop.f32.mrf.mxu0
      %v1095 = vadd.f32 0.0, %v1094
      %v1096 = vpop.f32.mrf.mxu0
      %1097 = vmatprep.mubr.f32.mxu0 0.0
      %1098 = vmatmul.mubr.f32.gmra.mxu0 %v882
      %v1099 = vpop.f32.mrf.mxu0
      %v1100 = vadd.f32 0.0, %v1099
      %v1101 = vpop.f32.mrf.mxu0
      %1102 = vmatprep.mubr.f32.mxu0 0.0
      %1103 = vmatmul.mubr.f32.gmra.mxu0 %v885
      %v1104 = vpop.f32.mrf.mxu0
      %v1105 = vadd.f32 0.0, %v1104
      %v1106 = vpop.f32.mrf.mxu0
      %1107 = vmatprep.mubr.f32.mxu0 0.0
      %1108 = vmatmul.mubr.f32.gmra.mxu0 %v888
      %v1109 = vpop.f32.mrf.mxu0
      %v1110 = vadd.f32 0.0, %v1109
      %v1111 = vpop.f32.mrf.mxu0
      %1112 = vmatprep.mubr.f32.mxu0 0.0
      %1113 = vmatmul.mubr.f32.gmra.mxu0 %v891
      %v1114 = vpop.f32.mrf.mxu0
      %v1115 = vadd.f32 0.0, %v1114
      %v1116 = vpop.f32.mrf.mxu0
      %1117 = vdwg.mxu0
      %v1119 = vsel %vm692, %v731, 0
      %v1122 = vsel %vm692, %v732, 0
      %v1125 = vsel %vm692, %v733, 0
      %v1128 = vsel %vm692, %v734, 0
      %v1131 = vsel %vm692, %v735, 0
      %v1134 = vsel %vm692, %v736, 0
      %v1137 = vsel %vm692, %v737, 0
      %v1140 = vsel %vm692, %v738, 0
      %v1143 = vsel %vm692, %v739, 0
      %v1146 = vsel %vm692, %v740, 0
      %v1149 = vsel %vm692, %v741, 0
      %v1152 = vsel %vm692, %v742, 0
      %v1155 = vsel %vm692, %v743, 0
      %v1158 = vsel %vm692, %v744, 0
      %v1161 = vsel %vm692, %v745, 0
      %v1164 = vsel %vm692, %v746, 0
      %v1167 = vsel %vm692, %v747, 0
      %v1170 = vsel %vm692, %v748, 0
      %v1173 = vsel %vm692, %v749, 0
      %v1176 = vsel %vm692, %v750, 0
      %v1179 = vsel %vm692, %v751, 0
      %v1182 = vsel %vm692, %v752, 0
      %v1185 = vsel %vm692, %v753, 0
      %v1188 = vsel %vm692, %v754, 0
      %v1191 = vsel %vm692, %v755, 0
      %v1194 = vsel %vm692, %v756, 0
      %v1197 = vsel %vm692, %v757, 0
      %v1200 = vsel %vm692, %v758, 0
      %v1203 = vsel %vm692, %v759, 0
      %v1206 = vsel %vm692, %v760, 0
      %v1209 = vsel %vm692, %v761, 0
      %v1212 = vsel %vm692, %v762, 0
      %1214 = vmatprep.subr.mxu0 0.0
      %1215 = vmatpush1.msra.mxu0 0.0
      %1216 = vmatprep.subr.mxu0 0.0
      %1217 = vmatpush1.msra.mxu0 0.0
      %1218 = vmatprep.subr.mxu0 0.0
      %1219 = vmatpush1.msra.mxu0 0.0
      %1220 = vmatprep.subr.mxu0 0.0
      %1221 = vmatpush1.msra.mxu0 0.0
      %1222 = vmatprep.subr.mxu0 0.0
      %1223 = vmatpush1.msra.mxu0 0.0
      %1224 = vmatprep.subr.mxu0 0.0
      %1225 = vmatpush1.msra.mxu0 0.0
      %1226 = vmatprep.subr.mxu0 0.0
      %1227 = vmatpush1.msra.mxu0 0.0
      %1228 = vmatprep.subr.mxu0 0.0
      %1229 = vmatpush1.msra.mxu0 0.0
      %1230 = vmatprep.subr.mxu0 0.0
      %1231 = vmatpush1.msra.mxu0 0.0
      %1232 = vmatprep.subr.mxu0 0.0
      %1233 = vmatpush1.msra.mxu0 0.0
      %1234 = vmatprep.subr.mxu0 0.0
      %1235 = vmatpush1.msra.mxu0 0.0
      %1236 = vmatprep.subr.mxu0 0.0
      %1237 = vmatpush1.msra.mxu0 0.0
      %1238 = vmatprep.subr.mxu0 0.0
      %1239 = vmatpush1.msra.mxu0 0.0
      %1240 = vmatprep.subr.mxu0 0.0
      %1241 = vmatpush1.msra.mxu0 0.0
      %1242 = vmatprep.subr.mxu0 0.0
      %1243 = vmatpush1.msra.mxu0 0.0
      %1244 = vmatprep.subr.mxu0 0.0
      %1245 = vmatpush1.msra.mxu0 %v763
      %1246 = vmatprep.subr.mxu0 0.0
      %1247 = vmatpush2.msra.mxu0 0.0
      %1248 = vmatprep.subr.mxu0 0.0
      %1249 = vmatpush2.msra.mxu0 0.0
      %1250 = vmatprep.subr.mxu0 0.0
      %1251 = vmatpush2.msra.mxu0 0.0
      %1252 = vmatprep.subr.mxu0 0.0
      %1253 = vmatpush2.msra.mxu0 0.0
      %1254 = vmatprep.subr.mxu0 0.0
      %1255 = vmatpush2.msra.mxu0 0.0
      %1256 = vmatprep.subr.mxu0 0.0
      %1257 = vmatpush2.msra.mxu0 0.0
      %1258 = vmatprep.subr.mxu0 0.0
      %1259 = vmatpush2.msra.mxu0 0.0
      %1260 = vmatprep.subr.mxu0 0.0
      %1261 = vmatpush2.msra.mxu0 0.0
      %1262 = vmatprep.subr.mxu0 0.0
      %1263 = vmatpush2.msra.mxu0 0.0
      %1264 = vmatprep.subr.mxu0 0.0
      %1265 = vmatpush2.msra.mxu0 0.0
      %1266 = vmatprep.subr.mxu0 0.0
      %1267 = vmatpush2.msra.mxu0 0.0
      %1268 = vmatprep.subr.mxu0 0.0
      %1269 = vmatpush2.msra.mxu0 0.0
      %1270 = vmatprep.subr.mxu0 0.0
      %1271 = vmatpush2.msra.mxu0 0.0
      %1272 = vmatprep.subr.mxu0 0.0
      %1273 = vmatpush2.msra.mxu0 0.0
      %1274 = vmatprep.subr.mxu0 0.0
      %1275 = vmatpush2.msra.mxu0 0.0
      %1276 = vmatprep.subr.mxu0 0.0
      %1277 = vmatpush2.msra.mxu0 0.0
      %1278 = vmatprep.mubr.f32.mxu0 0.0
      %1279 = vmatmul.mubr.f32.gmra.mxu0 %v1119
      %v1280 = vpop.f32.mrf.mxu0
      %v1281 = vadd.f32 %v960, %v1280
      %v1282 = vpop.f32.mrf.mxu0
      %1283 = vmatprep.mubr.f32.mxu0 0.0
      %1284 = vmatmul.mubr.f32.gmra.mxu0 %v1122
      %v1285 = vpop.f32.mrf.mxu0
      %v1286 = vadd.f32 %v965, %v1285
      %v1287 = vpop.f32.mrf.mxu0
      %1288 = vmatprep.mubr.f32.mxu0 0.0
      %1289 = vmatmul.mubr.f32.gmra.mxu0 %v1125
      %v1290 = vpop.f32.mrf.mxu0
      %v1291 = vadd.f32 %v970, %v1290
      %v1292 = vpop.f32.mrf.mxu0
      %1293 = vmatprep.mubr.f32.mxu0 0.0
      %1294 = vmatmul.mubr.f32.gmra.mxu0 %v1128
      %v1295 = vpop.f32.mrf.mxu0
      %v1296 = vadd.f32 %v975, %v1295
      %v1297 = vpop.f32.mrf.mxu0
      %1298 = vmatprep.mubr.f32.mxu0 0.0
      %1299 = vmatmul.mubr.f32.gmra.mxu0 %v1131
      %v1300 = vpop.f32.mrf.mxu0
      %v1301 = vadd.f32 %v980, %v1300
      %v1302 = vpop.f32.mrf.mxu0
      %1303 = vmatprep.mubr.f32.mxu0 0.0
      %1304 = vmatmul.mubr.f32.gmra.mxu0 %v1134
      %v1305 = vpop.f32.mrf.mxu0
      %v1306 = vadd.f32 %v985, %v1305
      %v1307 = vpop.f32.mrf.mxu0
      %1308 = vmatprep.mubr.f32.mxu0 0.0
      %1309 = vmatmul.mubr.f32.gmra.mxu0 %v1137
      %v1310 = vpop.f32.mrf.mxu0
      %v1311 = vadd.f32 %v990, %v1310
      %v1312 = vpop.f32.mrf.mxu0
      %1313 = vmatprep.mubr.f32.mxu0 0.0
      %1314 = vmatmul.mubr.f32.gmra.mxu0 %v1140
      %v1315 = vpop.f32.mrf.mxu0
      %v1316 = vadd.f32 %v995, %v1315
      %v1317 = vpop.f32.mrf.mxu0
      %1318 = vmatprep.mubr.f32.mxu0 0.0
      %1319 = vmatmul.mubr.f32.gmra.mxu0 %v1143
      %v1320 = vpop.f32.mrf.mxu0
      %v1321 = vadd.f32 %v1000, %v1320
      %v1322 = vpop.f32.mrf.mxu0
      %1323 = vmatprep.mubr.f32.mxu0 0.0
      %1324 = vmatmul.mubr.f32.gmra.mxu0 %v1146
      %v1325 = vpop.f32.mrf.mxu0
      %v1326 = vadd.f32 %v1005, %v1325
      %v1327 = vpop.f32.mrf.mxu0
      %1328 = vmatprep.mubr.f32.mxu0 0.0
      %1329 = vmatmul.mubr.f32.gmra.mxu0 %v1149
      %v1330 = vpop.f32.mrf.mxu0
      %v1331 = vadd.f32 %v1010, %v1330
      %v1332 = vpop.f32.mrf.mxu0
      %1333 = vmatprep.mubr.f32.mxu0 0.0
      %1334 = vmatmul.mubr.f32.gmra.mxu0 %v1152
      %v1335 = vpop.f32.mrf.mxu0
      %v1336 = vadd.f32 %v1015, %v1335
      %v1337 = vpop.f32.mrf.mxu0
      %1338 = vmatprep.mubr.f32.mxu0 0.0
      %1339 = vmatmul.mubr.f32.gmra.mxu0 %v1155
      %v1340 = vpop.f32.mrf.mxu0
      %v1341 = vadd.f32 %v1020, %v1340
      %v1342 = vpop.f32.mrf.mxu0
      %1343 = vmatprep.mubr.f32.mxu0 0.0
      %1344 = vmatmul.mubr.f32.gmra.mxu0 %v1158
      %v1345 = vpop.f32.mrf.mxu0
      %v1346 = vadd.f32 %v1025, %v1345
      %v1347 = vpop.f32.mrf.mxu0
      %1348 = vmatprep.mubr.f32.mxu0 0.0
      %1349 = vmatmul.mubr.f32.gmra.mxu0 %v1161
      %v1350 = vpop.f32.mrf.mxu0
      %v1351 = vadd.f32 %v1030, %v1350
      %v1352 = vpop.f32.mrf.mxu0
      %1353 = vmatprep.mubr.f32.mxu0 0.0
      %1354 = vmatmul.mubr.f32.gmra.mxu0 %v1164
      %v1355 = vpop.f32.mrf.mxu0
      %v1356 = vadd.f32 %v1035, %v1355
      %v1357 = vpop.f32.mrf.mxu0
      %1358 = vmatprep.mubr.f32.mxu0 0.0
      %1359 = vmatmul.mubr.f32.gmra.mxu0 %v1167
      %v1360 = vpop.f32.mrf.mxu0
      %v1361 = vadd.f32 %v1040, %v1360
      %v1362 = vpop.f32.mrf.mxu0
      %1363 = vmatprep.mubr.f32.mxu0 0.0
      %1364 = vmatmul.mubr.f32.gmra.mxu0 %v1170
      %v1365 = vpop.f32.mrf.mxu0
      %v1366 = vadd.f32 %v1045, %v1365
      %v1367 = vpop.f32.mrf.mxu0
      %1368 = vmatprep.mubr.f32.mxu0 0.0
      %1369 = vmatmul.mubr.f32.gmra.mxu0 %v1173
      %v1370 = vpop.f32.mrf.mxu0
      %v1371 = vadd.f32 %v1050, %v1370
      %v1372 = vpop.f32.mrf.mxu0
      %1373 = vmatprep.mubr.f32.mxu0 0.0
      %1374 = vmatmul.mubr.f32.gmra.mxu0 %v1176
      %v1375 = vpop.f32.mrf.mxu0
      %v1376 = vadd.f32 %v1055, %v1375
      %v1377 = vpop.f32.mrf.mxu0
      %1378 = vmatprep.mubr.f32.mxu0 0.0
      %1379 = vmatmul.mubr.f32.gmra.mxu0 %v1179
      %v1380 = vpop.f32.mrf.mxu0
      %v1381 = vadd.f32 %v1060, %v1380
      %v1382 = vpop.f32.mrf.mxu0
      %1383 = vmatprep.mubr.f32.mxu0 0.0
      %1384 = vmatmul.mubr.f32.gmra.mxu0 %v1182
      %v1385 = vpop.f32.mrf.mxu0
      %v1386 = vadd.f32 %v1065, %v1385
      %v1387 = vpop.f32.mrf.mxu0
      %1388 = vmatprep.mubr.f32.mxu0 0.0
      %1389 = vmatmul.mubr.f32.gmra.mxu0 %v1185
      %v1390 = vpop.f32.mrf.mxu0
      %v1391 = vadd.f32 %v1070, %v1390
      %v1392 = vpop.f32.mrf.mxu0
      %1393 = vmatprep.mubr.f32.mxu0 0.0
      %1394 = vmatmul.mubr.f32.gmra.mxu0 %v1188
      %v1395 = vpop.f32.mrf.mxu0
      %v1396 = vadd.f32 %v1075, %v1395
      %v1397 = vpop.f32.mrf.mxu0
      %1398 = vmatprep.mubr.f32.mxu0 0.0
      %1399 = vmatmul.mubr.f32.gmra.mxu0 %v1191
      %v1400 = vpop.f32.mrf.mxu0
      %v1401 = vadd.f32 %v1080, %v1400
      %v1402 = vpop.f32.mrf.mxu0
      %1403 = vmatprep.mubr.f32.mxu0 0.0
      %1404 = vmatmul.mubr.f32.gmra.mxu0 %v1194
      %v1405 = vpop.f32.mrf.mxu0
      %v1406 = vadd.f32 %v1085, %v1405
      %v1407 = vpop.f32.mrf.mxu0
      %1408 = vmatprep.mubr.f32.mxu0 0.0
      %1409 = vmatmul.mubr.f32.gmra.mxu0 %v1197
      %v1410 = vpop.f32.mrf.mxu0
      %v1411 = vadd.f32 %v1090, %v1410
      %v1412 = vpop.f32.mrf.mxu0
      %1413 = vmatprep.mubr.f32.mxu0 0.0
      %1414 = vmatmul.mubr.f32.gmra.mxu0 %v1200
      %v1415 = vpop.f32.mrf.mxu0
      %v1416 = vadd.f32 %v1095, %v1415
      %v1417 = vpop.f32.mrf.mxu0
      %1418 = vmatprep.mubr.f32.mxu0 0.0
      %1419 = vmatmul.mubr.f32.gmra.mxu0 %v1203
      %v1420 = vpop.f32.mrf.mxu0
      %v1421 = vadd.f32 %v1100, %v1420
      %v1422 = vpop.f32.mrf.mxu0
      %1423 = vmatprep.mubr.f32.mxu0 0.0
      %1424 = vmatmul.mubr.f32.gmra.mxu0 %v1206
      %v1425 = vpop.f32.mrf.mxu0
      %v1426 = vadd.f32 %v1105, %v1425
      %v1427 = vpop.f32.mrf.mxu0
      %1428 = vmatprep.mubr.f32.mxu0 0.0
      %1429 = vmatmul.mubr.f32.gmra.mxu0 %v1209
      %v1430 = vpop.f32.mrf.mxu0
      %v1431 = vadd.f32 %v1110, %v1430
      %v1432 = vpop.f32.mrf.mxu0
      %1433 = vmatprep.mubr.f32.mxu0 0.0
      %1434 = vmatmul.mubr.f32.gmra.mxu0 %v1212
      %v1435 = vpop.f32.mrf.mxu0
      %v1436 = vadd.f32 %v1115, %v1435
      %v1437 = vpop.f32.mrf.mxu0
      %1438 = vdwg.mxu0
      %v1439 = vld [vmem:[#allocation2 + $0x2] sm:$0xff]
      %v1440 = vld [vmem:[#allocation2 + $0xa] sm:$0xff]
      %v1441 = vld [vmem:[#allocation2 + $0x1a] sm:$0xff]
      %v1442 = vld [vmem:[#allocation2 + $0x22] sm:$0xff]
      %v1443 = vld [vmem:[#allocation2 + $0x32] sm:$0xff]
      %v1444 = vld [vmem:[#allocation2 + $0x3a] sm:$0xff]
      %v1445 = vld [vmem:[#allocation2 + $0x4a] sm:$0xff]
      %v1446 = vld [vmem:[#allocation2 + $0x52] sm:$0xff]
      %v1447 = vld [vmem:[#allocation2 + $0x62] sm:$0xff]
      %v1448 = vld [vmem:[#allocation2 + $0x6a] sm:$0xff]
      %v1449 = vld [vmem:[#allocation2 + $0x7a] sm:$0xff]
      %v1450 = vld [vmem:[#allocation2 + $0x82] sm:$0xff]
      %v1451 = vld [vmem:[#allocation2 + $0x92] sm:$0xff]
      %v1452 = vld [vmem:[#allocation2 + $0x9a] sm:$0xff]
      %v1453 = vld [vmem:[#allocation2 + $0xaa] sm:$0xff]
      %v1454 = vld [vmem:[#allocation2 + $0xb2] sm:$0xff]
      %v1455 = vld [vmem:[#allocation2 + $0xc2] sm:$0xff]
      %v1456 = vld [vmem:[#allocation2 + $0xca] sm:$0xff]
      %v1457 = vld [vmem:[#allocation2 + $0xda] sm:$0xff]
      %v1458 = vld [vmem:[#allocation2 + $0xe2] sm:$0xff]
      %v1459 = vld [vmem:[#allocation2 + $0xf2] sm:$0xff]
      %v1460 = vld [vmem:[#allocation2 + $0xfa] sm:$0xff]
      %v1461 = vld [vmem:[#allocation2 + $0x10a] sm:$0xff]
      %v1462 = vld [vmem:[#allocation2 + $0x112] sm:$0xff]
      %v1463 = vld [vmem:[#allocation2 + $0x122] sm:$0xff]
      %v1464 = vld [vmem:[#allocation2 + $0x12a] sm:$0xff]
      %v1465 = vld [vmem:[#allocation2 + $0x13a] sm:$0xff]
      %v1466 = vld [vmem:[#allocation2 + $0x142] sm:$0xff]
      %v1467 = vld [vmem:[#allocation2 + $0x152] sm:$0xff]
      %v1468 = vld [vmem:[#allocation2 + $0x15a] sm:$0xff]
      %v1469 = vld [vmem:[#allocation2 + $0x16a] sm:$0xff]
      %v1470 = vld [vmem:[#allocation2 + $0x172] sm:$0xff]
      %v1471 = vld [vmem:[%s4 + $0x10] sm:$0xff]
      %v1473 = vsel %vm692, %v1439, 0
      %v1476 = vsel %vm692, %v1440, 0
      %v1479 = vsel %vm692, %v1441, 0
      %v1482 = vsel %vm692, %v1442, 0
      %v1485 = vsel %vm692, %v1443, 0
      %v1488 = vsel %vm692, %v1444, 0
      %v1491 = vsel %vm692, %v1445, 0
      %v1494 = vsel %vm692, %v1446, 0
      %v1497 = vsel %vm692, %v1447, 0
      %v1500 = vsel %vm692, %v1448, 0
      %v1503 = vsel %vm692, %v1449, 0
      %v1506 = vsel %vm692, %v1450, 0
      %v1509 = vsel %vm692, %v1451, 0
      %v1512 = vsel %vm692, %v1452, 0
      %v1515 = vsel %vm692, %v1453, 0
      %v1518 = vsel %vm692, %v1454, 0
      %v1521 = vsel %vm692, %v1455, 0
      %v1524 = vsel %vm692, %v1456, 0
      %v1527 = vsel %vm692, %v1457, 0
      %v1530 = vsel %vm692, %v1458, 0
      %v1533 = vsel %vm692, %v1459, 0
      %v1536 = vsel %vm692, %v1460, 0
      %v1539 = vsel %vm692, %v1461, 0
      %v1542 = vsel %vm692, %v1462, 0
      %v1545 = vsel %vm692, %v1463, 0
      %v1548 = vsel %vm692, %v1464, 0
      %v1551 = vsel %vm692, %v1465, 0
      %v1554 = vsel %vm692, %v1466, 0
      %v1557 = vsel %vm692, %v1467, 0
      %v1560 = vsel %vm692, %v1468, 0
      %v1563 = vsel %vm692, %v1469, 0
      %v1566 = vsel %vm692, %v1470, 0
      %1568 = vmatprep.subr.mxu0 0.0
      %1569 = vmatpush1.msra.mxu0 0.0
      %1570 = vmatprep.subr.mxu0 0.0
      %1571 = vmatpush1.msra.mxu0 0.0
      %1572 = vmatprep.subr.mxu0 0.0
      %1573 = vmatpush1.msra.mxu0 0.0
      %1574 = vmatprep.subr.mxu0 0.0
      %1575 = vmatpush1.msra.mxu0 0.0
      %1576 = vmatprep.subr.mxu0 0.0
      %1577 = vmatpush1.msra.mxu0 0.0
      %1578 = vmatprep.subr.mxu0 0.0
      %1579 = vmatpush1.msra.mxu0 0.0
      %1580 = vmatprep.subr.mxu0 0.0
      %1581 = vmatpush1.msra.mxu0 0.0
      %1582 = vmatprep.subr.mxu0 0.0
      %1583 = vmatpush1.msra.mxu0 0.0
      %1584 = vmatprep.subr.mxu0 0.0
      %1585 = vmatpush1.msra.mxu0 0.0
      %1586 = vmatprep.subr.mxu0 0.0
      %1587 = vmatpush1.msra.mxu0 0.0
      %1588 = vmatprep.subr.mxu0 0.0
      %1589 = vmatpush1.msra.mxu0 0.0
      %1590 = vmatprep.subr.mxu0 0.0
      %1591 = vmatpush1.msra.mxu0 0.0
      %1592 = vmatprep.subr.mxu0 0.0
      %1593 = vmatpush1.msra.mxu0 0.0
      %1594 = vmatprep.subr.mxu0 0.0
      %1595 = vmatpush1.msra.mxu0 0.0
      %1596 = vmatprep.subr.mxu0 0.0
      %1597 = vmatpush1.msra.mxu0 0.0
      %1598 = vmatprep.subr.mxu0 0.0
      %1599 = vmatpush1.msra.mxu0 %v1471
      %1600 = vmatprep.subr.mxu0 0.0
      %1601 = vmatpush2.msra.mxu0 0.0
      %1602 = vmatprep.subr.mxu0 0.0
      %1603 = vmatpush2.msra.mxu0 0.0
      %1604 = vmatprep.subr.mxu0 0.0
      %1605 = vmatpush2.msra.mxu0 0.0
      %1606 = vmatprep.subr.mxu0 0.0
      %1607 = vmatpush2.msra.mxu0 0.0
      %1608 = vmatprep.subr.mxu0 0.0
      %1609 = vmatpush2.msra.mxu0 0.0
      %1610 = vmatprep.subr.mxu0 0.0
      %1611 = vmatpush2.msra.mxu0 0.0
      %1612 = vmatprep.subr.mxu0 0.0
      %1613 = vmatpush2.msra.mxu0 0.0
      %1614 = vmatprep.subr.mxu0 0.0
      %1615 = vmatpush2.msra.mxu0 0.0
      %1616 = vmatprep.subr.mxu0 0.0
      %1617 = vmatpush2.msra.mxu0 0.0
      %1618 = vmatprep.subr.mxu0 0.0
      %1619 = vmatpush2.msra.mxu0 0.0
      %1620 = vmatprep.subr.mxu0 0.0
      %1621 = vmatpush2.msra.mxu0 0.0
      %1622 = vmatprep.subr.mxu0 0.0
      %1623 = vmatpush2.msra.mxu0 0.0
      %1624 = vmatprep.subr.mxu0 0.0
      %1625 = vmatpush2.msra.mxu0 0.0
      %1626 = vmatprep.subr.mxu0 0.0
      %1627 = vmatpush2.msra.mxu0 0.0
      %1628 = vmatprep.subr.mxu0 0.0
      %1629 = vmatpush2.msra.mxu0 0.0
      %1630 = vmatprep.subr.mxu0 0.0
      %1631 = vmatpush2.msra.mxu0 0.0
      %1632 = vmatprep.mubr.f32.mxu0 0.0
      %1633 = vmatmul.mubr.f32.gmra.mxu0 %v1473
      %v1634 = vpop.f32.mrf.mxu0
      %v1635 = vadd.f32 0.0, %v1634
      %v1636 = vpop.f32.mrf.mxu0
      %1637 = vmatprep.mubr.f32.mxu0 0.0
      %1638 = vmatmul.mubr.f32.gmra.mxu0 %v1476
      %v1639 = vpop.f32.mrf.mxu0
      %v1640 = vadd.f32 0.0, %v1639
      %v1641 = vpop.f32.mrf.mxu0
      %1642 = vmatprep.mubr.f32.mxu0 0.0
      %1643 = vmatmul.mubr.f32.gmra.mxu0 %v1479
      %v1644 = vpop.f32.mrf.mxu0
      %v1645 = vadd.f32 0.0, %v1644
      %v1646 = vpop.f32.mrf.mxu0
      %1647 = vmatprep.mubr.f32.mxu0 0.0
      %1648 = vmatmul.mubr.f32.gmra.mxu0 %v1482
      %v1649 = vpop.f32.mrf.mxu0
      %v1650 = vadd.f32 0.0, %v1649
      %v1651 = vpop.f32.mrf.mxu0
      %1652 = vmatprep.mubr.f32.mxu0 0.0
      %1653 = vmatmul.mubr.f32.gmra.mxu0 %v1485
      %v1654 = vpop.f32.mrf.mxu0
      %v1655 = vadd.f32 0.0, %v1654
      %v1656 = vpop.f32.mrf.mxu0
      %1657 = vmatprep.mubr.f32.mxu0 0.0
      %1658 = vmatmul.mubr.f32.gmra.mxu0 %v1488
      %v1659 = vpop.f32.mrf.mxu0
      %v1660 = vadd.f32 0.0, %v1659
      %v1661 = vpop.f32.mrf.mxu0
      %1662 = vmatprep.mubr.f32.mxu0 0.0
      %1663 = vmatmul.mubr.f32.gmra.mxu0 %v1491
      %v1664 = vpop.f32.mrf.mxu0
      %v1665 = vadd.f32 0.0, %v1664
      %v1666 = vpop.f32.mrf.mxu0
      %1667 = vmatprep.mubr.f32.mxu0 0.0
      %1668 = vmatmul.mubr.f32.gmra.mxu0 %v1494
      %v1669 = vpop.f32.mrf.mxu0
      %v1670 = vadd.f32 0.0, %v1669
      %v1671 = vpop.f32.mrf.mxu0
      %1672 = vmatprep.mubr.f32.mxu0 0.0
      %1673 = vmatmul.mubr.f32.gmra.mxu0 %v1497
      %v1674 = vpop.f32.mrf.mxu0
      %v1675 = vadd.f32 0.0, %v1674
      %v1676 = vpop.f32.mrf.mxu0
      %1677 = vmatprep.mubr.f32.mxu0 0.0
      %1678 = vmatmul.mubr.f32.gmra.mxu0 %v1500
      %v1679 = vpop.f32.mrf.mxu0
      %v1680 = vadd.f32 0.0, %v1679
      %v1681 = vpop.f32.mrf.mxu0
      %1682 = vmatprep.mubr.f32.mxu0 0.0
      %1683 = vmatmul.mubr.f32.gmra.mxu0 %v1503
      %v1684 = vpop.f32.mrf.mxu0
      %v1685 = vadd.f32 0.0, %v1684
      %v1686 = vpop.f32.mrf.mxu0
      %1687 = vmatprep.mubr.f32.mxu0 0.0
      %1688 = vmatmul.mubr.f32.gmra.mxu0 %v1506
      %v1689 = vpop.f32.mrf.mxu0
      %v1690 = vadd.f32 0.0, %v1689
      %v1691 = vpop.f32.mrf.mxu0
      %1692 = vmatprep.mubr.f32.mxu0 0.0
      %1693 = vmatmul.mubr.f32.gmra.mxu0 %v1509
      %v1694 = vpop.f32.mrf.mxu0
      %v1695 = vadd.f32 0.0, %v1694
      %v1696 = vpop.f32.mrf.mxu0
      %1697 = vmatprep.mubr.f32.mxu0 0.0
      %1698 = vmatmul.mubr.f32.gmra.mxu0 %v1512
      %v1699 = vpop.f32.mrf.mxu0
      %v1700 = vadd.f32 0.0, %v1699
      %v1701 = vpop.f32.mrf.mxu0
      %1702 = vmatprep.mubr.f32.mxu0 0.0
      %1703 = vmatmul.mubr.f32.gmra.mxu0 %v1515
      %v1704 = vpop.f32.mrf.mxu0
      %v1705 = vadd.f32 0.0, %v1704
      %v1706 = vpop.f32.mrf.mxu0
      %1707 = vmatprep.mubr.f32.mxu0 0.0
      %1708 = vmatmul.mubr.f32.gmra.mxu0 %v1518
      %v1709 = vpop.f32.mrf.mxu0
      %v1710 = vadd.f32 0.0, %v1709
      %v1711 = vpop.f32.mrf.mxu0
      %1712 = vmatprep.mubr.f32.mxu0 0.0
      %1713 = vmatmul.mubr.f32.gmra.mxu0 %v1521
      %v1714 = vpop.f32.mrf.mxu0
      %v1715 = vadd.f32 0.0, %v1714
      %v1716 = vpop.f32.mrf.mxu0
      %1717 = vmatprep.mubr.f32.mxu0 0.0
      %1718 = vmatmul.mubr.f32.gmra.mxu0 %v1524
      %v1719 = vpop.f32.mrf.mxu0
      %v1720 = vadd.f32 0.0, %v1719
      %v1721 = vpop.f32.mrf.mxu0
      %1722 = vmatprep.mubr.f32.mxu0 0.0
      %1723 = vmatmul.mubr.f32.gmra.mxu0 %v1527
      %v1724 = vpop.f32.mrf.mxu0
      %v1725 = vadd.f32 0.0, %v1724
      %v1726 = vpop.f32.mrf.mxu0
      %1727 = vmatprep.mubr.f32.mxu0 0.0
      %1728 = vmatmul.mubr.f32.gmra.mxu0 %v1530
      %v1729 = vpop.f32.mrf.mxu0
      %v1730 = vadd.f32 0.0, %v1729
      %v1731 = vpop.f32.mrf.mxu0
      %1732 = vmatprep.mubr.f32.mxu0 0.0
      %1733 = vmatmul.mubr.f32.gmra.mxu0 %v1533
      %v1734 = vpop.f32.mrf.mxu0
      %v1735 = vadd.f32 0.0, %v1734
      %v1736 = vpop.f32.mrf.mxu0
      %1737 = vmatprep.mubr.f32.mxu0 0.0
      %1738 = vmatmul.mubr.f32.gmra.mxu0 %v1536
      %v1739 = vpop.f32.mrf.mxu0
      %v1740 = vadd.f32 0.0, %v1739
      %v1741 = vpop.f32.mrf.mxu0
      %1742 = vmatprep.mubr.f32.mxu0 0.0
      %1743 = vmatmul.mubr.f32.gmra.mxu0 %v1539
      %v1744 = vpop.f32.mrf.mxu0
      %v1745 = vadd.f32 0.0, %v1744
      %v1746 = vpop.f32.mrf.mxu0
      %1747 = vmatprep.mubr.f32.mxu0 0.0
      %1748 = vmatmul.mubr.f32.gmra.mxu0 %v1542
      %v1749 = vpop.f32.mrf.mxu0
      %v1750 = vadd.f32 0.0, %v1749
      %v1751 = vpop.f32.mrf.mxu0
      %1752 = vmatprep.mubr.f32.mxu0 0.0
      %1753 = vmatmul.mubr.f32.gmra.mxu0 %v1545
      %v1754 = vpop.f32.mrf.mxu0
      %v1755 = vadd.f32 0.0, %v1754
      %v1756 = vpop.f32.mrf.mxu0
      %1757 = vmatprep.mubr.f32.mxu0 0.0
      %1758 = vmatmul.mubr.f32.gmra.mxu0 %v1548
      %v1759 = vpop.f32.mrf.mxu0
      %v1760 = vadd.f32 0.0, %v1759
      %v1761 = vpop.f32.mrf.mxu0
      %1762 = vmatprep.mubr.f32.mxu0 0.0
      %1763 = vmatmul.mubr.f32.gmra.mxu0 %v1551
      %v1764 = vpop.f32.mrf.mxu0
      %v1765 = vadd.f32 0.0, %v1764
      %v1766 = vpop.f32.mrf.mxu0
      %1767 = vmatprep.mubr.f32.mxu0 0.0
      %1768 = vmatmul.mubr.f32.gmra.mxu0 %v1554
      %v1769 = vpop.f32.mrf.mxu0
      %v1770 = vadd.f32 0.0, %v1769
      %v1771 = vpop.f32.mrf.mxu0
      %1772 = vmatprep.mubr.f32.mxu0 0.0
      %1773 = vmatmul.mubr.f32.gmra.mxu0 %v1557
      %v1774 = vpop.f32.mrf.mxu0
      %v1775 = vadd.f32 0.0, %v1774
      %v1776 = vpop.f32.mrf.mxu0
      %1777 = vmatprep.mubr.f32.mxu0 0.0
      %1778 = vmatmul.mubr.f32.gmra.mxu0 %v1560
      %v1779 = vpop.f32.mrf.mxu0
      %v1780 = vadd.f32 0.0, %v1779
      %v1781 = vpop.f32.mrf.mxu0
      %1782 = vmatprep.mubr.f32.mxu0 0.0
      %1783 = vmatmul.mubr.f32.gmra.mxu0 %v1563
      %v1784 = vpop.f32.mrf.mxu0
      %v1785 = vadd.f32 0.0, %v1784
      %v1786 = vpop.f32.mrf.mxu0
      %1787 = vmatprep.mubr.f32.mxu0 0.0
      %1788 = vmatmul.mubr.f32.gmra.mxu0 %v1566
      %v1789 = vpop.f32.mrf.mxu0
      %v1790 = vadd.f32 0.0, %v1789
      %v1791 = vpop.f32.mrf.mxu0
      %1792 = vdwg.mxu0
      %v1793 = vadd.f32 %v1281, %v1635
      %v1794 = vadd.f32 %v1286, %v1640
      %v1795 = vadd.f32 %v1291, %v1645
      %v1796 = vadd.f32 %v1296, %v1650
      %v1797 = vadd.f32 %v1301, %v1655
      %v1798 = vadd.f32 %v1306, %v1660
      %v1799 = vadd.f32 %v1311, %v1665
      %v1800 = vadd.f32 %v1316, %v1670
      %v1801 = vadd.f32 %v1321, %v1675
      %v1802 = vadd.f32 %v1326, %v1680
      %v1803 = vadd.f32 %v1331, %v1685
      %v1804 = vadd.f32 %v1336, %v1690
      %v1805 = vadd.f32 %v1341, %v1695
      %v1806 = vadd.f32 %v1346, %v1700
      %v1807 = vadd.f32 %v1351, %v1705
      %v1808 = vadd.f32 %v1356, %v1710
      %v1809 = vadd.f32 %v1361, %v1715
      %v1810 = vadd.f32 %v1366, %v1720
      %v1811 = vadd.f32 %v1371, %v1725
      %v1812 = vadd.f32 %v1376, %v1730
      %v1813 = vadd.f32 %v1381, %v1735
      %v1814 = vadd.f32 %v1386, %v1740
      %v1815 = vadd.f32 %v1391, %v1745
      %v1816 = vadd.f32 %v1396, %v1750
      %v1817 = vadd.f32 %v1401, %v1755
      %v1818 = vadd.f32 %v1406, %v1760
      %v1819 = vadd.f32 %v1411, %v1765
      %v1820 = vadd.f32 %v1416, %v1770
      %v1821 = vadd.f32 %v1421, %v1775
      %v1822 = vadd.f32 %v1426, %v1780
      %v1823 = vadd.f32 %v1431, %v1785
      %v1824 = vadd.f32 %v1436, %v1790
      %v1825 = vld [vmem:[%s698] sm:$0xff]
      %v1826 = vld [vmem:[%s698 + $0x8] sm:$0xff]
      %v1827 = vld [vmem:[%s698 + $0x18] sm:$0xff]
      %v1828 = vld [vmem:[%s698 + $0x20] sm:$0xff]
      %v1829 = vld [vmem:[%s698 + $0x30] sm:$0xff]
      %v1830 = vld [vmem:[%s698 + $0x38] sm:$0xff]
      %v1831 = vld [vmem:[%s698 + $0x48] sm:$0xff]
      %v1832 = vld [vmem:[%s698 + $0x50] sm:$0xff]
      %v1833 = vld [vmem:[%s698 + $0x60] sm:$0xff]
      %v1834 = vld [vmem:[%s698 + $0x68] sm:$0xff]
      %v1835 = vld [vmem:[%s698 + $0x78] sm:$0xff]
      %v1836 = vld [vmem:[%s698 + $0x80] sm:$0xff]
      %v1837 = vld [vmem:[%s698 + $0x90] sm:$0xff]
      %v1838 = vld [vmem:[%s698 + $0x98] sm:$0xff]
      %v1839 = vld [vmem:[%s698 + $0xa8] sm:$0xff]
      %v1840 = vld [vmem:[%s698 + $0xb0] sm:$0xff]
      %v1841 = vld [vmem:[%s698 + $0xc0] sm:$0xff]
      %v1842 = vld [vmem:[%s698 + $0xc8] sm:$0xff]
      %v1843 = vld [vmem:[%s698 + $0xd8] sm:$0xff]
      %v1844 = vld [vmem:[%s698 + $0xe0] sm:$0xff]
      %v1845 = vld [vmem:[%s698 + $0xf0] sm:$0xff]
      %v1846 = vld [vmem:[%s698 + $0xf8] sm:$0xff]
      %v1847 = vld [vmem:[%s698 + $0x108] sm:$0xff]
      %v1848 = vld [vmem:[%s698 + $0x110] sm:$0xff]
      %v1849 = vld [vmem:[%s698 + $0x120] sm:$0xff]
      %v1850 = vld [vmem:[%s698 + $0x128] sm:$0xff]
      %v1851 = vld [vmem:[%s698 + $0x138] sm:$0xff]
      %v1852 = vld [vmem:[%s698 + $0x140] sm:$0xff]
      %v1853 = vld [vmem:[%s698 + $0x150] sm:$0xff]
      %v1854 = vld [vmem:[%s698 + $0x158] sm:$0xff]
      %v1855 = vld [vmem:[%s698 + $0x168] sm:$0xff]
      %v1856 = vld [vmem:[%s698 + $0x170] sm:$0xff]
      %v1857 = vld [vmem:[%s4 + $0x18] sm:$0xff]
      %v1859 = vsel %vm692, %v1825, 0
      %v1862 = vsel %vm692, %v1826, 0
      %v1865 = vsel %vm692, %v1827, 0
      %v1868 = vsel %vm692, %v1828, 0
      %v1871 = vsel %vm692, %v1829, 0
      %v1874 = vsel %vm692, %v1830, 0
      %v1877 = vsel %vm692, %v1831, 0
      %v1880 = vsel %vm692, %v1832, 0
      %v1883 = vsel %vm692, %v1833, 0
      %v1886 = vsel %vm692, %v1834, 0
      %v1889 = vsel %vm692, %v1835, 0
      %v1892 = vsel %vm692, %v1836, 0
      %v1895 = vsel %vm692, %v1837, 0
      %v1898 = vsel %vm692, %v1838, 0
      %v1901 = vsel %vm692, %v1839, 0
      %v1904 = vsel %vm692, %v1840, 0
      %v1907 = vsel %vm692, %v1841, 0
      %v1910 = vsel %vm692, %v1842, 0
      %v1913 = vsel %vm692, %v1843, 0
      %v1916 = vsel %vm692, %v1844, 0
      %v1919 = vsel %vm692, %v1845, 0
      %v1922 = vsel %vm692, %v1846, 0
      %v1925 = vsel %vm692, %v1847, 0
      %v1928 = vsel %vm692, %v1848, 0
      %v1931 = vsel %vm692, %v1849, 0
      %v1934 = vsel %vm692, %v1850, 0
      %v1937 = vsel %vm692, %v1851, 0
      %v1940 = vsel %vm692, %v1852, 0
      %v1943 = vsel %vm692, %v1853, 0
      %v1946 = vsel %vm692, %v1854, 0
      %v1949 = vsel %vm692, %v1855, 0
      %v1952 = vsel %vm692, %v1856, 0
      %1954 = vmatprep.subr.mxu0 0.0
      %1955 = vmatpush1.msra.mxu0 0.0
      %1956 = vmatprep.subr.mxu0 0.0
      %1957 = vmatpush1.msra.mxu0 0.0
      %1958 = vmatprep.subr.mxu0 0.0
      %1959 = vmatpush1.msra.mxu0 0.0
      %1960 = vmatprep.subr.mxu0 0.0
      %1961 = vmatpush1.msra.mxu0 0.0
      %1962 = vmatprep.subr.mxu0 0.0
      %1963 = vmatpush1.msra.mxu0 0.0
      %1964 = vmatprep.subr.mxu0 0.0
      %1965 = vmatpush1.msra.mxu0 0.0
      %1966 = vmatprep.subr.mxu0 0.0
      %1967 = vmatpush1.msra.mxu0 0.0
      %1968 = vmatprep.subr.mxu0 0.0
      %1969 = vmatpush1.msra.mxu0 0.0
      %1970 = vmatprep.subr.mxu0 0.0
      %1971 = vmatpush1.msra.mxu0 0.0
      %1972 = vmatprep.subr.mxu0 0.0
      %1973 = vmatpush1.msra.mxu0 0.0
      %1974 = vmatprep.subr.mxu0 0.0
      %1975 = vmatpush1.msra.mxu0 0.0
      %1976 = vmatprep.subr.mxu0 0.0
      %1977 = vmatpush1.msra.mxu0 0.0
      %1978 = vmatprep.subr.mxu0 0.0
      %1979 = vmatpush1.msra.mxu0 0.0
      %1980 = vmatprep.subr.mxu0 0.0
      %1981 = vmatpush1.msra.mxu0 0.0
      %1982 = vmatprep.subr.mxu0 0.0
      %1983 = vmatpush1.msra.mxu0 0.0
      %1984 = vmatprep.subr.mxu0 0.0
      %1985 = vmatpush1.msra.mxu0 %v1857
      %1986 = vmatprep.subr.mxu0 0.0
      %1987 = vmatpush2.msra.mxu0 0.0
      %1988 = vmatprep.subr.mxu0 0.0
      %1989 = vmatpush2.msra.mxu0 0.0
      %1990 = vmatprep.subr.mxu0 0.0
      %1991 = vmatpush2.msra.mxu0 0.0
      %1992 = vmatprep.subr.mxu0 0.0
      %1993 = vmatpush2.msra.mxu0 0.0
      %1994 = vmatprep.subr.mxu0 0.0
      %1995 = vmatpush2.msra.mxu0 0.0
      %1996 = vmatprep.subr.mxu0 0.0
      %1997 = vmatpush2.msra.mxu0 0.0
      %1998 = vmatprep.subr.mxu0 0.0
      %1999 = vmatpush2.msra.mxu0 0.0
      %2000 = vmatprep.subr.mxu0 0.0
      %2001 = vmatpush2.msra.mxu0 0.0
      %2002 = vmatprep.subr.mxu0 0.0
      %2003 = vmatpush2.msra.mxu0 0.0
      %2004 = vmatprep.subr.mxu0 0.0
      %2005 = vmatpush2.msra.mxu0 0.0
      %2006 = vmatprep.subr.mxu0 0.0
      %2007 = vmatpush2.msra.mxu0 0.0
      %2008 = vmatprep.subr.mxu0 0.0
      %2009 = vmatpush2.msra.mxu0 0.0
      %2010 = vmatprep.subr.mxu0 0.0
      %2011 = vmatpush2.msra.mxu0 0.0
      %2012 = vmatprep.subr.mxu0 0.0
      %2013 = vmatpush2.msra.mxu0 0.0
      %2014 = vmatprep.subr.mxu0 0.0
      %2015 = vmatpush2.msra.mxu0 0.0
      %2016 = vmatprep.subr.mxu0 0.0
      %2017 = vmatpush2.msra.mxu0 0.0
      %2018 = vmatprep.mubr.f32.mxu0 0.0
      %2019 = vmatmul.mubr.f32.gmra.mxu0 %v1859
      %v2020 = vpop.f32.mrf.mxu0
      %v2021 = vadd.f32 0.0, %v2020
      %v2022 = vpop.f32.mrf.mxu0
      %2023 = vmatprep.mubr.f32.mxu0 0.0
      %2024 = vmatmul.mubr.f32.gmra.mxu0 %v1862
      %v2025 = vpop.f32.mrf.mxu0
      %v2026 = vadd.f32 0.0, %v2025
      %v2027 = vpop.f32.mrf.mxu0
      %2028 = vmatprep.mubr.f32.mxu0 0.0
      %2029 = vmatmul.mubr.f32.gmra.mxu0 %v1865
      %v2030 = vpop.f32.mrf.mxu0
      %v2031 = vadd.f32 0.0, %v2030
      %v2032 = vpop.f32.mrf.mxu0
      %2033 = vmatprep.mubr.f32.mxu0 0.0
      %2034 = vmatmul.mubr.f32.gmra.mxu0 %v1868
      %v2035 = vpop.f32.mrf.mxu0
      %v2036 = vadd.f32 0.0, %v2035
      %v2037 = vpop.f32.mrf.mxu0
      %2038 = vmatprep.mubr.f32.mxu0 0.0
      %2039 = vmatmul.mubr.f32.gmra.mxu0 %v1871
      %v2040 = vpop.f32.mrf.mxu0
      %v2041 = vadd.f32 0.0, %v2040
      %v2042 = vpop.f32.mrf.mxu0
      %2043 = vmatprep.mubr.f32.mxu0 0.0
      %2044 = vmatmul.mubr.f32.gmra.mxu0 %v1874
      %v2045 = vpop.f32.mrf.mxu0
      %v2046 = vadd.f32 0.0, %v2045
      %v2047 = vpop.f32.mrf.mxu0
      %2048 = vmatprep.mubr.f32.mxu0 0.0
      %2049 = vmatmul.mubr.f32.gmra.mxu0 %v1877
      %v2050 = vpop.f32.mrf.mxu0
      %v2051 = vadd.f32 0.0, %v2050
      %v2052 = vpop.f32.mrf.mxu0
      %2053 = vmatprep.mubr.f32.mxu0 0.0
      %2054 = vmatmul.mubr.f32.gmra.mxu0 %v1880
      %v2055 = vpop.f32.mrf.mxu0
      %v2056 = vadd.f32 0.0, %v2055
      %v2057 = vpop.f32.mrf.mxu0
      %2058 = vmatprep.mubr.f32.mxu0 0.0
      %2059 = vmatmul.mubr.f32.gmra.mxu0 %v1883
      %v2060 = vpop.f32.mrf.mxu0
      %v2061 = vadd.f32 0.0, %v2060
      %v2062 = vpop.f32.mrf.mxu0
      %2063 = vmatprep.mubr.f32.mxu0 0.0
      %2064 = vmatmul.mubr.f32.gmra.mxu0 %v1886
      %v2065 = vpop.f32.mrf.mxu0
      %v2066 = vadd.f32 0.0, %v2065
      %v2067 = vpop.f32.mrf.mxu0
      %2068 = vmatprep.mubr.f32.mxu0 0.0
      %2069 = vmatmul.mubr.f32.gmra.mxu0 %v1889
      %v2070 = vpop.f32.mrf.mxu0
      %v2071 = vadd.f32 0.0, %v2070
      %v2072 = vpop.f32.mrf.mxu0
      %2073 = vmatprep.mubr.f32.mxu0 0.0
      %2074 = vmatmul.mubr.f32.gmra.mxu0 %v1892
      %v2075 = vpop.f32.mrf.mxu0
      %v2076 = vadd.f32 0.0, %v2075
      %v2077 = vpop.f32.mrf.mxu0
      %2078 = vmatprep.mubr.f32.mxu0 0.0
      %2079 = vmatmul.mubr.f32.gmra.mxu0 %v1895
      %v2080 = vpop.f32.mrf.mxu0
      %v2081 = vadd.f32 0.0, %v2080
      %v2082 = vpop.f32.mrf.mxu0
      %2083 = vmatprep.mubr.f32.mxu0 0.0
      %2084 = vmatmul.mubr.f32.gmra.mxu0 %v1898
      %v2085 = vpop.f32.mrf.mxu0
      %v2086 = vadd.f32 0.0, %v2085
      %v2087 = vpop.f32.mrf.mxu0
      %2088 = vmatprep.mubr.f32.mxu0 0.0
      %2089 = vmatmul.mubr.f32.gmra.mxu0 %v1901
      %v2090 = vpop.f32.mrf.mxu0
      %v2091 = vadd.f32 0.0, %v2090
      %v2092 = vpop.f32.mrf.mxu0
      %2093 = vmatprep.mubr.f32.mxu0 0.0
      %2094 = vmatmul.mubr.f32.gmra.mxu0 %v1904
      %v2095 = vpop.f32.mrf.mxu0
      %v2096 = vadd.f32 0.0, %v2095
      %v2097 = vpop.f32.mrf.mxu0
      %2098 = vmatprep.mubr.f32.mxu0 0.0
      %2099 = vmatmul.mubr.f32.gmra.mxu0 %v1907
      %v2100 = vpop.f32.mrf.mxu0
      %v2101 = vadd.f32 0.0, %v2100
      %v2102 = vpop.f32.mrf.mxu0
      %2103 = vmatprep.mubr.f32.mxu0 0.0
      %2104 = vmatmul.mubr.f32.gmra.mxu0 %v1910
      %v2105 = vpop.f32.mrf.mxu0
      %v2106 = vadd.f32 0.0, %v2105
      %v2107 = vpop.f32.mrf.mxu0
      %2108 = vmatprep.mubr.f32.mxu0 0.0
      %2109 = vmatmul.mubr.f32.gmra.mxu0 %v1913
      %v2110 = vpop.f32.mrf.mxu0
      %v2111 = vadd.f32 0.0, %v2110
      %v2112 = vpop.f32.mrf.mxu0
      %2113 = vmatprep.mubr.f32.mxu0 0.0
      %2114 = vmatmul.mubr.f32.gmra.mxu0 %v1916
      %v2115 = vpop.f32.mrf.mxu0
      %v2116 = vadd.f32 0.0, %v2115
      %v2117 = vpop.f32.mrf.mxu0
      %2118 = vmatprep.mubr.f32.mxu0 0.0
      %2119 = vmatmul.mubr.f32.gmra.mxu0 %v1919
      %v2120 = vpop.f32.mrf.mxu0
      %v2121 = vadd.f32 0.0, %v2120
      %v2122 = vpop.f32.mrf.mxu0
      %2123 = vmatprep.mubr.f32.mxu0 0.0
      %2124 = vmatmul.mubr.f32.gmra.mxu0 %v1922
      %v2125 = vpop.f32.mrf.mxu0
      %v2126 = vadd.f32 0.0, %v2125
      %v2127 = vpop.f32.mrf.mxu0
      %2128 = vmatprep.mubr.f32.mxu0 0.0
      %2129 = vmatmul.mubr.f32.gmra.mxu0 %v1925
      %v2130 = vpop.f32.mrf.mxu0
      %v2131 = vadd.f32 0.0, %v2130
      %v2132 = vpop.f32.mrf.mxu0
      %2133 = vmatprep.mubr.f32.mxu0 0.0
      %2134 = vmatmul.mubr.f32.gmra.mxu0 %v1928
      %v2135 = vpop.f32.mrf.mxu0
      %v2136 = vadd.f32 0.0, %v2135
      %v2137 = vpop.f32.mrf.mxu0
      %2138 = vmatprep.mubr.f32.mxu0 0.0
      %2139 = vmatmul.mubr.f32.gmra.mxu0 %v1931
      %v2140 = vpop.f32.mrf.mxu0
      %v2141 = vadd.f32 0.0, %v2140
      %v2142 = vpop.f32.mrf.mxu0
      %2143 = vmatprep.mubr.f32.mxu0 0.0
      %2144 = vmatmul.mubr.f32.gmra.mxu0 %v1934
      %v2145 = vpop.f32.mrf.mxu0
      %v2146 = vadd.f32 0.0, %v2145
      %v2147 = vpop.f32.mrf.mxu0
      %2148 = vmatprep.mubr.f32.mxu0 0.0
      %2149 = vmatmul.mubr.f32.gmra.mxu0 %v1937
      %v2150 = vpop.f32.mrf.mxu0
      %v2151 = vadd.f32 0.0, %v2150
      %v2152 = vpop.f32.mrf.mxu0
      %2153 = vmatprep.mubr.f32.mxu0 0.0
      %2154 = vmatmul.mubr.f32.gmra.mxu0 %v1940
      %v2155 = vpop.f32.mrf.mxu0
      %v2156 = vadd.f32 0.0, %v2155
      %v2157 = vpop.f32.mrf.mxu0
      %2158 = vmatprep.mubr.f32.mxu0 0.0
      %2159 = vmatmul.mubr.f32.gmra.mxu0 %v1943
      %v2160 = vpop.f32.mrf.mxu0
      %v2161 = vadd.f32 0.0, %v2160
      %v2162 = vpop.f32.mrf.mxu0
      %2163 = vmatprep.mubr.f32.mxu0 0.0
      %2164 = vmatmul.mubr.f32.gmra.mxu0 %v1946
      %v2165 = vpop.f32.mrf.mxu0
      %v2166 = vadd.f32 0.0, %v2165
      %v2167 = vpop.f32.mrf.mxu0
      %2168 = vmatprep.mubr.f32.mxu0 0.0
      %2169 = vmatmul.mubr.f32.gmra.mxu0 %v1949
      %v2170 = vpop.f32.mrf.mxu0
      %v2171 = vadd.f32 0.0, %v2170
      %v2172 = vpop.f32.mrf.mxu0
      %2173 = vmatprep.mubr.f32.mxu0 0.0
      %2174 = vmatmul.mubr.f32.gmra.mxu0 %v1952
      %v2175 = vpop.f32.mrf.mxu0
      %v2176 = vadd.f32 0.0, %v2175
      %v2177 = vpop.f32.mrf.mxu0
      %2178 = vdwg.mxu0
      %v2179 = vadd.f32 %v1793, %v2021
      %v2180 = vadd.f32 %v1794, %v2026
      %v2181 = vadd.f32 %v1795, %v2031
      %v2182 = vadd.f32 %v1796, %v2036
      %v2183 = vadd.f32 %v1797, %v2041
      %v2184 = vadd.f32 %v1798, %v2046
      %v2185 = vadd.f32 %v1799, %v2051
      %v2186 = vadd.f32 %v1800, %v2056
      %v2187 = vadd.f32 %v1801, %v2061
      %v2188 = vadd.f32 %v1802, %v2066
      %v2189 = vadd.f32 %v1803, %v2071
      %v2190 = vadd.f32 %v1804, %v2076
      %v2191 = vadd.f32 %v1805, %v2081
      %v2192 = vadd.f32 %v1806, %v2086
      %v2193 = vadd.f32 %v1807, %v2091
      %v2194 = vadd.f32 %v1808, %v2096
      %v2195 = vadd.f32 %v1809, %v2101
      %v2196 = vadd.f32 %v1810, %v2106
      %v2197 = vadd.f32 %v1811, %v2111
      %v2198 = vadd.f32 %v1812, %v2116
      %v2199 = vadd.f32 %v1813, %v2121
      %v2200 = vadd.f32 %v1814, %v2126
      %v2201 = vadd.f32 %v1815, %v2131
      %v2202 = vadd.f32 %v1816, %v2136
      %v2203 = vadd.f32 %v1817, %v2141
      %v2204 = vadd.f32 %v1818, %v2146
      %v2205 = vadd.f32 %v1819, %v2151
      %v2206 = vadd.f32 %v1820, %v2156
      %v2207 = vadd.f32 %v1821, %v2161
      %v2208 = vadd.f32 %v1822, %v2166
      %v2209 = vadd.f32 %v1823, %v2171
      %v2210 = vadd.f32 %v1824, %v2176
      %v2211 = vld [vmem:[%s698 + $0x1] sm:$0xff]
      %v2212 = vld [vmem:[%s698 + $0x9] sm:$0xff]
      %v2213 = vld [vmem:[%s698 + $0x19] sm:$0xff]
      %v2214 = vld [vmem:[%s698 + $0x21] sm:$0xff]
      %v2215 = vld [vmem:[%s698 + $0x31] sm:$0xff]
      %v2216 = vld [vmem:[%s698 + $0x39] sm:$0xff]
      %v2217 = vld [vmem:[%s698 + $0x49] sm:$0xff]
      %v2218 = vld [vmem:[%s698 + $0x51] sm:$0xff]
      %v2219 = vld [vmem:[%s698 + $0x61] sm:$0xff]
      %v2220 = vld [vmem:[%s698 + $0x69] sm:$0xff]
      %v2221 = vld [vmem:[%s698 + $0x79] sm:$0xff]
      %v2222 = vld [vmem:[%s698 + $0x81] sm:$0xff]
      %v2223 = vld [vmem:[%s698 + $0x91] sm:$0xff]
      %v2224 = vld [vmem:[%s698 + $0x99] sm:$0xff]
      %v2225 = vld [vmem:[%s698 + $0xa9] sm:$0xff]
      %v2226 = vld [vmem:[%s698 + $0xb1] sm:$0xff]
      %v2227 = vld [vmem:[%s698 + $0xc1] sm:$0xff]
      %v2228 = vld [vmem:[%s698 + $0xc9] sm:$0xff]
      %v2229 = vld [vmem:[%s698 + $0xd9] sm:$0xff]
      %v2230 = vld [vmem:[%s698 + $0xe1] sm:$0xff]
      %v2231 = vld [vmem:[%s698 + $0xf1] sm:$0xff]
      %v2232 = vld [vmem:[%s698 + $0xf9] sm:$0xff]
      %v2233 = vld [vmem:[%s698 + $0x109] sm:$0xff]
      %v2234 = vld [vmem:[%s698 + $0x111] sm:$0xff]
      %v2235 = vld [vmem:[%s698 + $0x121] sm:$0xff]
      %v2236 = vld [vmem:[%s698 + $0x129] sm:$0xff]
      %v2237 = vld [vmem:[%s698 + $0x139] sm:$0xff]
      %v2238 = vld [vmem:[%s698 + $0x141] sm:$0xff]
      %v2239 = vld [vmem:[%s698 + $0x151] sm:$0xff]
      %v2240 = vld [vmem:[%s698 + $0x159] sm:$0xff]
      %v2241 = vld [vmem:[%s698 + $0x169] sm:$0xff]
      %v2242 = vld [vmem:[%s698 + $0x171] sm:$0xff]
      %v2243 = vld [vmem:[%s4 + $0x20] sm:$0xff]
      %v2245 = vsel %vm692, %v2211, 0
      %v2248 = vsel %vm692, %v2212, 0
      %v2251 = vsel %vm692, %v2213, 0
      %v2254 = vsel %vm692, %v2214, 0
      %v2257 = vsel %vm692, %v2215, 0
      %v2260 = vsel %vm692, %v2216, 0
      %v2263 = vsel %vm692, %v2217, 0
      %v2266 = vsel %vm692, %v2218, 0
      %v2269 = vsel %vm692, %v2219, 0
      %v2272 = vsel %vm692, %v2220, 0
      %v2275 = vsel %vm692, %v2221, 0
      %v2278 = vsel %vm692, %v2222, 0
      %v2281 = vsel %vm692, %v2223, 0
      %v2284 = vsel %vm692, %v2224, 0
      %v2287 = vsel %vm692, %v2225, 0
      %v2290 = vsel %vm692, %v2226, 0
      %v2293 = vsel %vm692, %v2227, 0
      %v2296 = vsel %vm692, %v2228, 0
      %v2299 = vsel %vm692, %v2229, 0
      %v2302 = vsel %vm692, %v2230, 0
      %v2305 = vsel %vm692, %v2231, 0
      %v2308 = vsel %vm692, %v2232, 0
      %v2311 = vsel %vm692, %v2233, 0
      %v2314 = vsel %vm692, %v2234, 0
      %v2317 = vsel %vm692, %v2235, 0
      %v2320 = vsel %vm692, %v2236, 0
      %v2323 = vsel %vm692, %v2237, 0
      %v2326 = vsel %vm692, %v2238, 0
      %v2329 = vsel %vm692, %v2239, 0
      %v2332 = vsel %vm692, %v2240, 0
      %v2335 = vsel %vm692, %v2241, 0
      %v2338 = vsel %vm692, %v2242, 0
      %2340 = vmatprep.subr.mxu0 0.0
      %2341 = vmatpush1.msra.mxu0 0.0
      %2342 = vmatprep.subr.mxu0 0.0
      %2343 = vmatpush1.msra.mxu0 0.0
      %2344 = vmatprep.subr.mxu0 0.0
      %2345 = vmatpush1.msra.mxu0 0.0
      %2346 = vmatprep.subr.mxu0 0.0
      %2347 = vmatpush1.msra.mxu0 0.0
      %2348 = vmatprep.subr.mxu0 0.0
      %2349 = vmatpush1.msra.mxu0 0.0
      %2350 = vmatprep.subr.mxu0 0.0
      %2351 = vmatpush1.msra.mxu0 0.0
      %2352 = vmatprep.subr.mxu0 0.0
      %2353 = vmatpush1.msra.mxu0 0.0
      %2354 = vmatprep.subr.mxu0 0.0
      %2355 = vmatpush1.msra.mxu0 0.0
      %2356 = vmatprep.subr.mxu0 0.0
      %2357 = vmatpush1.msra.mxu0 0.0
      %2358 = vmatprep.subr.mxu0 0.0
      %2359 = vmatpush1.msra.mxu0 0.0
      %2360 = vmatprep.subr.mxu0 0.0
      %2361 = vmatpush1.msra.mxu0 0.0
      %2362 = vmatprep.subr.mxu0 0.0
      %2363 = vmatpush1.msra.mxu0 0.0
      %2364 = vmatprep.subr.mxu0 0.0
      %2365 = vmatpush1.msra.mxu0 0.0
      %2366 = vmatprep.subr.mxu0 0.0
      %2367 = vmatpush1.msra.mxu0 0.0
      %2368 = vmatprep.subr.mxu0 0.0
      %2369 = vmatpush1.msra.mxu0 0.0
      %2370 = vmatprep.subr.mxu0 0.0
      %2371 = vmatpush1.msra.mxu0 %v2243
      %2372 = vmatprep.subr.mxu0 0.0
      %2373 = vmatpush2.msra.mxu0 0.0
      %2374 = vmatprep.subr.mxu0 0.0
      %2375 = vmatpush2.msra.mxu0 0.0
      %2376 = vmatprep.subr.mxu0 0.0
      %2377 = vmatpush2.msra.mxu0 0.0
      %2378 = vmatprep.subr.mxu0 0.0
      %2379 = vmatpush2.msra.mxu0 0.0
      %2380 = vmatprep.subr.mxu0 0.0
      %2381 = vmatpush2.msra.mxu0 0.0
      %2382 = vmatprep.subr.mxu0 0.0
      %2383 = vmatpush2.msra.mxu0 0.0
      %2384 = vmatprep.subr.mxu0 0.0
      %2385 = vmatpush2.msra.mxu0 0.0
      %2386 = vmatprep.subr.mxu0 0.0
      %2387 = vmatpush2.msra.mxu0 0.0
      %2388 = vmatprep.subr.mxu0 0.0
      %2389 = vmatpush2.msra.mxu0 0.0
      %2390 = vmatprep.subr.mxu0 0.0
      %2391 = vmatpush2.msra.mxu0 0.0
      %2392 = vmatprep.subr.mxu0 0.0
      %2393 = vmatpush2.msra.mxu0 0.0
      %2394 = vmatprep.subr.mxu0 0.0
      %2395 = vmatpush2.msra.mxu0 0.0
      %2396 = vmatprep.subr.mxu0 0.0
      %2397 = vmatpush2.msra.mxu0 0.0
      %2398 = vmatprep.subr.mxu0 0.0
      %2399 = vmatpush2.msra.mxu0 0.0
      %2400 = vmatprep.subr.mxu0 0.0
      %2401 = vmatpush2.msra.mxu0 0.0
      %2402 = vmatprep.subr.mxu0 0.0
      %2403 = vmatpush2.msra.mxu0 0.0
      %2404 = vmatprep.mubr.f32.mxu0 0.0
      %2405 = vmatmul.mubr.f32.gmra.mxu0 %v2245
      %v2406 = vpop.f32.mrf.mxu0
      %v2407 = vadd.f32 0.0, %v2406
      %v2408 = vpop.f32.mrf.mxu0
      %2409 = vmatprep.mubr.f32.mxu0 0.0
      %2410 = vmatmul.mubr.f32.gmra.mxu0 %v2248
      %v2411 = vpop.f32.mrf.mxu0
      %v2412 = vadd.f32 0.0, %v2411
      %v2413 = vpop.f32.mrf.mxu0
      %2414 = vmatprep.mubr.f32.mxu0 0.0
      %2415 = vmatmul.mubr.f32.gmra.mxu0 %v2251
      %v2416 = vpop.f32.mrf.mxu0
      %v2417 = vadd.f32 0.0, %v2416
      %v2418 = vpop.f32.mrf.mxu0
      %2419 = vmatprep.mubr.f32.mxu0 0.0
      %2420 = vmatmul.mubr.f32.gmra.mxu0 %v2254
      %v2421 = vpop.f32.mrf.mxu0
      %v2422 = vadd.f32 0.0, %v2421
      %v2423 = vpop.f32.mrf.mxu0
      %2424 = vmatprep.mubr.f32.mxu0 0.0
      %2425 = vmatmul.mubr.f32.gmra.mxu0 %v2257
      %v2426 = vpop.f32.mrf.mxu0
      %v2427 = vadd.f32 0.0, %v2426
      %v2428 = vpop.f32.mrf.mxu0
      %2429 = vmatprep.mubr.f32.mxu0 0.0
      %2430 = vmatmul.mubr.f32.gmra.mxu0 %v2260
      %v2431 = vpop.f32.mrf.mxu0
      %v2432 = vadd.f32 0.0, %v2431
      %v2433 = vpop.f32.mrf.mxu0
      %2434 = vmatprep.mubr.f32.mxu0 0.0
      %2435 = vmatmul.mubr.f32.gmra.mxu0 %v2263
      %v2436 = vpop.f32.mrf.mxu0
      %v2437 = vadd.f32 0.0, %v2436
      %v2438 = vpop.f32.mrf.mxu0
      %2439 = vmatprep.mubr.f32.mxu0 0.0
      %2440 = vmatmul.mubr.f32.gmra.mxu0 %v2266
      %v2441 = vpop.f32.mrf.mxu0
      %v2442 = vadd.f32 0.0, %v2441
      %v2443 = vpop.f32.mrf.mxu0
      %2444 = vmatprep.mubr.f32.mxu0 0.0
      %2445 = vmatmul.mubr.f32.gmra.mxu0 %v2269
      %v2446 = vpop.f32.mrf.mxu0
      %v2447 = vadd.f32 0.0, %v2446
      %v2448 = vpop.f32.mrf.mxu0
      %2449 = vmatprep.mubr.f32.mxu0 0.0
      %2450 = vmatmul.mubr.f32.gmra.mxu0 %v2272
      %v2451 = vpop.f32.mrf.mxu0
      %v2452 = vadd.f32 0.0, %v2451
      %v2453 = vpop.f32.mrf.mxu0
      %2454 = vmatprep.mubr.f32.mxu0 0.0
      %2455 = vmatmul.mubr.f32.gmra.mxu0 %v2275
      %v2456 = vpop.f32.mrf.mxu0
      %v2457 = vadd.f32 0.0, %v2456
      %v2458 = vpop.f32.mrf.mxu0
      %2459 = vmatprep.mubr.f32.mxu0 0.0
      %2460 = vmatmul.mubr.f32.gmra.mxu0 %v2278
      %v2461 = vpop.f32.mrf.mxu0
      %v2462 = vadd.f32 0.0, %v2461
      %v2463 = vpop.f32.mrf.mxu0
      %2464 = vmatprep.mubr.f32.mxu0 0.0
      %2465 = vmatmul.mubr.f32.gmra.mxu0 %v2281
      %v2466 = vpop.f32.mrf.mxu0
      %v2467 = vadd.f32 0.0, %v2466
      %v2468 = vpop.f32.mrf.mxu0
      %2469 = vmatprep.mubr.f32.mxu0 0.0
      %2470 = vmatmul.mubr.f32.gmra.mxu0 %v2284
      %v2471 = vpop.f32.mrf.mxu0
      %v2472 = vadd.f32 0.0, %v2471
      %v2473 = vpop.f32.mrf.mxu0
      %2474 = vmatprep.mubr.f32.mxu0 0.0
      %2475 = vmatmul.mubr.f32.gmra.mxu0 %v2287
      %v2476 = vpop.f32.mrf.mxu0
      %v2477 = vadd.f32 0.0, %v2476
      %v2478 = vpop.f32.mrf.mxu0
      %2479 = vmatprep.mubr.f32.mxu0 0.0
      %2480 = vmatmul.mubr.f32.gmra.mxu0 %v2290
      %v2481 = vpop.f32.mrf.mxu0
      %v2482 = vadd.f32 0.0, %v2481
      %v2483 = vpop.f32.mrf.mxu0
      %2484 = vmatprep.mubr.f32.mxu0 0.0
      %2485 = vmatmul.mubr.f32.gmra.mxu0 %v2293
      %v2486 = vpop.f32.mrf.mxu0
      %v2487 = vadd.f32 0.0, %v2486
      %v2488 = vpop.f32.mrf.mxu0
      %2489 = vmatprep.mubr.f32.mxu0 0.0
      %2490 = vmatmul.mubr.f32.gmra.mxu0 %v2296
      %v2491 = vpop.f32.mrf.mxu0
      %v2492 = vadd.f32 0.0, %v2491
      %v2493 = vpop.f32.mrf.mxu0
      %2494 = vmatprep.mubr.f32.mxu0 0.0
      %2495 = vmatmul.mubr.f32.gmra.mxu0 %v2299
      %v2496 = vpop.f32.mrf.mxu0
      %v2497 = vadd.f32 0.0, %v2496
      %v2498 = vpop.f32.mrf.mxu0
      %2499 = vmatprep.mubr.f32.mxu0 0.0
      %2500 = vmatmul.mubr.f32.gmra.mxu0 %v2302
      %v2501 = vpop.f32.mrf.mxu0
      %v2502 = vadd.f32 0.0, %v2501
      %v2503 = vpop.f32.mrf.mxu0
      %2504 = vmatprep.mubr.f32.mxu0 0.0
      %2505 = vmatmul.mubr.f32.gmra.mxu0 %v2305
      %v2506 = vpop.f32.mrf.mxu0
      %v2507 = vadd.f32 0.0, %v2506
      %v2508 = vpop.f32.mrf.mxu0
      %2509 = vmatprep.mubr.f32.mxu0 0.0
      %2510 = vmatmul.mubr.f32.gmra.mxu0 %v2308
      %v2511 = vpop.f32.mrf.mxu0
      %v2512 = vadd.f32 0.0, %v2511
      %v2513 = vpop.f32.mrf.mxu0
      %2514 = vmatprep.mubr.f32.mxu0 0.0
      %2515 = vmatmul.mubr.f32.gmra.mxu0 %v2311
      %v2516 = vpop.f32.mrf.mxu0
      %v2517 = vadd.f32 0.0, %v2516
      %v2518 = vpop.f32.mrf.mxu0
      %2519 = vmatprep.mubr.f32.mxu0 0.0
      %2520 = vmatmul.mubr.f32.gmra.mxu0 %v2314
      %v2521 = vpop.f32.mrf.mxu0
      %v2522 = vadd.f32 0.0, %v2521
      %v2523 = vpop.f32.mrf.mxu0
      %2524 = vmatprep.mubr.f32.mxu0 0.0
      %2525 = vmatmul.mubr.f32.gmra.mxu0 %v2317
      %v2526 = vpop.f32.mrf.mxu0
      %v2527 = vadd.f32 0.0, %v2526
      %v2528 = vpop.f32.mrf.mxu0
      %2529 = vmatprep.mubr.f32.mxu0 0.0
      %2530 = vmatmul.mubr.f32.gmra.mxu0 %v2320
      %v2531 = vpop.f32.mrf.mxu0
      %v2532 = vadd.f32 0.0, %v2531
      %v2533 = vpop.f32.mrf.mxu0
      %2534 = vmatprep.mubr.f32.mxu0 0.0
      %2535 = vmatmul.mubr.f32.gmra.mxu0 %v2323
      %v2536 = vpop.f32.mrf.mxu0
      %v2537 = vadd.f32 0.0, %v2536
      %v2538 = vpop.f32.mrf.mxu0
      %2539 = vmatprep.mubr.f32.mxu0 0.0
      %2540 = vmatmul.mubr.f32.gmra.mxu0 %v2326
      %v2541 = vpop.f32.mrf.mxu0
      %v2542 = vadd.f32 0.0, %v2541
      %v2543 = vpop.f32.mrf.mxu0
      %2544 = vmatprep.mubr.f32.mxu0 0.0
      %2545 = vmatmul.mubr.f32.gmra.mxu0 %v2329
      %v2546 = vpop.f32.mrf.mxu0
      %v2547 = vadd.f32 0.0, %v2546
      %v2548 = vpop.f32.mrf.mxu0
      %2549 = vmatprep.mubr.f32.mxu0 0.0
      %2550 = vmatmul.mubr.f32.gmra.mxu0 %v2332
      %v2551 = vpop.f32.mrf.mxu0
      %v2552 = vadd.f32 0.0, %v2551
      %v2553 = vpop.f32.mrf.mxu0
      %2554 = vmatprep.mubr.f32.mxu0 0.0
      %2555 = vmatmul.mubr.f32.gmra.mxu0 %v2335
      %v2556 = vpop.f32.mrf.mxu0
      %v2557 = vadd.f32 0.0, %v2556
      %v2558 = vpop.f32.mrf.mxu0
      %2559 = vmatprep.mubr.f32.mxu0 0.0
      %2560 = vmatmul.mubr.f32.gmra.mxu0 %v2338
      %v2561 = vpop.f32.mrf.mxu0
      %v2562 = vadd.f32 0.0, %v2561
      %v2563 = vpop.f32.mrf.mxu0
      %2564 = vdwg.mxu0
      %v2565 = vadd.f32 %v2179, %v2407
      %v2566 = vadd.f32 %v2180, %v2412
      %v2567 = vadd.f32 %v2181, %v2417
      %v2568 = vadd.f32 %v2182, %v2422
      %v2569 = vadd.f32 %v2183, %v2427
      %v2570 = vadd.f32 %v2184, %v2432
      %v2571 = vadd.f32 %v2185, %v2437
      %v2572 = vadd.f32 %v2186, %v2442
      %v2573 = vadd.f32 %v2187, %v2447
      %v2574 = vadd.f32 %v2188, %v2452
      %v2575 = vadd.f32 %v2189, %v2457
      %v2576 = vadd.f32 %v2190, %v2462
      %v2577 = vadd.f32 %v2191, %v2467
      %v2578 = vadd.f32 %v2192, %v2472
      %v2579 = vadd.f32 %v2193, %v2477
      %v2580 = vadd.f32 %v2194, %v2482
      %v2581 = vadd.f32 %v2195, %v2487
      %v2582 = vadd.f32 %v2196, %v2492
      %v2583 = vadd.f32 %v2197, %v2497
      %v2584 = vadd.f32 %v2198, %v2502
      %v2585 = vadd.f32 %v2199, %v2507
      %v2586 = vadd.f32 %v2200, %v2512
      %v2587 = vadd.f32 %v2201, %v2517
      %v2588 = vadd.f32 %v2202, %v2522
      %v2589 = vadd.f32 %v2203, %v2527
      %v2590 = vadd.f32 %v2204, %v2532
      %v2591 = vadd.f32 %v2205, %v2537
      %v2592 = vadd.f32 %v2206, %v2542
      %v2593 = vadd.f32 %v2207, %v2547
      %v2594 = vadd.f32 %v2208, %v2552
      %v2595 = vadd.f32 %v2209, %v2557
      %v2596 = vadd.f32 %v2210, %v2562
      %v2597 = vld [vmem:[%s698 + $0x2] sm:$0xff]
      %v2598 = vld [vmem:[%s698 + $0xa] sm:$0xff]
      %v2599 = vld [vmem:[%s698 + $0x1a] sm:$0xff]
      %v2600 = vld [vmem:[%s698 + $0x22] sm:$0xff]
      %v2601 = vld [vmem:[%s698 + $0x32] sm:$0xff]
      %v2602 = vld [vmem:[%s698 + $0x3a] sm:$0xff]
      %v2603 = vld [vmem:[%s698 + $0x4a] sm:$0xff]
      %v2604 = vld [vmem:[%s698 + $0x52] sm:$0xff]
      %v2605 = vld [vmem:[%s698 + $0x62] sm:$0xff]
      %v2606 = vld [vmem:[%s698 + $0x6a] sm:$0xff]
      %v2607 = vld [vmem:[%s698 + $0x7a] sm:$0xff]
      %v2608 = vld [vmem:[%s698 + $0x82] sm:$0xff]
      %v2609 = vld [vmem:[%s698 + $0x92] sm:$0xff]
      %v2610 = vld [vmem:[%s698 + $0x9a] sm:$0xff]
      %v2611 = vld [vmem:[%s698 + $0xaa] sm:$0xff]
      %v2612 = vld [vmem:[%s698 + $0xb2] sm:$0xff]
      %v2613 = vld [vmem:[%s698 + $0xc2] sm:$0xff]
      %v2614 = vld [vmem:[%s698 + $0xca] sm:$0xff]
      %v2615 = vld [vmem:[%s698 + $0xda] sm:$0xff]
      %v2616 = vld [vmem:[%s698 + $0xe2] sm:$0xff]
      %v2617 = vld [vmem:[%s698 + $0xf2] sm:$0xff]
      %v2618 = vld [vmem:[%s698 + $0xfa] sm:$0xff]
      %v2619 = vld [vmem:[%s698 + $0x10a] sm:$0xff]
      %v2620 = vld [vmem:[%s698 + $0x112] sm:$0xff]
      %v2621 = vld [vmem:[%s698 + $0x122] sm:$0xff]
      %v2622 = vld [vmem:[%s698 + $0x12a] sm:$0xff]
      %v2623 = vld [vmem:[%s698 + $0x13a] sm:$0xff]
      %v2624 = vld [vmem:[%s698 + $0x142] sm:$0xff]
      %v2625 = vld [vmem:[%s698 + $0x152] sm:$0xff]
      %v2626 = vld [vmem:[%s698 + $0x15a] sm:$0xff]
      %v2627 = vld [vmem:[%s698 + $0x16a] sm:$0xff]
      %v2628 = vld [vmem:[%s698 + $0x172] sm:$0xff]
      %v2629 = vld [vmem:[%s4 + $0x28] sm:$0xff]
      %v2631 = vsel %vm692, %v2597, 0
      %v2634 = vsel %vm692, %v2598, 0
      %v2637 = vsel %vm692, %v2599, 0
      %v2640 = vsel %vm692, %v2600, 0
      %v2643 = vsel %vm692, %v2601, 0
      %v2646 = vsel %vm692, %v2602, 0
      %v2649 = vsel %vm692, %v2603, 0
      %v2652 = vsel %vm692, %v2604, 0
      %v2655 = vsel %vm692, %v2605, 0
      %v2658 = vsel %vm692, %v2606, 0
      %v2661 = vsel %vm692, %v2607, 0
      %v2664 = vsel %vm692, %v2608, 0
      %v2667 = vsel %vm692, %v2609, 0
      %v2670 = vsel %vm692, %v2610, 0
      %v2673 = vsel %vm692, %v2611, 0
      %v2676 = vsel %vm692, %v2612, 0
      %v2679 = vsel %vm692, %v2613, 0
      %v2682 = vsel %vm692, %v2614, 0
      %v2685 = vsel %vm692, %v2615, 0
      %v2688 = vsel %vm692, %v2616, 0
      %v2691 = vsel %vm692, %v2617, 0
      %v2694 = vsel %vm692, %v2618, 0
      %v2697 = vsel %vm692, %v2619, 0
      %v2700 = vsel %vm692, %v2620, 0
      %v2703 = vsel %vm692, %v2621, 0
      %v2706 = vsel %vm692, %v2622, 0
      %v2709 = vsel %vm692, %v2623, 0
      %v2712 = vsel %vm692, %v2624, 0
      %v2715 = vsel %vm692, %v2625, 0
      %v2718 = vsel %vm692, %v2626, 0
      %v2721 = vsel %vm692, %v2627, 0
      %v2724 = vsel %vm692, %v2628, 0
      %2726 = vmatprep.subr.mxu0 0.0
      %2727 = vmatpush1.msra.mxu0 0.0
      %2728 = vmatprep.subr.mxu0 0.0
      %2729 = vmatpush1.msra.mxu0 0.0
      %2730 = vmatprep.subr.mxu0 0.0
      %2731 = vmatpush1.msra.mxu0 0.0
      %2732 = vmatprep.subr.mxu0 0.0
      %2733 = vmatpush1.msra.mxu0 0.0
      %2734 = vmatprep.subr.mxu0 0.0
      %2735 = vmatpush1.msra.mxu0 0.0
      %2736 = vmatprep.subr.mxu0 0.0
      %2737 = vmatpush1.msra.mxu0 0.0
      %2738 = vmatprep.subr.mxu0 0.0
      %2739 = vmatpush1.msra.mxu0 0.0
      %2740 = vmatprep.subr.mxu0 0.0
      %2741 = vmatpush1.msra.mxu0 0.0
      %2742 = vmatprep.subr.mxu0 0.0
      %2743 = vmatpush1.msra.mxu0 0.0
      %2744 = vmatprep.subr.mxu0 0.0
      %2745 = vmatpush1.msra.mxu0 0.0
      %2746 = vmatprep.subr.mxu0 0.0
      %2747 = vmatpush1.msra.mxu0 0.0
      %2748 = vmatprep.subr.mxu0 0.0
      %2749 = vmatpush1.msra.mxu0 0.0
      %2750 = vmatprep.subr.mxu0 0.0
      %2751 = vmatpush1.msra.mxu0 0.0
      %2752 = vmatprep.subr.mxu0 0.0
      %2753 = vmatpush1.msra.mxu0 0.0
      %2754 = vmatprep.subr.mxu0 0.0
      %2755 = vmatpush1.msra.mxu0 0.0
      %2756 = vmatprep.subr.mxu0 0.0
      %2757 = vmatpush1.msra.mxu0 %v2629
      %2758 = vmatprep.subr.mxu0 0.0
      %2759 = vmatpush2.msra.mxu0 0.0
      %2760 = vmatprep.subr.mxu0 0.0
      %2761 = vmatpush2.msra.mxu0 0.0
      %2762 = vmatprep.subr.mxu0 0.0
      %2763 = vmatpush2.msra.mxu0 0.0
      %2764 = vmatprep.subr.mxu0 0.0
      %2765 = vmatpush2.msra.mxu0 0.0
      %2766 = vmatprep.subr.mxu0 0.0
      %2767 = vmatpush2.msra.mxu0 0.0
      %2768 = vmatprep.subr.mxu0 0.0
      %2769 = vmatpush2.msra.mxu0 0.0
      %2770 = vmatprep.subr.mxu0 0.0
      %2771 = vmatpush2.msra.mxu0 0.0
      %2772 = vmatprep.subr.mxu0 0.0
      %2773 = vmatpush2.msra.mxu0 0.0
      %2774 = vmatprep.subr.mxu0 0.0
      %2775 = vmatpush2.msra.mxu0 0.0
      %2776 = vmatprep.subr.mxu0 0.0
      %2777 = vmatpush2.msra.mxu0 0.0
      %2778 = vmatprep.subr.mxu0 0.0
      %2779 = vmatpush2.msra.mxu0 0.0
      %2780 = vmatprep.subr.mxu0 0.0
      %2781 = vmatpush2.msra.mxu0 0.0
      %2782 = vmatprep.subr.mxu0 0.0
      %2783 = vmatpush2.msra.mxu0 0.0
      %2784 = vmatprep.subr.mxu0 0.0
      %2785 = vmatpush2.msra.mxu0 0.0
      %2786 = vmatprep.subr.mxu0 0.0
      %2787 = vmatpush2.msra.mxu0 0.0
      %2788 = vmatprep.subr.mxu0 0.0
      %2789 = vmatpush2.msra.mxu0 0.0
      %2790 = vmatprep.mubr.f32.mxu0 0.0
      %2791 = vmatmul.mubr.f32.gmra.mxu0 %v2631
      %v2792 = vpop.f32.mrf.mxu0
      %v2793 = vadd.f32 0.0, %v2792
      %v2794 = vpop.f32.mrf.mxu0
      %2795 = vmatprep.mubr.f32.mxu0 0.0
      %2796 = vmatmul.mubr.f32.gmra.mxu0 %v2634
      %v2797 = vpop.f32.mrf.mxu0
      %v2798 = vadd.f32 0.0, %v2797
      %v2799 = vpop.f32.mrf.mxu0
      %2800 = vmatprep.mubr.f32.mxu0 0.0
      %2801 = vmatmul.mubr.f32.gmra.mxu0 %v2637
      %v2802 = vpop.f32.mrf.mxu0
      %v2803 = vadd.f32 0.0, %v2802
      %v2804 = vpop.f32.mrf.mxu0
      %2805 = vmatprep.mubr.f32.mxu0 0.0
      %2806 = vmatmul.mubr.f32.gmra.mxu0 %v2640
      %v2807 = vpop.f32.mrf.mxu0
      %v2808 = vadd.f32 0.0, %v2807
      %v2809 = vpop.f32.mrf.mxu0
      %2810 = vmatprep.mubr.f32.mxu0 0.0
      %2811 = vmatmul.mubr.f32.gmra.mxu0 %v2643
      %v2812 = vpop.f32.mrf.mxu0
      %v2813 = vadd.f32 0.0, %v2812
      %v2814 = vpop.f32.mrf.mxu0
      %2815 = vmatprep.mubr.f32.mxu0 0.0
      %2816 = vmatmul.mubr.f32.gmra.mxu0 %v2646
      %v2817 = vpop.f32.mrf.mxu0
      %v2818 = vadd.f32 0.0, %v2817
      %v2819 = vpop.f32.mrf.mxu0
      %2820 = vmatprep.mubr.f32.mxu0 0.0
      %2821 = vmatmul.mubr.f32.gmra.mxu0 %v2649
      %v2822 = vpop.f32.mrf.mxu0
      %v2823 = vadd.f32 0.0, %v2822
      %v2824 = vpop.f32.mrf.mxu0
      %2825 = vmatprep.mubr.f32.mxu0 0.0
      %2826 = vmatmul.mubr.f32.gmra.mxu0 %v2652
      %v2827 = vpop.f32.mrf.mxu0
      %v2828 = vadd.f32 0.0, %v2827
      %v2829 = vpop.f32.mrf.mxu0
      %2830 = vmatprep.mubr.f32.mxu0 0.0
      %2831 = vmatmul.mubr.f32.gmra.mxu0 %v2655
      %v2832 = vpop.f32.mrf.mxu0
      %v2833 = vadd.f32 0.0, %v2832
      %v2834 = vpop.f32.mrf.mxu0
      %2835 = vmatprep.mubr.f32.mxu0 0.0
      %2836 = vmatmul.mubr.f32.gmra.mxu0 %v2658
      %v2837 = vpop.f32.mrf.mxu0
      %v2838 = vadd.f32 0.0, %v2837
      %v2839 = vpop.f32.mrf.mxu0
      %2840 = vmatprep.mubr.f32.mxu0 0.0
      %2841 = vmatmul.mubr.f32.gmra.mxu0 %v2661
      %v2842 = vpop.f32.mrf.mxu0
      %v2843 = vadd.f32 0.0, %v2842
      %v2844 = vpop.f32.mrf.mxu0
      %2845 = vmatprep.mubr.f32.mxu0 0.0
      %2846 = vmatmul.mubr.f32.gmra.mxu0 %v2664
      %v2847 = vpop.f32.mrf.mxu0
      %v2848 = vadd.f32 0.0, %v2847
      %v2849 = vpop.f32.mrf.mxu0
      %2850 = vmatprep.mubr.f32.mxu0 0.0
      %2851 = vmatmul.mubr.f32.gmra.mxu0 %v2667
      %v2852 = vpop.f32.mrf.mxu0
      %v2853 = vadd.f32 0.0, %v2852
      %v2854 = vpop.f32.mrf.mxu0
      %2855 = vmatprep.mubr.f32.mxu0 0.0
      %2856 = vmatmul.mubr.f32.gmra.mxu0 %v2670
      %v2857 = vpop.f32.mrf.mxu0
      %v2858 = vadd.f32 0.0, %v2857
      %v2859 = vpop.f32.mrf.mxu0
      %2860 = vmatprep.mubr.f32.mxu0 0.0
      %2861 = vmatmul.mubr.f32.gmra.mxu0 %v2673
      %v2862 = vpop.f32.mrf.mxu0
      %v2863 = vadd.f32 0.0, %v2862
      %v2864 = vpop.f32.mrf.mxu0
      %2865 = vmatprep.mubr.f32.mxu0 0.0
      %2866 = vmatmul.mubr.f32.gmra.mxu0 %v2676
      %v2867 = vpop.f32.mrf.mxu0
      %v2868 = vadd.f32 0.0, %v2867
      %v2869 = vpop.f32.mrf.mxu0
      %2870 = vmatprep.mubr.f32.mxu0 0.0
      %2871 = vmatmul.mubr.f32.gmra.mxu0 %v2679
      %v2872 = vpop.f32.mrf.mxu0
      %v2873 = vadd.f32 0.0, %v2872
      %v2874 = vpop.f32.mrf.mxu0
      %2875 = vmatprep.mubr.f32.mxu0 0.0
      %2876 = vmatmul.mubr.f32.gmra.mxu0 %v2682
      %v2877 = vpop.f32.mrf.mxu0
      %v2878 = vadd.f32 0.0, %v2877
      %v2879 = vpop.f32.mrf.mxu0
      %2880 = vmatprep.mubr.f32.mxu0 0.0
      %2881 = vmatmul.mubr.f32.gmra.mxu0 %v2685
      %v2882 = vpop.f32.mrf.mxu0
      %v2883 = vadd.f32 0.0, %v2882
      %v2884 = vpop.f32.mrf.mxu0
      %2885 = vmatprep.mubr.f32.mxu0 0.0
      %2886 = vmatmul.mubr.f32.gmra.mxu0 %v2688
      %v2887 = vpop.f32.mrf.mxu0
      %v2888 = vadd.f32 0.0, %v2887
      %v2889 = vpop.f32.mrf.mxu0
      %2890 = vmatprep.mubr.f32.mxu0 0.0
      %2891 = vmatmul.mubr.f32.gmra.mxu0 %v2691
      %v2892 = vpop.f32.mrf.mxu0
      %v2893 = vadd.f32 0.0, %v2892
      %v2894 = vpop.f32.mrf.mxu0
      %2895 = vmatprep.mubr.f32.mxu0 0.0
      %2896 = vmatmul.mubr.f32.gmra.mxu0 %v2694
      %v2897 = vpop.f32.mrf.mxu0
      %v2898 = vadd.f32 0.0, %v2897
      %v2899 = vpop.f32.mrf.mxu0
      %2900 = vmatprep.mubr.f32.mxu0 0.0
      %2901 = vmatmul.mubr.f32.gmra.mxu0 %v2697
      %v2902 = vpop.f32.mrf.mxu0
      %v2903 = vadd.f32 0.0, %v2902
      %v2904 = vpop.f32.mrf.mxu0
      %2905 = vmatprep.mubr.f32.mxu0 0.0
      %2906 = vmatmul.mubr.f32.gmra.mxu0 %v2700
      %v2907 = vpop.f32.mrf.mxu0
      %v2908 = vadd.f32 0.0, %v2907
      %v2909 = vpop.f32.mrf.mxu0
      %2910 = vmatprep.mubr.f32.mxu0 0.0
      %2911 = vmatmul.mubr.f32.gmra.mxu0 %v2703
      %v2912 = vpop.f32.mrf.mxu0
      %v2913 = vadd.f32 0.0, %v2912
      %v2914 = vpop.f32.mrf.mxu0
      %2915 = vmatprep.mubr.f32.mxu0 0.0
      %2916 = vmatmul.mubr.f32.gmra.mxu0 %v2706
      %v2917 = vpop.f32.mrf.mxu0
      %v2918 = vadd.f32 0.0, %v2917
      %v2919 = vpop.f32.mrf.mxu0
      %2920 = vmatprep.mubr.f32.mxu0 0.0
      %2921 = vmatmul.mubr.f32.gmra.mxu0 %v2709
      %v2922 = vpop.f32.mrf.mxu0
      %v2923 = vadd.f32 0.0, %v2922
      %v2924 = vpop.f32.mrf.mxu0
      %2925 = vmatprep.mubr.f32.mxu0 0.0
      %2926 = vmatmul.mubr.f32.gmra.mxu0 %v2712
      %v2927 = vpop.f32.mrf.mxu0
      %v2928 = vadd.f32 0.0, %v2927
      %v2929 = vpop.f32.mrf.mxu0
      %2930 = vmatprep.mubr.f32.mxu0 0.0
      %2931 = vmatmul.mubr.f32.gmra.mxu0 %v2715
      %v2932 = vpop.f32.mrf.mxu0
      %v2933 = vadd.f32 0.0, %v2932
      %v2934 = vpop.f32.mrf.mxu0
      %2935 = vmatprep.mubr.f32.mxu0 0.0
      %2936 = vmatmul.mubr.f32.gmra.mxu0 %v2718
      %v2937 = vpop.f32.mrf.mxu0
      %v2938 = vadd.f32 0.0, %v2937
      %v2939 = vpop.f32.mrf.mxu0
      %2940 = vmatprep.mubr.f32.mxu0 0.0
      %2941 = vmatmul.mubr.f32.gmra.mxu0 %v2721
      %v2942 = vpop.f32.mrf.mxu0
      %v2943 = vadd.f32 0.0, %v2942
      %v2944 = vpop.f32.mrf.mxu0
      %2945 = vmatprep.mubr.f32.mxu0 0.0
      %2946 = vmatmul.mubr.f32.gmra.mxu0 %v2724
      %v2947 = vpop.f32.mrf.mxu0
      %v2948 = vadd.f32 0.0, %v2947
      %v2949 = vpop.f32.mrf.mxu0
      %2950 = vdwg.mxu0
      %v2951 = vadd.f32 %v2565, %v2793
      %v2952 = vadd.f32 %v2566, %v2798
      %v2953 = vadd.f32 %v2567, %v2803
      %v2954 = vadd.f32 %v2568, %v2808
      %v2955 = vadd.f32 %v2569, %v2813
      %v2956 = vadd.f32 %v2570, %v2818
      %v2957 = vadd.f32 %v2571, %v2823
      %v2958 = vadd.f32 %v2572, %v2828
      %v2959 = vadd.f32 %v2573, %v2833
      %v2960 = vadd.f32 %v2574, %v2838
      %v2961 = vadd.f32 %v2575, %v2843
      %v2962 = vadd.f32 %v2576, %v2848
      %v2963 = vadd.f32 %v2577, %v2853
      %v2964 = vadd.f32 %v2578, %v2858
      %v2965 = vadd.f32 %v2579, %v2863
      %v2966 = vadd.f32 %v2580, %v2868
      %v2967 = vadd.f32 %v2581, %v2873
      %v2968 = vadd.f32 %v2582, %v2878
      %v2969 = vadd.f32 %v2583, %v2883
      %v2970 = vadd.f32 %v2584, %v2888
      %v2971 = vadd.f32 %v2585, %v2893
      %v2972 = vadd.f32 %v2586, %v2898
      %v2973 = vadd.f32 %v2587, %v2903
      %v2974 = vadd.f32 %v2588, %v2908
      %v2975 = vadd.f32 %v2589, %v2913
      %v2976 = vadd.f32 %v2590, %v2918
      %v2977 = vadd.f32 %v2591, %v2923
      %v2978 = vadd.f32 %v2592, %v2928
      %v2979 = vadd.f32 %v2593, %v2933
      %v2980 = vadd.f32 %v2594, %v2938
      %v2981 = vadd.f32 %v2595, %v2943
      %v2982 = vadd.f32 %v2596, %v2948
      %s2983 = scalar_lea.vmem [#allocation2], 48
      %v2984 = vld [vmem:[%s2983] sm:$0xff]
      %v2985 = vld [vmem:[%s2983 + $0x8] sm:$0xff]
      %v2986 = vld [vmem:[%s2983 + $0x18] sm:$0xff]
      %v2987 = vld [vmem:[%s2983 + $0x20] sm:$0xff]
      %v2988 = vld [vmem:[%s2983 + $0x30] sm:$0xff]
      %v2989 = vld [vmem:[%s2983 + $0x38] sm:$0xff]
      %v2990 = vld [vmem:[%s2983 + $0x48] sm:$0xff]
      %v2991 = vld [vmem:[%s2983 + $0x50] sm:$0xff]
      %v2992 = vld [vmem:[%s2983 + $0x60] sm:$0xff]
      %v2993 = vld [vmem:[%s2983 + $0x68] sm:$0xff]
      %v2994 = vld [vmem:[%s2983 + $0x78] sm:$0xff]
      %v2995 = vld [vmem:[%s2983 + $0x80] sm:$0xff]
      %v2996 = vld [vmem:[%s2983 + $0x90] sm:$0xff]
      %v2997 = vld [vmem:[%s2983 + $0x98] sm:$0xff]
      %v2998 = vld [vmem:[%s2983 + $0xa8] sm:$0xff]
      %v2999 = vld [vmem:[%s2983 + $0xb0] sm:$0xff]
      %v3000 = vld [vmem:[%s2983 + $0xc0] sm:$0xff]
      %v3001 = vld [vmem:[%s2983 + $0xc8] sm:$0xff]
      %v3002 = vld [vmem:[%s2983 + $0xd8] sm:$0xff]
      %v3003 = vld [vmem:[%s2983 + $0xe0] sm:$0xff]
      %v3004 = vld [vmem:[%s2983 + $0xf0] sm:$0xff]
      %v3005 = vld [vmem:[%s2983 + $0xf8] sm:$0xff]
      %v3006 = vld [vmem:[%s2983 + $0x108] sm:$0xff]
      %v3007 = vld [vmem:[%s2983 + $0x110] sm:$0xff]
      %v3008 = vld [vmem:[%s2983 + $0x120] sm:$0xff]
      %v3009 = vld [vmem:[%s2983 + $0x128] sm:$0xff]
      %v3010 = vld [vmem:[%s2983 + $0x138] sm:$0xff]
      %v3011 = vld [vmem:[%s2983 + $0x140] sm:$0xff]
      %v3012 = vld [vmem:[%s2983 + $0x150] sm:$0xff]
      %v3013 = vld [vmem:[%s2983 + $0x158] sm:$0xff]
      %v3014 = vld [vmem:[%s2983 + $0x168] sm:$0xff]
      %v3015 = vld [vmem:[%s2983 + $0x170] sm:$0xff]
      %v3016 = vld [vmem:[%s4 + $0x30] sm:$0xff]
      %v3018 = vsel %vm692, %v2984, 0
      %v3021 = vsel %vm692, %v2985, 0
      %v3024 = vsel %vm692, %v2986, 0
      %v3027 = vsel %vm692, %v2987, 0
      %v3030 = vsel %vm692, %v2988, 0
      %v3033 = vsel %vm692, %v2989, 0
      %v3036 = vsel %vm692, %v2990, 0
      %v3039 = vsel %vm692, %v2991, 0
      %v3042 = vsel %vm692, %v2992, 0
      %v3045 = vsel %vm692, %v2993, 0
      %v3048 = vsel %vm692, %v2994, 0
      %v3051 = vsel %vm692, %v2995, 0
      %v3054 = vsel %vm692, %v2996, 0
      %v3057 = vsel %vm692, %v2997, 0
      %v3060 = vsel %vm692, %v2998, 0
      %v3063 = vsel %vm692, %v2999, 0
      %v3066 = vsel %vm692, %v3000, 0
      %v3069 = vsel %vm692, %v3001, 0
      %v3072 = vsel %vm692, %v3002, 0
      %v3075 = vsel %vm692, %v3003, 0
      %v3078 = vsel %vm692, %v3004, 0
      %v3081 = vsel %vm692, %v3005, 0
      %v3084 = vsel %vm692, %v3006, 0
      %v3087 = vsel %vm692, %v3007, 0
      %v3090 = vsel %vm692, %v3008, 0
      %v3093 = vsel %vm692, %v3009, 0
      %v3096 = vsel %vm692, %v3010, 0
      %v3099 = vsel %vm692, %v3011, 0
      %v3102 = vsel %vm692, %v3012, 0
      %v3105 = vsel %vm692, %v3013, 0
      %v3108 = vsel %vm692, %v3014, 0
      %v3111 = vsel %vm692, %v3015, 0
      %3113 = vmatprep.subr.mxu0 0.0
      %3114 = vmatpush1.msra.mxu0 0.0
      %3115 = vmatprep.subr.mxu0 0.0
      %3116 = vmatpush1.msra.mxu0 0.0
      %3117 = vmatprep.subr.mxu0 0.0
      %3118 = vmatpush1.msra.mxu0 0.0
      %3119 = vmatprep.subr.mxu0 0.0
      %3120 = vmatpush1.msra.mxu0 0.0
      %3121 = vmatprep.subr.mxu0 0.0
      %3122 = vmatpush1.msra.mxu0 0.0
      %3123 = vmatprep.subr.mxu0 0.0
      %3124 = vmatpush1.msra.mxu0 0.0
      %3125 = vmatprep.subr.mxu0 0.0
      %3126 = vmatpush1.msra.mxu0 0.0
      %3127 = vmatprep.subr.mxu0 0.0
      %3128 = vmatpush1.msra.mxu0 0.0
      %3129 = vmatprep.subr.mxu0 0.0
      %3130 = vmatpush1.msra.mxu0 0.0
      %3131 = vmatprep.subr.mxu0 0.0
      %3132 = vmatpush1.msra.mxu0 0.0
      %3133 = vmatprep.subr.mxu0 0.0
      %3134 = vmatpush1.msra.mxu0 0.0
      %3135 = vmatprep.subr.mxu0 0.0
      %3136 = vmatpush1.msra.mxu0 0.0
      %3137 = vmatprep.subr.mxu0 0.0
      %3138 = vmatpush1.msra.mxu0 0.0
      %3139 = vmatprep.subr.mxu0 0.0
      %3140 = vmatpush1.msra.mxu0 0.0
      %3141 = vmatprep.subr.mxu0 0.0
      %3142 = vmatpush1.msra.mxu0 0.0
      %3143 = vmatprep.subr.mxu0 0.0
      %3144 = vmatpush1.msra.mxu0 %v3016
      %3145 = vmatprep.subr.mxu0 0.0
      %3146 = vmatpush2.msra.mxu0 0.0
      %3147 = vmatprep.subr.mxu0 0.0
      %3148 = vmatpush2.msra.mxu0 0.0
      %3149 = vmatprep.subr.mxu0 0.0
      %3150 = vmatpush2.msra.mxu0 0.0
      %3151 = vmatprep.subr.mxu0 0.0
      %3152 = vmatpush2.msra.mxu0 0.0
      %3153 = vmatprep.subr.mxu0 0.0
      %3154 = vmatpush2.msra.mxu0 0.0
      %3155 = vmatprep.subr.mxu0 0.0
      %3156 = vmatpush2.msra.mxu0 0.0
      %3157 = vmatprep.subr.mxu0 0.0
      %3158 = vmatpush2.msra.mxu0 0.0
      %3159 = vmatprep.subr.mxu0 0.0
      %3160 = vmatpush2.msra.mxu0 0.0
      %3161 = vmatprep.subr.mxu0 0.0
      %3162 = vmatpush2.msra.mxu0 0.0
      %3163 = vmatprep.subr.mxu0 0.0
      %3164 = vmatpush2.msra.mxu0 0.0
      %3165 = vmatprep.subr.mxu0 0.0
      %3166 = vmatpush2.msra.mxu0 0.0
      %3167 = vmatprep.subr.mxu0 0.0
      %3168 = vmatpush2.msra.mxu0 0.0
      %3169 = vmatprep.subr.mxu0 0.0
      %3170 = vmatpush2.msra.mxu0 0.0
      %3171 = vmatprep.subr.mxu0 0.0
      %3172 = vmatpush2.msra.mxu0 0.0
      %3173 = vmatprep.subr.mxu0 0.0
      %3174 = vmatpush2.msra.mxu0 0.0
      %3175 = vmatprep.subr.mxu0 0.0
      %3176 = vmatpush2.msra.mxu0 0.0
      %3177 = vmatprep.mubr.f32.mxu0 0.0
      %3178 = vmatmul.mubr.f32.gmra.mxu0 %v3018
      %v3179 = vpop.f32.mrf.mxu0
      %v3180 = vadd.f32 0.0, %v3179
      %v3181 = vpop.f32.mrf.mxu0
      %3182 = vmatprep.mubr.f32.mxu0 0.0
      %3183 = vmatmul.mubr.f32.gmra.mxu0 %v3021
      %v3184 = vpop.f32.mrf.mxu0
      %v3185 = vadd.f32 0.0, %v3184
      %v3186 = vpop.f32.mrf.mxu0
      %3187 = vmatprep.mubr.f32.mxu0 0.0
      %3188 = vmatmul.mubr.f32.gmra.mxu0 %v3024
      %v3189 = vpop.f32.mrf.mxu0
      %v3190 = vadd.f32 0.0, %v3189
      %v3191 = vpop.f32.mrf.mxu0
      %3192 = vmatprep.mubr.f32.mxu0 0.0
      %3193 = vmatmul.mubr.f32.gmra.mxu0 %v3027
      %v3194 = vpop.f32.mrf.mxu0
      %v3195 = vadd.f32 0.0, %v3194
      %v3196 = vpop.f32.mrf.mxu0
      %3197 = vmatprep.mubr.f32.mxu0 0.0
      %3198 = vmatmul.mubr.f32.gmra.mxu0 %v3030
      %v3199 = vpop.f32.mrf.mxu0
      %v3200 = vadd.f32 0.0, %v3199
      %v3201 = vpop.f32.mrf.mxu0
      %3202 = vmatprep.mubr.f32.mxu0 0.0
      %3203 = vmatmul.mubr.f32.gmra.mxu0 %v3033
      %v3204 = vpop.f32.mrf.mxu0
      %v3205 = vadd.f32 0.0, %v3204
      %v3206 = vpop.f32.mrf.mxu0
      %3207 = vmatprep.mubr.f32.mxu0 0.0
      %3208 = vmatmul.mubr.f32.gmra.mxu0 %v3036
      %v3209 = vpop.f32.mrf.mxu0
      %v3210 = vadd.f32 0.0, %v3209
      %v3211 = vpop.f32.mrf.mxu0
      %3212 = vmatprep.mubr.f32.mxu0 0.0
      %3213 = vmatmul.mubr.f32.gmra.mxu0 %v3039
      %v3214 = vpop.f32.mrf.mxu0
      %v3215 = vadd.f32 0.0, %v3214
      %v3216 = vpop.f32.mrf.mxu0
      %3217 = vmatprep.mubr.f32.mxu0 0.0
      %3218 = vmatmul.mubr.f32.gmra.mxu0 %v3042
      %v3219 = vpop.f32.mrf.mxu0
      %v3220 = vadd.f32 0.0, %v3219
      %v3221 = vpop.f32.mrf.mxu0
      %3222 = vmatprep.mubr.f32.mxu0 0.0
      %3223 = vmatmul.mubr.f32.gmra.mxu0 %v3045
      %v3224 = vpop.f32.mrf.mxu0
      %v3225 = vadd.f32 0.0, %v3224
      %v3226 = vpop.f32.mrf.mxu0
      %3227 = vmatprep.mubr.f32.mxu0 0.0
      %3228 = vmatmul.mubr.f32.gmra.mxu0 %v3048
      %v3229 = vpop.f32.mrf.mxu0
      %v3230 = vadd.f32 0.0, %v3229
      %v3231 = vpop.f32.mrf.mxu0
      %3232 = vmatprep.mubr.f32.mxu0 0.0
      %3233 = vmatmul.mubr.f32.gmra.mxu0 %v3051
      %v3234 = vpop.f32.mrf.mxu0
      %v3235 = vadd.f32 0.0, %v3234
      %v3236 = vpop.f32.mrf.mxu0
      %3237 = vmatprep.mubr.f32.mxu0 0.0
      %3238 = vmatmul.mubr.f32.gmra.mxu0 %v3054
      %v3239 = vpop.f32.mrf.mxu0
      %v3240 = vadd.f32 0.0, %v3239
      %v3241 = vpop.f32.mrf.mxu0
      %3242 = vmatprep.mubr.f32.mxu0 0.0
      %3243 = vmatmul.mubr.f32.gmra.mxu0 %v3057
      %v3244 = vpop.f32.mrf.mxu0
      %v3245 = vadd.f32 0.0, %v3244
      %v3246 = vpop.f32.mrf.mxu0
      %3247 = vmatprep.mubr.f32.mxu0 0.0
      %3248 = vmatmul.mubr.f32.gmra.mxu0 %v3060
      %v3249 = vpop.f32.mrf.mxu0
      %v3250 = vadd.f32 0.0, %v3249
      %v3251 = vpop.f32.mrf.mxu0
      %3252 = vmatprep.mubr.f32.mxu0 0.0
      %3253 = vmatmul.mubr.f32.gmra.mxu0 %v3063
      %v3254 = vpop.f32.mrf.mxu0
      %v3255 = vadd.f32 0.0, %v3254
      %v3256 = vpop.f32.mrf.mxu0
      %3257 = vmatprep.mubr.f32.mxu0 0.0
      %3258 = vmatmul.mubr.f32.gmra.mxu0 %v3066
      %v3259 = vpop.f32.mrf.mxu0
      %v3260 = vadd.f32 0.0, %v3259
      %v3261 = vpop.f32.mrf.mxu0
      %3262 = vmatprep.mubr.f32.mxu0 0.0
      %3263 = vmatmul.mubr.f32.gmra.mxu0 %v3069
      %v3264 = vpop.f32.mrf.mxu0
      %v3265 = vadd.f32 0.0, %v3264
      %v3266 = vpop.f32.mrf.mxu0
      %3267 = vmatprep.mubr.f32.mxu0 0.0
      %3268 = vmatmul.mubr.f32.gmra.mxu0 %v3072
      %v3269 = vpop.f32.mrf.mxu0
      %v3270 = vadd.f32 0.0, %v3269
      %v3271 = vpop.f32.mrf.mxu0
      %3272 = vmatprep.mubr.f32.mxu0 0.0
      %3273 = vmatmul.mubr.f32.gmra.mxu0 %v3075
      %v3274 = vpop.f32.mrf.mxu0
      %v3275 = vadd.f32 0.0, %v3274
      %v3276 = vpop.f32.mrf.mxu0
      %3277 = vmatprep.mubr.f32.mxu0 0.0
      %3278 = vmatmul.mubr.f32.gmra.mxu0 %v3078
      %v3279 = vpop.f32.mrf.mxu0
      %v3280 = vadd.f32 0.0, %v3279
      %v3281 = vpop.f32.mrf.mxu0
      %3282 = vmatprep.mubr.f32.mxu0 0.0
      %3283 = vmatmul.mubr.f32.gmra.mxu0 %v3081
      %v3284 = vpop.f32.mrf.mxu0
      %v3285 = vadd.f32 0.0, %v3284
      %v3286 = vpop.f32.mrf.mxu0
      %3287 = vmatprep.mubr.f32.mxu0 0.0
      %3288 = vmatmul.mubr.f32.gmra.mxu0 %v3084
      %v3289 = vpop.f32.mrf.mxu0
      %v3290 = vadd.f32 0.0, %v3289
      %v3291 = vpop.f32.mrf.mxu0
      %3292 = vmatprep.mubr.f32.mxu0 0.0
      %3293 = vmatmul.mubr.f32.gmra.mxu0 %v3087
      %v3294 = vpop.f32.mrf.mxu0
      %v3295 = vadd.f32 0.0, %v3294
      %v3296 = vpop.f32.mrf.mxu0
      %3297 = vmatprep.mubr.f32.mxu0 0.0
      %3298 = vmatmul.mubr.f32.gmra.mxu0 %v3090
      %v3299 = vpop.f32.mrf.mxu0
      %v3300 = vadd.f32 0.0, %v3299
      %v3301 = vpop.f32.mrf.mxu0
      %3302 = vmatprep.mubr.f32.mxu0 0.0
      %3303 = vmatmul.mubr.f32.gmra.mxu0 %v3093
      %v3304 = vpop.f32.mrf.mxu0
      %v3305 = vadd.f32 0.0, %v3304
      %v3306 = vpop.f32.mrf.mxu0
      %3307 = vmatprep.mubr.f32.mxu0 0.0
      %3308 = vmatmul.mubr.f32.gmra.mxu0 %v3096
      %v3309 = vpop.f32.mrf.mxu0
      %v3310 = vadd.f32 0.0, %v3309
      %v3311 = vpop.f32.mrf.mxu0
      %3312 = vmatprep.mubr.f32.mxu0 0.0
      %3313 = vmatmul.mubr.f32.gmra.mxu0 %v3099
      %v3314 = vpop.f32.mrf.mxu0
      %v3315 = vadd.f32 0.0, %v3314
      %v3316 = vpop.f32.mrf.mxu0
      %3317 = vmatprep.mubr.f32.mxu0 0.0
      %3318 = vmatmul.mubr.f32.gmra.mxu0 %v3102
      %v3319 = vpop.f32.mrf.mxu0
      %v3320 = vadd.f32 0.0, %v3319
      %v3321 = vpop.f32.mrf.mxu0
      %3322 = vmatprep.mubr.f32.mxu0 0.0
      %3323 = vmatmul.mubr.f32.gmra.mxu0 %v3105
      %v3324 = vpop.f32.mrf.mxu0
      %v3325 = vadd.f32 0.0, %v3324
      %v3326 = vpop.f32.mrf.mxu0
      %3327 = vmatprep.mubr.f32.mxu0 0.0
      %3328 = vmatmul.mubr.f32.gmra.mxu0 %v3108
      %v3329 = vpop.f32.mrf.mxu0
      %v3330 = vadd.f32 0.0, %v3329
      %v3331 = vpop.f32.mrf.mxu0
      %3332 = vmatprep.mubr.f32.mxu0 0.0
      %3333 = vmatmul.mubr.f32.gmra.mxu0 %v3111
      %v3334 = vpop.f32.mrf.mxu0
      %v3335 = vadd.f32 0.0, %v3334
      %v3336 = vpop.f32.mrf.mxu0
      %3337 = vdwg.mxu0
      %v3338 = vadd.f32 %v2951, %v3180
      %v3339 = vadd.f32 %v2952, %v3185
      %v3340 = vadd.f32 %v2953, %v3190
      %v3341 = vadd.f32 %v2954, %v3195
      %v3342 = vadd.f32 %v2955, %v3200
      %v3343 = vadd.f32 %v2956, %v3205
      %v3344 = vadd.f32 %v2957, %v3210
      %v3345 = vadd.f32 %v2958, %v3215
      %v3346 = vadd.f32 %v2959, %v3220
      %v3347 = vadd.f32 %v2960, %v3225
      %v3348 = vadd.f32 %v2961, %v3230
      %v3349 = vadd.f32 %v2962, %v3235
      %v3350 = vadd.f32 %v2963, %v3240
      %v3351 = vadd.f32 %v2964, %v3245
      %v3352 = vadd.f32 %v2965, %v3250
      %v3353 = vadd.f32 %v2966, %v3255
      %v3354 = vadd.f32 %v2967, %v3260
      %v3355 = vadd.f32 %v2968, %v3265
      %v3356 = vadd.f32 %v2969, %v3270
      %v3357 = vadd.f32 %v2970, %v3275
      %v3358 = vadd.f32 %v2971, %v3280
      %v3359 = vadd.f32 %v2972, %v3285
      %v3360 = vadd.f32 %v2973, %v3290
      %v3361 = vadd.f32 %v2974, %v3295
      %v3362 = vadd.f32 %v2975, %v3300
      %v3363 = vadd.f32 %v2976, %v3305
      %v3364 = vadd.f32 %v2977, %v3310
      %v3365 = vadd.f32 %v2978, %v3315
      %v3366 = vadd.f32 %v2979, %v3320
      %v3367 = vadd.f32 %v2980, %v3325
      %v3368 = vadd.f32 %v2981, %v3330
      %v3369 = vadd.f32 %v2982, %v3335
      %v3370 = vld [vmem:[%s2983 + $0x1] sm:$0xff]
      %v3371 = vld [vmem:[%s2983 + $0x9] sm:$0xff]
      %v3372 = vld [vmem:[%s2983 + $0x19] sm:$0xff]
      %v3373 = vld [vmem:[%s2983 + $0x21] sm:$0xff]
      %v3374 = vld [vmem:[%s2983 + $0x31] sm:$0xff]
      %v3375 = vld [vmem:[%s2983 + $0x39] sm:$0xff]
      %v3376 = vld [vmem:[%s2983 + $0x49] sm:$0xff]
      %v3377 = vld [vmem:[%s2983 + $0x51] sm:$0xff]
      %v3378 = vld [vmem:[%s2983 + $0x61] sm:$0xff]
      %v3379 = vld [vmem:[%s2983 + $0x69] sm:$0xff]
      %v3380 = vld [vmem:[%s2983 + $0x79] sm:$0xff]
      %v3381 = vld [vmem:[%s2983 + $0x81] sm:$0xff]
      %v3382 = vld [vmem:[%s2983 + $0x91] sm:$0xff]
      %v3383 = vld [vmem:[%s2983 + $0x99] sm:$0xff]
      %v3384 = vld [vmem:[%s2983 + $0xa9] sm:$0xff]
      %v3385 = vld [vmem:[%s2983 + $0xb1] sm:$0xff]
      %v3386 = vld [vmem:[%s2983 + $0xc1] sm:$0xff]
      %v3387 = vld [vmem:[%s2983 + $0xc9] sm:$0xff]
      %v3388 = vld [vmem:[%s2983 + $0xd9] sm:$0xff]
      %v3389 = vld [vmem:[%s2983 + $0xe1] sm:$0xff]
      %v3390 = vld [vmem:[%s2983 + $0xf1] sm:$0xff]
      %v3391 = vld [vmem:[%s2983 + $0xf9] sm:$0xff]
      %v3392 = vld [vmem:[%s2983 + $0x109] sm:$0xff]
      %v3393 = vld [vmem:[%s2983 + $0x111] sm:$0xff]
      %v3394 = vld [vmem:[%s2983 + $0x121] sm:$0xff]
      %v3395 = vld [vmem:[%s2983 + $0x129] sm:$0xff]
      %v3396 = vld [vmem:[%s2983 + $0x139] sm:$0xff]
      %v3397 = vld [vmem:[%s2983 + $0x141] sm:$0xff]
      %v3398 = vld [vmem:[%s2983 + $0x151] sm:$0xff]
      %v3399 = vld [vmem:[%s2983 + $0x159] sm:$0xff]
      %v3400 = vld [vmem:[%s2983 + $0x169] sm:$0xff]
      %v3401 = vld [vmem:[%s2983 + $0x171] sm:$0xff]
      %v3402 = vld [vmem:[%s4 + $0x38] sm:$0xff]
      %v3404 = vsel %vm692, %v3370, 0
      %v3407 = vsel %vm692, %v3371, 0
      %v3410 = vsel %vm692, %v3372, 0
      %v3413 = vsel %vm692, %v3373, 0
      %v3416 = vsel %vm692, %v3374, 0
      %v3419 = vsel %vm692, %v3375, 0
      %v3422 = vsel %vm692, %v3376, 0
      %v3425 = vsel %vm692, %v3377, 0
      %v3428 = vsel %vm692, %v3378, 0
      %v3431 = vsel %vm692, %v3379, 0
      %v3434 = vsel %vm692, %v3380, 0
      %v3437 = vsel %vm692, %v3381, 0
      %v3440 = vsel %vm692, %v3382, 0
      %v3443 = vsel %vm692, %v3383, 0
      %v3446 = vsel %vm692, %v3384, 0
      %v3449 = vsel %vm692, %v3385, 0
      %v3452 = vsel %vm692, %v3386, 0
      %v3455 = vsel %vm692, %v3387, 0
      %v3458 = vsel %vm692, %v3388, 0
      %v3461 = vsel %vm692, %v3389, 0
      %v3464 = vsel %vm692, %v3390, 0
      %v3467 = vsel %vm692, %v3391, 0
      %v3470 = vsel %vm692, %v3392, 0
      %v3473 = vsel %vm692, %v3393, 0
      %v3476 = vsel %vm692, %v3394, 0
      %v3479 = vsel %vm692, %v3395, 0
      %v3482 = vsel %vm692, %v3396, 0
      %v3485 = vsel %vm692, %v3397, 0
      %v3488 = vsel %vm692, %v3398, 0
      %v3491 = vsel %vm692, %v3399, 0
      %v3494 = vsel %vm692, %v3400, 0
      %v3497 = vsel %vm692, %v3401, 0
      %3499 = vmatprep.subr.mxu0 0.0
      %3500 = vmatpush1.msra.mxu0 0.0
      %3501 = vmatprep.subr.mxu0 0.0
      %3502 = vmatpush1.msra.mxu0 0.0
      %3503 = vmatprep.subr.mxu0 0.0
      %3504 = vmatpush1.msra.mxu0 0.0
      %3505 = vmatprep.subr.mxu0 0.0
      %3506 = vmatpush1.msra.mxu0 0.0
      %3507 = vmatprep.subr.mxu0 0.0
      %3508 = vmatpush1.msra.mxu0 0.0
      %3509 = vmatprep.subr.mxu0 0.0
      %3510 = vmatpush1.msra.mxu0 0.0
      %3511 = vmatprep.subr.mxu0 0.0
      %3512 = vmatpush1.msra.mxu0 0.0
      %3513 = vmatprep.subr.mxu0 0.0
      %3514 = vmatpush1.msra.mxu0 0.0
      %3515 = vmatprep.subr.mxu0 0.0
      %3516 = vmatpush1.msra.mxu0 0.0
      %3517 = vmatprep.subr.mxu0 0.0
      %3518 = vmatpush1.msra.mxu0 0.0
      %3519 = vmatprep.subr.mxu0 0.0
      %3520 = vmatpush1.msra.mxu0 0.0
      %3521 = vmatprep.subr.mxu0 0.0
      %3522 = vmatpush1.msra.mxu0 0.0
      %3523 = vmatprep.subr.mxu0 0.0
      %3524 = vmatpush1.msra.mxu0 0.0
      %3525 = vmatprep.subr.mxu0 0.0
      %3526 = vmatpush1.msra.mxu0 0.0
      %3527 = vmatprep.subr.mxu0 0.0
      %3528 = vmatpush1.msra.mxu0 0.0
      %3529 = vmatprep.subr.mxu0 0.0
      %3530 = vmatpush1.msra.mxu0 %v3402
      %3531 = vmatprep.subr.mxu0 0.0
      %3532 = vmatpush2.msra.mxu0 0.0
      %3533 = vmatprep.subr.mxu0 0.0
      %3534 = vmatpush2.msra.mxu0 0.0
      %3535 = vmatprep.subr.mxu0 0.0
      %3536 = vmatpush2.msra.mxu0 0.0
      %3537 = vmatprep.subr.mxu0 0.0
      %3538 = vmatpush2.msra.mxu0 0.0
      %3539 = vmatprep.subr.mxu0 0.0
      %3540 = vmatpush2.msra.mxu0 0.0
      %3541 = vmatprep.subr.mxu0 0.0
      %3542 = vmatpush2.msra.mxu0 0.0
      %3543 = vmatprep.subr.mxu0 0.0
      %3544 = vmatpush2.msra.mxu0 0.0
      %3545 = vmatprep.subr.mxu0 0.0
      %3546 = vmatpush2.msra.mxu0 0.0
      %3547 = vmatprep.subr.mxu0 0.0
      %3548 = vmatpush2.msra.mxu0 0.0
      %3549 = vmatprep.subr.mxu0 0.0
      %3550 = vmatpush2.msra.mxu0 0.0
      %3551 = vmatprep.subr.mxu0 0.0
      %3552 = vmatpush2.msra.mxu0 0.0
      %3553 = vmatprep.subr.mxu0 0.0
      %3554 = vmatpush2.msra.mxu0 0.0
      %3555 = vmatprep.subr.mxu0 0.0
      %3556 = vmatpush2.msra.mxu0 0.0
      %3557 = vmatprep.subr.mxu0 0.0
      %3558 = vmatpush2.msra.mxu0 0.0
      %3559 = vmatprep.subr.mxu0 0.0
      %3560 = vmatpush2.msra.mxu0 0.0
      %3561 = vmatprep.subr.mxu0 0.0
      %3562 = vmatpush2.msra.mxu0 0.0
      %3563 = vmatprep.mubr.f32.mxu0 0.0
      %3564 = vmatmul.mubr.f32.gmra.mxu0 %v3404
      %v3565 = vpop.f32.mrf.mxu0
      %v3566 = vadd.f32 0.0, %v3565
      %v3567 = vpop.f32.mrf.mxu0
      %3568 = vmatprep.mubr.f32.mxu0 0.0
      %3569 = vmatmul.mubr.f32.gmra.mxu0 %v3407
      %v3570 = vpop.f32.mrf.mxu0
      %v3571 = vadd.f32 0.0, %v3570
      %v3572 = vpop.f32.mrf.mxu0
      %3573 = vmatprep.mubr.f32.mxu0 0.0
      %3574 = vmatmul.mubr.f32.gmra.mxu0 %v3410
      %v3575 = vpop.f32.mrf.mxu0
      %v3576 = vadd.f32 0.0, %v3575
      %v3577 = vpop.f32.mrf.mxu0
      %3578 = vmatprep.mubr.f32.mxu0 0.0
      %3579 = vmatmul.mubr.f32.gmra.mxu0 %v3413
      %v3580 = vpop.f32.mrf.mxu0
      %v3581 = vadd.f32 0.0, %v3580
      %v3582 = vpop.f32.mrf.mxu0
      %3583 = vmatprep.mubr.f32.mxu0 0.0
      %3584 = vmatmul.mubr.f32.gmra.mxu0 %v3416
      %v3585 = vpop.f32.mrf.mxu0
      %v3586 = vadd.f32 0.0, %v3585
      %v3587 = vpop.f32.mrf.mxu0
      %3588 = vmatprep.mubr.f32.mxu0 0.0
      %3589 = vmatmul.mubr.f32.gmra.mxu0 %v3419
      %v3590 = vpop.f32.mrf.mxu0
      %v3591 = vadd.f32 0.0, %v3590
      %v3592 = vpop.f32.mrf.mxu0
      %3593 = vmatprep.mubr.f32.mxu0 0.0
      %3594 = vmatmul.mubr.f32.gmra.mxu0 %v3422
      %v3595 = vpop.f32.mrf.mxu0
      %v3596 = vadd.f32 0.0, %v3595
      %v3597 = vpop.f32.mrf.mxu0
      %3598 = vmatprep.mubr.f32.mxu0 0.0
      %3599 = vmatmul.mubr.f32.gmra.mxu0 %v3425
      %v3600 = vpop.f32.mrf.mxu0
      %v3601 = vadd.f32 0.0, %v3600
      %v3602 = vpop.f32.mrf.mxu0
      %3603 = vmatprep.mubr.f32.mxu0 0.0
      %3604 = vmatmul.mubr.f32.gmra.mxu0 %v3428
      %v3605 = vpop.f32.mrf.mxu0
      %v3606 = vadd.f32 0.0, %v3605
      %v3607 = vpop.f32.mrf.mxu0
      %3608 = vmatprep.mubr.f32.mxu0 0.0
      %3609 = vmatmul.mubr.f32.gmra.mxu0 %v3431
      %v3610 = vpop.f32.mrf.mxu0
      %v3611 = vadd.f32 0.0, %v3610
      %v3612 = vpop.f32.mrf.mxu0
      %3613 = vmatprep.mubr.f32.mxu0 0.0
      %3614 = vmatmul.mubr.f32.gmra.mxu0 %v3434
      %v3615 = vpop.f32.mrf.mxu0
      %v3616 = vadd.f32 0.0, %v3615
      %v3617 = vpop.f32.mrf.mxu0
      %3618 = vmatprep.mubr.f32.mxu0 0.0
      %3619 = vmatmul.mubr.f32.gmra.mxu0 %v3437
      %v3620 = vpop.f32.mrf.mxu0
      %v3621 = vadd.f32 0.0, %v3620
      %v3622 = vpop.f32.mrf.mxu0
      %3623 = vmatprep.mubr.f32.mxu0 0.0
      %3624 = vmatmul.mubr.f32.gmra.mxu0 %v3440
      %v3625 = vpop.f32.mrf.mxu0
      %v3626 = vadd.f32 0.0, %v3625
      %v3627 = vpop.f32.mrf.mxu0
      %3628 = vmatprep.mubr.f32.mxu0 0.0
      %3629 = vmatmul.mubr.f32.gmra.mxu0 %v3443
      %v3630 = vpop.f32.mrf.mxu0
      %v3631 = vadd.f32 0.0, %v3630
      %v3632 = vpop.f32.mrf.mxu0
      %3633 = vmatprep.mubr.f32.mxu0 0.0
      %3634 = vmatmul.mubr.f32.gmra.mxu0 %v3446
      %v3635 = vpop.f32.mrf.mxu0
      %v3636 = vadd.f32 0.0, %v3635
      %v3637 = vpop.f32.mrf.mxu0
      %3638 = vmatprep.mubr.f32.mxu0 0.0
      %3639 = vmatmul.mubr.f32.gmra.mxu0 %v3449
      %v3640 = vpop.f32.mrf.mxu0
      %v3641 = vadd.f32 0.0, %v3640
      %v3642 = vpop.f32.mrf.mxu0
      %3643 = vmatprep.mubr.f32.mxu0 0.0
      %3644 = vmatmul.mubr.f32.gmra.mxu0 %v3452
      %v3645 = vpop.f32.mrf.mxu0
      %v3646 = vadd.f32 0.0, %v3645
      %v3647 = vpop.f32.mrf.mxu0
      %3648 = vmatprep.mubr.f32.mxu0 0.0
      %3649 = vmatmul.mubr.f32.gmra.mxu0 %v3455
      %v3650 = vpop.f32.mrf.mxu0
      %v3651 = vadd.f32 0.0, %v3650
      %v3652 = vpop.f32.mrf.mxu0
      %3653 = vmatprep.mubr.f32.mxu0 0.0
      %3654 = vmatmul.mubr.f32.gmra.mxu0 %v3458
      %v3655 = vpop.f32.mrf.mxu0
      %v3656 = vadd.f32 0.0, %v3655
      %v3657 = vpop.f32.mrf.mxu0
      %3658 = vmatprep.mubr.f32.mxu0 0.0
      %3659 = vmatmul.mubr.f32.gmra.mxu0 %v3461
      %v3660 = vpop.f32.mrf.mxu0
      %v3661 = vadd.f32 0.0, %v3660
      %v3662 = vpop.f32.mrf.mxu0
      %3663 = vmatprep.mubr.f32.mxu0 0.0
      %3664 = vmatmul.mubr.f32.gmra.mxu0 %v3464
      %v3665 = vpop.f32.mrf.mxu0
      %v3666 = vadd.f32 0.0, %v3665
      %v3667 = vpop.f32.mrf.mxu0
      %3668 = vmatprep.mubr.f32.mxu0 0.0
      %3669 = vmatmul.mubr.f32.gmra.mxu0 %v3467
      %v3670 = vpop.f32.mrf.mxu0
      %v3671 = vadd.f32 0.0, %v3670
      %v3672 = vpop.f32.mrf.mxu0
      %3673 = vmatprep.mubr.f32.mxu0 0.0
      %3674 = vmatmul.mubr.f32.gmra.mxu0 %v3470
      %v3675 = vpop.f32.mrf.mxu0
      %v3676 = vadd.f32 0.0, %v3675
      %v3677 = vpop.f32.mrf.mxu0
      %3678 = vmatprep.mubr.f32.mxu0 0.0
      %3679 = vmatmul.mubr.f32.gmra.mxu0 %v3473
      %v3680 = vpop.f32.mrf.mxu0
      %v3681 = vadd.f32 0.0, %v3680
      %v3682 = vpop.f32.mrf.mxu0
      %3683 = vmatprep.mubr.f32.mxu0 0.0
      %3684 = vmatmul.mubr.f32.gmra.mxu0 %v3476
      %v3685 = vpop.f32.mrf.mxu0
      %v3686 = vadd.f32 0.0, %v3685
      %v3687 = vpop.f32.mrf.mxu0
      %3688 = vmatprep.mubr.f32.mxu0 0.0
      %3689 = vmatmul.mubr.f32.gmra.mxu0 %v3479
      %v3690 = vpop.f32.mrf.mxu0
      %v3691 = vadd.f32 0.0, %v3690
      %v3692 = vpop.f32.mrf.mxu0
      %3693 = vmatprep.mubr.f32.mxu0 0.0
      %3694 = vmatmul.mubr.f32.gmra.mxu0 %v3482
      %v3695 = vpop.f32.mrf.mxu0
      %v3696 = vadd.f32 0.0, %v3695
      %v3697 = vpop.f32.mrf.mxu0
      %3698 = vmatprep.mubr.f32.mxu0 0.0
      %3699 = vmatmul.mubr.f32.gmra.mxu0 %v3485
      %v3700 = vpop.f32.mrf.mxu0
      %v3701 = vadd.f32 0.0, %v3700
      %v3702 = vpop.f32.mrf.mxu0
      %3703 = vmatprep.mubr.f32.mxu0 0.0
      %3704 = vmatmul.mubr.f32.gmra.mxu0 %v3488
      %v3705 = vpop.f32.mrf.mxu0
      %v3706 = vadd.f32 0.0, %v3705
      %v3707 = vpop.f32.mrf.mxu0
      %3708 = vmatprep.mubr.f32.mxu0 0.0
      %3709 = vmatmul.mubr.f32.gmra.mxu0 %v3491
      %v3710 = vpop.f32.mrf.mxu0
      %v3711 = vadd.f32 0.0, %v3710
      %v3712 = vpop.f32.mrf.mxu0
      %3713 = vmatprep.mubr.f32.mxu0 0.0
      %3714 = vmatmul.mubr.f32.gmra.mxu0 %v3494
      %v3715 = vpop.f32.mrf.mxu0
      %v3716 = vadd.f32 0.0, %v3715
      %v3717 = vpop.f32.mrf.mxu0
      %3718 = vmatprep.mubr.f32.mxu0 0.0
      %3719 = vmatmul.mubr.f32.gmra.mxu0 %v3497
      %v3720 = vpop.f32.mrf.mxu0
      %v3721 = vadd.f32 0.0, %v3720
      %v3722 = vpop.f32.mrf.mxu0
      %3723 = vdwg.mxu0
      %v3724 = vadd.f32 %v3338, %v3566
      %v3725 = vadd.f32 %v3339, %v3571
      %v3726 = vadd.f32 %v3340, %v3576
      %v3727 = vadd.f32 %v3341, %v3581
      %v3728 = vadd.f32 %v3342, %v3586
      %v3729 = vadd.f32 %v3343, %v3591
      %v3730 = vadd.f32 %v3344, %v3596
      %v3731 = vadd.f32 %v3345, %v3601
      %v3732 = vadd.f32 %v3346, %v3606
      %v3733 = vadd.f32 %v3347, %v3611
      %v3734 = vadd.f32 %v3348, %v3616
      %v3735 = vadd.f32 %v3349, %v3621
      %v3736 = vadd.f32 %v3350, %v3626
      %v3737 = vadd.f32 %v3351, %v3631
      %v3738 = vadd.f32 %v3352, %v3636
      %v3739 = vadd.f32 %v3353, %v3641
      %v3740 = vadd.f32 %v3354, %v3646
      %v3741 = vadd.f32 %v3355, %v3651
      %v3742 = vadd.f32 %v3356, %v3656
      %v3743 = vadd.f32 %v3357, %v3661
      %v3744 = vadd.f32 %v3358, %v3666
      %v3745 = vadd.f32 %v3359, %v3671
      %v3746 = vadd.f32 %v3360, %v3676
      %v3747 = vadd.f32 %v3361, %v3681
      %v3748 = vadd.f32 %v3362, %v3686
      %v3749 = vadd.f32 %v3363, %v3691
      %v3750 = vadd.f32 %v3364, %v3696
      %v3751 = vadd.f32 %v3365, %v3701
      %v3752 = vadd.f32 %v3366, %v3706
      %v3753 = vadd.f32 %v3367, %v3711
      %v3754 = vadd.f32 %v3368, %v3716
      %v3755 = vadd.f32 %v3369, %v3721
      %v3756 = vld [vmem:[%s2983 + $0x2] sm:$0xff]
      %v3757 = vld [vmem:[%s2983 + $0xa] sm:$0xff]
      %v3758 = vld [vmem:[%s2983 + $0x1a] sm:$0xff]
      %v3759 = vld [vmem:[%s2983 + $0x22] sm:$0xff]
      %v3760 = vld [vmem:[%s2983 + $0x32] sm:$0xff]
      %v3761 = vld [vmem:[%s2983 + $0x3a] sm:$0xff]
      %v3762 = vld [vmem:[%s2983 + $0x4a] sm:$0xff]
      %v3763 = vld [vmem:[%s2983 + $0x52] sm:$0xff]
      %v3764 = vld [vmem:[%s2983 + $0x62] sm:$0xff]
      %v3765 = vld [vmem:[%s2983 + $0x6a] sm:$0xff]
      %v3766 = vld [vmem:[%s2983 + $0x7a] sm:$0xff]
      %v3767 = vld [vmem:[%s2983 + $0x82] sm:$0xff]
      %v3768 = vld [vmem:[%s2983 + $0x92] sm:$0xff]
      %v3769 = vld [vmem:[%s2983 + $0x9a] sm:$0xff]
      %v3770 = vld [vmem:[%s2983 + $0xaa] sm:$0xff]
      %v3771 = vld [vmem:[%s2983 + $0xb2] sm:$0xff]
      %v3772 = vld [vmem:[%s2983 + $0xc2] sm:$0xff]
      %v3773 = vld [vmem:[%s2983 + $0xca] sm:$0xff]
      %v3774 = vld [vmem:[%s2983 + $0xda] sm:$0xff]
      %v3775 = vld [vmem:[%s2983 + $0xe2] sm:$0xff]
      %v3776 = vld [vmem:[%s2983 + $0xf2] sm:$0xff]
      %v3777 = vld [vmem:[%s2983 + $0xfa] sm:$0xff]
      %v3778 = vld [vmem:[%s2983 + $0x10a] sm:$0xff]
      %v3779 = vld [vmem:[%s2983 + $0x112] sm:$0xff]
      %v3780 = vld [vmem:[%s2983 + $0x122] sm:$0xff]
      %v3781 = vld [vmem:[%s2983 + $0x12a] sm:$0xff]
      %v3782 = vld [vmem:[%s2983 + $0x13a] sm:$0xff]
      %v3783 = vld [vmem:[%s2983 + $0x142] sm:$0xff]
      %v3784 = vld [vmem:[%s2983 + $0x152] sm:$0xff]
      %v3785 = vld [vmem:[%s2983 + $0x15a] sm:$0xff]
      %v3786 = vld [vmem:[%s2983 + $0x16a] sm:$0xff]
      %v3787 = vld [vmem:[%s2983 + $0x172] sm:$0xff]
      %v3788 = vld [vmem:[%s4 + $0x40] sm:$0xff]
      %v3790 = vsel %vm692, %v3756, 0
      %v3793 = vsel %vm692, %v3757, 0
      %v3796 = vsel %vm692, %v3758, 0
      %v3799 = vsel %vm692, %v3759, 0
      %v3802 = vsel %vm692, %v3760, 0
      %v3805 = vsel %vm692, %v3761, 0
      %v3808 = vsel %vm692, %v3762, 0
      %v3811 = vsel %vm692, %v3763, 0
      %v3814 = vsel %vm692, %v3764, 0
      %v3817 = vsel %vm692, %v3765, 0
      %v3820 = vsel %vm692, %v3766, 0
      %v3823 = vsel %vm692, %v3767, 0
      %v3826 = vsel %vm692, %v3768, 0
      %v3829 = vsel %vm692, %v3769, 0
      %v3832 = vsel %vm692, %v3770, 0
      %v3835 = vsel %vm692, %v3771, 0
      %v3838 = vsel %vm692, %v3772, 0
      %v3841 = vsel %vm692, %v3773, 0
      %v3844 = vsel %vm692, %v3774, 0
      %v3847 = vsel %vm692, %v3775, 0
      %v3850 = vsel %vm692, %v3776, 0
      %v3853 = vsel %vm692, %v3777, 0
      %v3856 = vsel %vm692, %v3778, 0
      %v3859 = vsel %vm692, %v3779, 0
      %v3862 = vsel %vm692, %v3780, 0
      %v3865 = vsel %vm692, %v3781, 0
      %v3868 = vsel %vm692, %v3782, 0
      %v3871 = vsel %vm692, %v3783, 0
      %v3874 = vsel %vm692, %v3784, 0
      %v3877 = vsel %vm692, %v3785, 0
      %v3880 = vsel %vm692, %v3786, 0
      %v3883 = vsel %vm692, %v3787, 0
      %3885 = vmatprep.subr.mxu0 0.0
      %3886 = vmatpush1.msra.mxu0 0.0
      %3887 = vmatprep.subr.mxu0 0.0
      %3888 = vmatpush1.msra.mxu0 0.0
      %3889 = vmatprep.subr.mxu0 0.0
      %3890 = vmatpush1.msra.mxu0 0.0
      %3891 = vmatprep.subr.mxu0 0.0
      %3892 = vmatpush1.msra.mxu0 0.0
      %3893 = vmatprep.subr.mxu0 0.0
      %3894 = vmatpush1.msra.mxu0 0.0
      %3895 = vmatprep.subr.mxu0 0.0
      %3896 = vmatpush1.msra.mxu0 0.0
      %3897 = vmatprep.subr.mxu0 0.0
      %3898 = vmatpush1.msra.mxu0 0.0
      %3899 = vmatprep.subr.mxu0 0.0
      %3900 = vmatpush1.msra.mxu0 0.0
      %3901 = vmatprep.subr.mxu0 0.0
      %3902 = vmatpush1.msra.mxu0 0.0
      %3903 = vmatprep.subr.mxu0 0.0
      %3904 = vmatpush1.msra.mxu0 0.0
      %3905 = vmatprep.subr.mxu0 0.0
      %3906 = vmatpush1.msra.mxu0 0.0
      %3907 = vmatprep.subr.mxu0 0.0
      %3908 = vmatpush1.msra.mxu0 0.0
      %3909 = vmatprep.subr.mxu0 0.0
      %3910 = vmatpush1.msra.mxu0 0.0
      %3911 = vmatprep.subr.mxu0 0.0
      %3912 = vmatpush1.msra.mxu0 0.0
      %3913 = vmatprep.subr.mxu0 0.0
      %3914 = vmatpush1.msra.mxu0 0.0
      %3915 = vmatprep.subr.mxu0 0.0
      %3916 = vmatpush1.msra.mxu0 %v3788
      %3917 = vmatprep.subr.mxu0 0.0
      %3918 = vmatpush2.msra.mxu0 0.0
      %3919 = vmatprep.subr.mxu0 0.0
      %3920 = vmatpush2.msra.mxu0 0.0
      %3921 = vmatprep.subr.mxu0 0.0
      %3922 = vmatpush2.msra.mxu0 0.0
      %3923 = vmatprep.subr.mxu0 0.0
      %3924 = vmatpush2.msra.mxu0 0.0
      %3925 = vmatprep.subr.mxu0 0.0
      %3926 = vmatpush2.msra.mxu0 0.0
      %3927 = vmatprep.subr.mxu0 0.0
      %3928 = vmatpush2.msra.mxu0 0.0
      %3929 = vmatprep.subr.mxu0 0.0
      %3930 = vmatpush2.msra.mxu0 0.0
      %3931 = vmatprep.subr.mxu0 0.0
      %3932 = vmatpush2.msra.mxu0 0.0
      %3933 = vmatprep.subr.mxu0 0.0
      %3934 = vmatpush2.msra.mxu0 0.0
      %3935 = vmatprep.subr.mxu0 0.0
      %3936 = vmatpush2.msra.mxu0 0.0
      %3937 = vmatprep.subr.mxu0 0.0
      %3938 = vmatpush2.msra.mxu0 0.0
      %3939 = vmatprep.subr.mxu0 0.0
      %3940 = vmatpush2.msra.mxu0 0.0
      %3941 = vmatprep.subr.mxu0 0.0
      %3942 = vmatpush2.msra.mxu0 0.0
      %3943 = vmatprep.subr.mxu0 0.0
      %3944 = vmatpush2.msra.mxu0 0.0
      %3945 = vmatprep.subr.mxu0 0.0
      %3946 = vmatpush2.msra.mxu0 0.0
      %3947 = vmatprep.subr.mxu0 0.0
      %3948 = vmatpush2.msra.mxu0 0.0
      %3949 = vmatprep.mubr.f32.mxu0 0.0
      %3950 = vmatmul.mubr.f32.gmra.mxu0 %v3790
      %v3951 = vpop.f32.mrf.mxu0
      %v3952 = vadd.f32 0.0, %v3951
      %v3953 = vpop.f32.mrf.mxu0
      %3954 = vmatprep.mubr.f32.mxu0 0.0
      %3955 = vmatmul.mubr.f32.gmra.mxu0 %v3793
      %v3956 = vpop.f32.mrf.mxu0
      %v3957 = vadd.f32 0.0, %v3956
      %v3958 = vpop.f32.mrf.mxu0
      %3959 = vmatprep.mubr.f32.mxu0 0.0
      %3960 = vmatmul.mubr.f32.gmra.mxu0 %v3796
      %v3961 = vpop.f32.mrf.mxu0
      %v3962 = vadd.f32 0.0, %v3961
      %v3963 = vpop.f32.mrf.mxu0
      %3964 = vmatprep.mubr.f32.mxu0 0.0
      %3965 = vmatmul.mubr.f32.gmra.mxu0 %v3799
      %v3966 = vpop.f32.mrf.mxu0
      %v3967 = vadd.f32 0.0, %v3966
      %v3968 = vpop.f32.mrf.mxu0
      %3969 = vmatprep.mubr.f32.mxu0 0.0
      %3970 = vmatmul.mubr.f32.gmra.mxu0 %v3802
      %v3971 = vpop.f32.mrf.mxu0
      %v3972 = vadd.f32 0.0, %v3971
      %v3973 = vpop.f32.mrf.mxu0
      %3974 = vmatprep.mubr.f32.mxu0 0.0
      %3975 = vmatmul.mubr.f32.gmra.mxu0 %v3805
      %v3976 = vpop.f32.mrf.mxu0
      %v3977 = vadd.f32 0.0, %v3976
      %v3978 = vpop.f32.mrf.mxu0
      %3979 = vmatprep.mubr.f32.mxu0 0.0
      %3980 = vmatmul.mubr.f32.gmra.mxu0 %v3808
      %v3981 = vpop.f32.mrf.mxu0
      %v3982 = vadd.f32 0.0, %v3981
      %v3983 = vpop.f32.mrf.mxu0
      %3984 = vmatprep.mubr.f32.mxu0 0.0
      %3985 = vmatmul.mubr.f32.gmra.mxu0 %v3811
      %v3986 = vpop.f32.mrf.mxu0
      %v3987 = vadd.f32 0.0, %v3986
      %v3988 = vpop.f32.mrf.mxu0
      %3989 = vmatprep.mubr.f32.mxu0 0.0
      %3990 = vmatmul.mubr.f32.gmra.mxu0 %v3814
      %v3991 = vpop.f32.mrf.mxu0
      %v3992 = vadd.f32 0.0, %v3991
      %v3993 = vpop.f32.mrf.mxu0
      %3994 = vmatprep.mubr.f32.mxu0 0.0
      %3995 = vmatmul.mubr.f32.gmra.mxu0 %v3817
      %v3996 = vpop.f32.mrf.mxu0
      %v3997 = vadd.f32 0.0, %v3996
      %v3998 = vpop.f32.mrf.mxu0
      %3999 = vmatprep.mubr.f32.mxu0 0.0
      %4000 = vmatmul.mubr.f32.gmra.mxu0 %v3820
      %v4001 = vpop.f32.mrf.mxu0
      %v4002 = vadd.f32 0.0, %v4001
      %v4003 = vpop.f32.mrf.mxu0
      %4004 = vmatprep.mubr.f32.mxu0 0.0
      %4005 = vmatmul.mubr.f32.gmra.mxu0 %v3823
      %v4006 = vpop.f32.mrf.mxu0
      %v4007 = vadd.f32 0.0, %v4006
      %v4008 = vpop.f32.mrf.mxu0
      %4009 = vmatprep.mubr.f32.mxu0 0.0
      %4010 = vmatmul.mubr.f32.gmra.mxu0 %v3826
      %v4011 = vpop.f32.mrf.mxu0
      %v4012 = vadd.f32 0.0, %v4011
      %v4013 = vpop.f32.mrf.mxu0
      %4014 = vmatprep.mubr.f32.mxu0 0.0
      %4015 = vmatmul.mubr.f32.gmra.mxu0 %v3829
      %v4016 = vpop.f32.mrf.mxu0
      %v4017 = vadd.f32 0.0, %v4016
      %v4018 = vpop.f32.mrf.mxu0
      %4019 = vmatprep.mubr.f32.mxu0 0.0
      %4020 = vmatmul.mubr.f32.gmra.mxu0 %v3832
      %v4021 = vpop.f32.mrf.mxu0
      %v4022 = vadd.f32 0.0, %v4021
      %v4023 = vpop.f32.mrf.mxu0
      %4024 = vmatprep.mubr.f32.mxu0 0.0
      %4025 = vmatmul.mubr.f32.gmra.mxu0 %v3835
      %v4026 = vpop.f32.mrf.mxu0
      %v4027 = vadd.f32 0.0, %v4026
      %v4028 = vpop.f32.mrf.mxu0
      %4029 = vmatprep.mubr.f32.mxu0 0.0
      %4030 = vmatmul.mubr.f32.gmra.mxu0 %v3838
      %v4031 = vpop.f32.mrf.mxu0
      %v4032 = vadd.f32 0.0, %v4031
      %v4033 = vpop.f32.mrf.mxu0
      %4034 = vmatprep.mubr.f32.mxu0 0.0
      %4035 = vmatmul.mubr.f32.gmra.mxu0 %v3841
      %v4036 = vpop.f32.mrf.mxu0
      %v4037 = vadd.f32 0.0, %v4036
      %v4038 = vpop.f32.mrf.mxu0
      %4039 = vmatprep.mubr.f32.mxu0 0.0
      %4040 = vmatmul.mubr.f32.gmra.mxu0 %v3844
      %v4041 = vpop.f32.mrf.mxu0
      %v4042 = vadd.f32 0.0, %v4041
      %v4043 = vpop.f32.mrf.mxu0
      %4044 = vmatprep.mubr.f32.mxu0 0.0
      %4045 = vmatmul.mubr.f32.gmra.mxu0 %v3847
      %v4046 = vpop.f32.mrf.mxu0
      %v4047 = vadd.f32 0.0, %v4046
      %v4048 = vpop.f32.mrf.mxu0
      %4049 = vmatprep.mubr.f32.mxu0 0.0
      %4050 = vmatmul.mubr.f32.gmra.mxu0 %v3850
      %v4051 = vpop.f32.mrf.mxu0
      %v4052 = vadd.f32 0.0, %v4051
      %v4053 = vpop.f32.mrf.mxu0
      %4054 = vmatprep.mubr.f32.mxu0 0.0
      %4055 = vmatmul.mubr.f32.gmra.mxu0 %v3853
      %v4056 = vpop.f32.mrf.mxu0
      %v4057 = vadd.f32 0.0, %v4056
      %v4058 = vpop.f32.mrf.mxu0
      %4059 = vmatprep.mubr.f32.mxu0 0.0
      %4060 = vmatmul.mubr.f32.gmra.mxu0 %v3856
      %v4061 = vpop.f32.mrf.mxu0
      %v4062 = vadd.f32 0.0, %v4061
      %v4063 = vpop.f32.mrf.mxu0
      %4064 = vmatprep.mubr.f32.mxu0 0.0
      %4065 = vmatmul.mubr.f32.gmra.mxu0 %v3859
      %v4066 = vpop.f32.mrf.mxu0
      %v4067 = vadd.f32 0.0, %v4066
      %v4068 = vpop.f32.mrf.mxu0
      %4069 = vmatprep.mubr.f32.mxu0 0.0
      %4070 = vmatmul.mubr.f32.gmra.mxu0 %v3862
      %v4071 = vpop.f32.mrf.mxu0
      %v4072 = vadd.f32 0.0, %v4071
      %v4073 = vpop.f32.mrf.mxu0
      %4074 = vmatprep.mubr.f32.mxu0 0.0
      %4075 = vmatmul.mubr.f32.gmra.mxu0 %v3865
      %v4076 = vpop.f32.mrf.mxu0
      %v4077 = vadd.f32 0.0, %v4076
      %v4078 = vpop.f32.mrf.mxu0
      %4079 = vmatprep.mubr.f32.mxu0 0.0
      %4080 = vmatmul.mubr.f32.gmra.mxu0 %v3868
      %v4081 = vpop.f32.mrf.mxu0
      %v4082 = vadd.f32 0.0, %v4081
      %v4083 = vpop.f32.mrf.mxu0
      %4084 = vmatprep.mubr.f32.mxu0 0.0
      %4085 = vmatmul.mubr.f32.gmra.mxu0 %v3871
      %v4086 = vpop.f32.mrf.mxu0
      %v4087 = vadd.f32 0.0, %v4086
      %v4088 = vpop.f32.mrf.mxu0
      %4089 = vmatprep.mubr.f32.mxu0 0.0
      %4090 = vmatmul.mubr.f32.gmra.mxu0 %v3874
      %v4091 = vpop.f32.mrf.mxu0
      %v4092 = vadd.f32 0.0, %v4091
      %v4093 = vpop.f32.mrf.mxu0
      %4094 = vmatprep.mubr.f32.mxu0 0.0
      %4095 = vmatmul.mubr.f32.gmra.mxu0 %v3877
      %v4096 = vpop.f32.mrf.mxu0
      %v4097 = vadd.f32 0.0, %v4096
      %v4098 = vpop.f32.mrf.mxu0
      %4099 = vmatprep.mubr.f32.mxu0 0.0
      %4100 = vmatmul.mubr.f32.gmra.mxu0 %v3880
      %v4101 = vpop.f32.mrf.mxu0
      %v4102 = vadd.f32 0.0, %v4101
      %v4103 = vpop.f32.mrf.mxu0
      %4104 = vmatprep.mubr.f32.mxu0 0.0
      %4105 = vmatmul.mubr.f32.gmra.mxu0 %v3883
      %v4106 = vpop.f32.mrf.mxu0
      %v4107 = vadd.f32 0.0, %v4106
      %v4108 = vpop.f32.mrf.mxu0
      %4109 = vdwg.mxu0
      %v4110 = vadd.f32 %v3724, %v3952
      %v4111 = vadd.f32 %v3725, %v3957
      %v4112 = vadd.f32 %v3726, %v3962
      %v4113 = vadd.f32 %v3727, %v3967
      %v4114 = vadd.f32 %v3728, %v3972
      %v4115 = vadd.f32 %v3729, %v3977
      %v4116 = vadd.f32 %v3730, %v3982
      %v4117 = vadd.f32 %v3731, %v3987
      %v4118 = vadd.f32 %v3732, %v3992
      %v4119 = vadd.f32 %v3733, %v3997
      %v4120 = vadd.f32 %v3734, %v4002
      %v4121 = vadd.f32 %v3735, %v4007
      %v4122 = vadd.f32 %v3736, %v4012
      %v4123 = vadd.f32 %v3737, %v4017
      %v4124 = vadd.f32 %v3738, %v4022
      %v4125 = vadd.f32 %v3739, %v4027
      %v4126 = vadd.f32 %v3740, %v4032
      %v4127 = vadd.f32 %v3741, %v4037
      %v4128 = vadd.f32 %v3742, %v4042
      %v4129 = vadd.f32 %v3743, %v4047
      %v4130 = vadd.f32 %v3744, %v4052
      %v4131 = vadd.f32 %v3745, %v4057
      %v4132 = vadd.f32 %v3746, %v4062
      %v4133 = vadd.f32 %v3747, %v4067
      %v4134 = vadd.f32 %v3748, %v4072
      %v4135 = vadd.f32 %v3749, %v4077
      %v4136 = vadd.f32 %v3750, %v4082
      %v4137 = vadd.f32 %v3751, %v4087
      %v4138 = vadd.f32 %v3752, %v4092
      %v4139 = vadd.f32 %v3753, %v4097
      %v4140 = vadd.f32 %v3754, %v4102
      %v4141 = vadd.f32 %v3755, %v4107
      %v4142 = vld [vmem:[%s473] sm:$0xff]
      %v4143 = vld [vmem:[%s473 + $0x8] sm:$0xff]
      %v4144 = vld [vmem:[%s473 + $0x10] sm:$0xff]
      %v4145 = vld [vmem:[%s473 + $0x18] sm:$0xff]
      %v4146 = vld [vmem:[%s473 + $0x20] sm:$0xff]
      %v4147 = vld [vmem:[%s473 + $0x28] sm:$0xff]
      %v4148 = vld [vmem:[%s473 + $0x30] sm:$0xff]
      %v4149 = vld [vmem:[%s473 + $0x38] sm:$0xff]
      %v4150 = vld [vmem:[%s473 + $0x40] sm:$0xff]
      %v4151 = vld [vmem:[%s473 + $0x48] sm:$0xff]
      %v4152 = vld [vmem:[%s473 + $0x50] sm:$0xff]
      %v4153 = vld [vmem:[%s473 + $0x58] sm:$0xff]
      %v4154 = vld [vmem:[%s473 + $0x60] sm:$0xff]
      %v4155 = vld [vmem:[%s473 + $0x68] sm:$0xff]
      %v4156 = vld [vmem:[%s473 + $0x70] sm:$0xff]
      %v4157 = vld [vmem:[%s473 + $0x78] sm:$0xff]
      %v4158 = vld [vmem:[%s473 + $0x80] sm:$0xff]
      %v4159 = vld [vmem:[%s473 + $0x88] sm:$0xff]
      %v4160 = vld [vmem:[%s473 + $0x90] sm:$0xff]
      %v4161 = vld [vmem:[%s473 + $0x98] sm:$0xff]
      %v4162 = vld [vmem:[%s473 + $0xa0] sm:$0xff]
      %v4163 = vld [vmem:[%s473 + $0xa8] sm:$0xff]
      %v4164 = vld [vmem:[%s473 + $0xb0] sm:$0xff]
      %v4165 = vld [vmem:[%s473 + $0xb8] sm:$0xff]
      %v4166 = vld [vmem:[%s473 + $0xc0] sm:$0xff]
      %v4167 = vld [vmem:[%s473 + $0xc8] sm:$0xff]
      %v4168 = vld [vmem:[%s473 + $0xd0] sm:$0xff]
      %v4169 = vld [vmem:[%s473 + $0xd8] sm:$0xff]
      %v4170 = vld [vmem:[%s473 + $0xe0] sm:$0xff]
      %v4171 = vld [vmem:[%s473 + $0xe8] sm:$0xff]
      %v4172 = vld [vmem:[%s473 + $0xf0] sm:$0xff]
      %v4173 = vld [vmem:[%s473 + $0xf8] sm:$0xff]
      %v4174 = vadd.f32 %v4110, %v4142
      %v4175 = vadd.f32 %v4111, %v4143
      %v4176 = vadd.f32 %v4112, %v4144
      %v4177 = vadd.f32 %v4113, %v4145
      %v4178 = vadd.f32 %v4114, %v4146
      %v4179 = vadd.f32 %v4115, %v4147
      %v4180 = vadd.f32 %v4116, %v4148
      %v4181 = vadd.f32 %v4117, %v4149
      %v4182 = vadd.f32 %v4118, %v4150
      %v4183 = vadd.f32 %v4119, %v4151
      %v4184 = vadd.f32 %v4120, %v4152
      %v4185 = vadd.f32 %v4121, %v4153
      %v4186 = vadd.f32 %v4122, %v4154
      %v4187 = vadd.f32 %v4123, %v4155
      %v4188 = vadd.f32 %v4124, %v4156
      %v4189 = vadd.f32 %v4125, %v4157
      %v4190 = vadd.f32 %v4126, %v4158
      %v4191 = vadd.f32 %v4127, %v4159
      %v4192 = vadd.f32 %v4128, %v4160
      %v4193 = vadd.f32 %v4129, %v4161
      %v4194 = vadd.f32 %v4130, %v4162
      %v4195 = vadd.f32 %v4131, %v4163
      %v4196 = vadd.f32 %v4132, %v4164
      %v4197 = vadd.f32 %v4133, %v4165
      %v4198 = vadd.f32 %v4134, %v4166
      %v4199 = vadd.f32 %v4135, %v4167
      %v4200 = vadd.f32 %v4136, %v4168
      %v4201 = vadd.f32 %v4137, %v4169
      %v4202 = vadd.f32 %v4138, %v4170
      %v4203 = vadd.f32 %v4139, %v4171
      %v4204 = vadd.f32 %v4140, %v4172
      %v4205 = vadd.f32 %v4141, %v4173
      %vm4206 = vcmask 130048
      %4207 = vst.msk [vmem:[%s484] sm:$0xff] %vm4206, %v4174
      %4208 = vst.msk [vmem:[%s484 + $0x8] sm:$0xff] %vm4206, %v4175
      %4209 = vst.msk [vmem:[%s484 + $0x10] sm:$0xff] %vm4206, %v4176
      %4210 = vst.msk [vmem:[%s484 + $0x18] sm:$0xff] %vm4206, %v4177
      %4211 = vst.msk [vmem:[%s484 + $0x20] sm:$0xff] %vm4206, %v4178
      %4212 = vst.msk [vmem:[%s484 + $0x28] sm:$0xff] %vm4206, %v4179
      %4213 = vst.msk [vmem:[%s484 + $0x30] sm:$0xff] %vm4206, %v4180
      %4214 = vst.msk [vmem:[%s484 + $0x38] sm:$0xff] %vm4206, %v4181
      %4215 = vst.msk [vmem:[%s484 + $0x40] sm:$0xff] %vm4206, %v4182
      %4216 = vst.msk [vmem:[%s484 + $0x48] sm:$0xff] %vm4206, %v4183
      %4217 = vst.msk [vmem:[%s484 + $0x50] sm:$0xff] %vm4206, %v4184
      %4218 = vst.msk [vmem:[%s484 + $0x58] sm:$0xff] %vm4206, %v4185
      %4219 = vst.msk [vmem:[%s484 + $0x60] sm:$0xff] %vm4206, %v4186
      %4220 = vst.msk [vmem:[%s484 + $0x68] sm:$0xff] %vm4206, %v4187
      %4221 = vst.msk [vmem:[%s484 + $0x70] sm:$0xff] %vm4206, %v4188
      %4222 = vst.msk [vmem:[%s484 + $0x78] sm:$0xff] %vm4206, %v4189
      %4223 = vst.msk [vmem:[%s484 + $0x80] sm:$0xff] %vm4206, %v4190
      %4224 = vst.msk [vmem:[%s484 + $0x88] sm:$0xff] %vm4206, %v4191
      %4225 = vst.msk [vmem:[%s484 + $0x90] sm:$0xff] %vm4206, %v4192
      %4226 = vst.msk [vmem:[%s484 + $0x98] sm:$0xff] %vm4206, %v4193
      %4227 = vst.msk [vmem:[%s484 + $0xa0] sm:$0xff] %vm4206, %v4194
      %4228 = vst.msk [vmem:[%s484 + $0xa8] sm:$0xff] %vm4206, %v4195
      %4229 = vst.msk [vmem:[%s484 + $0xb0] sm:$0xff] %vm4206, %v4196
      %4230 = vst.msk [vmem:[%s484 + $0xb8] sm:$0xff] %vm4206, %v4197
      %4231 = vst.msk [vmem:[%s484 + $0xc0] sm:$0xff] %vm4206, %v4198
      %4232 = vst.msk [vmem:[%s484 + $0xc8] sm:$0xff] %vm4206, %v4199
      %4233 = vst.msk [vmem:[%s484 + $0xd0] sm:$0xff] %vm4206, %v4200
      %4234 = vst.msk [vmem:[%s484 + $0xd8] sm:$0xff] %vm4206, %v4201
      %4235 = vst.msk [vmem:[%s484 + $0xe0] sm:$0xff] %vm4206, %v4202
      %4236 = vst.msk [vmem:[%s484 + $0xe8] sm:$0xff] %vm4206, %v4203
      %4237 = vst.msk [vmem:[%s484 + $0xf0] sm:$0xff] %vm4206, %v4204
      %4238 = vst.msk [vmem:[%s484 + $0xf8] sm:$0xff] %vm4206, %v4205
      %s4239 = smul.u32 16, %s23
      %p4240 = scmp.lt.s32.totalorder %s22, 1
      %s4241 = scalar_select %p4240, %s22, 1
      %p4242 = scmp.lt.s32.totalorder %s4239, 15
      %s4243 = scalar_select %p4242, %s4239, 15
      %s4244 = smul.addr %s4243, 2
      %s4245 = smul.addr %s4241, 32
      %s4246 = sadd.s32 %s4244, %s4245
      %s4247 = smul.addr %s4246, 8
      %s4248 = scalar_lea.vmem %s7, %s4247
      // Predicated region
      $region49: #{residual_conv_forward.3} parent=47 // pred_check
        %p4249 = pneg %p241
      $region50: #{residual_conv_forward.3} parent=47 // pred_check_branch
        %4251 = sbr.rel (%p4249) target = $region52
      $region51: #{residual_conv_forward.3} parent=47 // pred_region
        %s4252 = smul.u32 16, %s23
      $region52: #{residual_conv_forward.3} parent=47 // pred_fallthru
        _
    $region48: #{residual_conv_forward.3} parent=5 // pred_fallthru
      _
    %p4253 = scmp.le.s32.totalorder 2, %s13
    // Predicated region
    $region53: #{residual_conv_forward.3} parent=5 // pred_check
      %p4254 = pneg %p4253
    $region54: #{residual_conv_forward.3} parent=5 // pred_check_branch
      %4256 = sbr.rel (%p4254) target = $region56
    $region55: #{residual_conv_forward.3} parent=5 // pred_region
      %s4257 = ssub.s32 %s13, 2
      // Predicated region
      $region57: #{residual_conv_forward.3} parent=55 // pred_check
        %p4258 = pneg %p247
      $region58: #{residual_conv_forward.3} parent=55 // pred_check_branch
        %4260 = sbr.rel (%p4258) target = $region60
      $region59: #{residual_conv_forward.3} parent=55 // pred_region
        %s4261 = smul.u32 16, %s25
        %p4262 = scmp.lt.s32.totalorder %s24, 1
        %s4263 = scalar_select %p4262, %s24, 1
        %p4264 = scmp.lt.s32.totalorder %s4261, 15
        %s4265 = scalar_select %p4264, %s4261, 15
        %s4266 = smul.addr %s4265, 2
        %s4267 = smul.addr %s4263, 32
        %s4268 = sadd.s32 %s4266, %s4267
        %s4269 = smul.addr %s4268, 8
        %s4270 = scalar_lea.vmem %s7, %s4269
      $region60: #{residual_conv_forward.3} parent=55 // pred_fallthru
        _
    $region56: #{residual_conv_forward.3} parent=5 // pred_fallthru
      _
  $region6: #{residual_conv_forward.3} parent=0 // loop_footer
    %s17 = sadd.s32 1, %s13
  $region7: #{residual_conv_forward.3} parent=0 // loop_footer_branch
    %12 = sbr.rel target = $region3
  $region8: #{residual_conv_forward.3} parent=0 // loop_exit
    _

</llo_original>
